<compile_context>
chip_gen: v5e
topology: v5e:2x2
jax: 0.10.0
libtpu: 0.0.40
codegen_flags: <defaults>
</compile_context>

<pallas_src>
import functools

import numpy as np
import jax
import jax.numpy as jnp
from jax.experimental import pallas as pl
from jax.experimental.pallas import tpu as pltpu

BLOCK_PARAMETER = [
    {'layers': 3, 'planes': [3, 8, 12, 12], 'k_sizes': [2, 3, 3],
     'strides': [2, 2, 1], 'pads': [1, 1, 1], 'dilations': [1, 1, 1]},
    {'layers': 3, 'planes': [12, 12, 12, 12], 'k_sizes': [3, 3, 3],
     'strides': [1, 1, 1], 'pads': [1, 1, 1], 'dilations': [1, 1, 1]},
    {'layers': 4, 'planes': [12, 24, 24, 24, 24], 'k_sizes': [3, 3, 3, 3],
     'strides': [2, 1, 1, 1], 'pads': [1, 1, 1, 1], 'dilations': [1, 1, 1, 1]},
    {'layers': 3, 'planes': [24, 32, 32, 32], 'k_sizes': [3, 3, 3],
     'strides': [2, 1, 1], 'pads': [1, 1, 1], 'dilations': [1, 1, 1]},
    {'layers': 4, 'planes': [32, 32, 32, 32, 48], 'k_sizes': [3, 3, 3, 3],
     'strides': [1, 1, 1, 1], 'pads': [1, 1, 1, 1], 'dilations': [1, 1, 1, 1]},
]
FC_BLOCK = {'layers': 3, 'planes': [48, 64, 64, 64], 'k_sizes': [1, 1, 1],
            'strides': [1, 1, 1], 'pads': [0, 0, 0], 'dilations': [1, 1, 1]}

_LANE = 128


# ---------------------------------------------------------------- utilities --
def _conv_out(size, k, s, p, d):
    return (size + 2 * p - ((k - 1) * d + 1)) // s + 1


def _toeplitz_taps_np(w, Wp, Wo, s, d):
    """w: (kh,kw,cin,cout) f32.  Returns (kh, Wp*cin, Wo*cout) width-Toeplitz
    weights so a single (rows, Wp*cin)@(Wp*cin, Wo*cout) matmul per H-tap
    computes a whole conv row (W-taps / W-stride / W-dilation baked in)."""
    kh, kw, cin, cout = w.shape
    T = np.zeros((kh, Wp * cin, Wo * cout), np.float32)
    for i in range(kh):
        for q in range(Wo):
            for j in range(kw):
                col = q * s + j * d
                if col < Wp:
                    T[i, col * cin:(col + 1) * cin, q * cout:(q + 1) * cout] = w[i, j]
    return T


def _interp_matrix(out_size, in_size):
    """align_corners=True bilinear 1-D interpolation matrix (out_size, in_size)."""
    A = np.zeros((out_size, in_size), np.float32)
    for q in range(out_size):
        src = 0.0 if out_size == 1 else q * (in_size - 1) / (out_size - 1)
        lo = min(max(int(np.floor(src)), 0), in_size - 1)
        hi = min(lo + 1, in_size - 1)
        f = src - lo
        A[q, lo] += 1.0 - f
        A[q, hi] += f
    return A


def _interp_toeplitz(out_size, in_size, C):
    """W-direction interpolation as a (in_size*C, out_size*C) matrix acting on
    a channels-interleaved (.., W*C) slab."""
    A = _interp_matrix(out_size, in_size)
    T = np.zeros((in_size * C, out_size * C), np.float32)
    for q in range(out_size):
        for w in range(in_size):
            a = A[q, w]
            if a != 0.0:
                for c in range(C):
                    T[w * C + c, q * C + c] = a
    return T


class _PackBuilder:
    """Packs many small (K,N<=128) matrices into one (rows,128) slab; returns
    static row offsets so the kernel slices them with zero-cost static views."""

    def __init__(self, row_align):
        self._items = []
        self._offset = 0
        self._align = row_align

    def add(self, mat):
        mat = np.asarray(mat, np.float32)
        if mat.ndim == 1:
            mat = mat[None, :]
        K, N = mat.shape
        assert N <= _LANE, (K, N)
        Kp = -(-K // self._align) * self._align
        buf = np.zeros((Kp, _LANE), np.float32)
        buf[:K, :N] = mat
        off = self._offset
        self._items.append(buf)
        self._offset += Kp
        return off

    def finalize(self, dtype):
        packed = np.concatenate(self._items, axis=0)
        return jnp.asarray(packed).astype(dtype)


# --------------------------------------------------------------- parameters --
def _kaiming(key, kh, kw, cin, cout):
    std = (2.0 / (cin * kh * kw)) ** 0.5
    return jax.random.normal(key, (kh, kw, cin, cout), jnp.float32) * std


def make_cbr(key, cin, cout, k, stride=1, pad=0, dilation=1):
    """conv_bn_relu: Conv2d (kaiming, zero bias) + folded eval-BN + PReLU(0.25)."""
    eps = 1e-5
    gamma = jnp.ones((cout,), jnp.float32)
    beta = jnp.zeros((cout,), jnp.float32)
    mean = jnp.zeros((cout,), jnp.float32)
    var = jnp.ones((cout,), jnp.float32)
    scale = gamma / jnp.sqrt(var + eps)
    shift = beta - mean * scale
    w = _kaiming(key, k, k, cin, cout) * scale          # BN folded into weight
    b = jnp.zeros((cout,), jnp.float32) * scale + shift  # ... and into bias
    return dict(w=w, b=b, alpha=jnp.full((cout,), 0.25, jnp.float32),
                relu=True, stride=stride, pad=pad, dilation=dilation)


def make_plain_conv(key, cin, cout, k, stride=1, pad=0, dilation=1):
    return dict(w=_kaiming(key, k, k, cin, cout),
                b=jnp.zeros((cout,), jnp.float32),
                alpha=None, relu=False, stride=stride, pad=pad, dilation=dilation)


def make_block(key, spec):
    keys = jax.random.split(key, spec['layers'])
    return [make_cbr(keys[i], spec['planes'][i], spec['planes'][i + 1],
                     spec['k_sizes'][i], spec['strides'][i],
                     spec['pads'][i], spec['dilations'][i])
            for i in range(spec['layers'])]


def init_params(key, num_classes):
    ks = jax.random.split(key, 10)
    p = {}
    p['block1'] = make_block(ks[0], BLOCK_PARAMETER[0])
    p['block2'] = make_block(ks[1], BLOCK_PARAMETER[1])
    p['block3'] = make_block(ks[2], BLOCK_PARAMETER[2])
    p['block4'] = make_block(ks[3], BLOCK_PARAMETER[3])
    p['block5'] = make_block(ks[4], BLOCK_PARAMETER[4])
    p['dilation1'] = make_cbr(ks[5], BLOCK_PARAMETER[4]['planes'][-1],
                              BLOCK_PARAMETER[4]['planes'][-1], 3, pad=4, dilation=4)
    p['fc_block'] = make_block(ks[6], FC_BLOCK)
    p['last_conv1'] = make_plain_conv(ks[7], FC_BLOCK['planes'][-1], num_classes, 1)
    p['branch'] = make_cbr(ks[8], BLOCK_PARAMETER[1]['planes'][-1], num_classes, 1)
    p['last_conv2'] = make_plain_conv(ks[9], 2 * num_classes, num_classes, 3, pad=1)
    return p


# -------------------------------------------------------------- model build --
def _conv_geom_and_pack(L, cur_h, cur_w, wpk, bpk):
    """Geometry + packed-constant offsets for one conv(+bias+PReLU) layer."""
    w = np.asarray(L['w'], np.float32)
    kh, kw, cin, cout = w.shape
    s, p, d = L['stride'], L['pad'], L['dilation']
    Wp = cur_w + 2 * p
    Ho = _conv_out(cur_h, kh, s, p, d)
    Wo = _conv_out(cur_w, kw, s, p, d)
    K, N = Wp * cin, Wo * cout
    taps = _toeplitz_taps_np(w, Wp, Wo, s, d)
    tap_list = [(i * d, wpk.add(taps[i]), K, N) for i in range(kh)]
    b_row = bpk.add(np.tile(np.asarray(L['b'], np.float32), Wo))
    a_row = bpk.add(np.tile(np.asarray(L['alpha'], np.float32), Wo)) if L['relu'] else None
    Hwin = (Ho - 1) * s + 1
    dec_row = None
    if s > 1:
        D = np.zeros((Ho, Hwin), np.float32)
        D[np.arange(Ho), np.arange(Ho) * s] = 1.0
        dec_row = bpk.add(D)
    step = dict(taps=tap_list, s=s, Ho=Ho, Hwin=Hwin, N=N,
                b_row=b_row, a_row=a_row, dec_row=dec_row)
    return step, Ho, Wo, cout


def build_model(params, in_hw, num_classes):
    H, W = in_hw
    nc = num_classes
    wpk = _PackBuilder(16)   # bf16 weights, align items to packed sublane tile
    bpk = _PackBuilder(8)    # f32 bias / alpha / decimation / interp matrices

    scratch_shapes = []
    scratch_border = []

    def new_scratch(Hi, Wi, C, p):
        Hp, Wp = Hi + 2 * p, Wi + 2 * p
        idx = len(scratch_shapes)
        scratch_shapes.append((Hp, Wp * C))
        scratch_border.append(dict(p=p, C=C, Hi=Hi, Wi=Wi, Hp=Hp, Wp=Wp))
        return idx

    backbone = (params['block1'] + params['block2'] + params['block3'] +
                params['block4'] + params['block5'] + [params['dilation1']] +
                params['fc_block'] + [params['last_conv1']])
    idx_block2_last = len(params['block1']) + len(params['block2']) - 1

    # input staging scratch (padded for the first conv)
    p0 = backbone[0]['pad']
    in_scratch = new_scratch(H, W, 3, p0)
    src = ('scratch', in_scratch, 0, 0, (W + 2 * p0) * 3)

    steps = []
    cur_h, cur_w = H, W
    block2_info = None
    for li, L in enumerate(backbone):
        step, Ho, Wo, cout = _conv_geom_and_pack(L, cur_h, cur_w, wpk, bpk)
        step['src'] = src
        if li + 1 < len(backbone):
            nxt = backbone[li + 1]
            nkh = int(np.asarray(nxt['w']).shape[0])
            if nkh == 1 and nxt['pad'] == 0 and nxt['stride'] == 1:
                # next layer is a 1x1/s1/p0 conv -> feed it by value (no scratch)
                step['dst'] = ('value',)
                src = ('value',)
            else:
                npad = nxt['pad']
                sidx = new_scratch(Ho, Wo, cout, npad)
                step['dst'] = ('scratch', sidx, npad, cout, Wo, Ho)
                src = ('scratch', sidx, 0, 0, (Wo + 2 * npad) * cout)
                if li == idx_block2_last:
                    block2_info = dict(sidx=sidx, p=npad, C=cout, Ho=Ho, Wo=Wo)
        else:
            step['dst'] = ('value',)
        steps.append(step)
        cur_h, cur_w = Ho, Wo

    final_h, final_w = cur_h, cur_w            # backbone (last_conv1) spatial

    # --- branch 1x1 conv on the block2 output (read interior of its scratch) -
    b2 = block2_info
    bstep, bHo, bWo, bcout = _conv_geom_and_pack(params['branch'],
                                                 b2['Ho'], b2['Wo'], wpk, bpk)
    assert bcout == nc
    bstep['src'] = ('scratch', b2['sidx'], b2['p'],
                    b2['p'] * b2['C'], (b2['p'] + b2['Wo']) * b2['C'])
    lc2_pad = params['last_conv2']['pad']
    sb_br = new_scratch(bHo, bWo, nc, lc2_pad)
    bstep['dst'] = ('scratch', sb_br, lc2_pad, nc, bWo, bHo)

    # --- bilinear upsample of the backbone head to the branch resolution -----
    sb_up = new_scratch(bHo, bWo, nc, lc2_pad)
    r_ah25 = bpk.add(_interp_matrix(bHo, final_h))
    r_tw25 = bpk.add(_interp_toeplitz(bWo, final_w, nc))

    # --- last_conv2: split its weight over the two concatenated halves -------
    Wlc2 = np.asarray(params['last_conv2']['w'], np.float32)   # (3,3,2*nc,nc)
    s2, p2, d2 = (params['last_conv2']['stride'], params['last_conv2']['pad'],
                  params['last_conv2']['dilation'])
    Hp2, Wp2 = bHo + 2 * p2, bWo + 2 * p2
    Ho2 = _conv_out(bHo, 3, s2, p2, d2)
    Wo2 = _conv_out(bWo, 3, s2, p2, d2)
    TA = _toeplitz_taps_np(Wlc2[:, :, :nc, :], Wp2, Wo2, s2, d2)
    TB = _toeplitz_taps_np(Wlc2[:, :, nc:, :], Wp2, Wo2, s2, d2)
    lc2_a_offs = [wpk.add(TA[i]) for i in range(3)]
    lc2_b_offs = [wpk.add(TB[i]) for i in range(3)]
    lc2_bias = bpk.add(np.tile(np.asarray(params['last_conv2']['b'], np.float32), Wo2))

    # --- final bilinear upsample back to the input resolution ----------------
    r_ahF = bpk.add(_interp_matrix(H, Ho2))
    r_twF = bpk.add(_interp_toeplitz(W, Wo2, nc))

    plan = dict(
        H=H, W=W, Cin=3, num_classes=nc,
        in_scratch=in_scratch, in_pad=p0,
        steps=steps, branch=bstep,
        scratch_shapes=scratch_shapes, scratch_border=scratch_border,
        sb_up=sb_up, sb_br=sb_br, lc2_pad=lc2_pad,
        final_h=final_h, final_w=final_w, bHo=bHo, bWo=bWo,
        r_ah25=r_ah25, sh_ah25=(bHo, final_h),
        r_tw25=r_tw25, sh_tw25=(final_w * nc, bWo * nc),
        lc2_a_offs=lc2_a_offs, lc2_b_offs=lc2_b_offs,
        lc2_K=Wp2 * nc, lc2_N=Wo2 * nc, lc2_bias=lc2_bias, lc2_d=d2,
        Ho2=Ho2, Wo2=Wo2,
        r_ahF=r_ahF, sh_ahF=(H, Ho2),
        r_twF=r_twF, sh_twF=(Wo2 * nc, W * nc),
    )
    return dict(plan=plan,
                wpack=wpk.finalize(jnp.bfloat16),
                bpack=bpk.finalize(jnp.float32))


# ------------------------------------------------------------------- kernel --
def _make_kernel(plan):
    steps = plan['steps']
    borders = plan['scratch_border']
    nc = plan['num_classes']

    def kernel(x_ref, w_ref, b_ref, o_ref, *scratch):
        # ---- zero ONLY the padding borders (interiors are overwritten) ------
        for sidx, g in enumerate(borders):
            p, C, Hi, Wi, Hp, Wp = g['p'], g['C'], g['Hi'], g['Wi'], g['Hp'], g['Wp']
            if p == 0:
                continue
            sr = scratch[sidx]
            Wl = Wp * C
            sr[0:p, :] = jnp.zeros((p, Wl), jnp.float32)
            sr[p + Hi:Hp, :] = jnp.zeros((p, Wl), jnp.float32)
            sr[p:p + Hi, 0:p * C] = jnp.zeros((Hi, p * C), jnp.float32)
            sr[p:p + Hi, (p + Wi) * C:Wl] = jnp.zeros((Hi, p * C), jnp.float32)

        # ---- stage the input into the padded interior (in-kernel pad) -------
        p0, Cin = plan['in_pad'], plan['Cin']
        sin = scratch[plan['in_scratch']]
        sin[p0:p0 + plan['H'], p0 * Cin:(p0 + plan['W']) * Cin] = x_ref[0]

        # ---- one conv(+bias+PReLU) layer ------------------------------------
        def run_conv(st, val_in):
            Ho, s, Hwin, N = st['Ho'], st['s'], st['Hwin'], st['N']
            acc = None
            for (roff, woff, K, N_) in st['taps']:
                if st['src'][0] == 'scratch':
                    _, sidx, row0, clo, chi = st['src']
                    win = scratch[sidx][row0 + roff:row0 + roff + Hwin, clo:chi]
                    win = win.astype(jnp.bfloat16)
                else:
                    win = val_in.astype(jnp.bfloat16)
                wm = w_ref[woff:woff + K, 0:N_]
                part = jnp.dot(win, wm, preferred_element_type=jnp.float32)
                acc = part if acc is None else acc + part
            if s > 1:   # H-stride via a tiny f32 decimation matmul
                D = b_ref[st['dec_row']:st['dec_row'] + Ho, 0:Hwin]
                acc = jnp.dot(D, acc, preferred_element_type=jnp.float32)
            y = acc + b_ref[st['b_row']:st['b_row'] + 1, 0:N]
            if st['a_row'] is not None:
                a = b_ref[st['a_row']:st['a_row'] + 1, 0:N]
                y = jnp.where(y > 0, y, a * y)
            if st['dst'][0] == 'scratch':
                _, sidx, pn, Co, Wo, _Ho = st['dst']
                scratch[sidx][pn:pn + Ho, pn * Co:(pn + Wo) * Co] = y
            return y

        # ---- backbone (block1..5, dilation1, fc_block, last_conv1) ----------
        val = None
        for st in steps:
            val = run_conv(st, val)
        y_head = val                                   # (final_h, final_w*nc)

        # ---- branch 1x1 conv (block2 output) -> padded scratch --------------
        run_conv(plan['branch'], None)

        # ---- bilinear upsample head -> branch resolution (2 matmuls) --------
        oA, iA = plan['sh_ah25']
        Ah = b_ref[plan['r_ah25']:plan['r_ah25'] + oA, 0:iA]
        z = jnp.dot(Ah, y_head, preferred_element_type=jnp.float32)
        kT, nT = plan['sh_tw25']
        Tw = b_ref[plan['r_tw25']:plan['r_tw25'] + kT, 0:nT]
        up = jnp.dot(z, Tw, preferred_element_type=jnp.float32)
        pn = plan['lc2_pad']
        scratch[plan['sb_up']][pn:pn + plan['bHo'],
                               pn * nc:(pn + plan['bWo']) * nc] = up

        # ---- last_conv2 over (upsampled head ++ branch) — concat-free -------
        acc = None
        Ho2, N2, K2 = plan['Ho2'], plan['lc2_N'], plan['lc2_K']
        for i in range(3):
            roff = i * plan['lc2_d']
            winA = scratch[plan['sb_up']][roff:roff + Ho2, :].astype(jnp.bfloat16)
            winB = scratch[plan['sb_br']][roff:roff + Ho2, :].astype(jnp.bfloat16)
            wa = w_ref[plan['lc2_a_offs'][i]:plan['lc2_a_offs'][i] + K2, 0:N2]
            wb = w_ref[plan['lc2_b_offs'][i]:plan['lc2_b_offs'][i] + K2, 0:N2]
            part = (jnp.dot(winA, wa, preferred_element_type=jnp.float32) +
                    jnp.dot(winB, wb, preferred_element_type=jnp.float32))
            acc = part if acc is None else acc + part
        y5 = acc + b_ref[plan['lc2_bias']:plan['lc2_bias'] + 1, 0:N2]

        # ---- final bilinear upsample back to input resolution ---------------
        oF, iF = plan['sh_ahF']
        AhF = b_ref[plan['r_ahF']:plan['r_ahF'] + oF, 0:iF]
        zF = jnp.dot(AhF, y5, preferred_element_type=jnp.float32)
        kF, nF = plan['sh_twF']
        TwF = b_ref[plan['r_twF']:plan['r_twF'] + kF, 0:nF]
        o_ref[0] = jnp.dot(zF, TwF, preferred_element_type=jnp.float32)

    return kernel


# ------------------------------------------------------------------ forward --
def forward(built, x_nchw):
    plan = built['plan']
    N, C, H, W = x_nchw.shape
    nc = plan['num_classes']
    x = jnp.transpose(x_nchw, (0, 2, 3, 1)).reshape(N, H, W * C)   # NHWC slab

    out = pl.pallas_call(
        _make_kernel(plan),
        out_shape=jax.ShapeDtypeStruct((N, H, W * nc), jnp.float32),
        grid=(N,),
        in_specs=[
            pl.BlockSpec((1, H, W * C), lambda n: (n, 0, 0)),
            pl.BlockSpec(built['wpack'].shape, lambda n: (0, 0)),
            pl.BlockSpec(built['bpack'].shape, lambda n: (0, 0)),
        ],
        out_specs=pl.BlockSpec((1, H, W * nc), lambda n: (n, 0, 0)),
        scratch_shapes=[pltpu.VMEM(s, jnp.float32) for s in plan['scratch_shapes']],
        compiler_params=pltpu.CompilerParams(dimension_semantics=("parallel",)),
    )(x, built['wpack'], built['bpack'])

    return jnp.transpose(out.reshape(N, H, W, nc), (0, 3, 1, 2))   # -> NCHW


# --------------------------------------------------------------------- main --
if __name__ == "__main__":
    key = jax.random.PRNGKey(0)
    k_params, k_x = jax.random.split(key)
    NUM_CLASSES = 4

    params = init_params(k_params, NUM_CLASSES)
    x = jax.random.normal(k_x, (2, 3, 16, 16), jnp.float32)       # NCHW like PyTorch

    built = build_model(params, (16, 16), NUM_CLASSES)
    fwd = jax.jit(functools.partial(forward, built))
    y = fwd(x)
    jax.block_until_ready(y)

    assert y.shape == (2, NUM_CLASSES, 16, 16), y.shape
    assert y.dtype == jnp.float32
    print("KERNEL_OK")
</pallas_src>

<mosaic_0001>
module attributes {stable_mosaic.version = 11 : i64} {
  func.func @kernel(%arg0: i32, %arg1: memref<1x16x48xf32, #tpu.memory_space<vmem>>, %arg2: memref<7872x128xbf16, #tpu.memory_space<vmem>>, %arg3: memref<464x128xf32, #tpu.memory_space<vmem>>, %arg4: memref<1x16x64xf32, #tpu.memory_space<vmem>>, %arg5: memref<18x54xf32, #tpu.memory_space<vmem>>, %arg6: memref<11x88xf32, #tpu.memory_space<vmem>>, %arg7: memref<7x84xf32, #tpu.memory_space<vmem>>, %arg8: memref<7x84xf32, #tpu.memory_space<vmem>>, %arg9: memref<7x84xf32, #tpu.memory_space<vmem>>, %arg10: memref<7x84xf32, #tpu.memory_space<vmem>>, %arg11: memref<7x84xf32, #tpu.memory_space<vmem>>, %arg12: memref<5x120xf32, #tpu.memory_space<vmem>>, %arg13: memref<5x120xf32, #tpu.memory_space<vmem>>, %arg14: memref<5x120xf32, #tpu.memory_space<vmem>>, %arg15: memref<5x120xf32, #tpu.memory_space<vmem>>, %arg16: memref<4x128xf32, #tpu.memory_space<vmem>>, %arg17: memref<4x128xf32, #tpu.memory_space<vmem>>, %arg18: memref<4x128xf32, #tpu.memory_space<vmem>>, %arg19: memref<4x128xf32, #tpu.memory_space<vmem>>, %arg20: memref<4x128xf32, #tpu.memory_space<vmem>>, %arg21: memref<4x128xf32, #tpu.memory_space<vmem>>, %arg22: memref<10x480xf32, #tpu.memory_space<vmem>>, %arg23: memref<7x28xf32, #tpu.memory_space<vmem>>, %arg24: memref<7x28xf32, #tpu.memory_space<vmem>>) attributes {dimension_semantics = [#tpu.dimension_semantics<parallel>], iteration_bounds = array<i64: 2>, scalar_prefetch = 0 : i64, scratch_operands = 20 : i64, tpu.core_type = #tpu.core_type<tc>, window_params = [{transform_indices = @transform_0, window_bounds = array<i64: 1, 16, 48>}, {pipeline_mode = #tpu.pipeline_mode<synchronous>, transform_indices = @transform_1, window_bounds = array<i64: 7872, 128>}, {pipeline_mode = #tpu.pipeline_mode<synchronous>, transform_indices = @transform_2, window_bounds = array<i64: 464, 128>}, {transform_indices = @transform_3, window_bounds = array<i64: 1, 16, 64>}]} {
    %cst = arith.constant 0.000000e+00 : f32
    %0 = vector.broadcast %cst : f32 to vector<1x54xf32>
    %c0 = arith.constant 0 : index
    %c0_0 = arith.constant 0 : index
    %1 = vector.load %arg5[%c0, %c0_0] : memref<18x54xf32, #tpu.memory_space<vmem>>, vector<1x54xf32>
    tpu.vector_store %arg5[%c0, %c0_0], %0 {strides = array<i32>} : memref<18x54xf32, #tpu.memory_space<vmem>>, vector<1x54xf32>,
    %cst_1 = arith.constant 0.000000e+00 : f32
    %2 = vector.broadcast %cst_1 : f32 to vector<1x54xf32>
    %c17 = arith.constant 17 : index
    %c0_2 = arith.constant 0 : index
    %3 = vector.load %arg5[%c17, %c0_2] : memref<18x54xf32, #tpu.memory_space<vmem>>, vector<1x54xf32>
    tpu.vector_store %arg5[%c17, %c0_2], %2 {strides = array<i32>} : memref<18x54xf32, #tpu.memory_space<vmem>>, vector<1x54xf32>,
    %cst_3 = arith.constant 0.000000e+00 : f32
    %4 = vector.broadcast %cst_3 : f32 to vector<16x3xf32>
    %c1 = arith.constant 1 : index
    %c0_4 = arith.constant 0 : index
    %5 = vector.load %arg5[%c1, %c0_4] : memref<18x54xf32, #tpu.memory_space<vmem>>, vector<16x3xf32>
    tpu.vector_store %arg5[%c1, %c0_4], %4 {strides = array<i32>} : memref<18x54xf32, #tpu.memory_space<vmem>>, vector<16x3xf32>,
    %cst_5 = arith.constant 0.000000e+00 : f32
    %6 = vector.broadcast %cst_5 : f32 to vector<16x3xf32>
    %c1_6 = arith.constant 1 : index
    %c51 = arith.constant 51 : index
    %7 = vector.load %arg5[%c1_6, %c51] : memref<18x54xf32, #tpu.memory_space<vmem>>, vector<16x3xf32>
    tpu.vector_store %arg5[%c1_6, %c51], %6 {strides = array<i32>} : memref<18x54xf32, #tpu.memory_space<vmem>>, vector<16x3xf32>,
    %cst_7 = arith.constant 0.000000e+00 : f32
    %8 = vector.broadcast %cst_7 : f32 to vector<1x88xf32>
    %c0_8 = arith.constant 0 : index
    %c0_9 = arith.constant 0 : index
    %9 = vector.load %arg6[%c0_8, %c0_9] : memref<11x88xf32, #tpu.memory_space<vmem>>, vector<1x88xf32>
    tpu.vector_store %arg6[%c0_8, %c0_9], %8 {strides = array<i32>} : memref<11x88xf32, #tpu.memory_space<vmem>>, vector<1x88xf32>,
    %cst_10 = arith.constant 0.000000e+00 : f32
    %10 = vector.broadcast %cst_10 : f32 to vector<1x88xf32>
    %c10 = arith.constant 10 : index
    %c0_11 = arith.constant 0 : index
    %11 = vector.load %arg6[%c10, %c0_11] : memref<11x88xf32, #tpu.memory_space<vmem>>, vector<1x88xf32>
    tpu.vector_store %arg6[%c10, %c0_11], %10 {strides = array<i32>} : memref<11x88xf32, #tpu.memory_space<vmem>>, vector<1x88xf32>,
    %cst_12 = arith.constant 0.000000e+00 : f32
    %12 = vector.broadcast %cst_12 : f32 to vector<9x8xf32>
    %c1_13 = arith.constant 1 : index
    %c0_14 = arith.constant 0 : index
    %13 = vector.load %arg6[%c1_13, %c0_14] : memref<11x88xf32, #tpu.memory_space<vmem>>, vector<9x8xf32>
    tpu.vector_store %arg6[%c1_13, %c0_14], %12 {strides = array<i32>} : memref<11x88xf32, #tpu.memory_space<vmem>>, vector<9x8xf32>,
    %cst_15 = arith.constant 0.000000e+00 : f32
    %14 = vector.broadcast %cst_15 : f32 to vector<9x8xf32>
    %c1_16 = arith.constant 1 : index
    %c80 = arith.constant 80 : index
    %15 = vector.load %arg6[%c1_16, %c80] : memref<11x88xf32, #tpu.memory_space<vmem>>, vector<9x8xf32>
    tpu.vector_store %arg6[%c1_16, %c80], %14 {strides = array<i32>} : memref<11x88xf32, #tpu.memory_space<vmem>>, vector<9x8xf32>,
    %cst_17 = arith.constant 0.000000e+00 : f32
    %16 = vector.broadcast %cst_17 : f32 to vector<1x84xf32>
    %c0_18 = arith.constant 0 : index
    %c0_19 = arith.constant 0 : index
    %17 = vector.load %arg7[%c0_18, %c0_19] : memref<7x84xf32, #tpu.memory_space<vmem>>, vector<1x84xf32>
    tpu.vector_store %arg7[%c0_18, %c0_19], %16 {strides = array<i32>} : memref<7x84xf32, #tpu.memory_space<vmem>>, vector<1x84xf32>,
    %cst_20 = arith.constant 0.000000e+00 : f32
    %18 = vector.broadcast %cst_20 : f32 to vector<1x84xf32>
    %c6 = arith.constant 6 : index
    %c0_21 = arith.constant 0 : index
    %19 = vector.load %arg7[%c6, %c0_21] : memref<7x84xf32, #tpu.memory_space<vmem>>, vector<1x84xf32>
    tpu.vector_store %arg7[%c6, %c0_21], %18 {strides = array<i32>} : memref<7x84xf32, #tpu.memory_space<vmem>>, vector<1x84xf32>,
    %cst_22 = arith.constant 0.000000e+00 : f32
    %20 = vector.broadcast %cst_22 : f32 to vector<5x12xf32>
    %c1_23 = arith.constant 1 : index
    %c0_24 = arith.constant 0 : index
    %21 = vector.load %arg7[%c1_23, %c0_24] : memref<7x84xf32, #tpu.memory_space<vmem>>, vector<5x12xf32>
    tpu.vector_store %arg7[%c1_23, %c0_24], %20 {strides = array<i32>} : memref<7x84xf32, #tpu.memory_space<vmem>>, vector<5x12xf32>,
    %cst_25 = arith.constant 0.000000e+00 : f32
    %22 = vector.broadcast %cst_25 : f32 to vector<5x12xf32>
    %c1_26 = arith.constant 1 : index
    %c72 = arith.constant 72 : index
    %23 = vector.load %arg7[%c1_26, %c72] : memref<7x84xf32, #tpu.memory_space<vmem>>, vector<5x12xf32>
    tpu.vector_store %arg7[%c1_26, %c72], %22 {strides = array<i32>} : memref<7x84xf32, #tpu.memory_space<vmem>>, vector<5x12xf32>,
    %cst_27 = arith.constant 0.000000e+00 : f32
    %24 = vector.broadcast %cst_27 : f32 to vector<1x84xf32>
    %c0_28 = arith.constant 0 : index
    %c0_29 = arith.constant 0 : index
    %25 = vector.load %arg8[%c0_28, %c0_29] : memref<7x84xf32, #tpu.memory_space<vmem>>, vector<1x84xf32>
    tpu.vector_store %arg8[%c0_28, %c0_29], %24 {strides = array<i32>} : memref<7x84xf32, #tpu.memory_space<vmem>>, vector<1x84xf32>,
    %cst_30 = arith.constant 0.000000e+00 : f32
    %26 = vector.broadcast %cst_30 : f32 to vector<1x84xf32>
    %c6_31 = arith.constant 6 : index
    %c0_32 = arith.constant 0 : index
    %27 = vector.load %arg8[%c6_31, %c0_32] : memref<7x84xf32, #tpu.memory_space<vmem>>, vector<1x84xf32>
    tpu.vector_store %arg8[%c6_31, %c0_32], %26 {strides = array<i32>} : memref<7x84xf32, #tpu.memory_space<vmem>>, vector<1x84xf32>,
    %cst_33 = arith.constant 0.000000e+00 : f32
    %28 = vector.broadcast %cst_33 : f32 to vector<5x12xf32>
    %c1_34 = arith.constant 1 : index
    %c0_35 = arith.constant 0 : index
    %29 = vector.load %arg8[%c1_34, %c0_35] : memref<7x84xf32, #tpu.memory_space<vmem>>, vector<5x12xf32>
    tpu.vector_store %arg8[%c1_34, %c0_35], %28 {strides = array<i32>} : memref<7x84xf32, #tpu.memory_space<vmem>>, vector<5x12xf32>,
    %cst_36 = arith.constant 0.000000e+00 : f32
    %30 = vector.broadcast %cst_36 : f32 to vector<5x12xf32>
    %c1_37 = arith.constant 1 : index
    %c72_38 = arith.constant 72 : index
    %31 = vector.load %arg8[%c1_37, %c72_38] : memref<7x84xf32, #tpu.memory_space<vmem>>, vector<5x12xf32>
    tpu.vector_store %arg8[%c1_37, %c72_38], %30 {strides = array<i32>} : memref<7x84xf32, #tpu.memory_space<vmem>>, vector<5x12xf32>,
    %cst_39 = arith.constant 0.000000e+00 : f32
    %32 = vector.broadcast %cst_39 : f32 to vector<1x84xf32>
    %c0_40 = arith.constant 0 : index
    %c0_41 = arith.constant 0 : index
    %33 = vector.load %arg9[%c0_40, %c0_41] : memref<7x84xf32, #tpu.memory_space<vmem>>, vector<1x84xf32>
    tpu.vector_store %arg9[%c0_40, %c0_41], %32 {strides = array<i32>} : memref<7x84xf32, #tpu.memory_space<vmem>>, vector<1x84xf32>,
    %cst_42 = arith.constant 0.000000e+00 : f32
    %34 = vector.broadcast %cst_42 : f32 to vector<1x84xf32>
    %c6_43 = arith.constant 6 : index
    %c0_44 = arith.constant 0 : index
    %35 = vector.load %arg9[%c6_43, %c0_44] : memref<7x84xf32, #tpu.memory_space<vmem>>, vector<1x84xf32>
    tpu.vector_store %arg9[%c6_43, %c0_44], %34 {strides = array<i32>} : memref<7x84xf32, #tpu.memory_space<vmem>>, vector<1x84xf32>,
    %cst_45 = arith.constant 0.000000e+00 : f32
    %36 = vector.broadcast %cst_45 : f32 to vector<5x12xf32>
    %c1_46 = arith.constant 1 : index
    %c0_47 = arith.constant 0 : index
    %37 = vector.load %arg9[%c1_46, %c0_47] : memref<7x84xf32, #tpu.memory_space<vmem>>, vector<5x12xf32>
    tpu.vector_store %arg9[%c1_46, %c0_47], %36 {strides = array<i32>} : memref<7x84xf32, #tpu.memory_space<vmem>>, vector<5x12xf32>,
    %cst_48 = arith.constant 0.000000e+00 : f32
    %38 = vector.broadcast %cst_48 : f32 to vector<5x12xf32>
    %c1_49 = arith.constant 1 : index
    %c72_50 = arith.constant 72 : index
    %39 = vector.load %arg9[%c1_49, %c72_50] : memref<7x84xf32, #tpu.memory_space<vmem>>, vector<5x12xf32>
    tpu.vector_store %arg9[%c1_49, %c72_50], %38 {strides = array<i32>} : memref<7x84xf32, #tpu.memory_space<vmem>>, vector<5x12xf32>,
    %cst_51 = arith.constant 0.000000e+00 : f32
    %40 = vector.broadcast %cst_51 : f32 to vector<1x84xf32>
    %c0_52 = arith.constant 0 : index
    %c0_53 = arith.constant 0 : index
    %41 = vector.load %arg10[%c0_52, %c0_53] : memref<7x84xf32, #tpu.memory_space<vmem>>, vector<1x84xf32>
    tpu.vector_store %arg10[%c0_52, %c0_53], %40 {strides = array<i32>} : memref<7x84xf32, #tpu.memory_space<vmem>>, vector<1x84xf32>,
    %cst_54 = arith.constant 0.000000e+00 : f32
    %42 = vector.broadcast %cst_54 : f32 to vector<1x84xf32>
    %c6_55 = arith.constant 6 : index
    %c0_56 = arith.constant 0 : index
    %43 = vector.load %arg10[%c6_55, %c0_56] : memref<7x84xf32, #tpu.memory_space<vmem>>, vector<1x84xf32>
    tpu.vector_store %arg10[%c6_55, %c0_56], %42 {strides = array<i32>} : memref<7x84xf32, #tpu.memory_space<vmem>>, vector<1x84xf32>,
    %cst_57 = arith.constant 0.000000e+00 : f32
    %44 = vector.broadcast %cst_57 : f32 to vector<5x12xf32>
    %c1_58 = arith.constant 1 : index
    %c0_59 = arith.constant 0 : index
    %45 = vector.load %arg10[%c1_58, %c0_59] : memref<7x84xf32, #tpu.memory_space<vmem>>, vector<5x12xf32>
    tpu.vector_store %arg10[%c1_58, %c0_59], %44 {strides = array<i32>} : memref<7x84xf32, #tpu.memory_space<vmem>>, vector<5x12xf32>,
    %cst_60 = arith.constant 0.000000e+00 : f32
    %46 = vector.broadcast %cst_60 : f32 to vector<5x12xf32>
    %c1_61 = arith.constant 1 : index
    %c72_62 = arith.constant 72 : index
    %47 = vector.load %arg10[%c1_61, %c72_62] : memref<7x84xf32, #tpu.memory_space<vmem>>, vector<5x12xf32>
    tpu.vector_store %arg10[%c1_61, %c72_62], %46 {strides = array<i32>} : memref<7x84xf32, #tpu.memory_space<vmem>>, vector<5x12xf32>,
    %cst_63 = arith.constant 0.000000e+00 : f32
    %48 = vector.broadcast %cst_63 : f32 to vector<1x84xf32>
    %c0_64 = arith.constant 0 : index
    %c0_65 = arith.constant 0 : index
    %49 = vector.load %arg11[%c0_64, %c0_65] : memref<7x84xf32, #tpu.memory_space<vmem>>, vector<1x84xf32>
    tpu.vector_store %arg11[%c0_64, %c0_65], %48 {strides = array<i32>} : memref<7x84xf32, #tpu.memory_space<vmem>>, vector<1x84xf32>,
    %cst_66 = arith.constant 0.000000e+00 : f32
    %50 = vector.broadcast %cst_66 : f32 to vector<1x84xf32>
    %c6_67 = arith.constant 6 : index
    %c0_68 = arith.constant 0 : index
    %51 = vector.load %arg11[%c6_67, %c0_68] : memref<7x84xf32, #tpu.memory_space<vmem>>, vector<1x84xf32>
    tpu.vector_store %arg11[%c6_67, %c0_68], %50 {strides = array<i32>} : memref<7x84xf32, #tpu.memory_space<vmem>>, vector<1x84xf32>,
    %cst_69 = arith.constant 0.000000e+00 : f32
    %52 = vector.broadcast %cst_69 : f32 to vector<5x12xf32>
    %c1_70 = arith.constant 1 : index
    %c0_71 = arith.constant 0 : index
    %53 = vector.load %arg11[%c1_70, %c0_71] : memref<7x84xf32, #tpu.memory_space<vmem>>, vector<5x12xf32>
    tpu.vector_store %arg11[%c1_70, %c0_71], %52 {strides = array<i32>} : memref<7x84xf32, #tpu.memory_space<vmem>>, vector<5x12xf32>,
    %cst_72 = arith.constant 0.000000e+00 : f32
    %54 = vector.broadcast %cst_72 : f32 to vector<5x12xf32>
    %c1_73 = arith.constant 1 : index
    %c72_74 = arith.constant 72 : index
    %55 = vector.load %arg11[%c1_73, %c72_74] : memref<7x84xf32, #tpu.memory_space<vmem>>, vector<5x12xf32>
    tpu.vector_store %arg11[%c1_73, %c72_74], %54 {strides = array<i32>} : memref<7x84xf32, #tpu.memory_space<vmem>>, vector<5x12xf32>,
    %cst_75 = arith.constant 0.000000e+00 : f32
    %56 = vector.broadcast %cst_75 : f32 to vector<1x120xf32>
    %c0_76 = arith.constant 0 : index
    %c0_77 = arith.constant 0 : index
    %57 = vector.load %arg12[%c0_76, %c0_77] : memref<5x120xf32, #tpu.memory_space<vmem>>, vector<1x120xf32>
    tpu.vector_store %arg12[%c0_76, %c0_77], %56 {strides = array<i32>} : memref<5x120xf32, #tpu.memory_space<vmem>>, vector<1x120xf32>,
    %cst_78 = arith.constant 0.000000e+00 : f32
    %58 = vector.broadcast %cst_78 : f32 to vector<1x120xf32>
    %c4 = arith.constant 4 : index
    %c0_79 = arith.constant 0 : index
    %59 = vector.load %arg12[%c4, %c0_79] : memref<5x120xf32, #tpu.memory_space<vmem>>, vector<1x120xf32>
    tpu.vector_store %arg12[%c4, %c0_79], %58 {strides = array<i32>} : memref<5x120xf32, #tpu.memory_space<vmem>>, vector<1x120xf32>,
    %cst_80 = arith.constant 0.000000e+00 : f32
    %60 = vector.broadcast %cst_80 : f32 to vector<3x24xf32>
    %c1_81 = arith.constant 1 : index
    %c0_82 = arith.constant 0 : index
    %61 = vector.load %arg12[%c1_81, %c0_82] : memref<5x120xf32, #tpu.memory_space<vmem>>, vector<3x24xf32>
    tpu.vector_store %arg12[%c1_81, %c0_82], %60 {strides = array<i32>} : memref<5x120xf32, #tpu.memory_space<vmem>>, vector<3x24xf32>,
    %cst_83 = arith.constant 0.000000e+00 : f32
    %62 = vector.broadcast %cst_83 : f32 to vector<3x24xf32>
    %c1_84 = arith.constant 1 : index
    %c96 = arith.constant 96 : index
    %63 = vector.load %arg12[%c1_84, %c96] : memref<5x120xf32, #tpu.memory_space<vmem>>, vector<3x24xf32>
    tpu.vector_store %arg12[%c1_84, %c96], %62 {strides = array<i32>} : memref<5x120xf32, #tpu.memory_space<vmem>>, vector<3x24xf32>,
    %cst_85 = arith.constant 0.000000e+00 : f32
    %64 = vector.broadcast %cst_85 : f32 to vector<1x120xf32>
    %c0_86 = arith.constant 0 : index
    %c0_87 = arith.constant 0 : index
    %65 = vector.load %arg13[%c0_86, %c0_87] : memref<5x120xf32, #tpu.memory_space<vmem>>, vector<1x120xf32>
    tpu.vector_store %arg13[%c0_86, %c0_87], %64 {strides = array<i32>} : memref<5x120xf32, #tpu.memory_space<vmem>>, vector<1x120xf32>,
    %cst_88 = arith.constant 0.000000e+00 : f32
    %66 = vector.broadcast %cst_88 : f32 to vector<1x120xf32>
    %c4_89 = arith.constant 4 : index
    %c0_90 = arith.constant 0 : index
    %67 = vector.load %arg13[%c4_89, %c0_90] : memref<5x120xf32, #tpu.memory_space<vmem>>, vector<1x120xf32>
    tpu.vector_store %arg13[%c4_89, %c0_90], %66 {strides = array<i32>} : memref<5x120xf32, #tpu.memory_space<vmem>>, vector<1x120xf32>,
    %cst_91 = arith.constant 0.000000e+00 : f32
    %68 = vector.broadcast %cst_91 : f32 to vector<3x24xf32>
    %c1_92 = arith.constant 1 : index
    %c0_93 = arith.constant 0 : index
    %69 = vector.load %arg13[%c1_92, %c0_93] : memref<5x120xf32, #tpu.memory_space<vmem>>, vector<3x24xf32>
    tpu.vector_store %arg13[%c1_92, %c0_93], %68 {strides = array<i32>} : memref<5x120xf32, #tpu.memory_space<vmem>>, vector<3x24xf32>,
    %cst_94 = arith.constant 0.000000e+00 : f32
    %70 = vector.broadcast %cst_94 : f32 to vector<3x24xf32>
    %c1_95 = arith.constant 1 : index
    %c96_96 = arith.constant 96 : index
    %71 = vector.load %arg13[%c1_95, %c96_96] : memref<5x120xf32, #tpu.memory_space<vmem>>, vector<3x24xf32>
    tpu.vector_store %arg13[%c1_95, %c96_96], %70 {strides = array<i32>} : memref<5x120xf32, #tpu.memory_space<vmem>>, vector<3x24xf32>,
    %cst_97 = arith.constant 0.000000e+00 : f32
    %72 = vector.broadcast %cst_97 : f32 to vector<1x120xf32>
    %c0_98 = arith.constant 0 : index
    %c0_99 = arith.constant 0 : index
    %73 = vector.load %arg14[%c0_98, %c0_99] : memref<5x120xf32, #tpu.memory_space<vmem>>, vector<1x120xf32>
    tpu.vector_store %arg14[%c0_98, %c0_99], %72 {strides = array<i32>} : memref<5x120xf32, #tpu.memory_space<vmem>>, vector<1x120xf32>,
    %cst_100 = arith.constant 0.000000e+00 : f32
    %74 = vector.broadcast %cst_100 : f32 to vector<1x120xf32>
    %c4_101 = arith.constant 4 : index
    %c0_102 = arith.constant 0 : index
    %75 = vector.load %arg14[%c4_101, %c0_102] : memref<5x120xf32, #tpu.memory_space<vmem>>, vector<1x120xf32>
    tpu.vector_store %arg14[%c4_101, %c0_102], %74 {strides = array<i32>} : memref<5x120xf32, #tpu.memory_space<vmem>>, vector<1x120xf32>,
    %cst_103 = arith.constant 0.000000e+00 : f32
    %76 = vector.broadcast %cst_103 : f32 to vector<3x24xf32>
    %c1_104 = arith.constant 1 : index
    %c0_105 = arith.constant 0 : index
    %77 = vector.load %arg14[%c1_104, %c0_105] : memref<5x120xf32, #tpu.memory_space<vmem>>, vector<3x24xf32>
    tpu.vector_store %arg14[%c1_104, %c0_105], %76 {strides = array<i32>} : memref<5x120xf32, #tpu.memory_space<vmem>>, vector<3x24xf32>,
    %cst_106 = arith.constant 0.000000e+00 : f32
    %78 = vector.broadcast %cst_106 : f32 to vector<3x24xf32>
    %c1_107 = arith.constant 1 : index
    %c96_108 = arith.constant 96 : index
    %79 = vector.load %arg14[%c1_107, %c96_108] : memref<5x120xf32, #tpu.memory_space<vmem>>, vector<3x24xf32>
    tpu.vector_store %arg14[%c1_107, %c96_108], %78 {strides = array<i32>} : memref<5x120xf32, #tpu.memory_space<vmem>>, vector<3x24xf32>,
    %cst_109 = arith.constant 0.000000e+00 : f32
    %80 = vector.broadcast %cst_109 : f32 to vector<1x120xf32>
    %c0_110 = arith.constant 0 : index
    %c0_111 = arith.constant 0 : index
    %81 = vector.load %arg15[%c0_110, %c0_111] : memref<5x120xf32, #tpu.memory_space<vmem>>, vector<1x120xf32>
    tpu.vector_store %arg15[%c0_110, %c0_111], %80 {strides = array<i32>} : memref<5x120xf32, #tpu.memory_space<vmem>>, vector<1x120xf32>,
    %cst_112 = arith.constant 0.000000e+00 : f32
    %82 = vector.broadcast %cst_112 : f32 to vector<1x120xf32>
    %c4_113 = arith.constant 4 : index
    %c0_114 = arith.constant 0 : index
    %83 = vector.load %arg15[%c4_113, %c0_114] : memref<5x120xf32, #tpu.memory_space<vmem>>, vector<1x120xf32>
    tpu.vector_store %arg15[%c4_113, %c0_114], %82 {strides = array<i32>} : memref<5x120xf32, #tpu.memory_space<vmem>>, vector<1x120xf32>,
    %cst_115 = arith.constant 0.000000e+00 : f32
    %84 = vector.broadcast %cst_115 : f32 to vector<3x24xf32>
    %c1_116 = arith.constant 1 : index
    %c0_117 = arith.constant 0 : index
    %85 = vector.load %arg15[%c1_116, %c0_117] : memref<5x120xf32, #tpu.memory_space<vmem>>, vector<3x24xf32>
    tpu.vector_store %arg15[%c1_116, %c0_117], %84 {strides = array<i32>} : memref<5x120xf32, #tpu.memory_space<vmem>>, vector<3x24xf32>,
    %cst_118 = arith.constant 0.000000e+00 : f32
    %86 = vector.broadcast %cst_118 : f32 to vector<3x24xf32>
    %c1_119 = arith.constant 1 : index
    %c96_120 = arith.constant 96 : index
    %87 = vector.load %arg15[%c1_119, %c96_120] : memref<5x120xf32, #tpu.memory_space<vmem>>, vector<3x24xf32>
    tpu.vector_store %arg15[%c1_119, %c96_120], %86 {strides = array<i32>} : memref<5x120xf32, #tpu.memory_space<vmem>>, vector<3x24xf32>,
    %cst_121 = arith.constant 0.000000e+00 : f32
    %88 = vector.broadcast %cst_121 : f32 to vector<1x128xf32>
    %c0_122 = arith.constant 0 : index
    %c0_123 = arith.constant 0 : index
    %89 = vector.load %arg16[%c0_122, %c0_123] : memref<4x128xf32, #tpu.memory_space<vmem>>, vector<1x128xf32>
    tpu.vector_store %arg16[%c0_122, %c0_123], %88 {strides = array<i32>} : memref<4x128xf32, #tpu.memory_space<vmem>>, vector<1x128xf32>,
    %cst_124 = arith.constant 0.000000e+00 : f32
    %90 = vector.broadcast %cst_124 : f32 to vector<1x128xf32>
    %c3 = arith.constant 3 : index
    %c0_125 = arith.constant 0 : index
    %91 = vector.load %arg16[%c3, %c0_125] : memref<4x128xf32, #tpu.memory_space<vmem>>, vector<1x128xf32>
    tpu.vector_store %arg16[%c3, %c0_125], %90 {strides = array<i32>} : memref<4x128xf32, #tpu.memory_space<vmem>>, vector<1x128xf32>,
    %cst_126 = arith.constant 0.000000e+00 : f32
    %92 = vector.broadcast %cst_126 : f32 to vector<2x32xf32>
    %c1_127 = arith.constant 1 : index
    %c0_128 = arith.constant 0 : index
    %93 = vector.load %arg16[%c1_127, %c0_128] : memref<4x128xf32, #tpu.memory_space<vmem>>, vector<2x32xf32>
    tpu.vector_store %arg16[%c1_127, %c0_128], %92 {strides = array<i32>} : memref<4x128xf32, #tpu.memory_space<vmem>>, vector<2x32xf32>,
    %cst_129 = arith.constant 0.000000e+00 : f32
    %94 = vector.broadcast %cst_129 : f32 to vector<2x32xf32>
    %c1_130 = arith.constant 1 : index
    %c96_131 = arith.constant 96 : index
    %95 = vector.load %arg16[%c1_130, %c96_131] : memref<4x128xf32, #tpu.memory_space<vmem>>, vector<2x32xf32>
    tpu.vector_store %arg16[%c1_130, %c96_131], %94 {strides = array<i32>} : memref<4x128xf32, #tpu.memory_space<vmem>>, vector<2x32xf32>,
    %cst_132 = arith.constant 0.000000e+00 : f32
    %96 = vector.broadcast %cst_132 : f32 to vector<1x128xf32>
    %c0_133 = arith.constant 0 : index
    %c0_134 = arith.constant 0 : index
    %97 = vector.load %arg17[%c0_133, %c0_134] : memref<4x128xf32, #tpu.memory_space<vmem>>, vector<1x128xf32>
    tpu.vector_store %arg17[%c0_133, %c0_134], %96 {strides = array<i32>} : memref<4x128xf32, #tpu.memory_space<vmem>>, vector<1x128xf32>,
    %cst_135 = arith.constant 0.000000e+00 : f32
    %98 = vector.broadcast %cst_135 : f32 to vector<1x128xf32>
    %c3_136 = arith.constant 3 : index
    %c0_137 = arith.constant 0 : index
    %99 = vector.load %arg17[%c3_136, %c0_137] : memref<4x128xf32, #tpu.memory_space<vmem>>, vector<1x128xf32>
    tpu.vector_store %arg17[%c3_136, %c0_137], %98 {strides = array<i32>} : memref<4x128xf32, #tpu.memory_space<vmem>>, vector<1x128xf32>,
    %cst_138 = arith.constant 0.000000e+00 : f32
    %100 = vector.broadcast %cst_138 : f32 to vector<2x32xf32>
    %c1_139 = arith.constant 1 : index
    %c0_140 = arith.constant 0 : index
    %101 = vector.load %arg17[%c1_139, %c0_140] : memref<4x128xf32, #tpu.memory_space<vmem>>, vector<2x32xf32>
    tpu.vector_store %arg17[%c1_139, %c0_140], %100 {strides = array<i32>} : memref<4x128xf32, #tpu.memory_space<vmem>>, vector<2x32xf32>,
    %cst_141 = arith.constant 0.000000e+00 : f32
    %102 = vector.broadcast %cst_141 : f32 to vector<2x32xf32>
    %c1_142 = arith.constant 1 : index
    %c96_143 = arith.constant 96 : index
    %103 = vector.load %arg17[%c1_142, %c96_143] : memref<4x128xf32, #tpu.memory_space<vmem>>, vector<2x32xf32>
    tpu.vector_store %arg17[%c1_142, %c96_143], %102 {strides = array<i32>} : memref<4x128xf32, #tpu.memory_space<vmem>>, vector<2x32xf32>,
    %cst_144 = arith.constant 0.000000e+00 : f32
    %104 = vector.broadcast %cst_144 : f32 to vector<1x128xf32>
    %c0_145 = arith.constant 0 : index
    %c0_146 = arith.constant 0 : index
    %105 = vector.load %arg18[%c0_145, %c0_146] : memref<4x128xf32, #tpu.memory_space<vmem>>, vector<1x128xf32>
    tpu.vector_store %arg18[%c0_145, %c0_146], %104 {strides = array<i32>} : memref<4x128xf32, #tpu.memory_space<vmem>>, vector<1x128xf32>,
    %cst_147 = arith.constant 0.000000e+00 : f32
    %106 = vector.broadcast %cst_147 : f32 to vector<1x128xf32>
    %c3_148 = arith.constant 3 : index
    %c0_149 = arith.constant 0 : index
    %107 = vector.load %arg18[%c3_148, %c0_149] : memref<4x128xf32, #tpu.memory_space<vmem>>, vector<1x128xf32>
    tpu.vector_store %arg18[%c3_148, %c0_149], %106 {strides = array<i32>} : memref<4x128xf32, #tpu.memory_space<vmem>>, vector<1x128xf32>,
    %cst_150 = arith.constant 0.000000e+00 : f32
    %108 = vector.broadcast %cst_150 : f32 to vector<2x32xf32>
    %c1_151 = arith.constant 1 : index
    %c0_152 = arith.constant 0 : index
    %109 = vector.load %arg18[%c1_151, %c0_152] : memref<4x128xf32, #tpu.memory_space<vmem>>, vector<2x32xf32>
    tpu.vector_store %arg18[%c1_151, %c0_152], %108 {strides = array<i32>} : memref<4x128xf32, #tpu.memory_space<vmem>>, vector<2x32xf32>,
    %cst_153 = arith.constant 0.000000e+00 : f32
    %110 = vector.broadcast %cst_153 : f32 to vector<2x32xf32>
    %c1_154 = arith.constant 1 : index
    %c96_155 = arith.constant 96 : index
    %111 = vector.load %arg18[%c1_154, %c96_155] : memref<4x128xf32, #tpu.memory_space<vmem>>, vector<2x32xf32>
    tpu.vector_store %arg18[%c1_154, %c96_155], %110 {strides = array<i32>} : memref<4x128xf32, #tpu.memory_space<vmem>>, vector<2x32xf32>,
    %cst_156 = arith.constant 0.000000e+00 : f32
    %112 = vector.broadcast %cst_156 : f32 to vector<1x128xf32>
    %c0_157 = arith.constant 0 : index
    %c0_158 = arith.constant 0 : index
    %113 = vector.load %arg19[%c0_157, %c0_158] : memref<4x128xf32, #tpu.memory_space<vmem>>, vector<1x128xf32>
    tpu.vector_store %arg19[%c0_157, %c0_158], %112 {strides = array<i32>} : memref<4x128xf32, #tpu.memory_space<vmem>>, vector<1x128xf32>,
    %cst_159 = arith.constant 0.000000e+00 : f32
    %114 = vector.broadcast %cst_159 : f32 to vector<1x128xf32>
    %c3_160 = arith.constant 3 : index
    %c0_161 = arith.constant 0 : index
    %115 = vector.load %arg19[%c3_160, %c0_161] : memref<4x128xf32, #tpu.memory_space<vmem>>, vector<1x128xf32>
    tpu.vector_store %arg19[%c3_160, %c0_161], %114 {strides = array<i32>} : memref<4x128xf32, #tpu.memory_space<vmem>>, vector<1x128xf32>,
    %cst_162 = arith.constant 0.000000e+00 : f32
    %116 = vector.broadcast %cst_162 : f32 to vector<2x32xf32>
    %c1_163 = arith.constant 1 : index
    %c0_164 = arith.constant 0 : index
    %117 = vector.load %arg19[%c1_163, %c0_164] : memref<4x128xf32, #tpu.memory_space<vmem>>, vector<2x32xf32>
    tpu.vector_store %arg19[%c1_163, %c0_164], %116 {strides = array<i32>} : memref<4x128xf32, #tpu.memory_space<vmem>>, vector<2x32xf32>,
    %cst_165 = arith.constant 0.000000e+00 : f32
    %118 = vector.broadcast %cst_165 : f32 to vector<2x32xf32>
    %c1_166 = arith.constant 1 : index
    %c96_167 = arith.constant 96 : index
    %119 = vector.load %arg19[%c1_166, %c96_167] : memref<4x128xf32, #tpu.memory_space<vmem>>, vector<2x32xf32>
    tpu.vector_store %arg19[%c1_166, %c96_167], %118 {strides = array<i32>} : memref<4x128xf32, #tpu.memory_space<vmem>>, vector<2x32xf32>,
    %cst_168 = arith.constant 0.000000e+00 : f32
    %120 = vector.broadcast %cst_168 : f32 to vector<1x128xf32>
    %c0_169 = arith.constant 0 : index
    %c0_170 = arith.constant 0 : index
    %121 = vector.load %arg20[%c0_169, %c0_170] : memref<4x128xf32, #tpu.memory_space<vmem>>, vector<1x128xf32>
    tpu.vector_store %arg20[%c0_169, %c0_170], %120 {strides = array<i32>} : memref<4x128xf32, #tpu.memory_space<vmem>>, vector<1x128xf32>,
    %cst_171 = arith.constant 0.000000e+00 : f32
    %122 = vector.broadcast %cst_171 : f32 to vector<1x128xf32>
    %c3_172 = arith.constant 3 : index
    %c0_173 = arith.constant 0 : index
    %123 = vector.load %arg20[%c3_172, %c0_173] : memref<4x128xf32, #tpu.memory_space<vmem>>, vector<1x128xf32>
    tpu.vector_store %arg20[%c3_172, %c0_173], %122 {strides = array<i32>} : memref<4x128xf32, #tpu.memory_space<vmem>>, vector<1x128xf32>,
    %cst_174 = arith.constant 0.000000e+00 : f32
    %124 = vector.broadcast %cst_174 : f32 to vector<2x32xf32>
    %c1_175 = arith.constant 1 : index
    %c0_176 = arith.constant 0 : index
    %125 = vector.load %arg20[%c1_175, %c0_176] : memref<4x128xf32, #tpu.memory_space<vmem>>, vector<2x32xf32>
    tpu.vector_store %arg20[%c1_175, %c0_176], %124 {strides = array<i32>} : memref<4x128xf32, #tpu.memory_space<vmem>>, vector<2x32xf32>,
    %cst_177 = arith.constant 0.000000e+00 : f32
    %126 = vector.broadcast %cst_177 : f32 to vector<2x32xf32>
    %c1_178 = arith.constant 1 : index
    %c96_179 = arith.constant 96 : index
    %127 = vector.load %arg20[%c1_178, %c96_179] : memref<4x128xf32, #tpu.memory_space<vmem>>, vector<2x32xf32>
    tpu.vector_store %arg20[%c1_178, %c96_179], %126 {strides = array<i32>} : memref<4x128xf32, #tpu.memory_space<vmem>>, vector<2x32xf32>,
    %cst_180 = arith.constant 0.000000e+00 : f32
    %128 = vector.broadcast %cst_180 : f32 to vector<1x128xf32>
    %c0_181 = arith.constant 0 : index
    %c0_182 = arith.constant 0 : index
    %129 = vector.load %arg21[%c0_181, %c0_182] : memref<4x128xf32, #tpu.memory_space<vmem>>, vector<1x128xf32>
    tpu.vector_store %arg21[%c0_181, %c0_182], %128 {strides = array<i32>} : memref<4x128xf32, #tpu.memory_space<vmem>>, vector<1x128xf32>,
    %cst_183 = arith.constant 0.000000e+00 : f32
    %130 = vector.broadcast %cst_183 : f32 to vector<1x128xf32>
    %c3_184 = arith.constant 3 : index
    %c0_185 = arith.constant 0 : index
    %131 = vector.load %arg21[%c3_184, %c0_185] : memref<4x128xf32, #tpu.memory_space<vmem>>, vector<1x128xf32>
    tpu.vector_store %arg21[%c3_184, %c0_185], %130 {strides = array<i32>} : memref<4x128xf32, #tpu.memory_space<vmem>>, vector<1x128xf32>,
    %cst_186 = arith.constant 0.000000e+00 : f32
    %132 = vector.broadcast %cst_186 : f32 to vector<2x32xf32>
    %c1_187 = arith.constant 1 : index
    %c0_188 = arith.constant 0 : index
    %133 = vector.load %arg21[%c1_187, %c0_188] : memref<4x128xf32, #tpu.memory_space<vmem>>, vector<2x32xf32>
    tpu.vector_store %arg21[%c1_187, %c0_188], %132 {strides = array<i32>} : memref<4x128xf32, #tpu.memory_space<vmem>>, vector<2x32xf32>,
    %cst_189 = arith.constant 0.000000e+00 : f32
    %134 = vector.broadcast %cst_189 : f32 to vector<2x32xf32>
    %c1_190 = arith.constant 1 : index
    %c96_191 = arith.constant 96 : index
    %135 = vector.load %arg21[%c1_190, %c96_191] : memref<4x128xf32, #tpu.memory_space<vmem>>, vector<2x32xf32>
    tpu.vector_store %arg21[%c1_190, %c96_191], %134 {strides = array<i32>} : memref<4x128xf32, #tpu.memory_space<vmem>>, vector<2x32xf32>,
    %cst_192 = arith.constant 0.000000e+00 : f32
    %136 = vector.broadcast %cst_192 : f32 to vector<4x480xf32>
    %c0_193 = arith.constant 0 : index
    %c0_194 = arith.constant 0 : index
    %137 = vector.load %arg22[%c0_193, %c0_194] : memref<10x480xf32, #tpu.memory_space<vmem>>, vector<4x480xf32>
    tpu.vector_store %arg22[%c0_193, %c0_194], %136 {strides = array<i32>} : memref<10x480xf32, #tpu.memory_space<vmem>>, vector<4x480xf32>,
    %cst_195 = arith.constant 0.000000e+00 : f32
    %138 = vector.broadcast %cst_195 : f32 to vector<4x480xf32>
    %c6_196 = arith.constant 6 : index
    %c0_197 = arith.constant 0 : index
    %139 = vector.load %arg22[%c6_196, %c0_197] : memref<10x480xf32, #tpu.memory_space<vmem>>, vector<4x480xf32>
    tpu.vector_store %arg22[%c6_196, %c0_197], %138 {strides = array<i32>} : memref<10x480xf32, #tpu.memory_space<vmem>>, vector<4x480xf32>,
    %cst_198 = arith.constant 0.000000e+00 : f32
    %140 = vector.broadcast %cst_198 : f32 to vector<2x192xf32>
    %c4_199 = arith.constant 4 : index
    %c0_200 = arith.constant 0 : index
    %141 = vector.load %arg22[%c4_199, %c0_200] : memref<10x480xf32, #tpu.memory_space<vmem>>, vector<2x192xf32>
    tpu.vector_store %arg22[%c4_199, %c0_200], %140 {strides = array<i32>} : memref<10x480xf32, #tpu.memory_space<vmem>>, vector<2x192xf32>,
    %cst_201 = arith.constant 0.000000e+00 : f32
    %142 = vector.broadcast %cst_201 : f32 to vector<2x192xf32>
    %c4_202 = arith.constant 4 : index
    %c288 = arith.constant 288 : index
    %143 = vector.load %arg22[%c4_202, %c288] : memref<10x480xf32, #tpu.memory_space<vmem>>, vector<2x192xf32>
    tpu.vector_store %arg22[%c4_202, %c288], %142 {strides = array<i32>} : memref<10x480xf32, #tpu.memory_space<vmem>>, vector<2x192xf32>,
    %cst_203 = arith.constant 0.000000e+00 : f32
    %144 = vector.broadcast %cst_203 : f32 to vector<1x28xf32>
    %c0_204 = arith.constant 0 : index
    %c0_205 = arith.constant 0 : index
    %145 = vector.load %arg23[%c0_204, %c0_205] : memref<7x28xf32, #tpu.memory_space<vmem>>, vector<1x28xf32>
    tpu.vector_store %arg23[%c0_204, %c0_205], %144 {strides = array<i32>} : memref<7x28xf32, #tpu.memory_space<vmem>>, vector<1x28xf32>,
    %cst_206 = arith.constant 0.000000e+00 : f32
    %146 = vector.broadcast %cst_206 : f32 to vector<1x28xf32>
    %c6_207 = arith.constant 6 : index
    %c0_208 = arith.constant 0 : index
    %147 = vector.load %arg23[%c6_207, %c0_208] : memref<7x28xf32, #tpu.memory_space<vmem>>, vector<1x28xf32>
    tpu.vector_store %arg23[%c6_207, %c0_208], %146 {strides = array<i32>} : memref<7x28xf32, #tpu.memory_space<vmem>>, vector<1x28xf32>,
    %cst_209 = arith.constant 0.000000e+00 : f32
    %148 = vector.broadcast %cst_209 : f32 to vector<5x4xf32>
    %c1_210 = arith.constant 1 : index
    %c0_211 = arith.constant 0 : index
    %149 = vector.load %arg23[%c1_210, %c0_211] : memref<7x28xf32, #tpu.memory_space<vmem>>, vector<5x4xf32>
    tpu.vector_store %arg23[%c1_210, %c0_211], %148 {strides = array<i32>} : memref<7x28xf32, #tpu.memory_space<vmem>>, vector<5x4xf32>,
    %cst_212 = arith.constant 0.000000e+00 : f32
    %150 = vector.broadcast %cst_212 : f32 to vector<5x4xf32>
    %c1_213 = arith.constant 1 : index
    %c24 = arith.constant 24 : index
    %151 = vector.load %arg23[%c1_213, %c24] : memref<7x28xf32, #tpu.memory_space<vmem>>, vector<5x4xf32>
    tpu.vector_store %arg23[%c1_213, %c24], %150 {strides = array<i32>} : memref<7x28xf32, #tpu.memory_space<vmem>>, vector<5x4xf32>,
    %cst_214 = arith.constant 0.000000e+00 : f32
    %152 = vector.broadcast %cst_214 : f32 to vector<1x28xf32>
    %c0_215 = arith.constant 0 : index
    %c0_216 = arith.constant 0 : index
    %153 = vector.load %arg24[%c0_215, %c0_216] : memref<7x28xf32, #tpu.memory_space<vmem>>, vector<1x28xf32>
    tpu.vector_store %arg24[%c0_215, %c0_216], %152 {strides = array<i32>} : memref<7x28xf32, #tpu.memory_space<vmem>>, vector<1x28xf32>,
    %cst_217 = arith.constant 0.000000e+00 : f32
    %154 = vector.broadcast %cst_217 : f32 to vector<1x28xf32>
    %c6_218 = arith.constant 6 : index
    %c0_219 = arith.constant 0 : index
    %155 = vector.load %arg24[%c6_218, %c0_219] : memref<7x28xf32, #tpu.memory_space<vmem>>, vector<1x28xf32>
    tpu.vector_store %arg24[%c6_218, %c0_219], %154 {strides = array<i32>} : memref<7x28xf32, #tpu.memory_space<vmem>>, vector<1x28xf32>,
    %cst_220 = arith.constant 0.000000e+00 : f32
    %156 = vector.broadcast %cst_220 : f32 to vector<5x4xf32>
    %c1_221 = arith.constant 1 : index
    %c0_222 = arith.constant 0 : index
    %157 = vector.load %arg24[%c1_221, %c0_222] : memref<7x28xf32, #tpu.memory_space<vmem>>, vector<5x4xf32>
    tpu.vector_store %arg24[%c1_221, %c0_222], %156 {strides = array<i32>} : memref<7x28xf32, #tpu.memory_space<vmem>>, vector<5x4xf32>,
    %cst_223 = arith.constant 0.000000e+00 : f32
    %158 = vector.broadcast %cst_223 : f32 to vector<5x4xf32>
    %c1_224 = arith.constant 1 : index
    %c24_225 = arith.constant 24 : index
    %159 = vector.load %arg24[%c1_224, %c24_225] : memref<7x28xf32, #tpu.memory_space<vmem>>, vector<5x4xf32>
    tpu.vector_store %arg24[%c1_224, %c24_225], %158 {strides = array<i32>} : memref<7x28xf32, #tpu.memory_space<vmem>>, vector<5x4xf32>,
    %c0_226 = arith.constant 0 : index
    %c0_227 = arith.constant 0 : index
    %c0_228 = arith.constant 0 : index
    %160 = vector.load %arg1[%c0_226, %c0_227, %c0_228] : memref<1x16x48xf32, #tpu.memory_space<vmem>>, vector<1x16x48xf32>
    %161 = vector.shape_cast %160 : vector<1x16x48xf32> to vector<16x48xf32>
    %c1_229 = arith.constant 1 : index
    %c3_230 = arith.constant 3 : index
    %162 = vector.load %arg5[%c1_229, %c3_230] : memref<18x54xf32, #tpu.memory_space<vmem>>, vector<16x48xf32>
    tpu.vector_store %arg5[%c1_229, %c3_230], %161 {strides = array<i32>} : memref<18x54xf32, #tpu.memory_space<vmem>>, vector<16x48xf32>,
    %c0_231 = arith.constant 0 : index
    %c0_232 = arith.constant 0 : index
    %163 = vector.load %arg5[%c0_231, %c0_232] : memref<18x54xf32, #tpu.memory_space<vmem>>, vector<17x54xf32>
    %164 = arith.truncf %163 : vector<17x54xf32> to vector<17x54xbf16>
    %c0_233 = arith.constant 0 : index
    %c0_234 = arith.constant 0 : index
    %165 = vector.load %arg2[%c0_233, %c0_234] : memref<7872x128xbf16, #tpu.memory_space<vmem>>, vector<54x72xbf16>
    %cst_235 = arith.constant dense<0.000000e+00> : vector<17x72xf32>
    %166 = tpu.matmul %164, %165, %cst_235 {dimension_numbers = #tpu.dot_dimension_numbers<[1], [0], [0], [1], [0, 0, 1, 1], [], []>} : vector<17x54xbf16>, vector<54x72xbf16>, vector<17x72xf32> -> vector<17x72xf32>
    %c1_236 = arith.constant 1 : index
    %c0_237 = arith.constant 0 : index
    %167 = vector.load %arg5[%c1_236, %c0_237] : memref<18x54xf32, #tpu.memory_space<vmem>>, vector<17x54xf32>
    %168 = arith.truncf %167 : vector<17x54xf32> to vector<17x54xbf16>
    %c64 = arith.constant 64 : index
    %c0_238 = arith.constant 0 : index
    %169 = vector.load %arg2[%c64, %c0_238] : memref<7872x128xbf16, #tpu.memory_space<vmem>>, vector<54x72xbf16>
    %cst_239 = arith.constant dense<0.000000e+00> : vector<17x72xf32>
    %170 = tpu.matmul %168, %169, %cst_239 {dimension_numbers = #tpu.dot_dimension_numbers<[1], [0], [0], [1], [0, 0, 1, 1], [], []>} : vector<17x54xbf16>, vector<54x72xbf16>, vector<17x72xf32> -> vector<17x72xf32>
    %171 = arith.addf %166, %170 : vector<17x72xf32>
    %c16 = arith.constant 16 : index
    %c0_240 = arith.constant 0 : index
    %172 = vector.load %arg3[%c16, %c0_240] : memref<464x128xf32, #tpu.memory_space<vmem>>, vector<9x17xf32>
    %cst_241 = arith.constant dense<0.000000e+00> : vector<9x72xf32>
    %173 = tpu.matmul %172, %171, %cst_241 {dimension_numbers = #tpu.dot_dimension_numbers<[1], [0], [0], [1], [0, 0, 1, 1], [], []>} : vector<9x17xf32>, vector<17x72xf32>, vector<9x72xf32> -> vector<9x72xf32>
    %c0_242 = arith.constant 0 : index
    %c0_243 = arith.constant 0 : index
    %174 = vector.load %arg3[%c0_242, %c0_243] : memref<464x128xf32, #tpu.memory_space<vmem>>, vector<1x72xf32>
    %175 = vector.broadcast %174 : vector<1x72xf32> to vector<9x72xf32>
    %176 = arith.addf %173, %175 : vector<9x72xf32>
    %c8 = arith.constant 8 : index
    %c0_244 = arith.constant 0 : index
    %177 = vector.load %arg3[%c8, %c0_244] : memref<464x128xf32, #tpu.memory_space<vmem>>, vector<1x72xf32>
    %cst_245 = arith.constant 0.000000e+00 : f32
    %178 = vector.broadcast %cst_245 : f32 to vector<9x72xf32>
    %179 = arith.cmpf ogt, %176, %178 : vector<9x72xf32>
    %180 = vector.broadcast %177 : vector<1x72xf32> to vector<9x72xf32>
    %181 = arith.mulf %180, %176 : vector<9x72xf32>
    %182 = arith.select %179, %176, %181 : vector<9x72xi1>, vector<9x72xf32>
    %c1_246 = arith.constant 1 : index
    %c8_247 = arith.constant 8 : index
    %183 = vector.load %arg6[%c1_246, %c8_247] : memref<11x88xf32, #tpu.memory_space<vmem>>, vector<9x72xf32>
    tpu.vector_store %arg6[%c1_246, %c8_247], %182 {strides = array<i32>} : memref<11x88xf32, #tpu.memory_space<vmem>>, vector<9x72xf32>,
    %c0_248 = arith.constant 0 : index
    %c0_249 = arith.constant 0 : index
    %184 = vector.load %arg6[%c0_248, %c0_249] : memref<11x88xf32, #tpu.memory_space<vmem>>, vector<9x88xf32>
    %185 = arith.truncf %184 : vector<9x88xf32> to vector<9x88xbf16>
    %c128 = arith.constant 128 : index
    %c0_250 = arith.constant 0 : index
    %186 = vector.load %arg2[%c128, %c0_250] : memref<7872x128xbf16, #tpu.memory_space<vmem>>, vector<88x60xbf16>
    %cst_251 = arith.constant dense<0.000000e+00> : vector<9x60xf32>
    %187 = tpu.matmul %185, %186, %cst_251 {dimension_numbers = #tpu.dot_dimension_numbers<[1], [0], [0], [1], [0, 0, 1, 1], [], []>} : vector<9x88xbf16>, vector<88x60xbf16>, vector<9x60xf32> -> vector<9x60xf32>
    %c1_252 = arith.constant 1 : index
    %c0_253 = arith.constant 0 : index
    %188 = vector.load %arg6[%c1_252, %c0_253] : memref<11x88xf32, #tpu.memory_space<vmem>>, vector<9x88xf32>
    %189 = arith.truncf %188 : vector<9x88xf32> to vector<9x88xbf16>
    %c224 = arith.constant 224 : index
    %c0_254 = arith.constant 0 : index
    %190 = vector.load %arg2[%c224, %c0_254] : memref<7872x128xbf16, #tpu.memory_space<vmem>>, vector<88x60xbf16>
    %cst_255 = arith.constant dense<0.000000e+00> : vector<9x60xf32>
    %191 = tpu.matmul %189, %190, %cst_255 {dimension_numbers = #tpu.dot_dimension_numbers<[1], [0], [0], [1], [0, 0, 1, 1], [], []>} : vector<9x88xbf16>, vector<88x60xbf16>, vector<9x60xf32> -> vector<9x60xf32>
    %192 = arith.addf %187, %191 : vector<9x60xf32>
    %c2 = arith.constant 2 : index
    %c0_256 = arith.constant 0 : index
    %193 = vector.load %arg6[%c2, %c0_256] : memref<11x88xf32, #tpu.memory_space<vmem>>, vector<9x88xf32>
    %194 = arith.truncf %193 : vector<9x88xf32> to vector<9x88xbf16>
    %c320 = arith.constant 320 : index
    %c0_257 = arith.constant 0 : index
    %195 = vector.load %arg2[%c320, %c0_257] : memref<7872x128xbf16, #tpu.memory_space<vmem>>, vector<88x60xbf16>
    %cst_258 = arith.constant dense<0.000000e+00> : vector<9x60xf32>
    %196 = tpu.matmul %194, %195, %cst_258 {dimension_numbers = #tpu.dot_dimension_numbers<[1], [0], [0], [1], [0, 0, 1, 1], [], []>} : vector<9x88xbf16>, vector<88x60xbf16>, vector<9x60xf32> -> vector<9x60xf32>
    %197 = arith.addf %192, %196 : vector<9x60xf32>
    %c48 = arith.constant 48 : index
    %c0_259 = arith.constant 0 : index
    %198 = vector.load %arg3[%c48, %c0_259] : memref<464x128xf32, #tpu.memory_space<vmem>>, vector<5x9xf32>
    %cst_260 = arith.constant dense<0.000000e+00> : vector<5x60xf32>
    %199 = tpu.matmul %198, %197, %cst_260 {dimension_numbers = #tpu.dot_dimension_numbers<[1], [0], [0], [1], [0, 0, 1, 1], [], []>} : vector<5x9xf32>, vector<9x60xf32>, vector<5x60xf32> -> vector<5x60xf32>
    %c32 = arith.constant 32 : index
    %c0_261 = arith.constant 0 : index
    %200 = vector.load %arg3[%c32, %c0_261] : memref<464x128xf32, #tpu.memory_space<vmem>>, vector<1x60xf32>
    %201 = vector.broadcast %200 : vector<1x60xf32> to vector<5x60xf32>
    %202 = arith.addf %199, %201 : vector<5x60xf32>
    %c40 = arith.constant 40 : index
    %c0_262 = arith.constant 0 : index
    %203 = vector.load %arg3[%c40, %c0_262] : memref<464x128xf32, #tpu.memory_space<vmem>>, vector<1x60xf32>
    %cst_263 = arith.constant 0.000000e+00 : f32
    %204 = vector.broadcast %cst_263 : f32 to vector<5x60xf32>
    %205 = arith.cmpf ogt, %202, %204 : vector<5x60xf32>
    %206 = vector.broadcast %203 : vector<1x60xf32> to vector<5x60xf32>
    %207 = arith.mulf %206, %202 : vector<5x60xf32>
    %208 = arith.select %205, %202, %207 : vector<5x60xi1>, vector<5x60xf32>
    %c1_264 = arith.constant 1 : index
    %c12 = arith.constant 12 : index
    %209 = vector.load %arg7[%c1_264, %c12] : memref<7x84xf32, #tpu.memory_space<vmem>>, vector<5x60xf32>
    tpu.vector_store %arg7[%c1_264, %c12], %208 {strides = array<i32>} : memref<7x84xf32, #tpu.memory_space<vmem>>, vector<5x60xf32>,
    %c0_265 = arith.constant 0 : index
    %c0_266 = arith.constant 0 : index
    %210 = vector.load %arg7[%c0_265, %c0_266] : memref<7x84xf32, #tpu.memory_space<vmem>>, vector<5x84xf32>
    %211 = arith.truncf %210 : vector<5x84xf32> to vector<5x84xbf16>
    %c416 = arith.constant 416 : index
    %c0_267 = arith.constant 0 : index
    %212 = vector.load %arg2[%c416, %c0_267] : memref<7872x128xbf16, #tpu.memory_space<vmem>>, vector<84x60xbf16>
    %cst_268 = arith.constant dense<0.000000e+00> : vector<5x60xf32>
    %213 = tpu.matmul %211, %212, %cst_268 {dimension_numbers = #tpu.dot_dimension_numbers<[1], [0], [0], [1], [0, 0, 1, 1], [], []>} : vector<5x84xbf16>, vector<84x60xbf16>, vector<5x60xf32> -> vector<5x60xf32>
    %c1_269 = arith.constant 1 : index
    %c0_270 = arith.constant 0 : index
    %214 = vector.load %arg7[%c1_269, %c0_270] : memref<7x84xf32, #tpu.memory_space<vmem>>, vector<5x84xf32>
    %215 = arith.truncf %214 : vector<5x84xf32> to vector<5x84xbf16>
    %c512 = arith.constant 512 : index
    %c0_271 = arith.constant 0 : index
    %216 = vector.load %arg2[%c512, %c0_271] : memref<7872x128xbf16, #tpu.memory_space<vmem>>, vector<84x60xbf16>
    %cst_272 = arith.constant dense<0.000000e+00> : vector<5x60xf32>
    %217 = tpu.matmul %215, %216, %cst_272 {dimension_numbers = #tpu.dot_dimension_numbers<[1], [0], [0], [1], [0, 0, 1, 1], [], []>} : vector<5x84xbf16>, vector<84x60xbf16>, vector<5x60xf32> -> vector<5x60xf32>
    %218 = arith.addf %213, %217 : vector<5x60xf32>
    %c2_273 = arith.constant 2 : index
    %c0_274 = arith.constant 0 : index
    %219 = vector.load %arg7[%c2_273, %c0_274] : memref<7x84xf32, #tpu.memory_space<vmem>>, vector<5x84xf32>
    %220 = arith.truncf %219 : vector<5x84xf32> to vector<5x84xbf16>
    %c608 = arith.constant 608 : index
    %c0_275 = arith.constant 0 : index
    %221 = vector.load %arg2[%c608, %c0_275] : memref<7872x128xbf16, #tpu.memory_space<vmem>>, vector<84x60xbf16>
    %cst_276 = arith.constant dense<0.000000e+00> : vector<5x60xf32>
    %222 = tpu.matmul %220, %221, %cst_276 {dimension_numbers = #tpu.dot_dimension_numbers<[1], [0], [0], [1], [0, 0, 1, 1], [], []>} : vector<5x84xbf16>, vector<84x60xbf16>, vector<5x60xf32> -> vector<5x60xf32>
    %223 = arith.addf %218, %222 : vector<5x60xf32>
    %c56 = arith.constant 56 : index
    %c0_277 = arith.constant 0 : index
    %224 = vector.load %arg3[%c56, %c0_277] : memref<464x128xf32, #tpu.memory_space<vmem>>, vector<1x60xf32>
    %225 = vector.broadcast %224 : vector<1x60xf32> to vector<5x60xf32>
    %226 = arith.addf %223, %225 : vector<5x60xf32>
    %c64_278 = arith.constant 64 : index
    %c0_279 = arith.constant 0 : index
    %227 = vector.load %arg3[%c64_278, %c0_279] : memref<464x128xf32, #tpu.memory_space<vmem>>, vector<1x60xf32>
    %cst_280 = arith.constant 0.000000e+00 : f32
    %228 = vector.broadcast %cst_280 : f32 to vector<5x60xf32>
    %229 = arith.cmpf ogt, %226, %228 : vector<5x60xf32>
    %230 = vector.broadcast %227 : vector<1x60xf32> to vector<5x60xf32>
    %231 = arith.mulf %230, %226 : vector<5x60xf32>
    %232 = arith.select %229, %226, %231 : vector<5x60xi1>, vector<5x60xf32>
    %c1_281 = arith.constant 1 : index
    %c12_282 = arith.constant 12 : index
    %233 = vector.load %arg8[%c1_281, %c12_282] : memref<7x84xf32, #tpu.memory_space<vmem>>, vector<5x60xf32>
    tpu.vector_store %arg8[%c1_281, %c12_282], %232 {strides = array<i32>} : memref<7x84xf32, #tpu.memory_space<vmem>>, vector<5x60xf32>,
    %c0_283 = arith.constant 0 : index
    %c0_284 = arith.constant 0 : index
    %234 = vector.load %arg8[%c0_283, %c0_284] : memref<7x84xf32, #tpu.memory_space<vmem>>, vector<5x84xf32>
    %235 = arith.truncf %234 : vector<5x84xf32> to vector<5x84xbf16>
    %c704 = arith.constant 704 : index
    %c0_285 = arith.constant 0 : index
    %236 = vector.load %arg2[%c704, %c0_285] : memref<7872x128xbf16, #tpu.memory_space<vmem>>, vector<84x60xbf16>
    %cst_286 = arith.constant dense<0.000000e+00> : vector<5x60xf32>
    %237 = tpu.matmul %235, %236, %cst_286 {dimension_numbers = #tpu.dot_dimension_numbers<[1], [0], [0], [1], [0, 0, 1, 1], [], []>} : vector<5x84xbf16>, vector<84x60xbf16>, vector<5x60xf32> -> vector<5x60xf32>
    %c1_287 = arith.constant 1 : index
    %c0_288 = arith.constant 0 : index
    %238 = vector.load %arg8[%c1_287, %c0_288] : memref<7x84xf32, #tpu.memory_space<vmem>>, vector<5x84xf32>
    %239 = arith.truncf %238 : vector<5x84xf32> to vector<5x84xbf16>
    %c800 = arith.constant 800 : index
    %c0_289 = arith.constant 0 : index
    %240 = vector.load %arg2[%c800, %c0_289] : memref<7872x128xbf16, #tpu.memory_space<vmem>>, vector<84x60xbf16>
    %cst_290 = arith.constant dense<0.000000e+00> : vector<5x60xf32>
    %241 = tpu.matmul %239, %240, %cst_290 {dimension_numbers = #tpu.dot_dimension_numbers<[1], [0], [0], [1], [0, 0, 1, 1], [], []>} : vector<5x84xbf16>, vector<84x60xbf16>, vector<5x60xf32> -> vector<5x60xf32>
    %242 = arith.addf %237, %241 : vector<5x60xf32>
    %c2_291 = arith.constant 2 : index
    %c0_292 = arith.constant 0 : index
    %243 = vector.load %arg8[%c2_291, %c0_292] : memref<7x84xf32, #tpu.memory_space<vmem>>, vector<5x84xf32>
    %244 = arith.truncf %243 : vector<5x84xf32> to vector<5x84xbf16>
    %c896 = arith.constant 896 : index
    %c0_293 = arith.constant 0 : index
    %245 = vector.load %arg2[%c896, %c0_293] : memref<7872x128xbf16, #tpu.memory_space<vmem>>, vector<84x60xbf16>
    %cst_294 = arith.constant dense<0.000000e+00> : vector<5x60xf32>
    %246 = tpu.matmul %244, %245, %cst_294 {dimension_numbers = #tpu.dot_dimension_numbers<[1], [0], [0], [1], [0, 0, 1, 1], [], []>} : vector<5x84xbf16>, vector<84x60xbf16>, vector<5x60xf32> -> vector<5x60xf32>
    %247 = arith.addf %242, %246 : vector<5x60xf32>
    %c72_295 = arith.constant 72 : index
    %c0_296 = arith.constant 0 : index
    %248 = vector.load %arg3[%c72_295, %c0_296] : memref<464x128xf32, #tpu.memory_space<vmem>>, vector<1x60xf32>
    %249 = vector.broadcast %248 : vector<1x60xf32> to vector<5x60xf32>
    %250 = arith.addf %247, %249 : vector<5x60xf32>
    %c80_297 = arith.constant 80 : index
    %c0_298 = arith.constant 0 : index
    %251 = vector.load %arg3[%c80_297, %c0_298] : memref<464x128xf32, #tpu.memory_space<vmem>>, vector<1x60xf32>
    %cst_299 = arith.constant 0.000000e+00 : f32
    %252 = vector.broadcast %cst_299 : f32 to vector<5x60xf32>
    %253 = arith.cmpf ogt, %250, %252 : vector<5x60xf32>
    %254 = vector.broadcast %251 : vector<1x60xf32> to vector<5x60xf32>
    %255 = arith.mulf %254, %250 : vector<5x60xf32>
    %256 = arith.select %253, %250, %255 : vector<5x60xi1>, vector<5x60xf32>
    %c1_300 = arith.constant 1 : index
    %c12_301 = arith.constant 12 : index
    %257 = vector.load %arg9[%c1_300, %c12_301] : memref<7x84xf32, #tpu.memory_space<vmem>>, vector<5x60xf32>
    tpu.vector_store %arg9[%c1_300, %c12_301], %256 {strides = array<i32>} : memref<7x84xf32, #tpu.memory_space<vmem>>, vector<5x60xf32>,
    %c0_302 = arith.constant 0 : index
    %c0_303 = arith.constant 0 : index
    %258 = vector.load %arg9[%c0_302, %c0_303] : memref<7x84xf32, #tpu.memory_space<vmem>>, vector<5x84xf32>
    %259 = arith.truncf %258 : vector<5x84xf32> to vector<5x84xbf16>
    %c992 = arith.constant 992 : index
    %c0_304 = arith.constant 0 : index
    %260 = vector.load %arg2[%c992, %c0_304] : memref<7872x128xbf16, #tpu.memory_space<vmem>>, vector<84x60xbf16>
    %cst_305 = arith.constant dense<0.000000e+00> : vector<5x60xf32>
    %261 = tpu.matmul %259, %260, %cst_305 {dimension_numbers = #tpu.dot_dimension_numbers<[1], [0], [0], [1], [0, 0, 1, 1], [], []>} : vector<5x84xbf16>, vector<84x60xbf16>, vector<5x60xf32> -> vector<5x60xf32>
    %c1_306 = arith.constant 1 : index
    %c0_307 = arith.constant 0 : index
    %262 = vector.load %arg9[%c1_306, %c0_307] : memref<7x84xf32, #tpu.memory_space<vmem>>, vector<5x84xf32>
    %263 = arith.truncf %262 : vector<5x84xf32> to vector<5x84xbf16>
    %c1088 = arith.constant 1088 : index
    %c0_308 = arith.constant 0 : index
    %264 = vector.load %arg2[%c1088, %c0_308] : memref<7872x128xbf16, #tpu.memory_space<vmem>>, vector<84x60xbf16>
    %cst_309 = arith.constant dense<0.000000e+00> : vector<5x60xf32>
    %265 = tpu.matmul %263, %264, %cst_309 {dimension_numbers = #tpu.dot_dimension_numbers<[1], [0], [0], [1], [0, 0, 1, 1], [], []>} : vector<5x84xbf16>, vector<84x60xbf16>, vector<5x60xf32> -> vector<5x60xf32>
    %266 = arith.addf %261, %265 : vector<5x60xf32>
    %c2_310 = arith.constant 2 : index
    %c0_311 = arith.constant 0 : index
    %267 = vector.load %arg9[%c2_310, %c0_311] : memref<7x84xf32, #tpu.memory_space<vmem>>, vector<5x84xf32>
    %268 = arith.truncf %267 : vector<5x84xf32> to vector<5x84xbf16>
    %c1184 = arith.constant 1184 : index
    %c0_312 = arith.constant 0 : index
    %269 = vector.load %arg2[%c1184, %c0_312] : memref<7872x128xbf16, #tpu.memory_space<vmem>>, vector<84x60xbf16>
    %cst_313 = arith.constant dense<0.000000e+00> : vector<5x60xf32>
    %270 = tpu.matmul %268, %269, %cst_313 {dimension_numbers = #tpu.dot_dimension_numbers<[1], [0], [0], [1], [0, 0, 1, 1], [], []>} : vector<5x84xbf16>, vector<84x60xbf16>, vector<5x60xf32> -> vector<5x60xf32>
    %271 = arith.addf %266, %270 : vector<5x60xf32>
    %c88 = arith.constant 88 : index
    %c0_314 = arith.constant 0 : index
    %272 = vector.load %arg3[%c88, %c0_314] : memref<464x128xf32, #tpu.memory_space<vmem>>, vector<1x60xf32>
    %273 = vector.broadcast %272 : vector<1x60xf32> to vector<5x60xf32>
    %274 = arith.addf %271, %273 : vector<5x60xf32>
    %c96_315 = arith.constant 96 : index
    %c0_316 = arith.constant 0 : index
    %275 = vector.load %arg3[%c96_315, %c0_316] : memref<464x128xf32, #tpu.memory_space<vmem>>, vector<1x60xf32>
    %cst_317 = arith.constant 0.000000e+00 : f32
    %276 = vector.broadcast %cst_317 : f32 to vector<5x60xf32>
    %277 = arith.cmpf ogt, %274, %276 : vector<5x60xf32>
    %278 = vector.broadcast %275 : vector<1x60xf32> to vector<5x60xf32>
    %279 = arith.mulf %278, %274 : vector<5x60xf32>
    %280 = arith.select %277, %274, %279 : vector<5x60xi1>, vector<5x60xf32>
    %c1_318 = arith.constant 1 : index
    %c12_319 = arith.constant 12 : index
    %281 = vector.load %arg10[%c1_318, %c12_319] : memref<7x84xf32, #tpu.memory_space<vmem>>, vector<5x60xf32>
    tpu.vector_store %arg10[%c1_318, %c12_319], %280 {strides = array<i32>} : memref<7x84xf32, #tpu.memory_space<vmem>>, vector<5x60xf32>,
    %c0_320 = arith.constant 0 : index
    %c0_321 = arith.constant 0 : index
    %282 = vector.load %arg10[%c0_320, %c0_321] : memref<7x84xf32, #tpu.memory_space<vmem>>, vector<5x84xf32>
    %283 = arith.truncf %282 : vector<5x84xf32> to vector<5x84xbf16>
    %c1280 = arith.constant 1280 : index
    %c0_322 = arith.constant 0 : index
    %284 = vector.load %arg2[%c1280, %c0_322] : memref<7872x128xbf16, #tpu.memory_space<vmem>>, vector<84x60xbf16>
    %cst_323 = arith.constant dense<0.000000e+00> : vector<5x60xf32>
    %285 = tpu.matmul %283, %284, %cst_323 {dimension_numbers = #tpu.dot_dimension_numbers<[1], [0], [0], [1], [0, 0, 1, 1], [], []>} : vector<5x84xbf16>, vector<84x60xbf16>, vector<5x60xf32> -> vector<5x60xf32>
    %c1_324 = arith.constant 1 : index
    %c0_325 = arith.constant 0 : index
    %286 = vector.load %arg10[%c1_324, %c0_325] : memref<7x84xf32, #tpu.memory_space<vmem>>, vector<5x84xf32>
    %287 = arith.truncf %286 : vector<5x84xf32> to vector<5x84xbf16>
    %c1376 = arith.constant 1376 : index
    %c0_326 = arith.constant 0 : index
    %288 = vector.load %arg2[%c1376, %c0_326] : memref<7872x128xbf16, #tpu.memory_space<vmem>>, vector<84x60xbf16>
    %cst_327 = arith.constant dense<0.000000e+00> : vector<5x60xf32>
    %289 = tpu.matmul %287, %288, %cst_327 {dimension_numbers = #tpu.dot_dimension_numbers<[1], [0], [0], [1], [0, 0, 1, 1], [], []>} : vector<5x84xbf16>, vector<84x60xbf16>, vector<5x60xf32> -> vector<5x60xf32>
    %290 = arith.addf %285, %289 : vector<5x60xf32>
    %c2_328 = arith.constant 2 : index
    %c0_329 = arith.constant 0 : index
    %291 = vector.load %arg10[%c2_328, %c0_329] : memref<7x84xf32, #tpu.memory_space<vmem>>, vector<5x84xf32>
    %292 = arith.truncf %291 : vector<5x84xf32> to vector<5x84xbf16>
    %c1472 = arith.constant 1472 : index
    %c0_330 = arith.constant 0 : index
    %293 = vector.load %arg2[%c1472, %c0_330] : memref<7872x128xbf16, #tpu.memory_space<vmem>>, vector<84x60xbf16>
    %cst_331 = arith.constant dense<0.000000e+00> : vector<5x60xf32>
    %294 = tpu.matmul %292, %293, %cst_331 {dimension_numbers = #tpu.dot_dimension_numbers<[1], [0], [0], [1], [0, 0, 1, 1], [], []>} : vector<5x84xbf16>, vector<84x60xbf16>, vector<5x60xf32> -> vector<5x60xf32>
    %295 = arith.addf %290, %294 : vector<5x60xf32>
    %c104 = arith.constant 104 : index
    %c0_332 = arith.constant 0 : index
    %296 = vector.load %arg3[%c104, %c0_332] : memref<464x128xf32, #tpu.memory_space<vmem>>, vector<1x60xf32>
    %297 = vector.broadcast %296 : vector<1x60xf32> to vector<5x60xf32>
    %298 = arith.addf %295, %297 : vector<5x60xf32>
    %c112 = arith.constant 112 : index
    %c0_333 = arith.constant 0 : index
    %299 = vector.load %arg3[%c112, %c0_333] : memref<464x128xf32, #tpu.memory_space<vmem>>, vector<1x60xf32>
    %cst_334 = arith.constant 0.000000e+00 : f32
    %300 = vector.broadcast %cst_334 : f32 to vector<5x60xf32>
    %301 = arith.cmpf ogt, %298, %300 : vector<5x60xf32>
    %302 = vector.broadcast %299 : vector<1x60xf32> to vector<5x60xf32>
    %303 = arith.mulf %302, %298 : vector<5x60xf32>
    %304 = arith.select %301, %298, %303 : vector<5x60xi1>, vector<5x60xf32>
    %c1_335 = arith.constant 1 : index
    %c12_336 = arith.constant 12 : index
    %305 = vector.load %arg11[%c1_335, %c12_336] : memref<7x84xf32, #tpu.memory_space<vmem>>, vector<5x60xf32>
    tpu.vector_store %arg11[%c1_335, %c12_336], %304 {strides = array<i32>} : memref<7x84xf32, #tpu.memory_space<vmem>>, vector<5x60xf32>,
    %c0_337 = arith.constant 0 : index
    %c0_338 = arith.constant 0 : index
    %306 = vector.load %arg11[%c0_337, %c0_338] : memref<7x84xf32, #tpu.memory_space<vmem>>, vector<5x84xf32>
    %307 = arith.truncf %306 : vector<5x84xf32> to vector<5x84xbf16>
    %c1568 = arith.constant 1568 : index
    %c0_339 = arith.constant 0 : index
    %308 = vector.load %arg2[%c1568, %c0_339] : memref<7872x128xbf16, #tpu.memory_space<vmem>>, vector<84x72xbf16>
    %cst_340 = arith.constant dense<0.000000e+00> : vector<5x72xf32>
    %309 = tpu.matmul %307, %308, %cst_340 {dimension_numbers = #tpu.dot_dimension_numbers<[1], [0], [0], [1], [0, 0, 1, 1], [], []>} : vector<5x84xbf16>, vector<84x72xbf16>, vector<5x72xf32> -> vector<5x72xf32>
    %c1_341 = arith.constant 1 : index
    %c0_342 = arith.constant 0 : index
    %310 = vector.load %arg11[%c1_341, %c0_342] : memref<7x84xf32, #tpu.memory_space<vmem>>, vector<5x84xf32>
    %311 = arith.truncf %310 : vector<5x84xf32> to vector<5x84xbf16>
    %c1664 = arith.constant 1664 : index
    %c0_343 = arith.constant 0 : index
    %312 = vector.load %arg2[%c1664, %c0_343] : memref<7872x128xbf16, #tpu.memory_space<vmem>>, vector<84x72xbf16>
    %cst_344 = arith.constant dense<0.000000e+00> : vector<5x72xf32>
    %313 = tpu.matmul %311, %312, %cst_344 {dimension_numbers = #tpu.dot_dimension_numbers<[1], [0], [0], [1], [0, 0, 1, 1], [], []>} : vector<5x84xbf16>, vector<84x72xbf16>, vector<5x72xf32> -> vector<5x72xf32>
    %314 = arith.addf %309, %313 : vector<5x72xf32>
    %c2_345 = arith.constant 2 : index
    %c0_346 = arith.constant 0 : index
    %315 = vector.load %arg11[%c2_345, %c0_346] : memref<7x84xf32, #tpu.memory_space<vmem>>, vector<5x84xf32>
    %316 = arith.truncf %315 : vector<5x84xf32> to vector<5x84xbf16>
    %c1760 = arith.constant 1760 : index
    %c0_347 = arith.constant 0 : index
    %317 = vector.load %arg2[%c1760, %c0_347] : memref<7872x128xbf16, #tpu.memory_space<vmem>>, vector<84x72xbf16>
    %cst_348 = arith.constant dense<0.000000e+00> : vector<5x72xf32>
    %318 = tpu.matmul %316, %317, %cst_348 {dimension_numbers = #tpu.dot_dimension_numbers<[1], [0], [0], [1], [0, 0, 1, 1], [], []>} : vector<5x84xbf16>, vector<84x72xbf16>, vector<5x72xf32> -> vector<5x72xf32>
    %319 = arith.addf %314, %318 : vector<5x72xf32>
    %c136 = arith.constant 136 : index
    %c0_349 = arith.constant 0 : index
    %320 = vector.load %arg3[%c136, %c0_349] : memref<464x128xf32, #tpu.memory_space<vmem>>, vector<3x5xf32>
    %cst_350 = arith.constant dense<0.000000e+00> : vector<3x72xf32>
    %321 = tpu.matmul %320, %319, %cst_350 {dimension_numbers = #tpu.dot_dimension_numbers<[1], [0], [0], [1], [0, 0, 1, 1], [], []>} : vector<3x5xf32>, vector<5x72xf32>, vector<3x72xf32> -> vector<3x72xf32>
    %c120 = arith.constant 120 : index
    %c0_351 = arith.constant 0 : index
    %322 = vector.load %arg3[%c120, %c0_351] : memref<464x128xf32, #tpu.memory_space<vmem>>, vector<1x72xf32>
    %323 = vector.broadcast %322 : vector<1x72xf32> to vector<3x72xf32>
    %324 = arith.addf %321, %323 : vector<3x72xf32>
    %c128_352 = arith.constant 128 : index
    %c0_353 = arith.constant 0 : index
    %325 = vector.load %arg3[%c128_352, %c0_353] : memref<464x128xf32, #tpu.memory_space<vmem>>, vector<1x72xf32>
    %cst_354 = arith.constant 0.000000e+00 : f32
    %326 = vector.broadcast %cst_354 : f32 to vector<3x72xf32>
    %327 = arith.cmpf ogt, %324, %326 : vector<3x72xf32>
    %328 = vector.broadcast %325 : vector<1x72xf32> to vector<3x72xf32>
    %329 = arith.mulf %328, %324 : vector<3x72xf32>
    %330 = arith.select %327, %324, %329 : vector<3x72xi1>, vector<3x72xf32>
    %c1_355 = arith.constant 1 : index
    %c24_356 = arith.constant 24 : index
    %331 = vector.load %arg12[%c1_355, %c24_356] : memref<5x120xf32, #tpu.memory_space<vmem>>, vector<3x72xf32>
    tpu.vector_store %arg12[%c1_355, %c24_356], %330 {strides = array<i32>} : memref<5x120xf32, #tpu.memory_space<vmem>>, vector<3x72xf32>,
    %c0_357 = arith.constant 0 : index
    %c0_358 = arith.constant 0 : index
    %332 = vector.load %arg12[%c0_357, %c0_358] : memref<5x120xf32, #tpu.memory_space<vmem>>, vector<3x120xf32>
    %333 = arith.truncf %332 : vector<3x120xf32> to vector<3x120xbf16>
    %c1856 = arith.constant 1856 : index
    %c0_359 = arith.constant 0 : index
    %334 = vector.load %arg2[%c1856, %c0_359] : memref<7872x128xbf16, #tpu.memory_space<vmem>>, vector<120x72xbf16>
    %cst_360 = arith.constant dense<0.000000e+00> : vector<3x72xf32>
    %335 = tpu.matmul %333, %334, %cst_360 {dimension_numbers = #tpu.dot_dimension_numbers<[1], [0], [0], [1], [0, 0, 1, 1], [], []>} : vector<3x120xbf16>, vector<120x72xbf16>, vector<3x72xf32> -> vector<3x72xf32>
    %c1_361 = arith.constant 1 : index
    %c0_362 = arith.constant 0 : index
    %336 = vector.load %arg12[%c1_361, %c0_362] : memref<5x120xf32, #tpu.memory_space<vmem>>, vector<3x120xf32>
    %337 = arith.truncf %336 : vector<3x120xf32> to vector<3x120xbf16>
    %c1984 = arith.constant 1984 : index
    %c0_363 = arith.constant 0 : index
    %338 = vector.load %arg2[%c1984, %c0_363] : memref<7872x128xbf16, #tpu.memory_space<vmem>>, vector<120x72xbf16>
    %cst_364 = arith.constant dense<0.000000e+00> : vector<3x72xf32>
    %339 = tpu.matmul %337, %338, %cst_364 {dimension_numbers = #tpu.dot_dimension_numbers<[1], [0], [0], [1], [0, 0, 1, 1], [], []>} : vector<3x120xbf16>, vector<120x72xbf16>, vector<3x72xf32> -> vector<3x72xf32>
    %340 = arith.addf %335, %339 : vector<3x72xf32>
    %c2_365 = arith.constant 2 : index
    %c0_366 = arith.constant 0 : index
    %341 = vector.load %arg12[%c2_365, %c0_366] : memref<5x120xf32, #tpu.memory_space<vmem>>, vector<3x120xf32>
    %342 = arith.truncf %341 : vector<3x120xf32> to vector<3x120xbf16>
    %c2112 = arith.constant 2112 : index
    %c0_367 = arith.constant 0 : index
    %343 = vector.load %arg2[%c2112, %c0_367] : memref<7872x128xbf16, #tpu.memory_space<vmem>>, vector<120x72xbf16>
    %cst_368 = arith.constant dense<0.000000e+00> : vector<3x72xf32>
    %344 = tpu.matmul %342, %343, %cst_368 {dimension_numbers = #tpu.dot_dimension_numbers<[1], [0], [0], [1], [0, 0, 1, 1], [], []>} : vector<3x120xbf16>, vector<120x72xbf16>, vector<3x72xf32> -> vector<3x72xf32>
    %345 = arith.addf %340, %344 : vector<3x72xf32>
    %c144 = arith.constant 144 : index
    %c0_369 = arith.constant 0 : index
    %346 = vector.load %arg3[%c144, %c0_369] : memref<464x128xf32, #tpu.memory_space<vmem>>, vector<1x72xf32>
    %347 = vector.broadcast %346 : vector<1x72xf32> to vector<3x72xf32>
    %348 = arith.addf %345, %347 : vector<3x72xf32>
    %c152 = arith.constant 152 : index
    %c0_370 = arith.constant 0 : index
    %349 = vector.load %arg3[%c152, %c0_370] : memref<464x128xf32, #tpu.memory_space<vmem>>, vector<1x72xf32>
    %cst_371 = arith.constant 0.000000e+00 : f32
    %350 = vector.broadcast %cst_371 : f32 to vector<3x72xf32>
    %351 = arith.cmpf ogt, %348, %350 : vector<3x72xf32>
    %352 = vector.broadcast %349 : vector<1x72xf32> to vector<3x72xf32>
    %353 = arith.mulf %352, %348 : vector<3x72xf32>
    %354 = arith.select %351, %348, %353 : vector<3x72xi1>, vector<3x72xf32>
    %c1_372 = arith.constant 1 : index
    %c24_373 = arith.constant 24 : index
    %355 = vector.load %arg13[%c1_372, %c24_373] : memref<5x120xf32, #tpu.memory_space<vmem>>, vector<3x72xf32>
    tpu.vector_store %arg13[%c1_372, %c24_373], %354 {strides = array<i32>} : memref<5x120xf32, #tpu.memory_space<vmem>>, vector<3x72xf32>,
    %c0_374 = arith.constant 0 : index
    %c0_375 = arith.constant 0 : index
    %356 = vector.load %arg13[%c0_374, %c0_375] : memref<5x120xf32, #tpu.memory_space<vmem>>, vector<3x120xf32>
    %357 = arith.truncf %356 : vector<3x120xf32> to vector<3x120xbf16>
    %c2240 = arith.constant 2240 : index
    %c0_376 = arith.constant 0 : index
    %358 = vector.load %arg2[%c2240, %c0_376] : memref<7872x128xbf16, #tpu.memory_space<vmem>>, vector<120x72xbf16>
    %cst_377 = arith.constant dense<0.000000e+00> : vector<3x72xf32>
    %359 = tpu.matmul %357, %358, %cst_377 {dimension_numbers = #tpu.dot_dimension_numbers<[1], [0], [0], [1], [0, 0, 1, 1], [], []>} : vector<3x120xbf16>, vector<120x72xbf16>, vector<3x72xf32> -> vector<3x72xf32>
    %c1_378 = arith.constant 1 : index
    %c0_379 = arith.constant 0 : index
    %360 = vector.load %arg13[%c1_378, %c0_379] : memref<5x120xf32, #tpu.memory_space<vmem>>, vector<3x120xf32>
    %361 = arith.truncf %360 : vector<3x120xf32> to vector<3x120xbf16>
    %c2368 = arith.constant 2368 : index
    %c0_380 = arith.constant 0 : index
    %362 = vector.load %arg2[%c2368, %c0_380] : memref<7872x128xbf16, #tpu.memory_space<vmem>>, vector<120x72xbf16>
    %cst_381 = arith.constant dense<0.000000e+00> : vector<3x72xf32>
    %363 = tpu.matmul %361, %362, %cst_381 {dimension_numbers = #tpu.dot_dimension_numbers<[1], [0], [0], [1], [0, 0, 1, 1], [], []>} : vector<3x120xbf16>, vector<120x72xbf16>, vector<3x72xf32> -> vector<3x72xf32>
    %364 = arith.addf %359, %363 : vector<3x72xf32>
    %c2_382 = arith.constant 2 : index
    %c0_383 = arith.constant 0 : index
    %365 = vector.load %arg13[%c2_382, %c0_383] : memref<5x120xf32, #tpu.memory_space<vmem>>, vector<3x120xf32>
    %366 = arith.truncf %365 : vector<3x120xf32> to vector<3x120xbf16>
    %c2496 = arith.constant 2496 : index
    %c0_384 = arith.constant 0 : index
    %367 = vector.load %arg2[%c2496, %c0_384] : memref<7872x128xbf16, #tpu.memory_space<vmem>>, vector<120x72xbf16>
    %cst_385 = arith.constant dense<0.000000e+00> : vector<3x72xf32>
    %368 = tpu.matmul %366, %367, %cst_385 {dimension_numbers = #tpu.dot_dimension_numbers<[1], [0], [0], [1], [0, 0, 1, 1], [], []>} : vector<3x120xbf16>, vector<120x72xbf16>, vector<3x72xf32> -> vector<3x72xf32>
    %369 = arith.addf %364, %368 : vector<3x72xf32>
    %c160 = arith.constant 160 : index
    %c0_386 = arith.constant 0 : index
    %370 = vector.load %arg3[%c160, %c0_386] : memref<464x128xf32, #tpu.memory_space<vmem>>, vector<1x72xf32>
    %371 = vector.broadcast %370 : vector<1x72xf32> to vector<3x72xf32>
    %372 = arith.addf %369, %371 : vector<3x72xf32>
    %c168 = arith.constant 168 : index
    %c0_387 = arith.constant 0 : index
    %373 = vector.load %arg3[%c168, %c0_387] : memref<464x128xf32, #tpu.memory_space<vmem>>, vector<1x72xf32>
    %cst_388 = arith.constant 0.000000e+00 : f32
    %374 = vector.broadcast %cst_388 : f32 to vector<3x72xf32>
    %375 = arith.cmpf ogt, %372, %374 : vector<3x72xf32>
    %376 = vector.broadcast %373 : vector<1x72xf32> to vector<3x72xf32>
    %377 = arith.mulf %376, %372 : vector<3x72xf32>
    %378 = arith.select %375, %372, %377 : vector<3x72xi1>, vector<3x72xf32>
    %c1_389 = arith.constant 1 : index
    %c24_390 = arith.constant 24 : index
    %379 = vector.load %arg14[%c1_389, %c24_390] : memref<5x120xf32, #tpu.memory_space<vmem>>, vector<3x72xf32>
    tpu.vector_store %arg14[%c1_389, %c24_390], %378 {strides = array<i32>} : memref<5x120xf32, #tpu.memory_space<vmem>>, vector<3x72xf32>,
    %c0_391 = arith.constant 0 : index
    %c0_392 = arith.constant 0 : index
    %380 = vector.load %arg14[%c0_391, %c0_392] : memref<5x120xf32, #tpu.memory_space<vmem>>, vector<3x120xf32>
    %381 = arith.truncf %380 : vector<3x120xf32> to vector<3x120xbf16>
    %c2624 = arith.constant 2624 : index
    %c0_393 = arith.constant 0 : index
    %382 = vector.load %arg2[%c2624, %c0_393] : memref<7872x128xbf16, #tpu.memory_space<vmem>>, vector<120x72xbf16>
    %cst_394 = arith.constant dense<0.000000e+00> : vector<3x72xf32>
    %383 = tpu.matmul %381, %382, %cst_394 {dimension_numbers = #tpu.dot_dimension_numbers<[1], [0], [0], [1], [0, 0, 1, 1], [], []>} : vector<3x120xbf16>, vector<120x72xbf16>, vector<3x72xf32> -> vector<3x72xf32>
    %c1_395 = arith.constant 1 : index
    %c0_396 = arith.constant 0 : index
    %384 = vector.load %arg14[%c1_395, %c0_396] : memref<5x120xf32, #tpu.memory_space<vmem>>, vector<3x120xf32>
    %385 = arith.truncf %384 : vector<3x120xf32> to vector<3x120xbf16>
    %c2752 = arith.constant 2752 : index
    %c0_397 = arith.constant 0 : index
    %386 = vector.load %arg2[%c2752, %c0_397] : memref<7872x128xbf16, #tpu.memory_space<vmem>>, vector<120x72xbf16>
    %cst_398 = arith.constant dense<0.000000e+00> : vector<3x72xf32>
    %387 = tpu.matmul %385, %386, %cst_398 {dimension_numbers = #tpu.dot_dimension_numbers<[1], [0], [0], [1], [0, 0, 1, 1], [], []>} : vector<3x120xbf16>, vector<120x72xbf16>, vector<3x72xf32> -> vector<3x72xf32>
    %388 = arith.addf %383, %387 : vector<3x72xf32>
    %c2_399 = arith.constant 2 : index
    %c0_400 = arith.constant 0 : index
    %389 = vector.load %arg14[%c2_399, %c0_400] : memref<5x120xf32, #tpu.memory_space<vmem>>, vector<3x120xf32>
    %390 = arith.truncf %389 : vector<3x120xf32> to vector<3x120xbf16>
    %c2880 = arith.constant 2880 : index
    %c0_401 = arith.constant 0 : index
    %391 = vector.load %arg2[%c2880, %c0_401] : memref<7872x128xbf16, #tpu.memory_space<vmem>>, vector<120x72xbf16>
    %cst_402 = arith.constant dense<0.000000e+00> : vector<3x72xf32>
    %392 = tpu.matmul %390, %391, %cst_402 {dimension_numbers = #tpu.dot_dimension_numbers<[1], [0], [0], [1], [0, 0, 1, 1], [], []>} : vector<3x120xbf16>, vector<120x72xbf16>, vector<3x72xf32> -> vector<3x72xf32>
    %393 = arith.addf %388, %392 : vector<3x72xf32>
    %c176 = arith.constant 176 : index
    %c0_403 = arith.constant 0 : index
    %394 = vector.load %arg3[%c176, %c0_403] : memref<464x128xf32, #tpu.memory_space<vmem>>, vector<1x72xf32>
    %395 = vector.broadcast %394 : vector<1x72xf32> to vector<3x72xf32>
    %396 = arith.addf %393, %395 : vector<3x72xf32>
    %c184 = arith.constant 184 : index
    %c0_404 = arith.constant 0 : index
    %397 = vector.load %arg3[%c184, %c0_404] : memref<464x128xf32, #tpu.memory_space<vmem>>, vector<1x72xf32>
    %cst_405 = arith.constant 0.000000e+00 : f32
    %398 = vector.broadcast %cst_405 : f32 to vector<3x72xf32>
    %399 = arith.cmpf ogt, %396, %398 : vector<3x72xf32>
    %400 = vector.broadcast %397 : vector<1x72xf32> to vector<3x72xf32>
    %401 = arith.mulf %400, %396 : vector<3x72xf32>
    %402 = arith.select %399, %396, %401 : vector<3x72xi1>, vector<3x72xf32>
    %c1_406 = arith.constant 1 : index
    %c24_407 = arith.constant 24 : index
    %403 = vector.load %arg15[%c1_406, %c24_407] : memref<5x120xf32, #tpu.memory_space<vmem>>, vector<3x72xf32>
    tpu.vector_store %arg15[%c1_406, %c24_407], %402 {strides = array<i32>} : memref<5x120xf32, #tpu.memory_space<vmem>>, vector<3x72xf32>,
    %c0_408 = arith.constant 0 : index
    %c0_409 = arith.constant 0 : index
    %404 = vector.load %arg15[%c0_408, %c0_409] : memref<5x120xf32, #tpu.memory_space<vmem>>, vector<3x120xf32>
    %405 = arith.truncf %404 : vector<3x120xf32> to vector<3x120xbf16>
    %c3008 = arith.constant 3008 : index
    %c0_410 = arith.constant 0 : index
    %406 = vector.load %arg2[%c3008, %c0_410] : memref<7872x128xbf16, #tpu.memory_space<vmem>>, vector<120x64xbf16>
    %cst_411 = arith.constant dense<0.000000e+00> : vector<3x64xf32>
    %407 = tpu.matmul %405, %406, %cst_411 {dimension_numbers = #tpu.dot_dimension_numbers<[1], [0], [0], [1], [0, 0, 1, 1], [], []>} : vector<3x120xbf16>, vector<120x64xbf16>, vector<3x64xf32> -> vector<3x64xf32>
    %c1_412 = arith.constant 1 : index
    %c0_413 = arith.constant 0 : index
    %408 = vector.load %arg15[%c1_412, %c0_413] : memref<5x120xf32, #tpu.memory_space<vmem>>, vector<3x120xf32>
    %409 = arith.truncf %408 : vector<3x120xf32> to vector<3x120xbf16>
    %c3136 = arith.constant 3136 : index
    %c0_414 = arith.constant 0 : index
    %410 = vector.load %arg2[%c3136, %c0_414] : memref<7872x128xbf16, #tpu.memory_space<vmem>>, vector<120x64xbf16>
    %cst_415 = arith.constant dense<0.000000e+00> : vector<3x64xf32>
    %411 = tpu.matmul %409, %410, %cst_415 {dimension_numbers = #tpu.dot_dimension_numbers<[1], [0], [0], [1], [0, 0, 1, 1], [], []>} : vector<3x120xbf16>, vector<120x64xbf16>, vector<3x64xf32> -> vector<3x64xf32>
    %412 = arith.addf %407, %411 : vector<3x64xf32>
    %c2_416 = arith.constant 2 : index
    %c0_417 = arith.constant 0 : index
    %413 = vector.load %arg15[%c2_416, %c0_417] : memref<5x120xf32, #tpu.memory_space<vmem>>, vector<3x120xf32>
    %414 = arith.truncf %413 : vector<3x120xf32> to vector<3x120xbf16>
    %c3264 = arith.constant 3264 : index
    %c0_418 = arith.constant 0 : index
    %415 = vector.load %arg2[%c3264, %c0_418] : memref<7872x128xbf16, #tpu.memory_space<vmem>>, vector<120x64xbf16>
    %cst_419 = arith.constant dense<0.000000e+00> : vector<3x64xf32>
    %416 = tpu.matmul %414, %415, %cst_419 {dimension_numbers = #tpu.dot_dimension_numbers<[1], [0], [0], [1], [0, 0, 1, 1], [], []>} : vector<3x120xbf16>, vector<120x64xbf16>, vector<3x64xf32> -> vector<3x64xf32>
    %417 = arith.addf %412, %416 : vector<3x64xf32>
    %c208 = arith.constant 208 : index
    %c0_420 = arith.constant 0 : index
    %418 = vector.load %arg3[%c208, %c0_420] : memref<464x128xf32, #tpu.memory_space<vmem>>, vector<2x3xf32>
    %cst_421 = arith.constant dense<0.000000e+00> : vector<2x64xf32>
    %419 = tpu.matmul %418, %417, %cst_421 {dimension_numbers = #tpu.dot_dimension_numbers<[1], [0], [0], [1], [0, 0, 1, 1], [], []>} : vector<2x3xf32>, vector<3x64xf32>, vector<2x64xf32> -> vector<2x64xf32>
    %c192 = arith.constant 192 : index
    %c0_422 = arith.constant 0 : index
    %420 = vector.load %arg3[%c192, %c0_422] : memref<464x128xf32, #tpu.memory_space<vmem>>, vector<1x64xf32>
    %421 = vector.broadcast %420 : vector<1x64xf32> to vector<2x64xf32>
    %422 = arith.addf %419, %421 : vector<2x64xf32>
    %c200 = arith.constant 200 : index
    %c0_423 = arith.constant 0 : index
    %423 = vector.load %arg3[%c200, %c0_423] : memref<464x128xf32, #tpu.memory_space<vmem>>, vector<1x64xf32>
    %cst_424 = arith.constant 0.000000e+00 : f32
    %424 = vector.broadcast %cst_424 : f32 to vector<2x64xf32>
    %425 = arith.cmpf ogt, %422, %424 : vector<2x64xf32>
    %426 = vector.broadcast %423 : vector<1x64xf32> to vector<2x64xf32>
    %427 = arith.mulf %426, %422 : vector<2x64xf32>
    %428 = arith.select %425, %422, %427 : vector<2x64xi1>, vector<2x64xf32>
    %c1_425 = arith.constant 1 : index
    %c32_426 = arith.constant 32 : index
    %429 = vector.load %arg16[%c1_425, %c32_426] : memref<4x128xf32, #tpu.memory_space<vmem>>, vector<2x64xf32>
    tpu.vector_store %arg16[%c1_425, %c32_426], %428 {strides = array<i32>} : memref<4x128xf32, #tpu.memory_space<vmem>>, vector<2x64xf32>,
    %c0_427 = arith.constant 0 : index
    %c0_428 = arith.constant 0 : index
    %430 = vector.load %arg16[%c0_427, %c0_428] : memref<4x128xf32, #tpu.memory_space<vmem>>, vector<2x128xf32>
    %431 = arith.truncf %430 : vector<2x128xf32> to vector<2x128xbf16>
    %c3392 = arith.constant 3392 : index
    %c0_429 = arith.constant 0 : index
    %432 = vector.load %arg2[%c3392, %c0_429] : memref<7872x128xbf16, #tpu.memory_space<vmem>>, vector<128x64xbf16>
    %cst_430 = arith.constant dense<0.000000e+00> : vector<2x64xf32>
    %433 = tpu.matmul %431, %432, %cst_430 {dimension_numbers = #tpu.dot_dimension_numbers<[1], [0], [0], [1], [0, 0, 1, 1], [], []>} : vector<2x128xbf16>, vector<128x64xbf16>, vector<2x64xf32> -> vector<2x64xf32>
    %c1_431 = arith.constant 1 : index
    %c0_432 = arith.constant 0 : index
    %434 = vector.load %arg16[%c1_431, %c0_432] : memref<4x128xf32, #tpu.memory_space<vmem>>, vector<2x128xf32>
    %435 = arith.truncf %434 : vector<2x128xf32> to vector<2x128xbf16>
    %c3520 = arith.constant 3520 : index
    %c0_433 = arith.constant 0 : index
    %436 = vector.load %arg2[%c3520, %c0_433] : memref<7872x128xbf16, #tpu.memory_space<vmem>>, vector<128x64xbf16>
    %cst_434 = arith.constant dense<0.000000e+00> : vector<2x64xf32>
    %437 = tpu.matmul %435, %436, %cst_434 {dimension_numbers = #tpu.dot_dimension_numbers<[1], [0], [0], [1], [0, 0, 1, 1], [], []>} : vector<2x128xbf16>, vector<128x64xbf16>, vector<2x64xf32> -> vector<2x64xf32>
    %438 = arith.addf %433, %437 : vector<2x64xf32>
    %c2_435 = arith.constant 2 : index
    %c0_436 = arith.constant 0 : index
    %439 = vector.load %arg16[%c2_435, %c0_436] : memref<4x128xf32, #tpu.memory_space<vmem>>, vector<2x128xf32>
    %440 = arith.truncf %439 : vector<2x128xf32> to vector<2x128xbf16>
    %c3648 = arith.constant 3648 : index
    %c0_437 = arith.constant 0 : index
    %441 = vector.load %arg2[%c3648, %c0_437] : memref<7872x128xbf16, #tpu.memory_space<vmem>>, vector<128x64xbf16>
    %cst_438 = arith.constant dense<0.000000e+00> : vector<2x64xf32>
    %442 = tpu.matmul %440, %441, %cst_438 {dimension_numbers = #tpu.dot_dimension_numbers<[1], [0], [0], [1], [0, 0, 1, 1], [], []>} : vector<2x128xbf16>, vector<128x64xbf16>, vector<2x64xf32> -> vector<2x64xf32>
    %443 = arith.addf %438, %442 : vector<2x64xf32>
    %c216 = arith.constant 216 : index
    %c0_439 = arith.constant 0 : index
    %444 = vector.load %arg3[%c216, %c0_439] : memref<464x128xf32, #tpu.memory_space<vmem>>, vector<1x64xf32>
    %445 = vector.broadcast %444 : vector<1x64xf32> to vector<2x64xf32>
    %446 = arith.addf %443, %445 : vector<2x64xf32>
    %c224_440 = arith.constant 224 : index
    %c0_441 = arith.constant 0 : index
    %447 = vector.load %arg3[%c224_440, %c0_441] : memref<464x128xf32, #tpu.memory_space<vmem>>, vector<1x64xf32>
    %cst_442 = arith.constant 0.000000e+00 : f32
    %448 = vector.broadcast %cst_442 : f32 to vector<2x64xf32>
    %449 = arith.cmpf ogt, %446, %448 : vector<2x64xf32>
    %450 = vector.broadcast %447 : vector<1x64xf32> to vector<2x64xf32>
    %451 = arith.mulf %450, %446 : vector<2x64xf32>
    %452 = arith.select %449, %446, %451 : vector<2x64xi1>, vector<2x64xf32>
    %c1_443 = arith.constant 1 : index
    %c32_444 = arith.constant 32 : index
    %453 = vector.load %arg17[%c1_443, %c32_444] : memref<4x128xf32, #tpu.memory_space<vmem>>, vector<2x64xf32>
    tpu.vector_store %arg17[%c1_443, %c32_444], %452 {strides = array<i32>} : memref<4x128xf32, #tpu.memory_space<vmem>>, vector<2x64xf32>,
    %c0_445 = arith.constant 0 : index
    %c0_446 = arith.constant 0 : index
    %454 = vector.load %arg17[%c0_445, %c0_446] : memref<4x128xf32, #tpu.memory_space<vmem>>, vector<2x128xf32>
    %455 = arith.truncf %454 : vector<2x128xf32> to vector<2x128xbf16>
    %c3776 = arith.constant 3776 : index
    %c0_447 = arith.constant 0 : index
    %456 = vector.load %arg2[%c3776, %c0_447] : memref<7872x128xbf16, #tpu.memory_space<vmem>>, vector<128x64xbf16>
    %cst_448 = arith.constant dense<0.000000e+00> : vector<2x64xf32>
    %457 = tpu.matmul %455, %456, %cst_448 {dimension_numbers = #tpu.dot_dimension_numbers<[1], [0], [0], [1], [0, 0, 1, 1], [], []>} : vector<2x128xbf16>, vector<128x64xbf16>, vector<2x64xf32> -> vector<2x64xf32>
    %c1_449 = arith.constant 1 : index
    %c0_450 = arith.constant 0 : index
    %458 = vector.load %arg17[%c1_449, %c0_450] : memref<4x128xf32, #tpu.memory_space<vmem>>, vector<2x128xf32>
    %459 = arith.truncf %458 : vector<2x128xf32> to vector<2x128xbf16>
    %c3904 = arith.constant 3904 : index
    %c0_451 = arith.constant 0 : index
    %460 = vector.load %arg2[%c3904, %c0_451] : memref<7872x128xbf16, #tpu.memory_space<vmem>>, vector<128x64xbf16>
    %cst_452 = arith.constant dense<0.000000e+00> : vector<2x64xf32>
    %461 = tpu.matmul %459, %460, %cst_452 {dimension_numbers = #tpu.dot_dimension_numbers<[1], [0], [0], [1], [0, 0, 1, 1], [], []>} : vector<2x128xbf16>, vector<128x64xbf16>, vector<2x64xf32> -> vector<2x64xf32>
    %462 = arith.addf %457, %461 : vector<2x64xf32>
    %c2_453 = arith.constant 2 : index
    %c0_454 = arith.constant 0 : index
    %463 = vector.load %arg17[%c2_453, %c0_454] : memref<4x128xf32, #tpu.memory_space<vmem>>, vector<2x128xf32>
    %464 = arith.truncf %463 : vector<2x128xf32> to vector<2x128xbf16>
    %c4032 = arith.constant 4032 : index
    %c0_455 = arith.constant 0 : index
    %465 = vector.load %arg2[%c4032, %c0_455] : memref<7872x128xbf16, #tpu.memory_space<vmem>>, vector<128x64xbf16>
    %cst_456 = arith.constant dense<0.000000e+00> : vector<2x64xf32>
    %466 = tpu.matmul %464, %465, %cst_456 {dimension_numbers = #tpu.dot_dimension_numbers<[1], [0], [0], [1], [0, 0, 1, 1], [], []>} : vector<2x128xbf16>, vector<128x64xbf16>, vector<2x64xf32> -> vector<2x64xf32>
    %467 = arith.addf %462, %466 : vector<2x64xf32>
    %c232 = arith.constant 232 : index
    %c0_457 = arith.constant 0 : index
    %468 = vector.load %arg3[%c232, %c0_457] : memref<464x128xf32, #tpu.memory_space<vmem>>, vector<1x64xf32>
    %469 = vector.broadcast %468 : vector<1x64xf32> to vector<2x64xf32>
    %470 = arith.addf %467, %469 : vector<2x64xf32>
    %c240 = arith.constant 240 : index
    %c0_458 = arith.constant 0 : index
    %471 = vector.load %arg3[%c240, %c0_458] : memref<464x128xf32, #tpu.memory_space<vmem>>, vector<1x64xf32>
    %cst_459 = arith.constant 0.000000e+00 : f32
    %472 = vector.broadcast %cst_459 : f32 to vector<2x64xf32>
    %473 = arith.cmpf ogt, %470, %472 : vector<2x64xf32>
    %474 = vector.broadcast %471 : vector<1x64xf32> to vector<2x64xf32>
    %475 = arith.mulf %474, %470 : vector<2x64xf32>
    %476 = arith.select %473, %470, %475 : vector<2x64xi1>, vector<2x64xf32>
    %c1_460 = arith.constant 1 : index
    %c32_461 = arith.constant 32 : index
    %477 = vector.load %arg18[%c1_460, %c32_461] : memref<4x128xf32, #tpu.memory_space<vmem>>, vector<2x64xf32>
    tpu.vector_store %arg18[%c1_460, %c32_461], %476 {strides = array<i32>} : memref<4x128xf32, #tpu.memory_space<vmem>>, vector<2x64xf32>,
    %c0_462 = arith.constant 0 : index
    %c0_463 = arith.constant 0 : index
    %478 = vector.load %arg18[%c0_462, %c0_463] : memref<4x128xf32, #tpu.memory_space<vmem>>, vector<2x128xf32>
    %479 = arith.truncf %478 : vector<2x128xf32> to vector<2x128xbf16>
    %c4160 = arith.constant 4160 : index
    %c0_464 = arith.constant 0 : index
    %480 = vector.load %arg2[%c4160, %c0_464] : memref<7872x128xbf16, #tpu.memory_space<vmem>>, vector<128x64xbf16>
    %cst_465 = arith.constant dense<0.000000e+00> : vector<2x64xf32>
    %481 = tpu.matmul %479, %480, %cst_465 {dimension_numbers = #tpu.dot_dimension_numbers<[1], [0], [0], [1], [0, 0, 1, 1], [], []>} : vector<2x128xbf16>, vector<128x64xbf16>, vector<2x64xf32> -> vector<2x64xf32>
    %c1_466 = arith.constant 1 : index
    %c0_467 = arith.constant 0 : index
    %482 = vector.load %arg18[%c1_466, %c0_467] : memref<4x128xf32, #tpu.memory_space<vmem>>, vector<2x128xf32>
    %483 = arith.truncf %482 : vector<2x128xf32> to vector<2x128xbf16>
    %c4288 = arith.constant 4288 : index
    %c0_468 = arith.constant 0 : index
    %484 = vector.load %arg2[%c4288, %c0_468] : memref<7872x128xbf16, #tpu.memory_space<vmem>>, vector<128x64xbf16>
    %cst_469 = arith.constant dense<0.000000e+00> : vector<2x64xf32>
    %485 = tpu.matmul %483, %484, %cst_469 {dimension_numbers = #tpu.dot_dimension_numbers<[1], [0], [0], [1], [0, 0, 1, 1], [], []>} : vector<2x128xbf16>, vector<128x64xbf16>, vector<2x64xf32> -> vector<2x64xf32>
    %486 = arith.addf %481, %485 : vector<2x64xf32>
    %c2_470 = arith.constant 2 : index
    %c0_471 = arith.constant 0 : index
    %487 = vector.load %arg18[%c2_470, %c0_471] : memref<4x128xf32, #tpu.memory_space<vmem>>, vector<2x128xf32>
    %488 = arith.truncf %487 : vector<2x128xf32> to vector<2x128xbf16>
    %c4416 = arith.constant 4416 : index
    %c0_472 = arith.constant 0 : index
    %489 = vector.load %arg2[%c4416, %c0_472] : memref<7872x128xbf16, #tpu.memory_space<vmem>>, vector<128x64xbf16>
    %cst_473 = arith.constant dense<0.000000e+00> : vector<2x64xf32>
    %490 = tpu.matmul %488, %489, %cst_473 {dimension_numbers = #tpu.dot_dimension_numbers<[1], [0], [0], [1], [0, 0, 1, 1], [], []>} : vector<2x128xbf16>, vector<128x64xbf16>, vector<2x64xf32> -> vector<2x64xf32>
    %491 = arith.addf %486, %490 : vector<2x64xf32>
    %c248 = arith.constant 248 : index
    %c0_474 = arith.constant 0 : index
    %492 = vector.load %arg3[%c248, %c0_474] : memref<464x128xf32, #tpu.memory_space<vmem>>, vector<1x64xf32>
    %493 = vector.broadcast %492 : vector<1x64xf32> to vector<2x64xf32>
    %494 = arith.addf %491, %493 : vector<2x64xf32>
    %c256 = arith.constant 256 : index
    %c0_475 = arith.constant 0 : index
    %495 = vector.load %arg3[%c256, %c0_475] : memref<464x128xf32, #tpu.memory_space<vmem>>, vector<1x64xf32>
    %cst_476 = arith.constant 0.000000e+00 : f32
    %496 = vector.broadcast %cst_476 : f32 to vector<2x64xf32>
    %497 = arith.cmpf ogt, %494, %496 : vector<2x64xf32>
    %498 = vector.broadcast %495 : vector<1x64xf32> to vector<2x64xf32>
    %499 = arith.mulf %498, %494 : vector<2x64xf32>
    %500 = arith.select %497, %494, %499 : vector<2x64xi1>, vector<2x64xf32>
    %c1_477 = arith.constant 1 : index
    %c32_478 = arith.constant 32 : index
    %501 = vector.load %arg19[%c1_477, %c32_478] : memref<4x128xf32, #tpu.memory_space<vmem>>, vector<2x64xf32>
    tpu.vector_store %arg19[%c1_477, %c32_478], %500 {strides = array<i32>} : memref<4x128xf32, #tpu.memory_space<vmem>>, vector<2x64xf32>,
    %c0_479 = arith.constant 0 : index
    %c0_480 = arith.constant 0 : index
    %502 = vector.load %arg19[%c0_479, %c0_480] : memref<4x128xf32, #tpu.memory_space<vmem>>, vector<2x128xf32>
    %503 = arith.truncf %502 : vector<2x128xf32> to vector<2x128xbf16>
    %c4544 = arith.constant 4544 : index
    %c0_481 = arith.constant 0 : index
    %504 = vector.load %arg2[%c4544, %c0_481] : memref<7872x128xbf16, #tpu.memory_space<vmem>>, vector<128x64xbf16>
    %cst_482 = arith.constant dense<0.000000e+00> : vector<2x64xf32>
    %505 = tpu.matmul %503, %504, %cst_482 {dimension_numbers = #tpu.dot_dimension_numbers<[1], [0], [0], [1], [0, 0, 1, 1], [], []>} : vector<2x128xbf16>, vector<128x64xbf16>, vector<2x64xf32> -> vector<2x64xf32>
    %c1_483 = arith.constant 1 : index
    %c0_484 = arith.constant 0 : index
    %506 = vector.load %arg19[%c1_483, %c0_484] : memref<4x128xf32, #tpu.memory_space<vmem>>, vector<2x128xf32>
    %507 = arith.truncf %506 : vector<2x128xf32> to vector<2x128xbf16>
    %c4672 = arith.constant 4672 : index
    %c0_485 = arith.constant 0 : index
    %508 = vector.load %arg2[%c4672, %c0_485] : memref<7872x128xbf16, #tpu.memory_space<vmem>>, vector<128x64xbf16>
    %cst_486 = arith.constant dense<0.000000e+00> : vector<2x64xf32>
    %509 = tpu.matmul %507, %508, %cst_486 {dimension_numbers = #tpu.dot_dimension_numbers<[1], [0], [0], [1], [0, 0, 1, 1], [], []>} : vector<2x128xbf16>, vector<128x64xbf16>, vector<2x64xf32> -> vector<2x64xf32>
    %510 = arith.addf %505, %509 : vector<2x64xf32>
    %c2_487 = arith.constant 2 : index
    %c0_488 = arith.constant 0 : index
    %511 = vector.load %arg19[%c2_487, %c0_488] : memref<4x128xf32, #tpu.memory_space<vmem>>, vector<2x128xf32>
    %512 = arith.truncf %511 : vector<2x128xf32> to vector<2x128xbf16>
    %c4800 = arith.constant 4800 : index
    %c0_489 = arith.constant 0 : index
    %513 = vector.load %arg2[%c4800, %c0_489] : memref<7872x128xbf16, #tpu.memory_space<vmem>>, vector<128x64xbf16>
    %cst_490 = arith.constant dense<0.000000e+00> : vector<2x64xf32>
    %514 = tpu.matmul %512, %513, %cst_490 {dimension_numbers = #tpu.dot_dimension_numbers<[1], [0], [0], [1], [0, 0, 1, 1], [], []>} : vector<2x128xbf16>, vector<128x64xbf16>, vector<2x64xf32> -> vector<2x64xf32>
    %515 = arith.addf %510, %514 : vector<2x64xf32>
    %c264 = arith.constant 264 : index
    %c0_491 = arith.constant 0 : index
    %516 = vector.load %arg3[%c264, %c0_491] : memref<464x128xf32, #tpu.memory_space<vmem>>, vector<1x64xf32>
    %517 = vector.broadcast %516 : vector<1x64xf32> to vector<2x64xf32>
    %518 = arith.addf %515, %517 : vector<2x64xf32>
    %c272 = arith.constant 272 : index
    %c0_492 = arith.constant 0 : index
    %519 = vector.load %arg3[%c272, %c0_492] : memref<464x128xf32, #tpu.memory_space<vmem>>, vector<1x64xf32>
    %cst_493 = arith.constant 0.000000e+00 : f32
    %520 = vector.broadcast %cst_493 : f32 to vector<2x64xf32>
    %521 = arith.cmpf ogt, %518, %520 : vector<2x64xf32>
    %522 = vector.broadcast %519 : vector<1x64xf32> to vector<2x64xf32>
    %523 = arith.mulf %522, %518 : vector<2x64xf32>
    %524 = arith.select %521, %518, %523 : vector<2x64xi1>, vector<2x64xf32>
    %c1_494 = arith.constant 1 : index
    %c32_495 = arith.constant 32 : index
    %525 = vector.load %arg20[%c1_494, %c32_495] : memref<4x128xf32, #tpu.memory_space<vmem>>, vector<2x64xf32>
    tpu.vector_store %arg20[%c1_494, %c32_495], %524 {strides = array<i32>} : memref<4x128xf32, #tpu.memory_space<vmem>>, vector<2x64xf32>,
    %c0_496 = arith.constant 0 : index
    %c0_497 = arith.constant 0 : index
    %526 = vector.load %arg20[%c0_496, %c0_497] : memref<4x128xf32, #tpu.memory_space<vmem>>, vector<2x128xf32>
    %527 = arith.truncf %526 : vector<2x128xf32> to vector<2x128xbf16>
    %c4928 = arith.constant 4928 : index
    %c0_498 = arith.constant 0 : index
    %528 = vector.load %arg2[%c4928, %c0_498] : memref<7872x128xbf16, #tpu.memory_space<vmem>>, vector<128x64xbf16>
    %cst_499 = arith.constant dense<0.000000e+00> : vector<2x64xf32>
    %529 = tpu.matmul %527, %528, %cst_499 {dimension_numbers = #tpu.dot_dimension_numbers<[1], [0], [0], [1], [0, 0, 1, 1], [], []>} : vector<2x128xbf16>, vector<128x64xbf16>, vector<2x64xf32> -> vector<2x64xf32>
    %c1_500 = arith.constant 1 : index
    %c0_501 = arith.constant 0 : index
    %530 = vector.load %arg20[%c1_500, %c0_501] : memref<4x128xf32, #tpu.memory_space<vmem>>, vector<2x128xf32>
    %531 = arith.truncf %530 : vector<2x128xf32> to vector<2x128xbf16>
    %c5056 = arith.constant 5056 : index
    %c0_502 = arith.constant 0 : index
    %532 = vector.load %arg2[%c5056, %c0_502] : memref<7872x128xbf16, #tpu.memory_space<vmem>>, vector<128x64xbf16>
    %cst_503 = arith.constant dense<0.000000e+00> : vector<2x64xf32>
    %533 = tpu.matmul %531, %532, %cst_503 {dimension_numbers = #tpu.dot_dimension_numbers<[1], [0], [0], [1], [0, 0, 1, 1], [], []>} : vector<2x128xbf16>, vector<128x64xbf16>, vector<2x64xf32> -> vector<2x64xf32>
    %534 = arith.addf %529, %533 : vector<2x64xf32>
    %c2_504 = arith.constant 2 : index
    %c0_505 = arith.constant 0 : index
    %535 = vector.load %arg20[%c2_504, %c0_505] : memref<4x128xf32, #tpu.memory_space<vmem>>, vector<2x128xf32>
    %536 = arith.truncf %535 : vector<2x128xf32> to vector<2x128xbf16>
    %c5184 = arith.constant 5184 : index
    %c0_506 = arith.constant 0 : index
    %537 = vector.load %arg2[%c5184, %c0_506] : memref<7872x128xbf16, #tpu.memory_space<vmem>>, vector<128x64xbf16>
    %cst_507 = arith.constant dense<0.000000e+00> : vector<2x64xf32>
    %538 = tpu.matmul %536, %537, %cst_507 {dimension_numbers = #tpu.dot_dimension_numbers<[1], [0], [0], [1], [0, 0, 1, 1], [], []>} : vector<2x128xbf16>, vector<128x64xbf16>, vector<2x64xf32> -> vector<2x64xf32>
    %539 = arith.addf %534, %538 : vector<2x64xf32>
    %c280 = arith.constant 280 : index
    %c0_508 = arith.constant 0 : index
    %540 = vector.load %arg3[%c280, %c0_508] : memref<464x128xf32, #tpu.memory_space<vmem>>, vector<1x64xf32>
    %541 = vector.broadcast %540 : vector<1x64xf32> to vector<2x64xf32>
    %542 = arith.addf %539, %541 : vector<2x64xf32>
    %c288_509 = arith.constant 288 : index
    %c0_510 = arith.constant 0 : index
    %543 = vector.load %arg3[%c288_509, %c0_510] : memref<464x128xf32, #tpu.memory_space<vmem>>, vector<1x64xf32>
    %cst_511 = arith.constant 0.000000e+00 : f32
    %544 = vector.broadcast %cst_511 : f32 to vector<2x64xf32>
    %545 = arith.cmpf ogt, %542, %544 : vector<2x64xf32>
    %546 = vector.broadcast %543 : vector<1x64xf32> to vector<2x64xf32>
    %547 = arith.mulf %546, %542 : vector<2x64xf32>
    %548 = arith.select %545, %542, %547 : vector<2x64xi1>, vector<2x64xf32>
    %c1_512 = arith.constant 1 : index
    %c32_513 = arith.constant 32 : index
    %549 = vector.load %arg21[%c1_512, %c32_513] : memref<4x128xf32, #tpu.memory_space<vmem>>, vector<2x64xf32>
    tpu.vector_store %arg21[%c1_512, %c32_513], %548 {strides = array<i32>} : memref<4x128xf32, #tpu.memory_space<vmem>>, vector<2x64xf32>,
    %c0_514 = arith.constant 0 : index
    %c0_515 = arith.constant 0 : index
    %550 = vector.load %arg21[%c0_514, %c0_515] : memref<4x128xf32, #tpu.memory_space<vmem>>, vector<2x128xf32>
    %551 = arith.truncf %550 : vector<2x128xf32> to vector<2x128xbf16>
    %c5312 = arith.constant 5312 : index
    %c0_516 = arith.constant 0 : index
    %552 = vector.load %arg2[%c5312, %c0_516] : memref<7872x128xbf16, #tpu.memory_space<vmem>>, vector<128x96xbf16>
    %cst_517 = arith.constant dense<0.000000e+00> : vector<2x96xf32>
    %553 = tpu.matmul %551, %552, %cst_517 {dimension_numbers = #tpu.dot_dimension_numbers<[1], [0], [0], [1], [0, 0, 1, 1], [], []>} : vector<2x128xbf16>, vector<128x96xbf16>, vector<2x96xf32> -> vector<2x96xf32>
    %c1_518 = arith.constant 1 : index
    %c0_519 = arith.constant 0 : index
    %554 = vector.load %arg21[%c1_518, %c0_519] : memref<4x128xf32, #tpu.memory_space<vmem>>, vector<2x128xf32>
    %555 = arith.truncf %554 : vector<2x128xf32> to vector<2x128xbf16>
    %c5440 = arith.constant 5440 : index
    %c0_520 = arith.constant 0 : index
    %556 = vector.load %arg2[%c5440, %c0_520] : memref<7872x128xbf16, #tpu.memory_space<vmem>>, vector<128x96xbf16>
    %cst_521 = arith.constant dense<0.000000e+00> : vector<2x96xf32>
    %557 = tpu.matmul %555, %556, %cst_521 {dimension_numbers = #tpu.dot_dimension_numbers<[1], [0], [0], [1], [0, 0, 1, 1], [], []>} : vector<2x128xbf16>, vector<128x96xbf16>, vector<2x96xf32> -> vector<2x96xf32>
    %558 = arith.addf %553, %557 : vector<2x96xf32>
    %c2_522 = arith.constant 2 : index
    %c0_523 = arith.constant 0 : index
    %559 = vector.load %arg21[%c2_522, %c0_523] : memref<4x128xf32, #tpu.memory_space<vmem>>, vector<2x128xf32>
    %560 = arith.truncf %559 : vector<2x128xf32> to vector<2x128xbf16>
    %c5568 = arith.constant 5568 : index
    %c0_524 = arith.constant 0 : index
    %561 = vector.load %arg2[%c5568, %c0_524] : memref<7872x128xbf16, #tpu.memory_space<vmem>>, vector<128x96xbf16>
    %cst_525 = arith.constant dense<0.000000e+00> : vector<2x96xf32>
    %562 = tpu.matmul %560, %561, %cst_525 {dimension_numbers = #tpu.dot_dimension_numbers<[1], [0], [0], [1], [0, 0, 1, 1], [], []>} : vector<2x128xbf16>, vector<128x96xbf16>, vector<2x96xf32> -> vector<2x96xf32>
    %563 = arith.addf %558, %562 : vector<2x96xf32>
    %c296 = arith.constant 296 : index
    %c0_526 = arith.constant 0 : index
    %564 = vector.load %arg3[%c296, %c0_526] : memref<464x128xf32, #tpu.memory_space<vmem>>, vector<1x96xf32>
    %565 = vector.broadcast %564 : vector<1x96xf32> to vector<2x96xf32>
    %566 = arith.addf %563, %565 : vector<2x96xf32>
    %c304 = arith.constant 304 : index
    %c0_527 = arith.constant 0 : index
    %567 = vector.load %arg3[%c304, %c0_527] : memref<464x128xf32, #tpu.memory_space<vmem>>, vector<1x96xf32>
    %cst_528 = arith.constant 0.000000e+00 : f32
    %568 = vector.broadcast %cst_528 : f32 to vector<2x96xf32>
    %569 = arith.cmpf ogt, %566, %568 : vector<2x96xf32>
    %570 = vector.broadcast %567 : vector<1x96xf32> to vector<2x96xf32>
    %571 = arith.mulf %570, %566 : vector<2x96xf32>
    %572 = arith.select %569, %566, %571 : vector<2x96xi1>, vector<2x96xf32>
    %c4_529 = arith.constant 4 : index
    %c192_530 = arith.constant 192 : index
    %573 = vector.load %arg22[%c4_529, %c192_530] : memref<10x480xf32, #tpu.memory_space<vmem>>, vector<2x96xf32>
    tpu.vector_store %arg22[%c4_529, %c192_530], %572 {strides = array<i32>} : memref<10x480xf32, #tpu.memory_space<vmem>>, vector<2x96xf32>,
    %c0_531 = arith.constant 0 : index
    %c0_532 = arith.constant 0 : index
    %574 = vector.load %arg22[%c0_531, %c0_532] : memref<10x480xf32, #tpu.memory_space<vmem>>, vector<2x480xf32>
    %575 = arith.truncf %574 : vector<2x480xf32> to vector<2x480xbf16>
    %c5696 = arith.constant 5696 : index
    %c0_533 = arith.constant 0 : index
    %576 = vector.load %arg2[%c5696, %c0_533] : memref<7872x128xbf16, #tpu.memory_space<vmem>>, vector<480x96xbf16>
    %cst_534 = arith.constant dense<0.000000e+00> : vector<2x96xf32>
    %577 = tpu.matmul %575, %576, %cst_534 {dimension_numbers = #tpu.dot_dimension_numbers<[1], [0], [0], [1], [0, 0, 1, 1], [], []>} : vector<2x480xbf16>, vector<480x96xbf16>, vector<2x96xf32> -> vector<2x96xf32>
    %c4_535 = arith.constant 4 : index
    %c0_536 = arith.constant 0 : index
    %578 = vector.load %arg22[%c4_535, %c0_536] : memref<10x480xf32, #tpu.memory_space<vmem>>, vector<2x480xf32>
    %579 = arith.truncf %578 : vector<2x480xf32> to vector<2x480xbf16>
    %c6176 = arith.constant 6176 : index
    %c0_537 = arith.constant 0 : index
    %580 = vector.load %arg2[%c6176, %c0_537] : memref<7872x128xbf16, #tpu.memory_space<vmem>>, vector<480x96xbf16>
    %cst_538 = arith.constant dense<0.000000e+00> : vector<2x96xf32>
    %581 = tpu.matmul %579, %580, %cst_538 {dimension_numbers = #tpu.dot_dimension_numbers<[1], [0], [0], [1], [0, 0, 1, 1], [], []>} : vector<2x480xbf16>, vector<480x96xbf16>, vector<2x96xf32> -> vector<2x96xf32>
    %582 = arith.addf %577, %581 : vector<2x96xf32>
    %c8_539 = arith.constant 8 : index
    %c0_540 = arith.constant 0 : index
    %583 = vector.load %arg22[%c8_539, %c0_540] : memref<10x480xf32, #tpu.memory_space<vmem>>, vector<2x480xf32>
    %584 = arith.truncf %583 : vector<2x480xf32> to vector<2x480xbf16>
    %c6656 = arith.constant 6656 : index
    %c0_541 = arith.constant 0 : index
    %585 = vector.load %arg2[%c6656, %c0_541] : memref<7872x128xbf16, #tpu.memory_space<vmem>>, vector<480x96xbf16>
    %cst_542 = arith.constant dense<0.000000e+00> : vector<2x96xf32>
    %586 = tpu.matmul %584, %585, %cst_542 {dimension_numbers = #tpu.dot_dimension_numbers<[1], [0], [0], [1], [0, 0, 1, 1], [], []>} : vector<2x480xbf16>, vector<480x96xbf16>, vector<2x96xf32> -> vector<2x96xf32>
    %587 = arith.addf %582, %586 : vector<2x96xf32>
    %c312 = arith.constant 312 : index
    %c0_543 = arith.constant 0 : index
    %588 = vector.load %arg3[%c312, %c0_543] : memref<464x128xf32, #tpu.memory_space<vmem>>, vector<1x96xf32>
    %589 = vector.broadcast %588 : vector<1x96xf32> to vector<2x96xf32>
    %590 = arith.addf %587, %589 : vector<2x96xf32>
    %c320_544 = arith.constant 320 : index
    %c0_545 = arith.constant 0 : index
    %591 = vector.load %arg3[%c320_544, %c0_545] : memref<464x128xf32, #tpu.memory_space<vmem>>, vector<1x96xf32>
    %cst_546 = arith.constant 0.000000e+00 : f32
    %592 = vector.broadcast %cst_546 : f32 to vector<2x96xf32>
    %593 = arith.cmpf ogt, %590, %592 : vector<2x96xf32>
    %594 = vector.broadcast %591 : vector<1x96xf32> to vector<2x96xf32>
    %595 = arith.mulf %594, %590 : vector<2x96xf32>
    %596 = arith.select %593, %590, %595 : vector<2x96xi1>, vector<2x96xf32>
    %597 = arith.truncf %596 : vector<2x96xf32> to vector<2x96xbf16>
    %c7136 = arith.constant 7136 : index
    %c0_547 = arith.constant 0 : index
    %598 = vector.load %arg2[%c7136, %c0_547] : memref<7872x128xbf16, #tpu.memory_space<vmem>>, vector<96x128xbf16>
    %cst_548 = arith.constant dense<0.000000e+00> : vector<2x128xf32>
    %599 = tpu.matmul %597, %598, %cst_548 {dimension_numbers = #tpu.dot_dimension_numbers<[1], [0], [0], [1], [0, 0, 1, 1], [], []>} : vector<2x96xbf16>, vector<96x128xbf16>, vector<2x128xf32> -> vector<2x128xf32>
    %c328 = arith.constant 328 : index
    %c0_549 = arith.constant 0 : index
    %600 = vector.load %arg3[%c328, %c0_549] : memref<464x128xf32, #tpu.memory_space<vmem>>, vector<1x128xf32>
    %601 = vector.broadcast %600 : vector<1x128xf32> to vector<2x128xf32>
    %602 = arith.addf %599, %601 : vector<2x128xf32>
    %c336 = arith.constant 336 : index
    %c0_550 = arith.constant 0 : index
    %603 = vector.load %arg3[%c336, %c0_550] : memref<464x128xf32, #tpu.memory_space<vmem>>, vector<1x128xf32>
    %cst_551 = arith.constant 0.000000e+00 : f32
    %604 = vector.broadcast %cst_551 : f32 to vector<2x128xf32>
    %605 = arith.cmpf ogt, %602, %604 : vector<2x128xf32>
    %606 = vector.broadcast %603 : vector<1x128xf32> to vector<2x128xf32>
    %607 = arith.mulf %606, %602 : vector<2x128xf32>
    %608 = arith.select %605, %602, %607 : vector<2x128xi1>, vector<2x128xf32>
    %609 = arith.truncf %608 : vector<2x128xf32> to vector<2x128xbf16>
    %c7232 = arith.constant 7232 : index
    %c0_552 = arith.constant 0 : index
    %610 = vector.load %arg2[%c7232, %c0_552] : memref<7872x128xbf16, #tpu.memory_space<vmem>>, vector<128x128xbf16>
    %cst_553 = arith.constant dense<0.000000e+00> : vector<2x128xf32>
    %611 = tpu.matmul %609, %610, %cst_553 {dimension_numbers = #tpu.dot_dimension_numbers<[1], [0], [0], [1], [0, 0, 1, 1], [], []>} : vector<2x128xbf16>, vector<128x128xbf16>, vector<2x128xf32> -> vector<2x128xf32>
    %c344 = arith.constant 344 : index
    %c0_554 = arith.constant 0 : index
    %612 = vector.load %arg3[%c344, %c0_554] : memref<464x128xf32, #tpu.memory_space<vmem>>, vector<1x128xf32>
    %613 = vector.broadcast %612 : vector<1x128xf32> to vector<2x128xf32>
    %614 = arith.addf %611, %613 : vector<2x128xf32>
    %c352 = arith.constant 352 : index
    %c0_555 = arith.constant 0 : index
    %615 = vector.load %arg3[%c352, %c0_555] : memref<464x128xf32, #tpu.memory_space<vmem>>, vector<1x128xf32>
    %cst_556 = arith.constant 0.000000e+00 : f32
    %616 = vector.broadcast %cst_556 : f32 to vector<2x128xf32>
    %617 = arith.cmpf ogt, %614, %616 : vector<2x128xf32>
    %618 = vector.broadcast %615 : vector<1x128xf32> to vector<2x128xf32>
    %619 = arith.mulf %618, %614 : vector<2x128xf32>
    %620 = arith.select %617, %614, %619 : vector<2x128xi1>, vector<2x128xf32>
    %621 = arith.truncf %620 : vector<2x128xf32> to vector<2x128xbf16>
    %c7360 = arith.constant 7360 : index
    %c0_557 = arith.constant 0 : index
    %622 = vector.load %arg2[%c7360, %c0_557] : memref<7872x128xbf16, #tpu.memory_space<vmem>>, vector<128x128xbf16>
    %cst_558 = arith.constant dense<0.000000e+00> : vector<2x128xf32>
    %623 = tpu.matmul %621, %622, %cst_558 {dimension_numbers = #tpu.dot_dimension_numbers<[1], [0], [0], [1], [0, 0, 1, 1], [], []>} : vector<2x128xbf16>, vector<128x128xbf16>, vector<2x128xf32> -> vector<2x128xf32>
    %c360 = arith.constant 360 : index
    %c0_559 = arith.constant 0 : index
    %624 = vector.load %arg3[%c360, %c0_559] : memref<464x128xf32, #tpu.memory_space<vmem>>, vector<1x128xf32>
    %625 = vector.broadcast %624 : vector<1x128xf32> to vector<2x128xf32>
    %626 = arith.addf %623, %625 : vector<2x128xf32>
    %c368 = arith.constant 368 : index
    %c0_560 = arith.constant 0 : index
    %627 = vector.load %arg3[%c368, %c0_560] : memref<464x128xf32, #tpu.memory_space<vmem>>, vector<1x128xf32>
    %cst_561 = arith.constant 0.000000e+00 : f32
    %628 = vector.broadcast %cst_561 : f32 to vector<2x128xf32>
    %629 = arith.cmpf ogt, %626, %628 : vector<2x128xf32>
    %630 = vector.broadcast %627 : vector<1x128xf32> to vector<2x128xf32>
    %631 = arith.mulf %630, %626 : vector<2x128xf32>
    %632 = arith.select %629, %626, %631 : vector<2x128xi1>, vector<2x128xf32>
    %633 = arith.truncf %632 : vector<2x128xf32> to vector<2x128xbf16>
    %c7488 = arith.constant 7488 : index
    %c0_562 = arith.constant 0 : index
    %634 = vector.load %arg2[%c7488, %c0_562] : memref<7872x128xbf16, #tpu.memory_space<vmem>>, vector<128x8xbf16>
    %cst_563 = arith.constant dense<0.000000e+00> : vector<2x8xf32>
    %635 = tpu.matmul %633, %634, %cst_563 {dimension_numbers = #tpu.dot_dimension_numbers<[1], [0], [0], [1], [0, 0, 1, 1], [], []>} : vector<2x128xbf16>, vector<128x8xbf16>, vector<2x8xf32> -> vector<2x8xf32>
    %c376 = arith.constant 376 : index
    %c0_564 = arith.constant 0 : index
    %636 = vector.load %arg3[%c376, %c0_564] : memref<464x128xf32, #tpu.memory_space<vmem>>, vector<1x8xf32>
    %637 = vector.broadcast %636 : vector<1x8xf32> to vector<2x8xf32>
    %638 = arith.addf %635, %637 : vector<2x8xf32>
    %c1_565 = arith.constant 1 : index
    %c12_566 = arith.constant 12 : index
    %639 = vector.load %arg11[%c1_565, %c12_566] : memref<7x84xf32, #tpu.memory_space<vmem>>, vector<5x60xf32>
    %640 = arith.truncf %639 : vector<5x60xf32> to vector<5x60xbf16>
    %c7616 = arith.constant 7616 : index
    %c0_567 = arith.constant 0 : index
    %641 = vector.load %arg2[%c7616, %c0_567] : memref<7872x128xbf16, #tpu.memory_space<vmem>>, vector<60x20xbf16>
    %cst_568 = arith.constant dense<0.000000e+00> : vector<5x20xf32>
    %642 = tpu.matmul %640, %641, %cst_568 {dimension_numbers = #tpu.dot_dimension_numbers<[1], [0], [0], [1], [0, 0, 1, 1], [], []>} : vector<5x60xbf16>, vector<60x20xbf16>, vector<5x20xf32> -> vector<5x20xf32>
    %c384 = arith.constant 384 : index
    %c0_569 = arith.constant 0 : index
    %643 = vector.load %arg3[%c384, %c0_569] : memref<464x128xf32, #tpu.memory_space<vmem>>, vector<1x20xf32>
    %644 = vector.broadcast %643 : vector<1x20xf32> to vector<5x20xf32>
    %645 = arith.addf %642, %644 : vector<5x20xf32>
    %c392 = arith.constant 392 : index
    %c0_570 = arith.constant 0 : index
    %646 = vector.load %arg3[%c392, %c0_570] : memref<464x128xf32, #tpu.memory_space<vmem>>, vector<1x20xf32>
    %cst_571 = arith.constant 0.000000e+00 : f32
    %647 = vector.broadcast %cst_571 : f32 to vector<5x20xf32>
    %648 = arith.cmpf ogt, %645, %647 : vector<5x20xf32>
    %649 = vector.broadcast %646 : vector<1x20xf32> to vector<5x20xf32>
    %650 = arith.mulf %649, %645 : vector<5x20xf32>
    %651 = arith.select %648, %645, %650 : vector<5x20xi1>, vector<5x20xf32>
    %c1_572 = arith.constant 1 : index
    %c4_573 = arith.constant 4 : index
    %652 = vector.load %arg23[%c1_572, %c4_573] : memref<7x28xf32, #tpu.memory_space<vmem>>, vector<5x20xf32>
    tpu.vector_store %arg23[%c1_572, %c4_573], %651 {strides = array<i32>} : memref<7x28xf32, #tpu.memory_space<vmem>>, vector<5x20xf32>,
    %c400 = arith.constant 400 : index
    %c0_574 = arith.constant 0 : index
    %653 = vector.load %arg3[%c400, %c0_574] : memref<464x128xf32, #tpu.memory_space<vmem>>, vector<5x2xf32>
    %cst_575 = arith.constant dense<0.000000e+00> : vector<5x8xf32>
    %654 = tpu.matmul %653, %638, %cst_575 {dimension_numbers = #tpu.dot_dimension_numbers<[1], [0], [0], [1], [0, 0, 1, 1], [], []>} : vector<5x2xf32>, vector<2x8xf32>, vector<5x8xf32> -> vector<5x8xf32>
    %c408 = arith.constant 408 : index
    %c0_576 = arith.constant 0 : index
    %655 = vector.load %arg3[%c408, %c0_576] : memref<464x128xf32, #tpu.memory_space<vmem>>, vector<8x20xf32>
    %cst_577 = arith.constant dense<0.000000e+00> : vector<5x20xf32>
    %656 = tpu.matmul %654, %655, %cst_577 {dimension_numbers = #tpu.dot_dimension_numbers<[1], [0], [0], [1], [0, 0, 1, 1], [], []>} : vector<5x8xf32>, vector<8x20xf32>, vector<5x20xf32> -> vector<5x20xf32>
    %c1_578 = arith.constant 1 : index
    %c4_579 = arith.constant 4 : index
    %657 = vector.load %arg24[%c1_578, %c4_579] : memref<7x28xf32, #tpu.memory_space<vmem>>, vector<5x20xf32>
    tpu.vector_store %arg24[%c1_578, %c4_579], %656 {strides = array<i32>} : memref<7x28xf32, #tpu.memory_space<vmem>>, vector<5x20xf32>,
    %c0_580 = arith.constant 0 : index
    %c0_581 = arith.constant 0 : index
    %658 = vector.load %arg24[%c0_580, %c0_581] : memref<7x28xf32, #tpu.memory_space<vmem>>, vector<5x28xf32>
    %659 = arith.truncf %658 : vector<5x28xf32> to vector<5x28xbf16>
    %c0_582 = arith.constant 0 : index
    %c0_583 = arith.constant 0 : index
    %660 = vector.load %arg23[%c0_582, %c0_583] : memref<7x28xf32, #tpu.memory_space<vmem>>, vector<5x28xf32>
    %661 = arith.truncf %660 : vector<5x28xf32> to vector<5x28xbf16>
    %c7680 = arith.constant 7680 : index
    %c0_584 = arith.constant 0 : index
    %662 = vector.load %arg2[%c7680, %c0_584] : memref<7872x128xbf16, #tpu.memory_space<vmem>>, vector<28x20xbf16>
    %c7776 = arith.constant 7776 : index
    %c0_585 = arith.constant 0 : index
    %663 = vector.load %arg2[%c7776, %c0_585] : memref<7872x128xbf16, #tpu.memory_space<vmem>>, vector<28x20xbf16>
    %cst_586 = arith.constant dense<0.000000e+00> : vector<5x20xf32>
    %664 = tpu.matmul %659, %662, %cst_586 {dimension_numbers = #tpu.dot_dimension_numbers<[1], [0], [0], [1], [0, 0, 1, 1], [], []>} : vector<5x28xbf16>, vector<28x20xbf16>, vector<5x20xf32> -> vector<5x20xf32>
    %cst_587 = arith.constant dense<0.000000e+00> : vector<5x20xf32>
    %665 = tpu.matmul %661, %663, %cst_587 {dimension_numbers = #tpu.dot_dimension_numbers<[1], [0], [0], [1], [0, 0, 1, 1], [], []>} : vector<5x28xbf16>, vector<28x20xbf16>, vector<5x20xf32> -> vector<5x20xf32>
    %666 = arith.addf %664, %665 : vector<5x20xf32>
    %c1_588 = arith.constant 1 : index
    %c0_589 = arith.constant 0 : index
    %667 = vector.load %arg24[%c1_588, %c0_589] : memref<7x28xf32, #tpu.memory_space<vmem>>, vector<5x28xf32>
    %668 = arith.truncf %667 : vector<5x28xf32> to vector<5x28xbf16>
    %c1_590 = arith.constant 1 : index
    %c0_591 = arith.constant 0 : index
    %669 = vector.load %arg23[%c1_590, %c0_591] : memref<7x28xf32, #tpu.memory_space<vmem>>, vector<5x28xf32>
    %670 = arith.truncf %669 : vector<5x28xf32> to vector<5x28xbf16>
    %c7712 = arith.constant 7712 : index
    %c0_592 = arith.constant 0 : index
    %671 = vector.load %arg2[%c7712, %c0_592] : memref<7872x128xbf16, #tpu.memory_space<vmem>>, vector<28x20xbf16>
    %c7808 = arith.constant 7808 : index
    %c0_593 = arith.constant 0 : index
    %672 = vector.load %arg2[%c7808, %c0_593] : memref<7872x128xbf16, #tpu.memory_space<vmem>>, vector<28x20xbf16>
    %cst_594 = arith.constant dense<0.000000e+00> : vector<5x20xf32>
    %673 = tpu.matmul %668, %671, %cst_594 {dimension_numbers = #tpu.dot_dimension_numbers<[1], [0], [0], [1], [0, 0, 1, 1], [], []>} : vector<5x28xbf16>, vector<28x20xbf16>, vector<5x20xf32> -> vector<5x20xf32>
    %cst_595 = arith.constant dense<0.000000e+00> : vector<5x20xf32>
    %674 = tpu.matmul %670, %672, %cst_595 {dimension_numbers = #tpu.dot_dimension_numbers<[1], [0], [0], [1], [0, 0, 1, 1], [], []>} : vector<5x28xbf16>, vector<28x20xbf16>, vector<5x20xf32> -> vector<5x20xf32>
    %675 = arith.addf %673, %674 : vector<5x20xf32>
    %676 = arith.addf %666, %675 : vector<5x20xf32>
    %c2_596 = arith.constant 2 : index
    %c0_597 = arith.constant 0 : index
    %677 = vector.load %arg24[%c2_596, %c0_597] : memref<7x28xf32, #tpu.memory_space<vmem>>, vector<5x28xf32>
    %678 = arith.truncf %677 : vector<5x28xf32> to vector<5x28xbf16>
    %c2_598 = arith.constant 2 : index
    %c0_599 = arith.constant 0 : index
    %679 = vector.load %arg23[%c2_598, %c0_599] : memref<7x28xf32, #tpu.memory_space<vmem>>, vector<5x28xf32>
    %680 = arith.truncf %679 : vector<5x28xf32> to vector<5x28xbf16>
    %c7744 = arith.constant 7744 : index
    %c0_600 = arith.constant 0 : index
    %681 = vector.load %arg2[%c7744, %c0_600] : memref<7872x128xbf16, #tpu.memory_space<vmem>>, vector<28x20xbf16>
    %c7840 = arith.constant 7840 : index
    %c0_601 = arith.constant 0 : index
    %682 = vector.load %arg2[%c7840, %c0_601] : memref<7872x128xbf16, #tpu.memory_space<vmem>>, vector<28x20xbf16>
    %cst_602 = arith.constant dense<0.000000e+00> : vector<5x20xf32>
    %683 = tpu.matmul %678, %681, %cst_602 {dimension_numbers = #tpu.dot_dimension_numbers<[1], [0], [0], [1], [0, 0, 1, 1], [], []>} : vector<5x28xbf16>, vector<28x20xbf16>, vector<5x20xf32> -> vector<5x20xf32>
    %cst_603 = arith.constant dense<0.000000e+00> : vector<5x20xf32>
    %684 = tpu.matmul %680, %682, %cst_603 {dimension_numbers = #tpu.dot_dimension_numbers<[1], [0], [0], [1], [0, 0, 1, 1], [], []>} : vector<5x28xbf16>, vector<28x20xbf16>, vector<5x20xf32> -> vector<5x20xf32>
    %685 = arith.addf %683, %684 : vector<5x20xf32>
    %686 = arith.addf %676, %685 : vector<5x20xf32>
    %c416_604 = arith.constant 416 : index
    %c0_605 = arith.constant 0 : index
    %687 = vector.load %arg3[%c416_604, %c0_605] : memref<464x128xf32, #tpu.memory_space<vmem>>, vector<1x20xf32>
    %688 = vector.broadcast %687 : vector<1x20xf32> to vector<5x20xf32>
    %689 = arith.addf %686, %688 : vector<5x20xf32>
    %c424 = arith.constant 424 : index
    %c0_606 = arith.constant 0 : index
    %690 = vector.load %arg3[%c424, %c0_606] : memref<464x128xf32, #tpu.memory_space<vmem>>, vector<16x5xf32>
    %cst_607 = arith.constant dense<0.000000e+00> : vector<16x20xf32>
    %691 = tpu.matmul %690, %689, %cst_607 {dimension_numbers = #tpu.dot_dimension_numbers<[1], [0], [0], [1], [0, 0, 1, 1], [], []>} : vector<16x5xf32>, vector<5x20xf32>, vector<16x20xf32> -> vector<16x20xf32>
    %c440 = arith.constant 440 : index
    %c0_608 = arith.constant 0 : index
    %692 = vector.load %arg3[%c440, %c0_608] : memref<464x128xf32, #tpu.memory_space<vmem>>, vector<20x64xf32>
    %cst_609 = arith.constant dense<0.000000e+00> : vector<16x64xf32>
    %693 = tpu.matmul %691, %692, %cst_609 {dimension_numbers = #tpu.dot_dimension_numbers<[1], [0], [0], [1], [0, 0, 1, 1], [], []>} : vector<16x20xf32>, vector<20x64xf32>, vector<16x64xf32> -> vector<16x64xf32>
    %c0_610 = arith.constant 0 : index
    %c0_611 = arith.constant 0 : index
    %c0_612 = arith.constant 0 : index
    %694 = vector.load %arg4[%c0_610, %c0_611, %c0_612] : memref<1x16x64xf32, #tpu.memory_space<vmem>>, vector<1x16x64xf32>
    %695 = vector.shape_cast %694 : vector<1x16x64xf32> to vector<16x64xf32>
    %696 = vector.shape_cast %693 : vector<16x64xf32> to vector<1x16x64xf32>
    tpu.vector_store %arg4[%c0_610, %c0_611, %c0_612], %696 {strides = array<i32>} : memref<1x16x64xf32, #tpu.memory_space<vmem>>, vector<1x16x64xf32>,
    return
  }
  func.func @transform_0(%arg0: i32) -> (i32, i32, i32) {
    %c0_i32 = arith.constant 0 : i32
    %c0_i32_0 = arith.constant 0 : i32
    %c0_i32_1 = arith.constant 0 : i32
    return %arg0, %c0_i32, %c0_i32_0 : i32, i32, i32
  }
  func.func @transform_1(%arg0: i32) -> (i32, i32) {
    %c0_i32 = arith.constant 0 : i32
    %c0_i32_0 = arith.constant 0 : i32
    %c0_i32_1 = arith.constant 0 : i32
    return %c0_i32, %c0_i32_0 : i32, i32
  }
  func.func @transform_2(%arg0: i32) -> (i32, i32) {
    %c0_i32 = arith.constant 0 : i32
    %c0_i32_0 = arith.constant 0 : i32
    %c0_i32_1 = arith.constant 0 : i32
    return %c0_i32, %c0_i32_0 : i32, i32
  }
  func.func @transform_3(%arg0: i32) -> (i32, i32, i32) {
    %c0_i32 = arith.constant 0 : i32
    %c0_i32_0 = arith.constant 0 : i32
    %c0_i32_1 = arith.constant 0 : i32
    return %arg0, %c0_i32, %c0_i32_0 : i32, i32, i32
  }
}

</mosaic_0001>

<llo_original>
// kernel: forward.1
$region0: #{forward.1}
  #allocation0 [shape = 'u32[]', space=smem, size = 0x4, offset = 0x4, fixed_abs, tag = 'smem constant byte address 0x4 - core index']
  #allocation1 [shape = 'u32[72,128]{1,0:T(1,128)}', space=vmem, size = 0x9000, scoped, tag = 'internal scratch']
  #allocation2 [shape = 'f32[18,54]{1,0:T(8,128)}', space=vmem, size = 0x3000, scoped, tag = 'scratch operand']
  #allocation3 [shape = 'f32[11,88]{1,0:T(8,128)}', space=vmem, size = 0x2000, scoped, tag = 'scratch operand']
  #allocation4 [shape = 'f32[7,84]{1,0:T(8,128)}', space=vmem, size = 0x1000, scoped, tag = 'scratch operand']
  #allocation5 [shape = 'f32[7,84]{1,0:T(8,128)}', space=vmem, size = 0x1000, scoped, tag = 'scratch operand']
  #allocation6 [shape = 'f32[7,84]{1,0:T(8,128)}', space=vmem, size = 0x1000, scoped, tag = 'scratch operand']
  #allocation7 [shape = 'f32[7,84]{1,0:T(8,128)}', space=vmem, size = 0x1000, scoped, tag = 'scratch operand']
  #allocation8 [shape = 'f32[7,84]{1,0:T(8,128)}', space=vmem, size = 0x1000, scoped, tag = 'scratch operand']
  #allocation9 [shape = 'f32[5,120]{1,0:T(8,128)}', space=vmem, size = 0x1000, scoped, tag = 'scratch operand']
  #allocation10 [shape = 'f32[5,120]{1,0:T(8,128)}', space=vmem, size = 0x1000, scoped, tag = 'scratch operand']
  #allocation11 [shape = 'f32[5,120]{1,0:T(8,128)}', space=vmem, size = 0x1000, scoped, tag = 'scratch operand']
  #allocation12 [shape = 'f32[5,120]{1,0:T(8,128)}', space=vmem, size = 0x1000, scoped, tag = 'scratch operand']
  #allocation13 [shape = 'f32[4,128]{1,0:T(4,128)}', space=vmem, size = 0x800, scoped, tag = 'scratch operand']
  #allocation14 [shape = 'f32[4,128]{1,0:T(4,128)}', space=vmem, size = 0x800, scoped, tag = 'scratch operand']
  #allocation15 [shape = 'f32[4,128]{1,0:T(4,128)}', space=vmem, size = 0x800, scoped, tag = 'scratch operand']
  #allocation16 [shape = 'f32[4,128]{1,0:T(4,128)}', space=vmem, size = 0x800, scoped, tag = 'scratch operand']
  #allocation17 [shape = 'f32[4,128]{1,0:T(4,128)}', space=vmem, size = 0x800, scoped, tag = 'scratch operand']
  #allocation18 [shape = 'f32[4,128]{1,0:T(4,128)}', space=vmem, size = 0x800, scoped, tag = 'scratch operand']
  #allocation19 [shape = 'f32[10,480]{1,0:T(8,128)}', space=vmem, size = 0x8000, scoped, tag = 'scratch operand']
  #allocation20 [shape = 'f32[7,28]{1,0:T(8,128)}', space=vmem, size = 0x1000, scoped, tag = 'scratch operand']
  #allocation21 [shape = 'f32[7,28]{1,0:T(8,128)}', space=vmem, size = 0x1000, scoped, tag = 'scratch operand']
  %s0 = inlined_call_operand.vmem [shape: f32[2,16,48], index: 0, kind: input, shape index: {}]
  %s1 = inlined_call_operand.hbm [shape: bf16[7872,128], index: 1, kind: input, shape index: {}]
  %s2 = inlined_call_operand.hbm [shape: f32[464,128], index: 2, kind: input, shape index: {}]
  %s3 = inlined_call_operand.vmem [shape: f32[2,16,64], index: 3, kind: output, shape index: {}]
  %s4 = sld [smem:[#allocation0]]
  $region53: #{forward.1} parent=0
    _
  %s6 = ssub.s32 1, %s4
  %s7 = scalar_select 0, %s6, %s4
  $region1: #{forward.1} parent=0
    #allocation22 [shape = 'u8[2015232]{0}', space=vmem, size = 0x1ec000, scoped, tag = 'input window, operand 1, single buffered']
    #allocation23 [shape = 's32[2]{0}', space=sflag, size = 0x8, scoped, tag = 'scoped memory for forward.1']
    #allocation24 [shape = 'u8[237568]{0}', space=vmem, size = 0x3a000, scoped, tag = 'input window, operand 2, single buffered']
    #allocation25 [shape = 's32[1]{0}', space=sflag, size = 0x4, scoped, tag = 'scoped memory for forward.1']
    %8 = vsyncpa [#allocation23], 0
    %9 = vsyncpa [#allocation25], 0
    loop: start=0, step=1, limit=4
    $region2: #{forward.1} parent=1 // loop_pre_header
      _
    $region3: #{forward.1} parent=1 // loop_header
      %s11 = sphi 0, %s15
      %p12 = scmp.ge.s32.totalorder %s11, 4
      %s21 = sphi 0, %s23
      %s24 = sphi 0, %s21
      %s25 = sphi 0, %s24
      %s41 = sphi 0, %s25
      %s45 = sphi 0, %s45
      %s47 = sphi 0, %s45
      %s48 = sphi 0, %s47
      %s62 = sphi 0, %s48
      %s66 = sphi 0, %s66
      %s68 = sphi 0, %s66
      %s69 = sphi 0, %s68
      %s83 = sphi 0, %s69
      %s89 = sphi 0, %s91
      %s92 = sphi 0, %s89
      %s93 = sphi 0, %s92
      %s109 = sphi 0, %s93
    $region4: #{forward.1} parent=1 // loop_header_branch
      %14 = sbr.rel (%p12) target = $region8
    $region5: #{forward.1} parent=1 // loop_body
      %s16 = ssub.s32 %s11, 1
      %s17 = ssub.s32 %s11, 2
      %s18 = sadd.s32 %s11, 1
      %s19 = ssub.s32 %s11, %s18
      %p20 = scmp.eq.s32.totalorder %s19, 0
      %s22 = sadd.s32 %s21, 1
      %s23 = scalar_select %p20, %s21, %s22
      %p26 = pneg %p20
      %p27 = scmp.eq.s32.totalorder %s11, 1
      %p28 = por %p26, %p27
      %p29 = scmp.ne.s32.totalorder %s21, %s24
      %p30 = scmp.eq.s32.totalorder %s11, 0
      %p31 = por %p29, %p30
      %p32 = scmp.ne.s32.totalorder %s21, %s24
      %p33 = scmp.eq.s32.totalorder %s16, 1
      %p34 = por %p32, %p33
      %p35 = scmp.ne.s32.totalorder %s24, %s25
      %p36 = scmp.eq.s32.totalorder %s16, 0
      %p37 = por %p35, %p36
      %p38 = scmp.ne.s32.totalorder %s24, %s25
      %p39 = scmp.eq.s32.totalorder %s17, 1
      %p40 = por %p38, %p39
      %p42 = scmp.ne.s32.totalorder %s25, %s41
      %p43 = scmp.eq.s32.totalorder %s17, 0
      %p44 = por %p42, %p43
      %s46 = sadd.s32 %s45, 1
      %p49 = scmp.eq.s32.totalorder %s11, 1
      %p50 = scmp.ne.s32.totalorder %s45, %s47
      %p51 = scmp.eq.s32.totalorder %s11, 0
      %p52 = por %p50, %p51
      %p53 = scmp.ne.s32.totalorder %s45, %s47
      %p54 = scmp.eq.s32.totalorder %s16, 1
      %p55 = por %p53, %p54
      %p56 = scmp.ne.s32.totalorder %s47, %s48
      %p57 = scmp.eq.s32.totalorder %s16, 0
      %p58 = por %p56, %p57
      %p59 = scmp.ne.s32.totalorder %s47, %s48
      %p60 = scmp.eq.s32.totalorder %s17, 1
      %p61 = por %p59, %p60
      %p63 = scmp.ne.s32.totalorder %s48, %s62
      %p64 = scmp.eq.s32.totalorder %s17, 0
      %p65 = por %p63, %p64
      %s67 = sadd.s32 %s66, 1
      %p70 = scmp.eq.s32.totalorder %s11, 1
      %p71 = scmp.ne.s32.totalorder %s66, %s68
      %p72 = scmp.eq.s32.totalorder %s11, 0
      %p73 = por %p71, %p72
      %p74 = scmp.ne.s32.totalorder %s66, %s68
      %p75 = scmp.eq.s32.totalorder %s16, 1
      %p76 = por %p74, %p75
      %p77 = scmp.ne.s32.totalorder %s68, %s69
      %p78 = scmp.eq.s32.totalorder %s16, 0
      %p79 = por %p77, %p78
      %p80 = scmp.ne.s32.totalorder %s68, %s69
      %p81 = scmp.eq.s32.totalorder %s17, 1
      %p82 = por %p80, %p81
      %p84 = scmp.ne.s32.totalorder %s69, %s83
      %p85 = scmp.eq.s32.totalorder %s17, 0
      %p86 = por %p84, %p85
      %s87 = ssub.s32 %s11, %s18
      %p88 = scmp.eq.s32.totalorder %s87, 0
      %s90 = sadd.s32 %s89, 1
      %s91 = scalar_select %p88, %s89, %s90
      %p94 = pneg %p88
      %p95 = scmp.eq.s32.totalorder %s11, 1
      %p96 = por %p94, %p95
      %p97 = scmp.ne.s32.totalorder %s89, %s92
      %p98 = scmp.eq.s32.totalorder %s11, 0
      %p99 = por %p97, %p98
      %p100 = scmp.ne.s32.totalorder %s89, %s92
      %p101 = scmp.eq.s32.totalorder %s16, 1
      %p102 = por %p100, %p101
      %p103 = scmp.ne.s32.totalorder %s92, %s93
      %p104 = scmp.eq.s32.totalorder %s16, 0
      %p105 = por %p103, %p104
      %p106 = scmp.ne.s32.totalorder %s92, %s93
      %p107 = scmp.eq.s32.totalorder %s17, 1
      %p108 = por %p106, %p107
      %p110 = scmp.ne.s32.totalorder %s93, %s109
      %p111 = scmp.eq.s32.totalorder %s17, 0
      %p112 = por %p110, %p111
      %p113 = scmp.le.s32.totalorder 1, %s11
      %p114 = scmp.lt.s32.totalorder %s11, 3
      %p115 = pnand %p113, %p114
      %p116 = pneg %p115
      // Predicated region
      $region9: #{forward.1} parent=5 // pred_check
        _
      $region10: #{forward.1} parent=5 // pred_check_branch
        %118 = sbr.rel (%p115) target = $region12
      $region11: #{forward.1} parent=5 // pred_region
        %s119 = ssub.s32 %s11, 1
        // Predicated region
        $region13: #{forward.1} parent=11 // pred_check
          %p120 = pneg %p58
        $region14: #{forward.1} parent=11 // pred_check_branch
          %122 = sbr.rel (%p120) target = $region16
        $region15: #{forward.1} parent=11 // pred_region
          %124 = vsyncadd [#allocation23], 0
          %s125 = sshll.u32 %s1, 4
          %s126 = int_to_ptr.hbm [resolvable:$true] %s125
          %s127 = sshll.u32 [#allocation22], 4
          %s128 = int_to_ptr.vmem [resolvable:$true] %s127
          %133 = dma.hbm_to_vmem [thread:$0]  %s126, 62976, %s128, [#allocation23], 64, 64, 4
        $region16: #{forward.1} parent=11 // pred_fallthru
          _
        // Predicated region
        $region17: #{forward.1} parent=11 // pred_check
          %p134 = pneg %p79
        $region18: #{forward.1} parent=11 // pred_check_branch
          %136 = sbr.rel (%p134) target = $region20
        $region19: #{forward.1} parent=11 // pred_region
          %138 = vsyncadd [#allocation25], 0
          %s139 = sshll.u32 %s2, 4
          %s140 = int_to_ptr.hbm [resolvable:$true] %s139
          %s141 = sshll.u32 [#allocation24], 4
          %s142 = int_to_ptr.vmem [resolvable:$true] %s141
          %147 = dma.hbm_to_vmem [thread:$0]  %s140, 7424, %s142, [#allocation25], 128, 128, 8
        $region20: #{forward.1} parent=11 // pred_fallthru
          _
      $region12: #{forward.1} parent=5 // pred_fallthru
        _
      %p148 = scmp.lt.s32.totalorder %s11, 2
      // Predicated region
      $region21: #{forward.1} parent=5 // pred_check
        %p149 = pneg %p148
      $region22: #{forward.1} parent=5 // pred_check_branch
        %151 = sbr.rel (%p149) target = $region24
      $region23: #{forward.1} parent=5 // pred_region
        // Predicated region
        $region25: #{forward.1} parent=23 // pred_check
          %p152 = pneg %p31
        $region26: #{forward.1} parent=23 // pred_check_branch
          %154 = sbr.rel (%p152) target = $region28
        $region27: #{forward.1} parent=23 // pred_region
          %p155 = scmp.lt.s32.totalorder %s11, 1
          %s156 = scalar_select %p155, %s11, 1
          %s157 = smul.addr %s156, 2
          %s158 = smul.addr %s157, 8
          %s159 = scalar_lea.vmem %s0, %s158
        $region28: #{forward.1} parent=23 // pred_fallthru
          _
      $region24: #{forward.1} parent=5 // pred_fallthru
        _
      %p160 = scmp.le.s32.totalorder 1, %s11
      %p161 = scmp.lt.s32.totalorder %s11, 3
      %p162 = pnand %p160, %p161
      %p163 = pneg %p162
      // Predicated region
      $region29: #{forward.1} parent=5 // pred_check
        _
      $region30: #{forward.1} parent=5 // pred_check_branch
        %165 = sbr.rel (%p162) target = $region32
      $region31: #{forward.1} parent=5 // pred_region
        %s166 = ssub.s32 %s11, 1
        // Predicated region
        $region33: #{forward.1} parent=31 // pred_check
          %p167 = pneg %p58
        $region34: #{forward.1} parent=31 // pred_check_branch
          %169 = sbr.rel (%p167) target = $region36
        $region35: #{forward.1} parent=31 // pred_region
          %171 = dma.done [#allocation23], 62976
        $region36: #{forward.1} parent=31 // pred_fallthru
          _
        // Predicated region
        $region37: #{forward.1} parent=31 // pred_check
          %p172 = pneg %p79
        $region38: #{forward.1} parent=31 // pred_check_branch
          %174 = sbr.rel (%p172) target = $region40
        $region39: #{forward.1} parent=31 // pred_region
          %176 = dma.done [#allocation25], 7424
        $region40: #{forward.1} parent=31 // pred_fallthru
          _
        %p177 = scmp.lt.s32.totalorder %s16, 1
        %s178 = scalar_select %p177, %s16, 1
        %s179 = smul.addr %s178, 2
        %s180 = smul.addr %s179, 8
        %s181 = scalar_lea.vmem %s0, %s180
        %p182 = pneg %p37
        %p183 = pneg %p34
        %p184 = pneg %p58
        %p185 = pneg %p55
        %p186 = pneg %p79
        %p187 = pneg %p76
        %p188 = pneg %p105
        %p189 = pneg %p102
        %p190 = scmp.lt.s32.totalorder %s16, 1
        %s191 = scalar_select %p190, %s16, 1
        %s192 = smul.addr %s191, 2
        %s193 = smul.addr %s192, 8
        %s194 = scalar_lea.vmem %s3, %s193
        %p195 = scmp.lt.s32.totalorder %s16, 1
        %s196 = scalar_select %p195, %s16, 1
        %s197 = smul.addr %s196, 2
        %s198 = smul.addr %s197, 8
        %s199 = scalar_lea.vmem %s0, %s198
        %p200 = scmp.lt.s32.totalorder %s16, 1
        %s201 = scalar_select %p200, %s16, 1
        %s202 = smul.addr %s201, 2
        %s203 = smul.addr %s202, 8
        %s204 = scalar_lea.vmem %s3, %s203
        %vm206 = vcmask 434176
        %207 = vst.msk [vmem:[#allocation2] sm:$0x1] %vm206, 0.0
        %208 = vst.msk [vmem:[#allocation2 + $0x11] sm:$0x1] %vm206, 0.0
        %vm209 = vcmask 23552
        %210 = vst.msk [vmem:[#allocation2 + $0x1] sm:$0xff] %vm209, 0.0
        %211 = vst.msk [vmem:[#allocation2 + $0x9] sm:$0xff] %vm209, 0.0
        %vm212 = vcmask 441752
        %213 = vst.msk [vmem:[#allocation2 + $0x1] sm:$0xff] %vm212, 0.0
        %214 = vst.msk [vmem:[#allocation2 + $0x9] sm:$0xff] %vm212, 0.0
        %vm215 = vcmask 712704
        %216 = vst.msk [vmem:[#allocation3] sm:$0x1] %vm215, 0.0
        %217 = vst.msk [vmem:[#allocation3 + $0xa] sm:$0x1] %vm215, 0.0
        %vm218 = vcmask 64512
        %219 = vst.msk [vmem:[#allocation3 + $0x1] sm:$0xff] %vm218, 0.0
        %vm220 = vcmask 57344
        %221 = vst.msk [vmem:[#allocation3 + $0x9] sm:$0x1] %vm220, 0.0
        %vm222 = vcmask 720512
        %223 = vst.msk [vmem:[#allocation3 + $0x1] sm:$0xff] %vm222, 0.0
        %vm224 = vcmask 713344
        %225 = vst.msk [vmem:[#allocation3 + $0x9] sm:$0x1] %vm224, 0.0
        %vm226 = vcmask 679936
        %227 = vst.msk [vmem:[#allocation4] sm:$0x1] %vm226, 0.0
        %228 = vst.msk [vmem:[#allocation4 + $0x6] sm:$0x1] %vm226, 0.0
        %vm229 = vcmask 94208
        %230 = vst.msk [vmem:[#allocation4 + $0x1] sm:$0x1f] %vm229, 0.0
        %vm231 = vcmask 684608
        %232 = vst.msk [vmem:[#allocation4 + $0x1] sm:$0x1f] %vm231, 0.0
        %233 = vst.msk [vmem:[#allocation5] sm:$0x1] %vm226, 0.0
        %234 = vst.msk [vmem:[#allocation5 + $0x6] sm:$0x1] %vm226, 0.0
        %235 = vst.msk [vmem:[#allocation5 + $0x1] sm:$0x1f] %vm229, 0.0
        %236 = vst.msk [vmem:[#allocation5 + $0x1] sm:$0x1f] %vm231, 0.0
        %237 = vst.msk [vmem:[#allocation6] sm:$0x1] %vm226, 0.0
        %238 = vst.msk [vmem:[#allocation6 + $0x6] sm:$0x1] %vm226, 0.0
        %239 = vst.msk [vmem:[#allocation6 + $0x1] sm:$0x1f] %vm229, 0.0
        %240 = vst.msk [vmem:[#allocation6 + $0x1] sm:$0x1f] %vm231, 0.0
        %241 = vst.msk [vmem:[#allocation7] sm:$0x1] %vm226, 0.0
        %242 = vst.msk [vmem:[#allocation7 + $0x6] sm:$0x1] %vm226, 0.0
        %243 = vst.msk [vmem:[#allocation7 + $0x1] sm:$0x1f] %vm229, 0.0
        %244 = vst.msk [vmem:[#allocation7 + $0x1] sm:$0x1f] %vm231, 0.0
        %245 = vst.msk [vmem:[#allocation8] sm:$0x1] %vm226, 0.0
        %246 = vst.msk [vmem:[#allocation8 + $0x6] sm:$0x1] %vm226, 0.0
        %247 = vst.msk [vmem:[#allocation8 + $0x1] sm:$0x1f] %vm229, 0.0
        %248 = vst.msk [vmem:[#allocation8 + $0x1] sm:$0x1f] %vm231, 0.0
        %vm249 = vcmask 974848
        %250 = vst.msk [vmem:[#allocation9] sm:$0x1] %vm249, 0.0
        %251 = vst.msk [vmem:[#allocation9 + $0x4] sm:$0x1] %vm249, 0.0
        %vm252 = vcmask 190464
        %253 = vst.msk [vmem:[#allocation9 + $0x1] sm:$0x7] %vm252, 0.0
        %vm254 = vcmask 977664
        %255 = vst.msk [vmem:[#allocation9 + $0x1] sm:$0x7] %vm254, 0.0
        %256 = vst.msk [vmem:[#allocation10] sm:$0x1] %vm249, 0.0
        %257 = vst.msk [vmem:[#allocation10 + $0x4] sm:$0x1] %vm249, 0.0
        %258 = vst.msk [vmem:[#allocation10 + $0x1] sm:$0x7] %vm252, 0.0
        %259 = vst.msk [vmem:[#allocation10 + $0x1] sm:$0x7] %vm254, 0.0
        %260 = vst.msk [vmem:[#allocation11] sm:$0x1] %vm249, 0.0
        %261 = vst.msk [vmem:[#allocation11 + $0x4] sm:$0x1] %vm249, 0.0
        %262 = vst.msk [vmem:[#allocation11 + $0x1] sm:$0x7] %vm252, 0.0
        %263 = vst.msk [vmem:[#allocation11 + $0x1] sm:$0x7] %vm254, 0.0
        %264 = vst.msk [vmem:[#allocation12] sm:$0x1] %vm249, 0.0
        %265 = vst.msk [vmem:[#allocation12 + $0x4] sm:$0x1] %vm249, 0.0
        %266 = vst.msk [vmem:[#allocation12 + $0x1] sm:$0x7] %vm252, 0.0
        %267 = vst.msk [vmem:[#allocation12 + $0x1] sm:$0x7] %vm254, 0.0
        %268 = vst [vmem:[#allocation13] sm:$0x1] 0.0
        %269 = vst [vmem:[#allocation13 + $0x3] sm:$0x1] 0.0
        %vm270 = vcmask 254976
        %271 = vst.msk [vmem:[#allocation13 + $0x1] sm:$0x3] %vm270, 0.0
        %vm272 = vcmask 1042176
        %273 = vst.msk [vmem:[#allocation13 + $0x1] sm:$0x3] %vm272, 0.0
        %274 = vst [vmem:[#allocation14] sm:$0x1] 0.0
        %275 = vst [vmem:[#allocation14 + $0x3] sm:$0x1] 0.0
        %276 = vst.msk [vmem:[#allocation14 + $0x1] sm:$0x3] %vm270, 0.0
        %277 = vst.msk [vmem:[#allocation14 + $0x1] sm:$0x3] %vm272, 0.0
        %278 = vst [vmem:[#allocation15] sm:$0x1] 0.0
        %279 = vst [vmem:[#allocation15 + $0x3] sm:$0x1] 0.0
        %280 = vst.msk [vmem:[#allocation15 + $0x1] sm:$0x3] %vm270, 0.0
        %281 = vst.msk [vmem:[#allocation15 + $0x1] sm:$0x3] %vm272, 0.0
        %282 = vst [vmem:[#allocation16] sm:$0x1] 0.0
        %283 = vst [vmem:[#allocation16 + $0x3] sm:$0x1] 0.0
        %284 = vst.msk [vmem:[#allocation16 + $0x1] sm:$0x3] %vm270, 0.0
        %285 = vst.msk [vmem:[#allocation16 + $0x1] sm:$0x3] %vm272, 0.0
        %286 = vst [vmem:[#allocation17] sm:$0x1] 0.0
        %287 = vst [vmem:[#allocation17 + $0x3] sm:$0x1] 0.0
        %288 = vst.msk [vmem:[#allocation17 + $0x1] sm:$0x3] %vm270, 0.0
        %289 = vst.msk [vmem:[#allocation17 + $0x1] sm:$0x3] %vm272, 0.0
        %290 = vst [vmem:[#allocation18] sm:$0x1] 0.0
        %291 = vst [vmem:[#allocation18 + $0x3] sm:$0x1] 0.0
        %292 = vst.msk [vmem:[#allocation18 + $0x1] sm:$0x3] %vm270, 0.0
        %293 = vst.msk [vmem:[#allocation18 + $0x1] sm:$0x3] %vm272, 0.0
        %294 = vst [vmem:[#allocation19] sm:$0xf] 0.0
        %295 = vst [vmem:[#allocation19 + $0x8] sm:$0xf] 0.0
        %296 = vst [vmem:[#allocation19 + $0x10] sm:$0xf] 0.0
        %vm297 = vcmask 781312
        %298 = vst.msk [vmem:[#allocation19 + $0x18] sm:$0xf] %vm297, 0.0
        %299 = vst [vmem:[#allocation19] sm:$0xc0] 0.0
        %300 = vst [vmem:[#allocation19 + $0x8] sm:$0xc0] 0.0
        %301 = vst [vmem:[#allocation19 + $0x10] sm:$0xc0] 0.0
        %vm302 = vcmask 785414
        %303 = vst.msk [vmem:[#allocation19 + $0x18] sm:$0xc0] %vm302, 0.0
        %304 = vst [vmem:[#allocation19 + $0x20] sm:$0x3] 0.0
        %305 = vst [vmem:[#allocation19 + $0x28] sm:$0x3] 0.0
        %306 = vst [vmem:[#allocation19 + $0x30] sm:$0x3] 0.0
        %vm307 = vcmask 779264
        %308 = vst.msk [vmem:[#allocation19 + $0x38] sm:$0x3] %vm307, 0.0
        %309 = vst [vmem:[#allocation19] sm:$0x30] 0.0
        %vm310 = vcmask 521220
        %311 = vst.msk [vmem:[#allocation19 + $0x8] sm:$0x30] %vm310, 0.0
        %vm312 = vcmask 1045764
        %313 = vst.msk [vmem:[#allocation19 + $0x10] sm:$0x30] %vm312, 0.0
        %vm314 = vcmask 783364
        %315 = vst.msk [vmem:[#allocation19 + $0x18] sm:$0x30] %vm314, 0.0
        %vm316 = vcmask 221184
        %317 = vst.msk [vmem:[#allocation20] sm:$0x1] %vm316, 0.0
        %318 = vst.msk [vmem:[#allocation20 + $0x6] sm:$0x1] %vm316, 0.0
        %vm319 = vcmask 28672
        %320 = vst.msk [vmem:[#allocation20 + $0x1] sm:$0x1f] %vm319, 0.0
        %vm321 = vcmask 225472
        %322 = vst.msk [vmem:[#allocation20 + $0x1] sm:$0x1f] %vm321, 0.0
        %323 = vst.msk [vmem:[#allocation21] sm:$0x1] %vm316, 0.0
        %324 = vst.msk [vmem:[#allocation21 + $0x6] sm:$0x1] %vm316, 0.0
        %325 = vst.msk [vmem:[#allocation21 + $0x1] sm:$0x1f] %vm319, 0.0
        %326 = vst.msk [vmem:[#allocation21 + $0x1] sm:$0x1f] %vm321, 0.0
        %v327 = vld [vmem:[%s199] sm:$0xff]
        %v328 = vld [vmem:[%s199 + $0x8] sm:$0xff]
        %331 = vrot.lane.b32.xlu0 %v327, 3
        %v332 = vpop.permute.xlu0 %331
        %333 = vrot.lane.b32.xlu0 %v328, 3
        %v334 = vpop.permute.xlu0 %333
        %vm337 = vcmask 416792
        %338 = vst.msk [vmem:[#allocation2 + $0x1] sm:$0xff] %vm337, %v332
        %339 = vst.msk [vmem:[#allocation2 + $0x9] sm:$0xff] %vm337, %v334
        %v340 = vld [vmem:[#allocation2] sm:$0xff]
        %v341 = vld [vmem:[#allocation2 + $0x8] sm:$0xff]
        %v342 = vld [vmem:[#allocation2 + $0x10] sm:$0x1]
        %v343 = vpack.c.bf16 %v341, %v340
        %v344 = vpack.c.bf16 %v342, %v342
        %v345 = vld [vmem:[#allocation22] sm:$0xf]
        %v346 = vld [vmem:[#allocation22 + $0x4] sm:$0xf]
        %v347 = vld [vmem:[#allocation22 + $0x8] sm:$0xf]
        %v348 = vld [vmem:[#allocation22 + $0xc] sm:$0xf]
        %v349 = vld [vmem:[#allocation22 + $0x10] sm:$0xf]
        %v350 = vld [vmem:[#allocation22 + $0x14] sm:$0xf]
        %v351 = vld [vmem:[#allocation22 + $0x18] sm:$0x7]
        %v352 = vld [vmem:[#allocation2 + $0x1] sm:$0xff]
        %v353 = vld [vmem:[#allocation2 + $0x9] sm:$0xff]
        %v354 = vld [vmem:[#allocation2 + $0x11] sm:$0x1]
        %v355 = vpack.c.bf16 %v353, %v352
        %v356 = vpack.c.bf16 %v354, %v354
        %v357 = vld [vmem:[#allocation22 + $0x20] sm:$0xf]
        %v358 = vld [vmem:[#allocation22 + $0x24] sm:$0xf]
        %v359 = vld [vmem:[#allocation22 + $0x28] sm:$0xf]
        %v360 = vld [vmem:[#allocation22 + $0x2c] sm:$0xf]
        %v361 = vld [vmem:[#allocation22 + $0x30] sm:$0xf]
        %v362 = vld [vmem:[#allocation22 + $0x34] sm:$0xf]
        %v363 = vld [vmem:[#allocation22 + $0x38] sm:$0x7]
        %v371 = vunpack.c.l.b16 %v357
        %v372 = vunpack.c.l.b16 %v358
        %v373 = vunpack.c.l.b16 %v359
        %v374 = vunpack.c.l.b16 %v360
        %v375 = vunpack.c.l.b16 %v361
        %v376 = vunpack.c.l.b16 %v362
        %v377 = vunpack.c.l.b16 %v363
        %v378 = vpack.c.b16 %v372, %v371
        %v379 = vpack.c.b16 %v374, %v373
        %v380 = vpack.c.b16 %v376, %v375
        %v381 = vpack.c.b16 %v377, %v377
        %vm385 = vcmask 441344
        %v387 = vsel %vm385, %v355, 0
        %v390 = vsel %vm385, %v356, 0
        %vm392 = vcmask 1042432
        %v394 = vsel %vm392, %v381, 0
        %396 = vmatpush.bf16.msra.mxu0 0
        %397 = vmatpush.bf16.msra.mxu0 0
        %398 = vmatpush.bf16.msra.mxu0 0
        %399 = vmatpush.bf16.msra.mxu0 0
        %400 = vmatpush.bf16.msra.mxu0 %v394
        %401 = vmatpush.bf16.msra.mxu0 %v380
        %402 = vmatpush.bf16.msra.mxu0 %v379
        %403 = vmatpush.bf16.msra.mxu0 %v378
        %404 = vmatmul.bf16.gmra.mxu0 %v387
        %v405 = vpop.f32.mrf.mxu0
        %v406 = vadd.f32 0.0, %v405
        %v407 = vpop.f32.mrf.mxu0
        %v408 = vadd.f32 0.0, %v407
        %409 = vmatmul.bf16.gmra.mxu0 %v390
        %v410 = vpop.f32.mrf.mxu0
        %v411 = vadd.f32 0.0, %v410
        %v412 = vpop.f32.mrf.mxu0
        %413 = vdwg.mxu0
        %v421 = vunpack.c.l.b16 %v345
        %v422 = vunpack.c.l.b16 %v346
        %v423 = vunpack.c.l.b16 %v347
        %v424 = vunpack.c.l.b16 %v348
        %v425 = vunpack.c.l.b16 %v349
        %v426 = vunpack.c.l.b16 %v350
        %v427 = vunpack.c.l.b16 %v351
        %v428 = vpack.c.b16 %v422, %v421
        %v429 = vpack.c.b16 %v424, %v423
        %v430 = vpack.c.b16 %v426, %v425
        %v431 = vpack.c.b16 %v427, %v427
        %v436 = vsel %vm385, %v343, 0
        %v439 = vsel %vm385, %v344, 0
        %v442 = vsel %vm392, %v431, 0
        %444 = vmatpush.bf16.msra.mxu0 0
        %445 = vmatpush.bf16.msra.mxu0 0
        %446 = vmatpush.bf16.msra.mxu0 0
        %447 = vmatpush.bf16.msra.mxu0 0
        %448 = vmatpush.bf16.msra.mxu0 %v442
        %449 = vmatpush.bf16.msra.mxu0 %v430
        %450 = vmatpush.bf16.msra.mxu0 %v429
        %451 = vmatpush.bf16.msra.mxu0 %v428
        %452 = vmatmul.bf16.gmra.mxu0 %v436
        %v453 = vpop.f32.mrf.mxu0
        %v454 = vadd.f32 %v406, %v453
        %v455 = vpop.f32.mrf.mxu0
        %v456 = vadd.f32 %v408, %v455
        %457 = vmatmul.bf16.gmra.mxu0 %v439
        %v458 = vpop.f32.mrf.mxu0
        %v459 = vadd.f32 %v411, %v458
        %v460 = vpop.f32.mrf.mxu0
        %461 = vdwg.mxu0
        %v462 = vld [vmem:[#allocation24 + $0x10] sm:$0xff]
        %v463 = vld [vmem:[#allocation24 + $0x18] sm:$0x1]
        %v464 = vld [vmem:[#allocation24] sm:$0x1]
        %v465 = vperm.slane %v464, 0
        %vm466 = vcmask 138240
        %v468 = vsel %vm466, %v462, 0
        %v471 = vsel %vm466, %v463, 0
        %vm473 = vcmask 1040384
        %v475 = vsel %vm473, %v459, 0
        %477 = vmatpush.msra.mxu0 0.0
        %478 = vmatpush.msra.mxu0 0.0
        %479 = vmatpush.msra.mxu0 0.0
        %480 = vmatpush.msra.mxu0 0.0
        %481 = vmatpush.msra.mxu0 0.0
        %482 = vmatpush.msra.mxu0 0.0
        %483 = vmatpush.msra.mxu0 0.0
        %484 = vmatpush.msra.mxu0 0.0
        %485 = vmatpush.msra.mxu0 0.0
        %486 = vmatpush.msra.mxu0 0.0
        %487 = vmatpush.msra.mxu0 0.0
        %488 = vmatpush.msra.mxu0 0.0
        %489 = vmatpush.msra.mxu0 0.0
        %490 = vmatpush.msra.mxu0 %v475
        %491 = vmatpush.msra.mxu0 %v456
        %492 = vmatpush.msra.mxu0 %v454
        %493 = vmatmul.f32.gmra.mxu0 %v468
        %v494 = vpop.f32.mrf.mxu0
        %v495 = vadd.f32 %v465, %v494
        %496 = vmatmul.f32.gmra.mxu0 %v471
        %v497 = vpop.f32.mrf.mxu0
        %v498 = vadd.f32 %v465, %v497
        %499 = vdwg.mxu0
        %v500 = vld [vmem:[#allocation24 + $0x8] sm:$0x1]
        %vm501 = vcmp.gt.f32.partialorder %v495, 0.0
        %vm502 = vcmp.gt.f32.partialorder %v498, 0.0
        %v503 = vperm.slane %v500, 0
        %v504 = vmul.f32 %v503, %v495
        %v505 = vmul.f32 %v503, %v498
        %v506 = vsel %vm501, %v495, %v504
        %v507 = vsel %vm502, %v498, %v505
        %510 = vrot.lane.b32.xlu0 %v506, 8
        %v511 = vpop.permute.xlu0 %510
        %512 = vrot.lane.b32.xlu0 %v507, 8
        %v513 = vpop.permute.xlu0 %512
        %vm516 = vcmask 654400
        %517 = vst.msk [vmem:[#allocation3 + $0x1] sm:$0xff] %vm516, %v511
        %vm518 = vcmask 647232
        %519 = vst.msk [vmem:[#allocation3 + $0x9] sm:$0x1] %vm518, %v513
        %v520 = vld [vmem:[#allocation3] sm:$0xff]
        %v521 = vld [vmem:[#allocation3 + $0x8] sm:$0x1]
        %v522 = vpack.c.bf16 %v521, %v520
        %v523 = vld [vmem:[#allocation22 + $0x40] sm:$0xf]
        %v524 = vld [vmem:[#allocation22 + $0x44] sm:$0xf]
        %v525 = vld [vmem:[#allocation22 + $0x48] sm:$0xf]
        %v526 = vld [vmem:[#allocation22 + $0x4c] sm:$0xf]
        %v527 = vld [vmem:[#allocation22 + $0x50] sm:$0xf]
        %v528 = vld [vmem:[#allocation22 + $0x54] sm:$0xf]
        %v529 = vld [vmem:[#allocation22 + $0x58] sm:$0xf]
        %v530 = vld [vmem:[#allocation22 + $0x5c] sm:$0xf]
        %v531 = vld [vmem:[#allocation22 + $0x60] sm:$0xf]
        %v532 = vld [vmem:[#allocation22 + $0x64] sm:$0xf]
        %v533 = vld [vmem:[#allocation22 + $0x68] sm:$0xf]
        %v534 = vld [vmem:[#allocation3 + $0x1] sm:$0xff]
        %v535 = vld [vmem:[#allocation3 + $0x9] sm:$0x1]
        %v536 = vpack.c.bf16 %v535, %v534
        %v537 = vld [vmem:[#allocation22 + $0x70] sm:$0xf]
        %v538 = vld [vmem:[#allocation22 + $0x74] sm:$0xf]
        %v539 = vld [vmem:[#allocation22 + $0x78] sm:$0xf]
        %v540 = vld [vmem:[#allocation22 + $0x7c] sm:$0xf]
        %v541 = vld [vmem:[#allocation22 + $0x80] sm:$0xf]
        %v542 = vld [vmem:[#allocation22 + $0x84] sm:$0xf]
        %v543 = vld [vmem:[#allocation22 + $0x88] sm:$0xf]
        %v544 = vld [vmem:[#allocation22 + $0x8c] sm:$0xf]
        %v545 = vld [vmem:[#allocation22 + $0x90] sm:$0xf]
        %v546 = vld [vmem:[#allocation22 + $0x94] sm:$0xf]
        %v547 = vld [vmem:[#allocation22 + $0x98] sm:$0xf]
        %v559 = vunpack.c.l.b16 %v537
        %v560 = vunpack.c.l.b16 %v538
        %v561 = vunpack.c.l.b16 %v539
        %v562 = vunpack.c.l.b16 %v540
        %v563 = vunpack.c.l.b16 %v541
        %v564 = vunpack.c.l.b16 %v542
        %v565 = vunpack.c.l.b16 %v543
        %v566 = vunpack.c.l.b16 %v544
        %v567 = vunpack.c.l.b16 %v545
        %v568 = vunpack.c.l.b16 %v546
        %v569 = vunpack.c.l.b16 %v547
        %v570 = vpack.c.b16 %v560, %v559
        %v571 = vpack.c.b16 %v562, %v561
        %v572 = vpack.c.b16 %v564, %v563
        %v573 = vpack.c.b16 %v566, %v565
        %v574 = vpack.c.b16 %v568, %v567
        %v575 = vpack.c.b16 %v569, %v569
        %vm581 = vcmask 719872
        %v583 = vsel %vm581, %v536, 0
        %vm585 = vcmask 1043456
        %v587 = vsel %vm585, %v575, 0
        %589 = vmatpush.bf16.msra.mxu0 0
        %590 = vmatpush.bf16.msra.mxu0 0
        %591 = vmatpush.bf16.msra.mxu0 %v587
        %592 = vmatpush.bf16.msra.mxu0 %v574
        %593 = vmatpush.bf16.msra.mxu0 %v573
        %594 = vmatpush.bf16.msra.mxu0 %v572
        %595 = vmatpush.bf16.msra.mxu0 %v571
        %596 = vmatpush.bf16.msra.mxu0 %v570
        %597 = vmatmul.bf16.gmra.mxu0 %v583
        %v598 = vpop.f32.mrf.mxu0
        %v599 = vadd.f32 0.0, %v598
        %v600 = vpop.f32.mrf.mxu0
        %v601 = vadd.f32 0.0, %v600
        %602 = vdwg.mxu0
        %v614 = vunpack.c.l.b16 %v523
        %v615 = vunpack.c.l.b16 %v524
        %v616 = vunpack.c.l.b16 %v525
        %v617 = vunpack.c.l.b16 %v526
        %v618 = vunpack.c.l.b16 %v527
        %v619 = vunpack.c.l.b16 %v528
        %v620 = vunpack.c.l.b16 %v529
        %v621 = vunpack.c.l.b16 %v530
        %v622 = vunpack.c.l.b16 %v531
        %v623 = vunpack.c.l.b16 %v532
        %v624 = vunpack.c.l.b16 %v533
        %v625 = vpack.c.b16 %v615, %v614
        %v626 = vpack.c.b16 %v617, %v616
        %v627 = vpack.c.b16 %v619, %v618
        %v628 = vpack.c.b16 %v621, %v620
        %v629 = vpack.c.b16 %v623, %v622
        %v630 = vpack.c.b16 %v624, %v624
        %v637 = vsel %vm581, %v522, 0
        %v640 = vsel %vm585, %v630, 0
        %642 = vmatpush.bf16.msra.mxu0 0
        %643 = vmatpush.bf16.msra.mxu0 0
        %644 = vmatpush.bf16.msra.mxu0 %v640
        %645 = vmatpush.bf16.msra.mxu0 %v629
        %646 = vmatpush.bf16.msra.mxu0 %v628
        %647 = vmatpush.bf16.msra.mxu0 %v627
        %648 = vmatpush.bf16.msra.mxu0 %v626
        %649 = vmatpush.bf16.msra.mxu0 %v625
        %650 = vmatmul.bf16.gmra.mxu0 %v637
        %v651 = vpop.f32.mrf.mxu0
        %v652 = vadd.f32 %v599, %v651
        %v653 = vpop.f32.mrf.mxu0
        %v654 = vadd.f32 %v601, %v653
        %655 = vdwg.mxu0
        %v656 = vld [vmem:[#allocation3 + $0x2] sm:$0xff]
        %v657 = vld [vmem:[#allocation3 + $0xa] sm:$0x1]
        %v658 = vpack.c.bf16 %v657, %v656
        %v659 = vld [vmem:[#allocation22 + $0xa0] sm:$0xf]
        %v660 = vld [vmem:[#allocation22 + $0xa4] sm:$0xf]
        %v661 = vld [vmem:[#allocation22 + $0xa8] sm:$0xf]
        %v662 = vld [vmem:[#allocation22 + $0xac] sm:$0xf]
        %v663 = vld [vmem:[#allocation22 + $0xb0] sm:$0xf]
        %v664 = vld [vmem:[#allocation22 + $0xb4] sm:$0xf]
        %v665 = vld [vmem:[#allocation22 + $0xb8] sm:$0xf]
        %v666 = vld [vmem:[#allocation22 + $0xbc] sm:$0xf]
        %v667 = vld [vmem:[#allocation22 + $0xc0] sm:$0xf]
        %v668 = vld [vmem:[#allocation22 + $0xc4] sm:$0xf]
        %v669 = vld [vmem:[#allocation22 + $0xc8] sm:$0xf]
        %v681 = vunpack.c.l.b16 %v659
        %v682 = vunpack.c.l.b16 %v660
        %v683 = vunpack.c.l.b16 %v661
        %v684 = vunpack.c.l.b16 %v662
        %v685 = vunpack.c.l.b16 %v663
        %v686 = vunpack.c.l.b16 %v664
        %v687 = vunpack.c.l.b16 %v665
        %v688 = vunpack.c.l.b16 %v666
        %v689 = vunpack.c.l.b16 %v667
        %v690 = vunpack.c.l.b16 %v668
        %v691 = vunpack.c.l.b16 %v669
        %v692 = vpack.c.b16 %v682, %v681
        %v693 = vpack.c.b16 %v684, %v683
        %v694 = vpack.c.b16 %v686, %v685
        %v695 = vpack.c.b16 %v688, %v687
        %v696 = vpack.c.b16 %v690, %v689
        %v697 = vpack.c.b16 %v691, %v691
        %v704 = vsel %vm581, %v658, 0
        %v707 = vsel %vm585, %v697, 0
        %709 = vmatpush.bf16.msra.mxu0 0
        %710 = vmatpush.bf16.msra.mxu0 0
        %711 = vmatpush.bf16.msra.mxu0 %v707
        %712 = vmatpush.bf16.msra.mxu0 %v696
        %713 = vmatpush.bf16.msra.mxu0 %v695
        %714 = vmatpush.bf16.msra.mxu0 %v694
        %715 = vmatpush.bf16.msra.mxu0 %v693
        %716 = vmatpush.bf16.msra.mxu0 %v692
        %717 = vmatmul.bf16.gmra.mxu0 %v704
        %v718 = vpop.f32.mrf.mxu0
        %v719 = vadd.f32 0.0, %v718
        %v720 = vpop.f32.mrf.mxu0
        %v721 = vadd.f32 0.0, %v720
        %722 = vdwg.mxu0
        %v723 = vadd.f32 %v652, %v719
        %v724 = vadd.f32 %v654, %v721
        %v725 = vld [vmem:[#allocation24 + $0x30] sm:$0x1f]
        %v726 = vld [vmem:[#allocation24 + $0x20] sm:$0x1]
        %v727 = vperm.slane %v726, 0
        %vm728 = vcmask 72704
        %v730 = vsel %vm728, %v725, 0
        %v733 = vsel %vm473, %v724, 0
        %735 = vmatpush.msra.mxu0 0.0
        %736 = vmatpush.msra.mxu0 0.0
        %737 = vmatpush.msra.mxu0 0.0
        %738 = vmatpush.msra.mxu0 0.0
        %739 = vmatpush.msra.mxu0 0.0
        %740 = vmatpush.msra.mxu0 0.0
        %741 = vmatpush.msra.mxu0 0.0
        %742 = vmatpush.msra.mxu0 0.0
        %743 = vmatpush.msra.mxu0 0.0
        %744 = vmatpush.msra.mxu0 0.0
        %745 = vmatpush.msra.mxu0 0.0
        %746 = vmatpush.msra.mxu0 0.0
        %747 = vmatpush.msra.mxu0 0.0
        %748 = vmatpush.msra.mxu0 0.0
        %749 = vmatpush.msra.mxu0 %v733
        %750 = vmatpush.msra.mxu0 %v723
        %751 = vmatmul.f32.gmra.mxu0 %v730
        %v752 = vpop.f32.mrf.mxu0
        %v753 = vadd.f32 %v727, %v752
        %754 = vdwg.mxu0
        %v755 = vld [vmem:[#allocation24 + $0x28] sm:$0x1]
        %vm756 = vcmp.gt.f32.partialorder %v753, 0.0
        %v757 = vperm.slane %v755, 0
        %v758 = vmul.f32 %v757, %v753
        %v759 = vsel %vm756, %v753, %v758
        %761 = vrot.lane.b32.xlu0 %v759, 12
        %v762 = vpop.permute.xlu0 %761
        %vm764 = vcmask 585824
        %765 = vst.msk [vmem:[#allocation4 + $0x1] sm:$0x1f] %vm764, %v762
        %v766 = vld [vmem:[#allocation4] sm:$0x1f]
        %v767 = vpack.c.bf16 %v766, %v766
        %v768 = vld [vmem:[#allocation22 + $0xd0] sm:$0xf]
        %v769 = vld [vmem:[#allocation22 + $0xd4] sm:$0xf]
        %v770 = vld [vmem:[#allocation22 + $0xd8] sm:$0xf]
        %v771 = vld [vmem:[#allocation22 + $0xdc] sm:$0xf]
        %v772 = vld [vmem:[#allocation22 + $0xe0] sm:$0xf]
        %v773 = vld [vmem:[#allocation22 + $0xe4] sm:$0xf]
        %v774 = vld [vmem:[#allocation22 + $0xe8] sm:$0xf]
        %v775 = vld [vmem:[#allocation22 + $0xec] sm:$0xf]
        %v776 = vld [vmem:[#allocation22 + $0xf0] sm:$0xf]
        %v777 = vld [vmem:[#allocation22 + $0xf4] sm:$0xf]
        %v778 = vld [vmem:[#allocation22 + $0xf8] sm:$0x3]
        %v779 = vld [vmem:[#allocation4 + $0x1] sm:$0x1f]
        %v780 = vpack.c.bf16 %v779, %v779
        %v781 = vld [vmem:[#allocation22 + $0x100] sm:$0xf]
        %v782 = vld [vmem:[#allocation22 + $0x104] sm:$0xf]
        %v783 = vld [vmem:[#allocation22 + $0x108] sm:$0xf]
        %v784 = vld [vmem:[#allocation22 + $0x10c] sm:$0xf]
        %v785 = vld [vmem:[#allocation22 + $0x110] sm:$0xf]
        %v786 = vld [vmem:[#allocation22 + $0x114] sm:$0xf]
        %v787 = vld [vmem:[#allocation22 + $0x118] sm:$0xf]
        %v788 = vld [vmem:[#allocation22 + $0x11c] sm:$0xf]
        %v789 = vld [vmem:[#allocation22 + $0x120] sm:$0xf]
        %v790 = vld [vmem:[#allocation22 + $0x124] sm:$0xf]
        %v791 = vld [vmem:[#allocation22 + $0x128] sm:$0x3]
        %v803 = vunpack.c.l.b16 %v781
        %v804 = vunpack.c.l.b16 %v782
        %v805 = vunpack.c.l.b16 %v783
        %v806 = vunpack.c.l.b16 %v784
        %v807 = vunpack.c.l.b16 %v785
        %v808 = vunpack.c.l.b16 %v786
        %v809 = vunpack.c.l.b16 %v787
        %v810 = vunpack.c.l.b16 %v788
        %v811 = vunpack.c.l.b16 %v789
        %v812 = vunpack.c.l.b16 %v790
        %v813 = vunpack.c.l.b16 %v791
        %v814 = vpack.c.b16 %v804, %v803
        %v815 = vpack.c.b16 %v806, %v805
        %v816 = vpack.c.b16 %v808, %v807
        %v817 = vpack.c.b16 %v810, %v809
        %v818 = vpack.c.b16 %v812, %v811
        %v819 = vpack.c.b16 %v813, %v813
        %vm825 = vcmask 687104
        %v827 = vsel %vm825, %v780, 0
        %vm829 = vcmask 1041408
        %v831 = vsel %vm829, %v819, 0
        %833 = vmatpush.bf16.msra.mxu0 0
        %834 = vmatpush.bf16.msra.mxu0 0
        %835 = vmatpush.bf16.msra.mxu0 %v831
        %836 = vmatpush.bf16.msra.mxu0 %v818
        %837 = vmatpush.bf16.msra.mxu0 %v817
        %838 = vmatpush.bf16.msra.mxu0 %v816
        %839 = vmatpush.bf16.msra.mxu0 %v815
        %840 = vmatpush.bf16.msra.mxu0 %v814
        %841 = vmatmul.bf16.gmra.mxu0 %v827
        %v842 = vpop.f32.mrf.mxu0
        %v843 = vadd.f32 0.0, %v842
        %v844 = vpop.f32.mrf.mxu0
        %845 = vdwg.mxu0
        %v857 = vunpack.c.l.b16 %v768
        %v858 = vunpack.c.l.b16 %v769
        %v859 = vunpack.c.l.b16 %v770
        %v860 = vunpack.c.l.b16 %v771
        %v861 = vunpack.c.l.b16 %v772
        %v862 = vunpack.c.l.b16 %v773
        %v863 = vunpack.c.l.b16 %v774
        %v864 = vunpack.c.l.b16 %v775
        %v865 = vunpack.c.l.b16 %v776
        %v866 = vunpack.c.l.b16 %v777
        %v867 = vunpack.c.l.b16 %v778
        %v868 = vpack.c.b16 %v858, %v857
        %v869 = vpack.c.b16 %v860, %v859
        %v870 = vpack.c.b16 %v862, %v861
        %v871 = vpack.c.b16 %v864, %v863
        %v872 = vpack.c.b16 %v866, %v865
        %v873 = vpack.c.b16 %v867, %v867
        %v880 = vsel %vm825, %v767, 0
        %v883 = vsel %vm829, %v873, 0
        %885 = vmatpush.bf16.msra.mxu0 0
        %886 = vmatpush.bf16.msra.mxu0 0
        %887 = vmatpush.bf16.msra.mxu0 %v883
        %888 = vmatpush.bf16.msra.mxu0 %v872
        %889 = vmatpush.bf16.msra.mxu0 %v871
        %890 = vmatpush.bf16.msra.mxu0 %v870
        %891 = vmatpush.bf16.msra.mxu0 %v869
        %892 = vmatpush.bf16.msra.mxu0 %v868
        %893 = vmatmul.bf16.gmra.mxu0 %v880
        %v894 = vpop.f32.mrf.mxu0
        %v895 = vadd.f32 %v843, %v894
        %v896 = vpop.f32.mrf.mxu0
        %897 = vdwg.mxu0
        %v898 = vld [vmem:[#allocation4 + $0x2] sm:$0x1f]
        %v899 = vpack.c.bf16 %v898, %v898
        %v900 = vld [vmem:[#allocation22 + $0x130] sm:$0xf]
        %v901 = vld [vmem:[#allocation22 + $0x134] sm:$0xf]
        %v902 = vld [vmem:[#allocation22 + $0x138] sm:$0xf]
        %v903 = vld [vmem:[#allocation22 + $0x13c] sm:$0xf]
        %v904 = vld [vmem:[#allocation22 + $0x140] sm:$0xf]
        %v905 = vld [vmem:[#allocation22 + $0x144] sm:$0xf]
        %v906 = vld [vmem:[#allocation22 + $0x148] sm:$0xf]
        %v907 = vld [vmem:[#allocation22 + $0x14c] sm:$0xf]
        %v908 = vld [vmem:[#allocation22 + $0x150] sm:$0xf]
        %v909 = vld [vmem:[#allocation22 + $0x154] sm:$0xf]
        %v910 = vld [vmem:[#allocation22 + $0x158] sm:$0x3]
        %v922 = vunpack.c.l.b16 %v900
        %v923 = vunpack.c.l.b16 %v901
        %v924 = vunpack.c.l.b16 %v902
        %v925 = vunpack.c.l.b16 %v903
        %v926 = vunpack.c.l.b16 %v904
        %v927 = vunpack.c.l.b16 %v905
        %v928 = vunpack.c.l.b16 %v906
        %v929 = vunpack.c.l.b16 %v907
        %v930 = vunpack.c.l.b16 %v908
        %v931 = vunpack.c.l.b16 %v909
        %v932 = vunpack.c.l.b16 %v910
        %v933 = vpack.c.b16 %v923, %v922
        %v934 = vpack.c.b16 %v925, %v924
        %v935 = vpack.c.b16 %v927, %v926
        %v936 = vpack.c.b16 %v929, %v928
        %v937 = vpack.c.b16 %v931, %v930
        %v938 = vpack.c.b16 %v932, %v932
        %v945 = vsel %vm825, %v899, 0
        %v948 = vsel %vm829, %v938, 0
        %950 = vmatpush.bf16.msra.mxu0 0
        %951 = vmatpush.bf16.msra.mxu0 0
        %952 = vmatpush.bf16.msra.mxu0 %v948
        %953 = vmatpush.bf16.msra.mxu0 %v937
        %954 = vmatpush.bf16.msra.mxu0 %v936
        %955 = vmatpush.bf16.msra.mxu0 %v935
        %956 = vmatpush.bf16.msra.mxu0 %v934
        %957 = vmatpush.bf16.msra.mxu0 %v933
        %958 = vmatmul.bf16.gmra.mxu0 %v945
        %v959 = vpop.f32.mrf.mxu0
        %v960 = vadd.f32 0.0, %v959
        %v961 = vpop.f32.mrf.mxu0
        %962 = vdwg.mxu0
        %v963 = vadd.f32 %v895, %v960
        %v964 = vld [vmem:[#allocation24 + $0x38] sm:$0x1]
        %v965 = vperm.slane %v964, 0
        %v966 = vadd.f32 %v963, %v965
        %v967 = vld [vmem:[#allocation24 + $0x40] sm:$0x1]
        %vm968 = vcmp.gt.f32.partialorder %v966, 0.0
        %v969 = vperm.slane %v967, 0
        %v970 = vmul.f32 %v969, %v966
        %v971 = vsel %vm968, %v966, %v970
        %973 = vrot.lane.b32.xlu0 %v971, 12
        %v974 = vpop.permute.xlu0 %973
        %976 = vst.msk [vmem:[#allocation5 + $0x1] sm:$0x1f] %vm764, %v974
        %v977 = vld [vmem:[#allocation5] sm:$0x1f]
        %v978 = vpack.c.bf16 %v977, %v977
        %v979 = vld [vmem:[#allocation22 + $0x160] sm:$0xf]
        %v980 = vld [vmem:[#allocation22 + $0x164] sm:$0xf]
        %v981 = vld [vmem:[#allocation22 + $0x168] sm:$0xf]
        %v982 = vld [vmem:[#allocation22 + $0x16c] sm:$0xf]
        %v983 = vld [vmem:[#allocation22 + $0x170] sm:$0xf]
        %v984 = vld [vmem:[#allocation22 + $0x174] sm:$0xf]
        %v985 = vld [vmem:[#allocation22 + $0x178] sm:$0xf]
        %v986 = vld [vmem:[#allocation22 + $0x17c] sm:$0xf]
        %v987 = vld [vmem:[#allocation22 + $0x180] sm:$0xf]
        %v988 = vld [vmem:[#allocation22 + $0x184] sm:$0xf]
        %v989 = vld [vmem:[#allocation22 + $0x188] sm:$0x3]
        %v990 = vld [vmem:[#allocation5 + $0x1] sm:$0x1f]
        %v991 = vpack.c.bf16 %v990, %v990
        %v992 = vld [vmem:[#allocation22 + $0x190] sm:$0xf]
        %v993 = vld [vmem:[#allocation22 + $0x194] sm:$0xf]
        %v994 = vld [vmem:[#allocation22 + $0x198] sm:$0xf]
        %v995 = vld [vmem:[#allocation22 + $0x19c] sm:$0xf]
        %v996 = vld [vmem:[#allocation22 + $0x1a0] sm:$0xf]
        %v997 = vld [vmem:[#allocation22 + $0x1a4] sm:$0xf]
        %v998 = vld [vmem:[#allocation22 + $0x1a8] sm:$0xf]
        %v999 = vld [vmem:[#allocation22 + $0x1ac] sm:$0xf]
        %v1000 = vld [vmem:[#allocation22 + $0x1b0] sm:$0xf]
        %v1001 = vld [vmem:[#allocation22 + $0x1b4] sm:$0xf]
        %v1002 = vld [vmem:[#allocation22 + $0x1b8] sm:$0x3]
        %v1014 = vunpack.c.l.b16 %v992
        %v1015 = vunpack.c.l.b16 %v993
        %v1016 = vunpack.c.l.b16 %v994
        %v1017 = vunpack.c.l.b16 %v995
        %v1018 = vunpack.c.l.b16 %v996
        %v1019 = vunpack.c.l.b16 %v997
        %v1020 = vunpack.c.l.b16 %v998
        %v1021 = vunpack.c.l.b16 %v999
        %v1022 = vunpack.c.l.b16 %v1000
        %v1023 = vunpack.c.l.b16 %v1001
        %v1024 = vunpack.c.l.b16 %v1002
        %v1025 = vpack.c.b16 %v1015, %v1014
        %v1026 = vpack.c.b16 %v1017, %v1016
        %v1027 = vpack.c.b16 %v1019, %v1018
        %v1028 = vpack.c.b16 %v1021, %v1020
        %v1029 = vpack.c.b16 %v1023, %v1022
        %v1030 = vpack.c.b16 %v1024, %v1024
        %v1037 = vsel %vm825, %v991, 0
        %v1040 = vsel %vm829, %v1030, 0
        %1042 = vmatpush.bf16.msra.mxu0 0
        %1043 = vmatpush.bf16.msra.mxu0 0
        %1044 = vmatpush.bf16.msra.mxu0 %v1040
        %1045 = vmatpush.bf16.msra.mxu0 %v1029
        %1046 = vmatpush.bf16.msra.mxu0 %v1028
        %1047 = vmatpush.bf16.msra.mxu0 %v1027
        %1048 = vmatpush.bf16.msra.mxu0 %v1026
        %1049 = vmatpush.bf16.msra.mxu0 %v1025
        %1050 = vmatmul.bf16.gmra.mxu0 %v1037
        %v1051 = vpop.f32.mrf.mxu0
        %v1052 = vadd.f32 0.0, %v1051
        %v1053 = vpop.f32.mrf.mxu0
        %1054 = vdwg.mxu0
        %v1066 = vunpack.c.l.b16 %v979
        %v1067 = vunpack.c.l.b16 %v980
        %v1068 = vunpack.c.l.b16 %v981
        %v1069 = vunpack.c.l.b16 %v982
        %v1070 = vunpack.c.l.b16 %v983
        %v1071 = vunpack.c.l.b16 %v984
        %v1072 = vunpack.c.l.b16 %v985
        %v1073 = vunpack.c.l.b16 %v986
        %v1074 = vunpack.c.l.b16 %v987
        %v1075 = vunpack.c.l.b16 %v988
        %v1076 = vunpack.c.l.b16 %v989
        %v1077 = vpack.c.b16 %v1067, %v1066
        %v1078 = vpack.c.b16 %v1069, %v1068
        %v1079 = vpack.c.b16 %v1071, %v1070
        %v1080 = vpack.c.b16 %v1073, %v1072
        %v1081 = vpack.c.b16 %v1075, %v1074
        %v1082 = vpack.c.b16 %v1076, %v1076
        %v1089 = vsel %vm825, %v978, 0
        %v1092 = vsel %vm829, %v1082, 0
        %1094 = vmatpush.bf16.msra.mxu0 0
        %1095 = vmatpush.bf16.msra.mxu0 0
        %1096 = vmatpush.bf16.msra.mxu0 %v1092
        %1097 = vmatpush.bf16.msra.mxu0 %v1081
        %1098 = vmatpush.bf16.msra.mxu0 %v1080
        %1099 = vmatpush.bf16.msra.mxu0 %v1079
        %1100 = vmatpush.bf16.msra.mxu0 %v1078
        %1101 = vmatpush.bf16.msra.mxu0 %v1077
        %1102 = vmatmul.bf16.gmra.mxu0 %v1089
        %v1103 = vpop.f32.mrf.mxu0
        %v1104 = vadd.f32 %v1052, %v1103
        %v1105 = vpop.f32.mrf.mxu0
        %1106 = vdwg.mxu0
        %v1107 = vld [vmem:[#allocation5 + $0x2] sm:$0x1f]
        %v1108 = vpack.c.bf16 %v1107, %v1107
        %v1109 = vld [vmem:[#allocation22 + $0x1c0] sm:$0xf]
        %v1110 = vld [vmem:[#allocation22 + $0x1c4] sm:$0xf]
        %v1111 = vld [vmem:[#allocation22 + $0x1c8] sm:$0xf]
        %v1112 = vld [vmem:[#allocation22 + $0x1cc] sm:$0xf]
        %v1113 = vld [vmem:[#allocation22 + $0x1d0] sm:$0xf]
        %v1114 = vld [vmem:[#allocation22 + $0x1d4] sm:$0xf]
        %v1115 = vld [vmem:[#allocation22 + $0x1d8] sm:$0xf]
        %v1116 = vld [vmem:[#allocation22 + $0x1dc] sm:$0xf]
        %v1117 = vld [vmem:[#allocation22 + $0x1e0] sm:$0xf]
        %v1118 = vld [vmem:[#allocation22 + $0x1e4] sm:$0xf]
        %v1119 = vld [vmem:[#allocation22 + $0x1e8] sm:$0x3]
        %v1131 = vunpack.c.l.b16 %v1109
        %v1132 = vunpack.c.l.b16 %v1110
        %v1133 = vunpack.c.l.b16 %v1111
        %v1134 = vunpack.c.l.b16 %v1112
        %v1135 = vunpack.c.l.b16 %v1113
        %v1136 = vunpack.c.l.b16 %v1114
        %v1137 = vunpack.c.l.b16 %v1115
        %v1138 = vunpack.c.l.b16 %v1116
        %v1139 = vunpack.c.l.b16 %v1117
        %v1140 = vunpack.c.l.b16 %v1118
        %v1141 = vunpack.c.l.b16 %v1119
        %v1142 = vpack.c.b16 %v1132, %v1131
        %v1143 = vpack.c.b16 %v1134, %v1133
        %v1144 = vpack.c.b16 %v1136, %v1135
        %v1145 = vpack.c.b16 %v1138, %v1137
        %v1146 = vpack.c.b16 %v1140, %v1139
        %v1147 = vpack.c.b16 %v1141, %v1141
        %v1154 = vsel %vm825, %v1108, 0
        %v1157 = vsel %vm829, %v1147, 0
        %1159 = vmatpush.bf16.msra.mxu0 0
        %1160 = vmatpush.bf16.msra.mxu0 0
        %1161 = vmatpush.bf16.msra.mxu0 %v1157
        %1162 = vmatpush.bf16.msra.mxu0 %v1146
        %1163 = vmatpush.bf16.msra.mxu0 %v1145
        %1164 = vmatpush.bf16.msra.mxu0 %v1144
        %1165 = vmatpush.bf16.msra.mxu0 %v1143
        %1166 = vmatpush.bf16.msra.mxu0 %v1142
        %1167 = vmatmul.bf16.gmra.mxu0 %v1154
        %v1168 = vpop.f32.mrf.mxu0
        %v1169 = vadd.f32 0.0, %v1168
        %v1170 = vpop.f32.mrf.mxu0
        %1171 = vdwg.mxu0
        %v1172 = vadd.f32 %v1104, %v1169
        %v1173 = vld [vmem:[#allocation24 + $0x48] sm:$0x1]
        %v1174 = vperm.slane %v1173, 0
        %v1175 = vadd.f32 %v1172, %v1174
        %v1176 = vld [vmem:[#allocation24 + $0x50] sm:$0x1]
        %vm1177 = vcmp.gt.f32.partialorder %v1175, 0.0
        %v1178 = vperm.slane %v1176, 0
        %v1179 = vmul.f32 %v1178, %v1175
        %v1180 = vsel %vm1177, %v1175, %v1179
        %1182 = vrot.lane.b32.xlu0 %v1180, 12
        %v1183 = vpop.permute.xlu0 %1182
        %1185 = vst.msk [vmem:[#allocation6 + $0x1] sm:$0x1f] %vm764, %v1183
        %v1186 = vld [vmem:[#allocation6] sm:$0x1f]
        %v1187 = vpack.c.bf16 %v1186, %v1186
        %v1188 = vld [vmem:[#allocation22 + $0x1f0] sm:$0xf]
        %v1189 = vld [vmem:[#allocation22 + $0x1f4] sm:$0xf]
        %v1190 = vld [vmem:[#allocation22 + $0x1f8] sm:$0xf]
        %v1191 = vld [vmem:[#allocation22 + $0x1fc] sm:$0xf]
        %v1192 = vld [vmem:[#allocation22 + $0x200] sm:$0xf]
        %v1193 = vld [vmem:[#allocation22 + $0x204] sm:$0xf]
        %v1194 = vld [vmem:[#allocation22 + $0x208] sm:$0xf]
        %v1195 = vld [vmem:[#allocation22 + $0x20c] sm:$0xf]
        %v1196 = vld [vmem:[#allocation22 + $0x210] sm:$0xf]
        %v1197 = vld [vmem:[#allocation22 + $0x214] sm:$0xf]
        %v1198 = vld [vmem:[#allocation22 + $0x218] sm:$0x3]
        %v1199 = vld [vmem:[#allocation6 + $0x1] sm:$0x1f]
        %v1200 = vpack.c.bf16 %v1199, %v1199
        %v1201 = vld [vmem:[#allocation22 + $0x220] sm:$0xf]
        %v1202 = vld [vmem:[#allocation22 + $0x224] sm:$0xf]
        %v1203 = vld [vmem:[#allocation22 + $0x228] sm:$0xf]
        %v1204 = vld [vmem:[#allocation22 + $0x22c] sm:$0xf]
        %v1205 = vld [vmem:[#allocation22 + $0x230] sm:$0xf]
        %v1206 = vld [vmem:[#allocation22 + $0x234] sm:$0xf]
        %v1207 = vld [vmem:[#allocation22 + $0x238] sm:$0xf]
        %v1208 = vld [vmem:[#allocation22 + $0x23c] sm:$0xf]
        %v1209 = vld [vmem:[#allocation22 + $0x240] sm:$0xf]
        %v1210 = vld [vmem:[#allocation22 + $0x244] sm:$0xf]
        %v1211 = vld [vmem:[#allocation22 + $0x248] sm:$0x3]
        %v1223 = vunpack.c.l.b16 %v1201
        %v1224 = vunpack.c.l.b16 %v1202
        %v1225 = vunpack.c.l.b16 %v1203
        %v1226 = vunpack.c.l.b16 %v1204
        %v1227 = vunpack.c.l.b16 %v1205
        %v1228 = vunpack.c.l.b16 %v1206
        %v1229 = vunpack.c.l.b16 %v1207
        %v1230 = vunpack.c.l.b16 %v1208
        %v1231 = vunpack.c.l.b16 %v1209
        %v1232 = vunpack.c.l.b16 %v1210
        %v1233 = vunpack.c.l.b16 %v1211
        %v1234 = vpack.c.b16 %v1224, %v1223
        %v1235 = vpack.c.b16 %v1226, %v1225
        %v1236 = vpack.c.b16 %v1228, %v1227
        %v1237 = vpack.c.b16 %v1230, %v1229
        %v1238 = vpack.c.b16 %v1232, %v1231
        %v1239 = vpack.c.b16 %v1233, %v1233
        %v1246 = vsel %vm825, %v1200, 0
        %v1249 = vsel %vm829, %v1239, 0
        %1251 = vmatpush.bf16.msra.mxu0 0
        %1252 = vmatpush.bf16.msra.mxu0 0
        %1253 = vmatpush.bf16.msra.mxu0 %v1249
        %1254 = vmatpush.bf16.msra.mxu0 %v1238
        %1255 = vmatpush.bf16.msra.mxu0 %v1237
        %1256 = vmatpush.bf16.msra.mxu0 %v1236
        %1257 = vmatpush.bf16.msra.mxu0 %v1235
        %1258 = vmatpush.bf16.msra.mxu0 %v1234
        %1259 = vmatmul.bf16.gmra.mxu0 %v1246
        %v1260 = vpop.f32.mrf.mxu0
        %v1261 = vadd.f32 0.0, %v1260
        %v1262 = vpop.f32.mrf.mxu0
        %1263 = vdwg.mxu0
        %v1275 = vunpack.c.l.b16 %v1188
        %v1276 = vunpack.c.l.b16 %v1189
        %v1277 = vunpack.c.l.b16 %v1190
        %v1278 = vunpack.c.l.b16 %v1191
        %v1279 = vunpack.c.l.b16 %v1192
        %v1280 = vunpack.c.l.b16 %v1193
        %v1281 = vunpack.c.l.b16 %v1194
        %v1282 = vunpack.c.l.b16 %v1195
        %v1283 = vunpack.c.l.b16 %v1196
        %v1284 = vunpack.c.l.b16 %v1197
        %v1285 = vunpack.c.l.b16 %v1198
        %v1286 = vpack.c.b16 %v1276, %v1275
        %v1287 = vpack.c.b16 %v1278, %v1277
        %v1288 = vpack.c.b16 %v1280, %v1279
        %v1289 = vpack.c.b16 %v1282, %v1281
        %v1290 = vpack.c.b16 %v1284, %v1283
        %v1291 = vpack.c.b16 %v1285, %v1285
        %v1298 = vsel %vm825, %v1187, 0
        %v1301 = vsel %vm829, %v1291, 0
        %1303 = vmatpush.bf16.msra.mxu0 0
        %1304 = vmatpush.bf16.msra.mxu0 0
        %1305 = vmatpush.bf16.msra.mxu0 %v1301
        %1306 = vmatpush.bf16.msra.mxu0 %v1290
        %1307 = vmatpush.bf16.msra.mxu0 %v1289
        %1308 = vmatpush.bf16.msra.mxu0 %v1288
        %1309 = vmatpush.bf16.msra.mxu0 %v1287
        %1310 = vmatpush.bf16.msra.mxu0 %v1286
        %1311 = vmatmul.bf16.gmra.mxu0 %v1298
        %v1312 = vpop.f32.mrf.mxu0
        %v1313 = vadd.f32 %v1261, %v1312
        %v1314 = vpop.f32.mrf.mxu0
        %1315 = vdwg.mxu0
        %v1316 = vld [vmem:[#allocation6 + $0x2] sm:$0x1f]
        %v1317 = vpack.c.bf16 %v1316, %v1316
        %v1318 = vld [vmem:[#allocation22 + $0x250] sm:$0xf]
        %v1319 = vld [vmem:[#allocation22 + $0x254] sm:$0xf]
        %v1320 = vld [vmem:[#allocation22 + $0x258] sm:$0xf]
        %v1321 = vld [vmem:[#allocation22 + $0x25c] sm:$0xf]
        %v1322 = vld [vmem:[#allocation22 + $0x260] sm:$0xf]
        %v1323 = vld [vmem:[#allocation22 + $0x264] sm:$0xf]
        %v1324 = vld [vmem:[#allocation22 + $0x268] sm:$0xf]
        %v1325 = vld [vmem:[#allocation22 + $0x26c] sm:$0xf]
        %v1326 = vld [vmem:[#allocation22 + $0x270] sm:$0xf]
        %v1327 = vld [vmem:[#allocation22 + $0x274] sm:$0xf]
        %v1328 = vld [vmem:[#allocation22 + $0x278] sm:$0x3]
        %v1340 = vunpack.c.l.b16 %v1318
        %v1341 = vunpack.c.l.b16 %v1319
        %v1342 = vunpack.c.l.b16 %v1320
        %v1343 = vunpack.c.l.b16 %v1321
        %v1344 = vunpack.c.l.b16 %v1322
        %v1345 = vunpack.c.l.b16 %v1323
        %v1346 = vunpack.c.l.b16 %v1324
        %v1347 = vunpack.c.l.b16 %v1325
        %v1348 = vunpack.c.l.b16 %v1326
        %v1349 = vunpack.c.l.b16 %v1327
        %v1350 = vunpack.c.l.b16 %v1328
        %v1351 = vpack.c.b16 %v1341, %v1340
        %v1352 = vpack.c.b16 %v1343, %v1342
        %v1353 = vpack.c.b16 %v1345, %v1344
        %v1354 = vpack.c.b16 %v1347, %v1346
        %v1355 = vpack.c.b16 %v1349, %v1348
        %v1356 = vpack.c.b16 %v1350, %v1350
        %v1363 = vsel %vm825, %v1317, 0
        %v1366 = vsel %vm829, %v1356, 0
        %1368 = vmatpush.bf16.msra.mxu0 0
        %1369 = vmatpush.bf16.msra.mxu0 0
        %1370 = vmatpush.bf16.msra.mxu0 %v1366
        %1371 = vmatpush.bf16.msra.mxu0 %v1355
        %1372 = vmatpush.bf16.msra.mxu0 %v1354
        %1373 = vmatpush.bf16.msra.mxu0 %v1353
        %1374 = vmatpush.bf16.msra.mxu0 %v1352
        %1375 = vmatpush.bf16.msra.mxu0 %v1351
        %1376 = vmatmul.bf16.gmra.mxu0 %v1363
        %v1377 = vpop.f32.mrf.mxu0
        %v1378 = vadd.f32 0.0, %v1377
        %v1379 = vpop.f32.mrf.mxu0
        %1380 = vdwg.mxu0
        %v1381 = vadd.f32 %v1313, %v1378
        %v1382 = vld [vmem:[#allocation24 + $0x58] sm:$0x1]
        %v1383 = vperm.slane %v1382, 0
        %v1384 = vadd.f32 %v1381, %v1383
        %v1385 = vld [vmem:[#allocation24 + $0x60] sm:$0x1]
        %vm1386 = vcmp.gt.f32.partialorder %v1384, 0.0
        %v1387 = vperm.slane %v1385, 0
        %v1388 = vmul.f32 %v1387, %v1384
        %v1389 = vsel %vm1386, %v1384, %v1388
        %1391 = vrot.lane.b32.xlu0 %v1389, 12
        %v1392 = vpop.permute.xlu0 %1391
        %1394 = vst.msk [vmem:[#allocation7 + $0x1] sm:$0x1f] %vm764, %v1392
        %v1395 = vld [vmem:[#allocation7] sm:$0x1f]
        %v1396 = vpack.c.bf16 %v1395, %v1395
        %v1397 = vld [vmem:[#allocation22 + $0x280] sm:$0xf]
        %v1398 = vld [vmem:[#allocation22 + $0x284] sm:$0xf]
        %v1399 = vld [vmem:[#allocation22 + $0x288] sm:$0xf]
        %v1400 = vld [vmem:[#allocation22 + $0x28c] sm:$0xf]
        %v1401 = vld [vmem:[#allocation22 + $0x290] sm:$0xf]
        %v1402 = vld [vmem:[#allocation22 + $0x294] sm:$0xf]
        %v1403 = vld [vmem:[#allocation22 + $0x298] sm:$0xf]
        %v1404 = vld [vmem:[#allocation22 + $0x29c] sm:$0xf]
        %v1405 = vld [vmem:[#allocation22 + $0x2a0] sm:$0xf]
        %v1406 = vld [vmem:[#allocation22 + $0x2a4] sm:$0xf]
        %v1407 = vld [vmem:[#allocation22 + $0x2a8] sm:$0x3]
        %v1408 = vld [vmem:[#allocation7 + $0x1] sm:$0x1f]
        %v1409 = vpack.c.bf16 %v1408, %v1408
        %v1410 = vld [vmem:[#allocation22 + $0x2b0] sm:$0xf]
        %v1411 = vld [vmem:[#allocation22 + $0x2b4] sm:$0xf]
        %v1412 = vld [vmem:[#allocation22 + $0x2b8] sm:$0xf]
        %v1413 = vld [vmem:[#allocation22 + $0x2bc] sm:$0xf]
        %v1414 = vld [vmem:[#allocation22 + $0x2c0] sm:$0xf]
        %v1415 = vld [vmem:[#allocation22 + $0x2c4] sm:$0xf]
        %v1416 = vld [vmem:[#allocation22 + $0x2c8] sm:$0xf]
        %v1417 = vld [vmem:[#allocation22 + $0x2cc] sm:$0xf]
        %v1418 = vld [vmem:[#allocation22 + $0x2d0] sm:$0xf]
        %v1419 = vld [vmem:[#allocation22 + $0x2d4] sm:$0xf]
        %v1420 = vld [vmem:[#allocation22 + $0x2d8] sm:$0x3]
        %v1432 = vunpack.c.l.b16 %v1410
        %v1433 = vunpack.c.l.b16 %v1411
        %v1434 = vunpack.c.l.b16 %v1412
        %v1435 = vunpack.c.l.b16 %v1413
        %v1436 = vunpack.c.l.b16 %v1414
        %v1437 = vunpack.c.l.b16 %v1415
        %v1438 = vunpack.c.l.b16 %v1416
        %v1439 = vunpack.c.l.b16 %v1417
        %v1440 = vunpack.c.l.b16 %v1418
        %v1441 = vunpack.c.l.b16 %v1419
        %v1442 = vunpack.c.l.b16 %v1420
        %v1443 = vpack.c.b16 %v1433, %v1432
        %v1444 = vpack.c.b16 %v1435, %v1434
        %v1445 = vpack.c.b16 %v1437, %v1436
        %v1446 = vpack.c.b16 %v1439, %v1438
        %v1447 = vpack.c.b16 %v1441, %v1440
        %v1448 = vpack.c.b16 %v1442, %v1442
        %v1455 = vsel %vm825, %v1409, 0
        %v1458 = vsel %vm829, %v1448, 0
        %1460 = vmatpush.bf16.msra.mxu0 0
        %1461 = vmatpush.bf16.msra.mxu0 0
        %1462 = vmatpush.bf16.msra.mxu0 %v1458
        %1463 = vmatpush.bf16.msra.mxu0 %v1447
        %1464 = vmatpush.bf16.msra.mxu0 %v1446
        %1465 = vmatpush.bf16.msra.mxu0 %v1445
        %1466 = vmatpush.bf16.msra.mxu0 %v1444
        %1467 = vmatpush.bf16.msra.mxu0 %v1443
        %1468 = vmatmul.bf16.gmra.mxu0 %v1455
        %v1469 = vpop.f32.mrf.mxu0
        %v1470 = vadd.f32 0.0, %v1469
        %v1471 = vpop.f32.mrf.mxu0
        %1472 = vdwg.mxu0
        %v1484 = vunpack.c.l.b16 %v1397
        %v1485 = vunpack.c.l.b16 %v1398
        %v1486 = vunpack.c.l.b16 %v1399
        %v1487 = vunpack.c.l.b16 %v1400
        %v1488 = vunpack.c.l.b16 %v1401
        %v1489 = vunpack.c.l.b16 %v1402
        %v1490 = vunpack.c.l.b16 %v1403
        %v1491 = vunpack.c.l.b16 %v1404
        %v1492 = vunpack.c.l.b16 %v1405
        %v1493 = vunpack.c.l.b16 %v1406
        %v1494 = vunpack.c.l.b16 %v1407
        %v1495 = vpack.c.b16 %v1485, %v1484
        %v1496 = vpack.c.b16 %v1487, %v1486
        %v1497 = vpack.c.b16 %v1489, %v1488
        %v1498 = vpack.c.b16 %v1491, %v1490
        %v1499 = vpack.c.b16 %v1493, %v1492
        %v1500 = vpack.c.b16 %v1494, %v1494
        %v1507 = vsel %vm825, %v1396, 0
        %v1510 = vsel %vm829, %v1500, 0
        %1512 = vmatpush.bf16.msra.mxu0 0
        %1513 = vmatpush.bf16.msra.mxu0 0
        %1514 = vmatpush.bf16.msra.mxu0 %v1510
        %1515 = vmatpush.bf16.msra.mxu0 %v1499
        %1516 = vmatpush.bf16.msra.mxu0 %v1498
        %1517 = vmatpush.bf16.msra.mxu0 %v1497
        %1518 = vmatpush.bf16.msra.mxu0 %v1496
        %1519 = vmatpush.bf16.msra.mxu0 %v1495
        %1520 = vmatmul.bf16.gmra.mxu0 %v1507
        %v1521 = vpop.f32.mrf.mxu0
        %v1522 = vadd.f32 %v1470, %v1521
        %v1523 = vpop.f32.mrf.mxu0
        %1524 = vdwg.mxu0
        %v1525 = vld [vmem:[#allocation7 + $0x2] sm:$0x1f]
        %v1526 = vpack.c.bf16 %v1525, %v1525
        %v1527 = vld [vmem:[#allocation22 + $0x2e0] sm:$0xf]
        %v1528 = vld [vmem:[#allocation22 + $0x2e4] sm:$0xf]
        %v1529 = vld [vmem:[#allocation22 + $0x2e8] sm:$0xf]
        %v1530 = vld [vmem:[#allocation22 + $0x2ec] sm:$0xf]
        %v1531 = vld [vmem:[#allocation22 + $0x2f0] sm:$0xf]
        %v1532 = vld [vmem:[#allocation22 + $0x2f4] sm:$0xf]
        %v1533 = vld [vmem:[#allocation22 + $0x2f8] sm:$0xf]
        %v1534 = vld [vmem:[#allocation22 + $0x2fc] sm:$0xf]
        %v1535 = vld [vmem:[#allocation22 + $0x300] sm:$0xf]
        %v1536 = vld [vmem:[#allocation22 + $0x304] sm:$0xf]
        %v1537 = vld [vmem:[#allocation22 + $0x308] sm:$0x3]
        %v1549 = vunpack.c.l.b16 %v1527
        %v1550 = vunpack.c.l.b16 %v1528
        %v1551 = vunpack.c.l.b16 %v1529
        %v1552 = vunpack.c.l.b16 %v1530
        %v1553 = vunpack.c.l.b16 %v1531
        %v1554 = vunpack.c.l.b16 %v1532
        %v1555 = vunpack.c.l.b16 %v1533
        %v1556 = vunpack.c.l.b16 %v1534
        %v1557 = vunpack.c.l.b16 %v1535
        %v1558 = vunpack.c.l.b16 %v1536
        %v1559 = vunpack.c.l.b16 %v1537
        %v1560 = vpack.c.b16 %v1550, %v1549
        %v1561 = vpack.c.b16 %v1552, %v1551
        %v1562 = vpack.c.b16 %v1554, %v1553
        %v1563 = vpack.c.b16 %v1556, %v1555
        %v1564 = vpack.c.b16 %v1558, %v1557
        %v1565 = vpack.c.b16 %v1559, %v1559
        %v1572 = vsel %vm825, %v1526, 0
        %v1575 = vsel %vm829, %v1565, 0
        %1577 = vmatpush.bf16.msra.mxu0 0
        %1578 = vmatpush.bf16.msra.mxu0 0
        %1579 = vmatpush.bf16.msra.mxu0 %v1575
        %1580 = vmatpush.bf16.msra.mxu0 %v1564
        %1581 = vmatpush.bf16.msra.mxu0 %v1563
        %1582 = vmatpush.bf16.msra.mxu0 %v1562
        %1583 = vmatpush.bf16.msra.mxu0 %v1561
        %1584 = vmatpush.bf16.msra.mxu0 %v1560
        %1585 = vmatmul.bf16.gmra.mxu0 %v1572
        %v1586 = vpop.f32.mrf.mxu0
        %v1587 = vadd.f32 0.0, %v1586
        %v1588 = vpop.f32.mrf.mxu0
        %1589 = vdwg.mxu0
        %v1590 = vadd.f32 %v1522, %v1587
        %v1591 = vld [vmem:[#allocation24 + $0x68] sm:$0x1]
        %v1592 = vperm.slane %v1591, 0
        %v1593 = vadd.f32 %v1590, %v1592
        %v1594 = vld [vmem:[#allocation24 + $0x70] sm:$0x1]
        %vm1595 = vcmp.gt.f32.partialorder %v1593, 0.0
        %v1596 = vperm.slane %v1594, 0
        %v1597 = vmul.f32 %v1596, %v1593
        %v1598 = vsel %vm1595, %v1593, %v1597
        %1600 = vrot.lane.b32.xlu0 %v1598, 12
        %v1601 = vpop.permute.xlu0 %1600
        %1603 = vst.msk [vmem:[#allocation8 + $0x1] sm:$0x1f] %vm764, %v1601
        %v1604 = vld [vmem:[#allocation8] sm:$0x1f]
        %v1605 = vpack.c.bf16 %v1604, %v1604
        %v1606 = vld [vmem:[#allocation22 + $0x310] sm:$0xf]
        %v1607 = vld [vmem:[#allocation22 + $0x314] sm:$0xf]
        %v1608 = vld [vmem:[#allocation22 + $0x318] sm:$0xf]
        %v1609 = vld [vmem:[#allocation22 + $0x31c] sm:$0xf]
        %v1610 = vld [vmem:[#allocation22 + $0x320] sm:$0xf]
        %v1611 = vld [vmem:[#allocation22 + $0x324] sm:$0xf]
        %v1612 = vld [vmem:[#allocation22 + $0x328] sm:$0xf]
        %v1613 = vld [vmem:[#allocation22 + $0x32c] sm:$0xf]
        %v1614 = vld [vmem:[#allocation22 + $0x330] sm:$0xf]
        %v1615 = vld [vmem:[#allocation22 + $0x334] sm:$0xf]
        %v1616 = vld [vmem:[#allocation22 + $0x338] sm:$0x3]
        %v1617 = vld [vmem:[#allocation8 + $0x1] sm:$0x1f]
        %v1618 = vpack.c.bf16 %v1617, %v1617
        %v1619 = vld [vmem:[#allocation22 + $0x340] sm:$0xf]
        %v1620 = vld [vmem:[#allocation22 + $0x344] sm:$0xf]
        %v1621 = vld [vmem:[#allocation22 + $0x348] sm:$0xf]
        %v1622 = vld [vmem:[#allocation22 + $0x34c] sm:$0xf]
        %v1623 = vld [vmem:[#allocation22 + $0x350] sm:$0xf]
        %v1624 = vld [vmem:[#allocation22 + $0x354] sm:$0xf]
        %v1625 = vld [vmem:[#allocation22 + $0x358] sm:$0xf]
        %v1626 = vld [vmem:[#allocation22 + $0x35c] sm:$0xf]
        %v1627 = vld [vmem:[#allocation22 + $0x360] sm:$0xf]
        %v1628 = vld [vmem:[#allocation22 + $0x364] sm:$0xf]
        %v1629 = vld [vmem:[#allocation22 + $0x368] sm:$0x3]
        %v1641 = vunpack.c.l.b16 %v1619
        %v1642 = vunpack.c.l.b16 %v1620
        %v1643 = vunpack.c.l.b16 %v1621
        %v1644 = vunpack.c.l.b16 %v1622
        %v1645 = vunpack.c.l.b16 %v1623
        %v1646 = vunpack.c.l.b16 %v1624
        %v1647 = vunpack.c.l.b16 %v1625
        %v1648 = vunpack.c.l.b16 %v1626
        %v1649 = vunpack.c.l.b16 %v1627
        %v1650 = vunpack.c.l.b16 %v1628
        %v1651 = vunpack.c.l.b16 %v1629
        %v1652 = vpack.c.b16 %v1642, %v1641
        %v1653 = vpack.c.b16 %v1644, %v1643
        %v1654 = vpack.c.b16 %v1646, %v1645
        %v1655 = vpack.c.b16 %v1648, %v1647
        %v1656 = vpack.c.b16 %v1650, %v1649
        %v1657 = vpack.c.b16 %v1651, %v1651
        %v1664 = vsel %vm825, %v1618, 0
        %v1667 = vsel %vm829, %v1657, 0
        %1669 = vmatpush.bf16.msra.mxu0 0
        %1670 = vmatpush.bf16.msra.mxu0 0
        %1671 = vmatpush.bf16.msra.mxu0 %v1667
        %1672 = vmatpush.bf16.msra.mxu0 %v1656
        %1673 = vmatpush.bf16.msra.mxu0 %v1655
        %1674 = vmatpush.bf16.msra.mxu0 %v1654
        %1675 = vmatpush.bf16.msra.mxu0 %v1653
        %1676 = vmatpush.bf16.msra.mxu0 %v1652
        %1677 = vmatmul.bf16.gmra.mxu0 %v1664
        %v1678 = vpop.f32.mrf.mxu0
        %v1679 = vadd.f32 0.0, %v1678
        %v1680 = vpop.f32.mrf.mxu0
        %1681 = vdwg.mxu0
        %v1693 = vunpack.c.l.b16 %v1606
        %v1694 = vunpack.c.l.b16 %v1607
        %v1695 = vunpack.c.l.b16 %v1608
        %v1696 = vunpack.c.l.b16 %v1609
        %v1697 = vunpack.c.l.b16 %v1610
        %v1698 = vunpack.c.l.b16 %v1611
        %v1699 = vunpack.c.l.b16 %v1612
        %v1700 = vunpack.c.l.b16 %v1613
        %v1701 = vunpack.c.l.b16 %v1614
        %v1702 = vunpack.c.l.b16 %v1615
        %v1703 = vunpack.c.l.b16 %v1616
        %v1704 = vpack.c.b16 %v1694, %v1693
        %v1705 = vpack.c.b16 %v1696, %v1695
        %v1706 = vpack.c.b16 %v1698, %v1697
        %v1707 = vpack.c.b16 %v1700, %v1699
        %v1708 = vpack.c.b16 %v1702, %v1701
        %v1709 = vpack.c.b16 %v1703, %v1703
        %v1716 = vsel %vm825, %v1605, 0
        %v1719 = vsel %vm829, %v1709, 0
        %1721 = vmatpush.bf16.msra.mxu0 0
        %1722 = vmatpush.bf16.msra.mxu0 0
        %1723 = vmatpush.bf16.msra.mxu0 %v1719
        %1724 = vmatpush.bf16.msra.mxu0 %v1708
        %1725 = vmatpush.bf16.msra.mxu0 %v1707
        %1726 = vmatpush.bf16.msra.mxu0 %v1706
        %1727 = vmatpush.bf16.msra.mxu0 %v1705
        %1728 = vmatpush.bf16.msra.mxu0 %v1704
        %1729 = vmatmul.bf16.gmra.mxu0 %v1716
        %v1730 = vpop.f32.mrf.mxu0
        %v1731 = vadd.f32 %v1679, %v1730
        %v1732 = vpop.f32.mrf.mxu0
        %1733 = vdwg.mxu0
        %v1734 = vld [vmem:[#allocation8 + $0x2] sm:$0x1f]
        %v1735 = vpack.c.bf16 %v1734, %v1734
        %v1736 = vld [vmem:[#allocation22 + $0x370] sm:$0xf]
        %v1737 = vld [vmem:[#allocation22 + $0x374] sm:$0xf]
        %v1738 = vld [vmem:[#allocation22 + $0x378] sm:$0xf]
        %v1739 = vld [vmem:[#allocation22 + $0x37c] sm:$0xf]
        %v1740 = vld [vmem:[#allocation22 + $0x380] sm:$0xf]
        %v1741 = vld [vmem:[#allocation22 + $0x384] sm:$0xf]
        %v1742 = vld [vmem:[#allocation22 + $0x388] sm:$0xf]
        %v1743 = vld [vmem:[#allocation22 + $0x38c] sm:$0xf]
        %v1744 = vld [vmem:[#allocation22 + $0x390] sm:$0xf]
        %v1745 = vld [vmem:[#allocation22 + $0x394] sm:$0xf]
        %v1746 = vld [vmem:[#allocation22 + $0x398] sm:$0x3]
        %v1758 = vunpack.c.l.b16 %v1736
        %v1759 = vunpack.c.l.b16 %v1737
        %v1760 = vunpack.c.l.b16 %v1738
        %v1761 = vunpack.c.l.b16 %v1739
        %v1762 = vunpack.c.l.b16 %v1740
        %v1763 = vunpack.c.l.b16 %v1741
        %v1764 = vunpack.c.l.b16 %v1742
        %v1765 = vunpack.c.l.b16 %v1743
        %v1766 = vunpack.c.l.b16 %v1744
        %v1767 = vunpack.c.l.b16 %v1745
        %v1768 = vunpack.c.l.b16 %v1746
        %v1769 = vpack.c.b16 %v1759, %v1758
        %v1770 = vpack.c.b16 %v1761, %v1760
        %v1771 = vpack.c.b16 %v1763, %v1762
        %v1772 = vpack.c.b16 %v1765, %v1764
        %v1773 = vpack.c.b16 %v1767, %v1766
        %v1774 = vpack.c.b16 %v1768, %v1768
        %v1781 = vsel %vm825, %v1735, 0
        %v1784 = vsel %vm829, %v1774, 0
        %1786 = vmatpush.bf16.msra.mxu0 0
        %1787 = vmatpush.bf16.msra.mxu0 0
        %1788 = vmatpush.bf16.msra.mxu0 %v1784
        %1789 = vmatpush.bf16.msra.mxu0 %v1773
        %1790 = vmatpush.bf16.msra.mxu0 %v1772
        %1791 = vmatpush.bf16.msra.mxu0 %v1771
        %1792 = vmatpush.bf16.msra.mxu0 %v1770
        %1793 = vmatpush.bf16.msra.mxu0 %v1769
        %1794 = vmatmul.bf16.gmra.mxu0 %v1781
        %v1795 = vpop.f32.mrf.mxu0
        %v1796 = vadd.f32 0.0, %v1795
        %v1797 = vpop.f32.mrf.mxu0
        %1798 = vdwg.mxu0
        %v1799 = vadd.f32 %v1731, %v1796
        %v1800 = vld [vmem:[#allocation24 + $0x88] sm:$0x7]
        %v1801 = vld [vmem:[#allocation24 + $0x78] sm:$0x1]
        %v1802 = vperm.slane %v1801, 0
        %vm1803 = vcmask 39936
        %v1805 = vsel %vm1803, %v1800, 0
        %vm1807 = vcmask 1044480
        %v1809 = vsel %vm1807, %v1799, 0
        %1811 = vmatpush.msra.mxu0 0.0
        %1812 = vmatpush.msra.mxu0 0.0
        %1813 = vmatpush.msra.mxu0 0.0
        %1814 = vmatpush.msra.mxu0 0.0
        %1815 = vmatpush.msra.mxu0 0.0
        %1816 = vmatpush.msra.mxu0 0.0
        %1817 = vmatpush.msra.mxu0 0.0
        %1818 = vmatpush.msra.mxu0 0.0
        %1819 = vmatpush.msra.mxu0 0.0
        %1820 = vmatpush.msra.mxu0 0.0
        %1821 = vmatpush.msra.mxu0 0.0
        %1822 = vmatpush.msra.mxu0 0.0
        %1823 = vmatpush.msra.mxu0 0.0
        %1824 = vmatpush.msra.mxu0 0.0
        %1825 = vmatpush.msra.mxu0 0.0
        %1826 = vmatpush.msra.mxu0 %v1809
        %1827 = vmatmul.f32.gmra.mxu0 %v1805
        %v1828 = vpop.f32.mrf.mxu0
        %v1829 = vadd.f32 %v1802, %v1828
        %1830 = vdwg.mxu0
        %v1831 = vld [vmem:[#allocation24 + $0x80] sm:$0x1]
        %vm1832 = vcmp.gt.f32.partialorder %v1829, 0.0
        %v1833 = vperm.slane %v1831, 0
        %v1834 = vmul.f32 %v1833, %v1829
        %v1835 = vsel %vm1832, %v1829, %v1834
        %1837 = vrot.lane.b32.xlu0 %v1835, 24
        %v1838 = vpop.permute.xlu0 %1837
        %vm1840 = vcmask 780480
        %1841 = vst.msk [vmem:[#allocation9 + $0x1] sm:$0x7] %vm1840, %v1838
        %v1842 = vld [vmem:[#allocation9] sm:$0x7]
        %v1843 = vpack.c.bf16 %v1842, %v1842
        %v1844 = vld [vmem:[#allocation22 + $0x3a0] sm:$0xf]
        %v1845 = vld [vmem:[#allocation22 + $0x3a4] sm:$0xf]
        %v1846 = vld [vmem:[#allocation22 + $0x3a8] sm:$0xf]
        %v1847 = vld [vmem:[#allocation22 + $0x3ac] sm:$0xf]
        %v1848 = vld [vmem:[#allocation22 + $0x3b0] sm:$0xf]
        %v1849 = vld [vmem:[#allocation22 + $0x3b4] sm:$0xf]
        %v1850 = vld [vmem:[#allocation22 + $0x3b8] sm:$0xf]
        %v1851 = vld [vmem:[#allocation22 + $0x3bc] sm:$0xf]
        %v1852 = vld [vmem:[#allocation22 + $0x3c0] sm:$0xf]
        %v1853 = vld [vmem:[#allocation22 + $0x3c4] sm:$0xf]
        %v1854 = vld [vmem:[#allocation22 + $0x3c8] sm:$0xf]
        %v1855 = vld [vmem:[#allocation22 + $0x3cc] sm:$0xf]
        %v1856 = vld [vmem:[#allocation22 + $0x3d0] sm:$0xf]
        %v1857 = vld [vmem:[#allocation22 + $0x3d4] sm:$0xf]
        %v1858 = vld [vmem:[#allocation22 + $0x3d8] sm:$0xf]
        %v1859 = vld [vmem:[#allocation9 + $0x1] sm:$0x7]
        %v1860 = vpack.c.bf16 %v1859, %v1859
        %v1861 = vld [vmem:[#allocation22 + $0x3e0] sm:$0xf]
        %v1862 = vld [vmem:[#allocation22 + $0x3e4] sm:$0xf]
        %v1863 = vld [vmem:[#allocation22 + $0x3e8] sm:$0xf]
        %v1864 = vld [vmem:[#allocation22 + $0x3ec] sm:$0xf]
        %v1865 = vld [vmem:[#allocation22 + $0x3f0] sm:$0xf]
        %v1866 = vld [vmem:[#allocation22 + $0x3f4] sm:$0xf]
        %v1867 = vld [vmem:[#allocation22 + $0x3f8] sm:$0xf]
        %v1868 = vld [vmem:[#allocation22 + $0x3fc] sm:$0xf]
        %v1869 = vld [vmem:[#allocation22 + $0x400] sm:$0xf]
        %v1870 = vld [vmem:[#allocation22 + $0x404] sm:$0xf]
        %v1871 = vld [vmem:[#allocation22 + $0x408] sm:$0xf]
        %v1872 = vld [vmem:[#allocation22 + $0x40c] sm:$0xf]
        %v1873 = vld [vmem:[#allocation22 + $0x410] sm:$0xf]
        %v1874 = vld [vmem:[#allocation22 + $0x414] sm:$0xf]
        %v1875 = vld [vmem:[#allocation22 + $0x418] sm:$0xf]
        %v1891 = vunpack.c.l.b16 %v1861
        %v1892 = vunpack.c.l.b16 %v1862
        %v1893 = vunpack.c.l.b16 %v1863
        %v1894 = vunpack.c.l.b16 %v1864
        %v1895 = vunpack.c.l.b16 %v1865
        %v1896 = vunpack.c.l.b16 %v1866
        %v1897 = vunpack.c.l.b16 %v1867
        %v1898 = vunpack.c.l.b16 %v1868
        %v1899 = vunpack.c.l.b16 %v1869
        %v1900 = vunpack.c.l.b16 %v1870
        %v1901 = vunpack.c.l.b16 %v1871
        %v1902 = vunpack.c.l.b16 %v1872
        %v1903 = vunpack.c.l.b16 %v1873
        %v1904 = vunpack.c.l.b16 %v1874
        %v1905 = vunpack.c.l.b16 %v1875
        %v1906 = vpack.c.b16 %v1892, %v1891
        %v1907 = vpack.c.b16 %v1894, %v1893
        %v1908 = vpack.c.b16 %v1896, %v1895
        %v1909 = vpack.c.b16 %v1898, %v1897
        %v1910 = vpack.c.b16 %v1900, %v1899
        %v1911 = vpack.c.b16 %v1902, %v1901
        %v1912 = vpack.c.b16 %v1904, %v1903
        %v1913 = vpack.c.b16 %v1905, %v1905
        %vm1921 = vcmask 982016
        %v1923 = vsel %vm1921, %v1860, 0
        %v1926 = vsel %vm585, %v1913, 0
        %1928 = vmatpush.bf16.msra.mxu0 %v1926
        %1929 = vmatpush.bf16.msra.mxu0 %v1912
        %1930 = vmatpush.bf16.msra.mxu0 %v1911
        %1931 = vmatpush.bf16.msra.mxu0 %v1910
        %1932 = vmatpush.bf16.msra.mxu0 %v1909
        %1933 = vmatpush.bf16.msra.mxu0 %v1908
        %1934 = vmatpush.bf16.msra.mxu0 %v1907
        %1935 = vmatpush.bf16.msra.mxu0 %v1906
        %1936 = vmatmul.bf16.gmra.mxu0 %v1923
        %v1937 = vpop.f32.mrf.mxu0
        %v1938 = vadd.f32 0.0, %v1937
        %v1939 = vpop.f32.mrf.mxu0
        %1940 = vdwg.mxu0
        %v1956 = vunpack.c.l.b16 %v1844
        %v1957 = vunpack.c.l.b16 %v1845
        %v1958 = vunpack.c.l.b16 %v1846
        %v1959 = vunpack.c.l.b16 %v1847
        %v1960 = vunpack.c.l.b16 %v1848
        %v1961 = vunpack.c.l.b16 %v1849
        %v1962 = vunpack.c.l.b16 %v1850
        %v1963 = vunpack.c.l.b16 %v1851
        %v1964 = vunpack.c.l.b16 %v1852
        %v1965 = vunpack.c.l.b16 %v1853
        %v1966 = vunpack.c.l.b16 %v1854
        %v1967 = vunpack.c.l.b16 %v1855
        %v1968 = vunpack.c.l.b16 %v1856
        %v1969 = vunpack.c.l.b16 %v1857
        %v1970 = vunpack.c.l.b16 %v1858
        %v1971 = vpack.c.b16 %v1957, %v1956
        %v1972 = vpack.c.b16 %v1959, %v1958
        %v1973 = vpack.c.b16 %v1961, %v1960
        %v1974 = vpack.c.b16 %v1963, %v1962
        %v1975 = vpack.c.b16 %v1965, %v1964
        %v1976 = vpack.c.b16 %v1967, %v1966
        %v1977 = vpack.c.b16 %v1969, %v1968
        %v1978 = vpack.c.b16 %v1970, %v1970
        %v1987 = vsel %vm1921, %v1843, 0
        %v1990 = vsel %vm585, %v1978, 0
        %1992 = vmatpush.bf16.msra.mxu0 %v1990
        %1993 = vmatpush.bf16.msra.mxu0 %v1977
        %1994 = vmatpush.bf16.msra.mxu0 %v1976
        %1995 = vmatpush.bf16.msra.mxu0 %v1975
        %1996 = vmatpush.bf16.msra.mxu0 %v1974
        %1997 = vmatpush.bf16.msra.mxu0 %v1973
        %1998 = vmatpush.bf16.msra.mxu0 %v1972
        %1999 = vmatpush.bf16.msra.mxu0 %v1971
        %2000 = vmatmul.bf16.gmra.mxu0 %v1987
        %v2001 = vpop.f32.mrf.mxu0
        %v2002 = vadd.f32 %v1938, %v2001
        %v2003 = vpop.f32.mrf.mxu0
        %2004 = vdwg.mxu0
        %v2005 = vld [vmem:[#allocation9 + $0x2] sm:$0x7]
        %v2006 = vpack.c.bf16 %v2005, %v2005
        %v2007 = vld [vmem:[#allocation22 + $0x420] sm:$0xf]
        %v2008 = vld [vmem:[#allocation22 + $0x424] sm:$0xf]
        %v2009 = vld [vmem:[#allocation22 + $0x428] sm:$0xf]
        %v2010 = vld [vmem:[#allocation22 + $0x42c] sm:$0xf]
        %v2011 = vld [vmem:[#allocation22 + $0x430] sm:$0xf]
        %v2012 = vld [vmem:[#allocation22 + $0x434] sm:$0xf]
        %v2013 = vld [vmem:[#allocation22 + $0x438] sm:$0xf]
        %v2014 = vld [vmem:[#allocation22 + $0x43c] sm:$0xf]
        %v2015 = vld [vmem:[#allocation22 + $0x440] sm:$0xf]
        %v2016 = vld [vmem:[#allocation22 + $0x444] sm:$0xf]
        %v2017 = vld [vmem:[#allocation22 + $0x448] sm:$0xf]
        %v2018 = vld [vmem:[#allocation22 + $0x44c] sm:$0xf]
        %v2019 = vld [vmem:[#allocation22 + $0x450] sm:$0xf]
        %v2020 = vld [vmem:[#allocation22 + $0x454] sm:$0xf]
        %v2021 = vld [vmem:[#allocation22 + $0x458] sm:$0xf]
        %v2037 = vunpack.c.l.b16 %v2007
        %v2038 = vunpack.c.l.b16 %v2008
        %v2039 = vunpack.c.l.b16 %v2009
        %v2040 = vunpack.c.l.b16 %v2010
        %v2041 = vunpack.c.l.b16 %v2011
        %v2042 = vunpack.c.l.b16 %v2012
        %v2043 = vunpack.c.l.b16 %v2013
        %v2044 = vunpack.c.l.b16 %v2014
        %v2045 = vunpack.c.l.b16 %v2015
        %v2046 = vunpack.c.l.b16 %v2016
        %v2047 = vunpack.c.l.b16 %v2017
        %v2048 = vunpack.c.l.b16 %v2018
        %v2049 = vunpack.c.l.b16 %v2019
        %v2050 = vunpack.c.l.b16 %v2020
        %v2051 = vunpack.c.l.b16 %v2021
        %v2052 = vpack.c.b16 %v2038, %v2037
        %v2053 = vpack.c.b16 %v2040, %v2039
        %v2054 = vpack.c.b16 %v2042, %v2041
        %v2055 = vpack.c.b16 %v2044, %v2043
        %v2056 = vpack.c.b16 %v2046, %v2045
        %v2057 = vpack.c.b16 %v2048, %v2047
        %v2058 = vpack.c.b16 %v2050, %v2049
        %v2059 = vpack.c.b16 %v2051, %v2051
        %v2068 = vsel %vm1921, %v2006, 0
        %v2071 = vsel %vm585, %v2059, 0
        %2073 = vmatpush.bf16.msra.mxu0 %v2071
        %2074 = vmatpush.bf16.msra.mxu0 %v2058
        %2075 = vmatpush.bf16.msra.mxu0 %v2057
        %2076 = vmatpush.bf16.msra.mxu0 %v2056
        %2077 = vmatpush.bf16.msra.mxu0 %v2055
        %2078 = vmatpush.bf16.msra.mxu0 %v2054
        %2079 = vmatpush.bf16.msra.mxu0 %v2053
        %2080 = vmatpush.bf16.msra.mxu0 %v2052
        %2081 = vmatmul.bf16.gmra.mxu0 %v2068
        %v2082 = vpop.f32.mrf.mxu0
        %v2083 = vadd.f32 0.0, %v2082
        %v2084 = vpop.f32.mrf.mxu0
        %2085 = vdwg.mxu0
        %v2086 = vadd.f32 %v2002, %v2083
        %v2087 = vld [vmem:[#allocation24 + $0x90] sm:$0x1]
        %v2088 = vperm.slane %v2087, 0
        %v2089 = vadd.f32 %v2086, %v2088
        %v2090 = vld [vmem:[#allocation24 + $0x98] sm:$0x1]
        %vm2091 = vcmp.gt.f32.partialorder %v2089, 0.0
        %v2092 = vperm.slane %v2090, 0
        %v2093 = vmul.f32 %v2092, %v2089
        %v2094 = vsel %vm2091, %v2089, %v2093
        %2096 = vrot.lane.b32.xlu0 %v2094, 24
        %v2097 = vpop.permute.xlu0 %2096
        %2099 = vst.msk [vmem:[#allocation10 + $0x1] sm:$0x7] %vm1840, %v2097
        %v2100 = vld [vmem:[#allocation10] sm:$0x7]
        %v2101 = vpack.c.bf16 %v2100, %v2100
        %v2102 = vld [vmem:[#allocation22 + $0x460] sm:$0xf]
        %v2103 = vld [vmem:[#allocation22 + $0x464] sm:$0xf]
        %v2104 = vld [vmem:[#allocation22 + $0x468] sm:$0xf]
        %v2105 = vld [vmem:[#allocation22 + $0x46c] sm:$0xf]
        %v2106 = vld [vmem:[#allocation22 + $0x470] sm:$0xf]
        %v2107 = vld [vmem:[#allocation22 + $0x474] sm:$0xf]
        %v2108 = vld [vmem:[#allocation22 + $0x478] sm:$0xf]
        %v2109 = vld [vmem:[#allocation22 + $0x47c] sm:$0xf]
        %v2110 = vld [vmem:[#allocation22 + $0x480] sm:$0xf]
        %v2111 = vld [vmem:[#allocation22 + $0x484] sm:$0xf]
        %v2112 = vld [vmem:[#allocation22 + $0x488] sm:$0xf]
        %v2113 = vld [vmem:[#allocation22 + $0x48c] sm:$0xf]
        %v2114 = vld [vmem:[#allocation22 + $0x490] sm:$0xf]
        %v2115 = vld [vmem:[#allocation22 + $0x494] sm:$0xf]
        %v2116 = vld [vmem:[#allocation22 + $0x498] sm:$0xf]
        %v2117 = vld [vmem:[#allocation10 + $0x1] sm:$0x7]
        %v2118 = vpack.c.bf16 %v2117, %v2117
        %v2119 = vld [vmem:[#allocation22 + $0x4a0] sm:$0xf]
        %v2120 = vld [vmem:[#allocation22 + $0x4a4] sm:$0xf]
        %v2121 = vld [vmem:[#allocation22 + $0x4a8] sm:$0xf]
        %v2122 = vld [vmem:[#allocation22 + $0x4ac] sm:$0xf]
        %v2123 = vld [vmem:[#allocation22 + $0x4b0] sm:$0xf]
        %v2124 = vld [vmem:[#allocation22 + $0x4b4] sm:$0xf]
        %v2125 = vld [vmem:[#allocation22 + $0x4b8] sm:$0xf]
        %v2126 = vld [vmem:[#allocation22 + $0x4bc] sm:$0xf]
        %v2127 = vld [vmem:[#allocation22 + $0x4c0] sm:$0xf]
        %v2128 = vld [vmem:[#allocation22 + $0x4c4] sm:$0xf]
        %v2129 = vld [vmem:[#allocation22 + $0x4c8] sm:$0xf]
        %v2130 = vld [vmem:[#allocation22 + $0x4cc] sm:$0xf]
        %v2131 = vld [vmem:[#allocation22 + $0x4d0] sm:$0xf]
        %v2132 = vld [vmem:[#allocation22 + $0x4d4] sm:$0xf]
        %v2133 = vld [vmem:[#allocation22 + $0x4d8] sm:$0xf]
        %v2149 = vunpack.c.l.b16 %v2119
        %v2150 = vunpack.c.l.b16 %v2120
        %v2151 = vunpack.c.l.b16 %v2121
        %v2152 = vunpack.c.l.b16 %v2122
        %v2153 = vunpack.c.l.b16 %v2123
        %v2154 = vunpack.c.l.b16 %v2124
        %v2155 = vunpack.c.l.b16 %v2125
        %v2156 = vunpack.c.l.b16 %v2126
        %v2157 = vunpack.c.l.b16 %v2127
        %v2158 = vunpack.c.l.b16 %v2128
        %v2159 = vunpack.c.l.b16 %v2129
        %v2160 = vunpack.c.l.b16 %v2130
        %v2161 = vunpack.c.l.b16 %v2131
        %v2162 = vunpack.c.l.b16 %v2132
        %v2163 = vunpack.c.l.b16 %v2133
        %v2164 = vpack.c.b16 %v2150, %v2149
        %v2165 = vpack.c.b16 %v2152, %v2151
        %v2166 = vpack.c.b16 %v2154, %v2153
        %v2167 = vpack.c.b16 %v2156, %v2155
        %v2168 = vpack.c.b16 %v2158, %v2157
        %v2169 = vpack.c.b16 %v2160, %v2159
        %v2170 = vpack.c.b16 %v2162, %v2161
        %v2171 = vpack.c.b16 %v2163, %v2163
        %v2180 = vsel %vm1921, %v2118, 0
        %v2183 = vsel %vm585, %v2171, 0
        %2185 = vmatpush.bf16.msra.mxu0 %v2183
        %2186 = vmatpush.bf16.msra.mxu0 %v2170
        %2187 = vmatpush.bf16.msra.mxu0 %v2169
        %2188 = vmatpush.bf16.msra.mxu0 %v2168
        %2189 = vmatpush.bf16.msra.mxu0 %v2167
        %2190 = vmatpush.bf16.msra.mxu0 %v2166
        %2191 = vmatpush.bf16.msra.mxu0 %v2165
        %2192 = vmatpush.bf16.msra.mxu0 %v2164
        %2193 = vmatmul.bf16.gmra.mxu0 %v2180
        %v2194 = vpop.f32.mrf.mxu0
        %v2195 = vadd.f32 0.0, %v2194
        %v2196 = vpop.f32.mrf.mxu0
        %2197 = vdwg.mxu0
        %v2213 = vunpack.c.l.b16 %v2102
        %v2214 = vunpack.c.l.b16 %v2103
        %v2215 = vunpack.c.l.b16 %v2104
        %v2216 = vunpack.c.l.b16 %v2105
        %v2217 = vunpack.c.l.b16 %v2106
        %v2218 = vunpack.c.l.b16 %v2107
        %v2219 = vunpack.c.l.b16 %v2108
        %v2220 = vunpack.c.l.b16 %v2109
        %v2221 = vunpack.c.l.b16 %v2110
        %v2222 = vunpack.c.l.b16 %v2111
        %v2223 = vunpack.c.l.b16 %v2112
        %v2224 = vunpack.c.l.b16 %v2113
        %v2225 = vunpack.c.l.b16 %v2114
        %v2226 = vunpack.c.l.b16 %v2115
        %v2227 = vunpack.c.l.b16 %v2116
        %v2228 = vpack.c.b16 %v2214, %v2213
        %v2229 = vpack.c.b16 %v2216, %v2215
        %v2230 = vpack.c.b16 %v2218, %v2217
        %v2231 = vpack.c.b16 %v2220, %v2219
        %v2232 = vpack.c.b16 %v2222, %v2221
        %v2233 = vpack.c.b16 %v2224, %v2223
        %v2234 = vpack.c.b16 %v2226, %v2225
        %v2235 = vpack.c.b16 %v2227, %v2227
        %v2244 = vsel %vm1921, %v2101, 0
        %v2247 = vsel %vm585, %v2235, 0
        %2249 = vmatpush.bf16.msra.mxu0 %v2247
        %2250 = vmatpush.bf16.msra.mxu0 %v2234
        %2251 = vmatpush.bf16.msra.mxu0 %v2233
        %2252 = vmatpush.bf16.msra.mxu0 %v2232
        %2253 = vmatpush.bf16.msra.mxu0 %v2231
        %2254 = vmatpush.bf16.msra.mxu0 %v2230
        %2255 = vmatpush.bf16.msra.mxu0 %v2229
        %2256 = vmatpush.bf16.msra.mxu0 %v2228
        %2257 = vmatmul.bf16.gmra.mxu0 %v2244
        %v2258 = vpop.f32.mrf.mxu0
        %v2259 = vadd.f32 %v2195, %v2258
        %v2260 = vpop.f32.mrf.mxu0
        %2261 = vdwg.mxu0
        %v2262 = vld [vmem:[#allocation10 + $0x2] sm:$0x7]
        %v2263 = vpack.c.bf16 %v2262, %v2262
        %v2264 = vld [vmem:[#allocation22 + $0x4e0] sm:$0xf]
        %v2265 = vld [vmem:[#allocation22 + $0x4e4] sm:$0xf]
        %v2266 = vld [vmem:[#allocation22 + $0x4e8] sm:$0xf]
        %v2267 = vld [vmem:[#allocation22 + $0x4ec] sm:$0xf]
        %v2268 = vld [vmem:[#allocation22 + $0x4f0] sm:$0xf]
        %v2269 = vld [vmem:[#allocation22 + $0x4f4] sm:$0xf]
        %v2270 = vld [vmem:[#allocation22 + $0x4f8] sm:$0xf]
        %v2271 = vld [vmem:[#allocation22 + $0x4fc] sm:$0xf]
        %v2272 = vld [vmem:[#allocation22 + $0x500] sm:$0xf]
        %v2273 = vld [vmem:[#allocation22 + $0x504] sm:$0xf]
        %v2274 = vld [vmem:[#allocation22 + $0x508] sm:$0xf]
        %v2275 = vld [vmem:[#allocation22 + $0x50c] sm:$0xf]
        %v2276 = vld [vmem:[#allocation22 + $0x510] sm:$0xf]
        %v2277 = vld [vmem:[#allocation22 + $0x514] sm:$0xf]
        %v2278 = vld [vmem:[#allocation22 + $0x518] sm:$0xf]
        %v2294 = vunpack.c.l.b16 %v2264
        %v2295 = vunpack.c.l.b16 %v2265
        %v2296 = vunpack.c.l.b16 %v2266
        %v2297 = vunpack.c.l.b16 %v2267
        %v2298 = vunpack.c.l.b16 %v2268
        %v2299 = vunpack.c.l.b16 %v2269
        %v2300 = vunpack.c.l.b16 %v2270
        %v2301 = vunpack.c.l.b16 %v2271
        %v2302 = vunpack.c.l.b16 %v2272
        %v2303 = vunpack.c.l.b16 %v2273
        %v2304 = vunpack.c.l.b16 %v2274
        %v2305 = vunpack.c.l.b16 %v2275
        %v2306 = vunpack.c.l.b16 %v2276
        %v2307 = vunpack.c.l.b16 %v2277
        %v2308 = vunpack.c.l.b16 %v2278
        %v2309 = vpack.c.b16 %v2295, %v2294
        %v2310 = vpack.c.b16 %v2297, %v2296
        %v2311 = vpack.c.b16 %v2299, %v2298
        %v2312 = vpack.c.b16 %v2301, %v2300
        %v2313 = vpack.c.b16 %v2303, %v2302
        %v2314 = vpack.c.b16 %v2305, %v2304
        %v2315 = vpack.c.b16 %v2307, %v2306
        %v2316 = vpack.c.b16 %v2308, %v2308
        %v2325 = vsel %vm1921, %v2263, 0
        %v2328 = vsel %vm585, %v2316, 0
        %2330 = vmatpush.bf16.msra.mxu0 %v2328
        %2331 = vmatpush.bf16.msra.mxu0 %v2315
        %2332 = vmatpush.bf16.msra.mxu0 %v2314
        %2333 = vmatpush.bf16.msra.mxu0 %v2313
        %2334 = vmatpush.bf16.msra.mxu0 %v2312
        %2335 = vmatpush.bf16.msra.mxu0 %v2311
        %2336 = vmatpush.bf16.msra.mxu0 %v2310
        %2337 = vmatpush.bf16.msra.mxu0 %v2309
        %2338 = vmatmul.bf16.gmra.mxu0 %v2325
        %v2339 = vpop.f32.mrf.mxu0
        %v2340 = vadd.f32 0.0, %v2339
        %v2341 = vpop.f32.mrf.mxu0
        %2342 = vdwg.mxu0
        %v2343 = vadd.f32 %v2259, %v2340
        %v2344 = vld [vmem:[#allocation24 + $0xa0] sm:$0x1]
        %v2345 = vperm.slane %v2344, 0
        %v2346 = vadd.f32 %v2343, %v2345
        %v2347 = vld [vmem:[#allocation24 + $0xa8] sm:$0x1]
        %vm2348 = vcmp.gt.f32.partialorder %v2346, 0.0
        %v2349 = vperm.slane %v2347, 0
        %v2350 = vmul.f32 %v2349, %v2346
        %v2351 = vsel %vm2348, %v2346, %v2350
        %2353 = vrot.lane.b32.xlu0 %v2351, 24
        %v2354 = vpop.permute.xlu0 %2353
        %2356 = vst.msk [vmem:[#allocation11 + $0x1] sm:$0x7] %vm1840, %v2354
        %v2357 = vld [vmem:[#allocation11] sm:$0x7]
        %v2358 = vpack.c.bf16 %v2357, %v2357
        %v2359 = vld [vmem:[#allocation22 + $0x520] sm:$0xf]
        %v2360 = vld [vmem:[#allocation22 + $0x524] sm:$0xf]
        %v2361 = vld [vmem:[#allocation22 + $0x528] sm:$0xf]
        %v2362 = vld [vmem:[#allocation22 + $0x52c] sm:$0xf]
        %v2363 = vld [vmem:[#allocation22 + $0x530] sm:$0xf]
        %v2364 = vld [vmem:[#allocation22 + $0x534] sm:$0xf]
        %v2365 = vld [vmem:[#allocation22 + $0x538] sm:$0xf]
        %v2366 = vld [vmem:[#allocation22 + $0x53c] sm:$0xf]
        %v2367 = vld [vmem:[#allocation22 + $0x540] sm:$0xf]
        %v2368 = vld [vmem:[#allocation22 + $0x544] sm:$0xf]
        %v2369 = vld [vmem:[#allocation22 + $0x548] sm:$0xf]
        %v2370 = vld [vmem:[#allocation22 + $0x54c] sm:$0xf]
        %v2371 = vld [vmem:[#allocation22 + $0x550] sm:$0xf]
        %v2372 = vld [vmem:[#allocation22 + $0x554] sm:$0xf]
        %v2373 = vld [vmem:[#allocation22 + $0x558] sm:$0xf]
        %v2374 = vld [vmem:[#allocation11 + $0x1] sm:$0x7]
        %v2375 = vpack.c.bf16 %v2374, %v2374
        %v2376 = vld [vmem:[#allocation22 + $0x560] sm:$0xf]
        %v2377 = vld [vmem:[#allocation22 + $0x564] sm:$0xf]
        %v2378 = vld [vmem:[#allocation22 + $0x568] sm:$0xf]
        %v2379 = vld [vmem:[#allocation22 + $0x56c] sm:$0xf]
        %v2380 = vld [vmem:[#allocation22 + $0x570] sm:$0xf]
        %v2381 = vld [vmem:[#allocation22 + $0x574] sm:$0xf]
        %v2382 = vld [vmem:[#allocation22 + $0x578] sm:$0xf]
        %v2383 = vld [vmem:[#allocation22 + $0x57c] sm:$0xf]
        %v2384 = vld [vmem:[#allocation22 + $0x580] sm:$0xf]
        %v2385 = vld [vmem:[#allocation22 + $0x584] sm:$0xf]
        %v2386 = vld [vmem:[#allocation22 + $0x588] sm:$0xf]
        %v2387 = vld [vmem:[#allocation22 + $0x58c] sm:$0xf]
        %v2388 = vld [vmem:[#allocation22 + $0x590] sm:$0xf]
        %v2389 = vld [vmem:[#allocation22 + $0x594] sm:$0xf]
        %v2390 = vld [vmem:[#allocation22 + $0x598] sm:$0xf]
        %v2406 = vunpack.c.l.b16 %v2376
        %v2407 = vunpack.c.l.b16 %v2377
        %v2408 = vunpack.c.l.b16 %v2378
        %v2409 = vunpack.c.l.b16 %v2379
        %v2410 = vunpack.c.l.b16 %v2380
        %v2411 = vunpack.c.l.b16 %v2381
        %v2412 = vunpack.c.l.b16 %v2382
        %v2413 = vunpack.c.l.b16 %v2383
        %v2414 = vunpack.c.l.b16 %v2384
        %v2415 = vunpack.c.l.b16 %v2385
        %v2416 = vunpack.c.l.b16 %v2386
        %v2417 = vunpack.c.l.b16 %v2387
        %v2418 = vunpack.c.l.b16 %v2388
        %v2419 = vunpack.c.l.b16 %v2389
        %v2420 = vunpack.c.l.b16 %v2390
        %v2421 = vpack.c.b16 %v2407, %v2406
        %v2422 = vpack.c.b16 %v2409, %v2408
        %v2423 = vpack.c.b16 %v2411, %v2410
        %v2424 = vpack.c.b16 %v2413, %v2412
        %v2425 = vpack.c.b16 %v2415, %v2414
        %v2426 = vpack.c.b16 %v2417, %v2416
        %v2427 = vpack.c.b16 %v2419, %v2418
        %v2428 = vpack.c.b16 %v2420, %v2420
        %v2437 = vsel %vm1921, %v2375, 0
        %v2440 = vsel %vm585, %v2428, 0
        %2442 = vmatpush.bf16.msra.mxu0 %v2440
        %2443 = vmatpush.bf16.msra.mxu0 %v2427
        %2444 = vmatpush.bf16.msra.mxu0 %v2426
        %2445 = vmatpush.bf16.msra.mxu0 %v2425
        %2446 = vmatpush.bf16.msra.mxu0 %v2424
        %2447 = vmatpush.bf16.msra.mxu0 %v2423
        %2448 = vmatpush.bf16.msra.mxu0 %v2422
        %2449 = vmatpush.bf16.msra.mxu0 %v2421
        %2450 = vmatmul.bf16.gmra.mxu0 %v2437
        %v2451 = vpop.f32.mrf.mxu0
        %v2452 = vadd.f32 0.0, %v2451
        %v2453 = vpop.f32.mrf.mxu0
        %2454 = vdwg.mxu0
        %v2470 = vunpack.c.l.b16 %v2359
        %v2471 = vunpack.c.l.b16 %v2360
        %v2472 = vunpack.c.l.b16 %v2361
        %v2473 = vunpack.c.l.b16 %v2362
        %v2474 = vunpack.c.l.b16 %v2363
        %v2475 = vunpack.c.l.b16 %v2364
        %v2476 = vunpack.c.l.b16 %v2365
        %v2477 = vunpack.c.l.b16 %v2366
        %v2478 = vunpack.c.l.b16 %v2367
        %v2479 = vunpack.c.l.b16 %v2368
        %v2480 = vunpack.c.l.b16 %v2369
        %v2481 = vunpack.c.l.b16 %v2370
        %v2482 = vunpack.c.l.b16 %v2371
        %v2483 = vunpack.c.l.b16 %v2372
        %v2484 = vunpack.c.l.b16 %v2373
        %v2485 = vpack.c.b16 %v2471, %v2470
        %v2486 = vpack.c.b16 %v2473, %v2472
        %v2487 = vpack.c.b16 %v2475, %v2474
        %v2488 = vpack.c.b16 %v2477, %v2476
        %v2489 = vpack.c.b16 %v2479, %v2478
        %v2490 = vpack.c.b16 %v2481, %v2480
        %v2491 = vpack.c.b16 %v2483, %v2482
        %v2492 = vpack.c.b16 %v2484, %v2484
        %v2501 = vsel %vm1921, %v2358, 0
        %v2504 = vsel %vm585, %v2492, 0
        %2506 = vmatpush.bf16.msra.mxu0 %v2504
        %2507 = vmatpush.bf16.msra.mxu0 %v2491
        %2508 = vmatpush.bf16.msra.mxu0 %v2490
        %2509 = vmatpush.bf16.msra.mxu0 %v2489
        %2510 = vmatpush.bf16.msra.mxu0 %v2488
        %2511 = vmatpush.bf16.msra.mxu0 %v2487
        %2512 = vmatpush.bf16.msra.mxu0 %v2486
        %2513 = vmatpush.bf16.msra.mxu0 %v2485
        %2514 = vmatmul.bf16.gmra.mxu0 %v2501
        %v2515 = vpop.f32.mrf.mxu0
        %v2516 = vadd.f32 %v2452, %v2515
        %v2517 = vpop.f32.mrf.mxu0
        %2518 = vdwg.mxu0
        %v2519 = vld [vmem:[#allocation11 + $0x2] sm:$0x7]
        %v2520 = vpack.c.bf16 %v2519, %v2519
        %v2521 = vld [vmem:[#allocation22 + $0x5a0] sm:$0xf]
        %v2522 = vld [vmem:[#allocation22 + $0x5a4] sm:$0xf]
        %v2523 = vld [vmem:[#allocation22 + $0x5a8] sm:$0xf]
        %v2524 = vld [vmem:[#allocation22 + $0x5ac] sm:$0xf]
        %v2525 = vld [vmem:[#allocation22 + $0x5b0] sm:$0xf]
        %v2526 = vld [vmem:[#allocation22 + $0x5b4] sm:$0xf]
        %v2527 = vld [vmem:[#allocation22 + $0x5b8] sm:$0xf]
        %v2528 = vld [vmem:[#allocation22 + $0x5bc] sm:$0xf]
        %v2529 = vld [vmem:[#allocation22 + $0x5c0] sm:$0xf]
        %v2530 = vld [vmem:[#allocation22 + $0x5c4] sm:$0xf]
        %v2531 = vld [vmem:[#allocation22 + $0x5c8] sm:$0xf]
        %v2532 = vld [vmem:[#allocation22 + $0x5cc] sm:$0xf]
        %v2533 = vld [vmem:[#allocation22 + $0x5d0] sm:$0xf]
        %v2534 = vld [vmem:[#allocation22 + $0x5d4] sm:$0xf]
        %v2535 = vld [vmem:[#allocation22 + $0x5d8] sm:$0xf]
        %v2551 = vunpack.c.l.b16 %v2521
        %v2552 = vunpack.c.l.b16 %v2522
        %v2553 = vunpack.c.l.b16 %v2523
        %v2554 = vunpack.c.l.b16 %v2524
        %v2555 = vunpack.c.l.b16 %v2525
        %v2556 = vunpack.c.l.b16 %v2526
        %v2557 = vunpack.c.l.b16 %v2527
        %v2558 = vunpack.c.l.b16 %v2528
        %v2559 = vunpack.c.l.b16 %v2529
        %v2560 = vunpack.c.l.b16 %v2530
        %v2561 = vunpack.c.l.b16 %v2531
        %v2562 = vunpack.c.l.b16 %v2532
        %v2563 = vunpack.c.l.b16 %v2533
        %v2564 = vunpack.c.l.b16 %v2534
        %v2565 = vunpack.c.l.b16 %v2535
        %v2566 = vpack.c.b16 %v2552, %v2551
        %v2567 = vpack.c.b16 %v2554, %v2553
        %v2568 = vpack.c.b16 %v2556, %v2555
        %v2569 = vpack.c.b16 %v2558, %v2557
        %v2570 = vpack.c.b16 %v2560, %v2559
        %v2571 = vpack.c.b16 %v2562, %v2561
        %v2572 = vpack.c.b16 %v2564, %v2563
        %v2573 = vpack.c.b16 %v2565, %v2565
        %v2582 = vsel %vm1921, %v2520, 0
        %v2585 = vsel %vm585, %v2573, 0
        %2587 = vmatpush.bf16.msra.mxu0 %v2585
        %2588 = vmatpush.bf16.msra.mxu0 %v2572
        %2589 = vmatpush.bf16.msra.mxu0 %v2571
        %2590 = vmatpush.bf16.msra.mxu0 %v2570
        %2591 = vmatpush.bf16.msra.mxu0 %v2569
        %2592 = vmatpush.bf16.msra.mxu0 %v2568
        %2593 = vmatpush.bf16.msra.mxu0 %v2567
        %2594 = vmatpush.bf16.msra.mxu0 %v2566
        %2595 = vmatmul.bf16.gmra.mxu0 %v2582
        %v2596 = vpop.f32.mrf.mxu0
        %v2597 = vadd.f32 0.0, %v2596
        %v2598 = vpop.f32.mrf.mxu0
        %2599 = vdwg.mxu0
        %v2600 = vadd.f32 %v2516, %v2597
        %v2601 = vld [vmem:[#allocation24 + $0xb0] sm:$0x1]
        %v2602 = vperm.slane %v2601, 0
        %v2603 = vadd.f32 %v2600, %v2602
        %v2604 = vld [vmem:[#allocation24 + $0xb8] sm:$0x1]
        %vm2605 = vcmp.gt.f32.partialorder %v2603, 0.0
        %v2606 = vperm.slane %v2604, 0
        %v2607 = vmul.f32 %v2606, %v2603
        %v2608 = vsel %vm2605, %v2603, %v2607
        %2610 = vrot.lane.b32.xlu0 %v2608, 24
        %v2611 = vpop.permute.xlu0 %2610
        %2613 = vst.msk [vmem:[#allocation12 + $0x1] sm:$0x7] %vm1840, %v2611
        %v2614 = vld [vmem:[#allocation12] sm:$0x7]
        %v2615 = vpack.c.bf16 %v2614, %v2614
        %v2616 = vld [vmem:[#allocation22 + $0x5e0] sm:$0xf]
        %v2617 = vld [vmem:[#allocation22 + $0x5e4] sm:$0xf]
        %v2618 = vld [vmem:[#allocation22 + $0x5e8] sm:$0xf]
        %v2619 = vld [vmem:[#allocation22 + $0x5ec] sm:$0xf]
        %v2620 = vld [vmem:[#allocation22 + $0x5f0] sm:$0xf]
        %v2621 = vld [vmem:[#allocation22 + $0x5f4] sm:$0xf]
        %v2622 = vld [vmem:[#allocation22 + $0x5f8] sm:$0xf]
        %v2623 = vld [vmem:[#allocation22 + $0x5fc] sm:$0xf]
        %v2624 = vld [vmem:[#allocation22 + $0x600] sm:$0xf]
        %v2625 = vld [vmem:[#allocation22 + $0x604] sm:$0xf]
        %v2626 = vld [vmem:[#allocation22 + $0x608] sm:$0xf]
        %v2627 = vld [vmem:[#allocation22 + $0x60c] sm:$0xf]
        %v2628 = vld [vmem:[#allocation22 + $0x610] sm:$0xf]
        %v2629 = vld [vmem:[#allocation22 + $0x614] sm:$0xf]
        %v2630 = vld [vmem:[#allocation22 + $0x618] sm:$0xf]
        %v2631 = vld [vmem:[#allocation12 + $0x1] sm:$0x7]
        %v2632 = vpack.c.bf16 %v2631, %v2631
        %v2633 = vld [vmem:[#allocation22 + $0x620] sm:$0xf]
        %v2634 = vld [vmem:[#allocation22 + $0x624] sm:$0xf]
        %v2635 = vld [vmem:[#allocation22 + $0x628] sm:$0xf]
        %v2636 = vld [vmem:[#allocation22 + $0x62c] sm:$0xf]
        %v2637 = vld [vmem:[#allocation22 + $0x630] sm:$0xf]
        %v2638 = vld [vmem:[#allocation22 + $0x634] sm:$0xf]
        %v2639 = vld [vmem:[#allocation22 + $0x638] sm:$0xf]
        %v2640 = vld [vmem:[#allocation22 + $0x63c] sm:$0xf]
        %v2641 = vld [vmem:[#allocation22 + $0x640] sm:$0xf]
        %v2642 = vld [vmem:[#allocation22 + $0x644] sm:$0xf]
        %v2643 = vld [vmem:[#allocation22 + $0x648] sm:$0xf]
        %v2644 = vld [vmem:[#allocation22 + $0x64c] sm:$0xf]
        %v2645 = vld [vmem:[#allocation22 + $0x650] sm:$0xf]
        %v2646 = vld [vmem:[#allocation22 + $0x654] sm:$0xf]
        %v2647 = vld [vmem:[#allocation22 + $0x658] sm:$0xf]
        %v2663 = vunpack.c.l.b16 %v2633
        %v2664 = vunpack.c.l.b16 %v2634
        %v2665 = vunpack.c.l.b16 %v2635
        %v2666 = vunpack.c.l.b16 %v2636
        %v2667 = vunpack.c.l.b16 %v2637
        %v2668 = vunpack.c.l.b16 %v2638
        %v2669 = vunpack.c.l.b16 %v2639
        %v2670 = vunpack.c.l.b16 %v2640
        %v2671 = vunpack.c.l.b16 %v2641
        %v2672 = vunpack.c.l.b16 %v2642
        %v2673 = vunpack.c.l.b16 %v2643
        %v2674 = vunpack.c.l.b16 %v2644
        %v2675 = vunpack.c.l.b16 %v2645
        %v2676 = vunpack.c.l.b16 %v2646
        %v2677 = vunpack.c.l.b16 %v2647
        %v2678 = vpack.c.b16 %v2664, %v2663
        %v2679 = vpack.c.b16 %v2666, %v2665
        %v2680 = vpack.c.b16 %v2668, %v2667
        %v2681 = vpack.c.b16 %v2670, %v2669
        %v2682 = vpack.c.b16 %v2672, %v2671
        %v2683 = vpack.c.b16 %v2674, %v2673
        %v2684 = vpack.c.b16 %v2676, %v2675
        %v2685 = vpack.c.b16 %v2677, %v2677
        %v2694 = vsel %vm1921, %v2632, 0
        %v2697 = vsel %vm585, %v2685, 0
        %2699 = vmatpush.bf16.msra.mxu0 %v2697
        %2700 = vmatpush.bf16.msra.mxu0 %v2684
        %2701 = vmatpush.bf16.msra.mxu0 %v2683
        %2702 = vmatpush.bf16.msra.mxu0 %v2682
        %2703 = vmatpush.bf16.msra.mxu0 %v2681
        %2704 = vmatpush.bf16.msra.mxu0 %v2680
        %2705 = vmatpush.bf16.msra.mxu0 %v2679
        %2706 = vmatpush.bf16.msra.mxu0 %v2678
        %2707 = vmatmul.bf16.gmra.mxu0 %v2694
        %v2708 = vpop.f32.mrf.mxu0
        %v2709 = vadd.f32 0.0, %v2708
        %v2710 = vpop.f32.mrf.mxu0
        %2711 = vdwg.mxu0
        %v2727 = vunpack.c.l.b16 %v2616
        %v2728 = vunpack.c.l.b16 %v2617
        %v2729 = vunpack.c.l.b16 %v2618
        %v2730 = vunpack.c.l.b16 %v2619
        %v2731 = vunpack.c.l.b16 %v2620
        %v2732 = vunpack.c.l.b16 %v2621
        %v2733 = vunpack.c.l.b16 %v2622
        %v2734 = vunpack.c.l.b16 %v2623
        %v2735 = vunpack.c.l.b16 %v2624
        %v2736 = vunpack.c.l.b16 %v2625
        %v2737 = vunpack.c.l.b16 %v2626
        %v2738 = vunpack.c.l.b16 %v2627
        %v2739 = vunpack.c.l.b16 %v2628
        %v2740 = vunpack.c.l.b16 %v2629
        %v2741 = vunpack.c.l.b16 %v2630
        %v2742 = vpack.c.b16 %v2728, %v2727
        %v2743 = vpack.c.b16 %v2730, %v2729
        %v2744 = vpack.c.b16 %v2732, %v2731
        %v2745 = vpack.c.b16 %v2734, %v2733
        %v2746 = vpack.c.b16 %v2736, %v2735
        %v2747 = vpack.c.b16 %v2738, %v2737
        %v2748 = vpack.c.b16 %v2740, %v2739
        %v2749 = vpack.c.b16 %v2741, %v2741
        %v2758 = vsel %vm1921, %v2615, 0
        %v2761 = vsel %vm585, %v2749, 0
        %2763 = vmatpush.bf16.msra.mxu0 %v2761
        %2764 = vmatpush.bf16.msra.mxu0 %v2748
        %2765 = vmatpush.bf16.msra.mxu0 %v2747
        %2766 = vmatpush.bf16.msra.mxu0 %v2746
        %2767 = vmatpush.bf16.msra.mxu0 %v2745
        %2768 = vmatpush.bf16.msra.mxu0 %v2744
        %2769 = vmatpush.bf16.msra.mxu0 %v2743
        %2770 = vmatpush.bf16.msra.mxu0 %v2742
        %2771 = vmatmul.bf16.gmra.mxu0 %v2758
        %v2772 = vpop.f32.mrf.mxu0
        %v2773 = vadd.f32 %v2709, %v2772
        %v2774 = vpop.f32.mrf.mxu0
        %2775 = vdwg.mxu0
        %v2776 = vld [vmem:[#allocation12 + $0x2] sm:$0x7]
        %v2777 = vpack.c.bf16 %v2776, %v2776
        %v2778 = vld [vmem:[#allocation22 + $0x660] sm:$0xf]
        %v2779 = vld [vmem:[#allocation22 + $0x664] sm:$0xf]
        %v2780 = vld [vmem:[#allocation22 + $0x668] sm:$0xf]
        %v2781 = vld [vmem:[#allocation22 + $0x66c] sm:$0xf]
        %v2782 = vld [vmem:[#allocation22 + $0x670] sm:$0xf]
        %v2783 = vld [vmem:[#allocation22 + $0x674] sm:$0xf]
        %v2784 = vld [vmem:[#allocation22 + $0x678] sm:$0xf]
        %v2785 = vld [vmem:[#allocation22 + $0x67c] sm:$0xf]
        %v2786 = vld [vmem:[#allocation22 + $0x680] sm:$0xf]
        %v2787 = vld [vmem:[#allocation22 + $0x684] sm:$0xf]
        %v2788 = vld [vmem:[#allocation22 + $0x688] sm:$0xf]
        %v2789 = vld [vmem:[#allocation22 + $0x68c] sm:$0xf]
        %v2790 = vld [vmem:[#allocation22 + $0x690] sm:$0xf]
        %v2791 = vld [vmem:[#allocation22 + $0x694] sm:$0xf]
        %v2792 = vld [vmem:[#allocation22 + $0x698] sm:$0xf]
        %v2808 = vunpack.c.l.b16 %v2778
        %v2809 = vunpack.c.l.b16 %v2779
        %v2810 = vunpack.c.l.b16 %v2780
        %v2811 = vunpack.c.l.b16 %v2781
        %v2812 = vunpack.c.l.b16 %v2782
        %v2813 = vunpack.c.l.b16 %v2783
        %v2814 = vunpack.c.l.b16 %v2784
        %v2815 = vunpack.c.l.b16 %v2785
        %v2816 = vunpack.c.l.b16 %v2786
        %v2817 = vunpack.c.l.b16 %v2787
        %v2818 = vunpack.c.l.b16 %v2788
        %v2819 = vunpack.c.l.b16 %v2789
        %v2820 = vunpack.c.l.b16 %v2790
        %v2821 = vunpack.c.l.b16 %v2791
        %v2822 = vunpack.c.l.b16 %v2792
        %v2823 = vpack.c.b16 %v2809, %v2808
        %v2824 = vpack.c.b16 %v2811, %v2810
        %v2825 = vpack.c.b16 %v2813, %v2812
        %v2826 = vpack.c.b16 %v2815, %v2814
        %v2827 = vpack.c.b16 %v2817, %v2816
        %v2828 = vpack.c.b16 %v2819, %v2818
        %v2829 = vpack.c.b16 %v2821, %v2820
        %v2830 = vpack.c.b16 %v2822, %v2822
        %v2839 = vsel %vm1921, %v2777, 0
        %v2842 = vsel %vm585, %v2830, 0
        %2844 = vmatpush.bf16.msra.mxu0 %v2842
        %2845 = vmatpush.bf16.msra.mxu0 %v2829
        %2846 = vmatpush.bf16.msra.mxu0 %v2828
        %2847 = vmatpush.bf16.msra.mxu0 %v2827
        %2848 = vmatpush.bf16.msra.mxu0 %v2826
        %2849 = vmatpush.bf16.msra.mxu0 %v2825
        %2850 = vmatpush.bf16.msra.mxu0 %v2824
        %2851 = vmatpush.bf16.msra.mxu0 %v2823
        %2852 = vmatmul.bf16.gmra.mxu0 %v2839
        %v2853 = vpop.f32.mrf.mxu0
        %v2854 = vadd.f32 0.0, %v2853
        %v2855 = vpop.f32.mrf.mxu0
        %2856 = vdwg.mxu0
        %v2857 = vadd.f32 %v2773, %v2854
        %v2858 = vld [vmem:[#allocation24 + $0xd0] sm:$0x3]
        %v2859 = vld [vmem:[#allocation24 + $0xc0] sm:$0x1]
        %v2860 = vperm.slane %v2859, 0
        %v2862 = vsel %vm209, %v2858, 0
        %v2865 = vsel %vm392, %v2857, 0
        %2867 = vmatpush.msra.mxu0 0.0
        %2868 = vmatpush.msra.mxu0 0.0
        %2869 = vmatpush.msra.mxu0 0.0
        %2870 = vmatpush.msra.mxu0 0.0
        %2871 = vmatpush.msra.mxu0 0.0
        %2872 = vmatpush.msra.mxu0 0.0
        %2873 = vmatpush.msra.mxu0 0.0
        %2874 = vmatpush.msra.mxu0 0.0
        %2875 = vmatpush.msra.mxu0 0.0
        %2876 = vmatpush.msra.mxu0 0.0
        %2877 = vmatpush.msra.mxu0 0.0
        %2878 = vmatpush.msra.mxu0 0.0
        %2879 = vmatpush.msra.mxu0 0.0
        %2880 = vmatpush.msra.mxu0 0.0
        %2881 = vmatpush.msra.mxu0 0.0
        %2882 = vmatpush.msra.mxu0 %v2865
        %2883 = vmatmul.f32.gmra.mxu0 %v2862
        %v2884 = vpop.f32.mrf.mxu0
        %v2885 = vadd.f32 %v2860, %v2884
        %2886 = vdwg.mxu0
        %v2887 = vld [vmem:[#allocation24 + $0xc8] sm:$0x1]
        %vm2888 = vcmp.gt.f32.partialorder %v2885, 0.0
        %v2889 = vperm.slane %v2887, 0
        %v2890 = vmul.f32 %v2889, %v2885
        %v2891 = vsel %vm2888, %v2885, %v2890
        %2893 = vrot.lane.b32.xlu0 %v2891, 32
        %v2894 = vpop.permute.xlu0 %2893
        %vm2896 = vcmask 779520
        %2897 = vst.msk [vmem:[#allocation13 + $0x1] sm:$0x3] %vm2896, %v2894
        %v2898 = vld [vmem:[#allocation13] sm:$0x3]
        %v2899 = vpack.c.bf16 %v2898, %v2898
        %v2900 = vld [vmem:[#allocation22 + $0x6a0] sm:$0xf]
        %v2901 = vld [vmem:[#allocation22 + $0x6a4] sm:$0xf]
        %v2902 = vld [vmem:[#allocation22 + $0x6a8] sm:$0xf]
        %v2903 = vld [vmem:[#allocation22 + $0x6ac] sm:$0xf]
        %v2904 = vld [vmem:[#allocation22 + $0x6b0] sm:$0xf]
        %v2905 = vld [vmem:[#allocation22 + $0x6b4] sm:$0xf]
        %v2906 = vld [vmem:[#allocation22 + $0x6b8] sm:$0xf]
        %v2907 = vld [vmem:[#allocation22 + $0x6bc] sm:$0xf]
        %v2908 = vld [vmem:[#allocation22 + $0x6c0] sm:$0xf]
        %v2909 = vld [vmem:[#allocation22 + $0x6c4] sm:$0xf]
        %v2910 = vld [vmem:[#allocation22 + $0x6c8] sm:$0xf]
        %v2911 = vld [vmem:[#allocation22 + $0x6cc] sm:$0xf]
        %v2912 = vld [vmem:[#allocation22 + $0x6d0] sm:$0xf]
        %v2913 = vld [vmem:[#allocation22 + $0x6d4] sm:$0xf]
        %v2914 = vld [vmem:[#allocation22 + $0x6d8] sm:$0xf]
        %v2915 = vld [vmem:[#allocation22 + $0x6dc] sm:$0xf]
        %v2916 = vld [vmem:[#allocation13 + $0x1] sm:$0x3]
        %v2917 = vpack.c.bf16 %v2916, %v2916
        %v2918 = vld [vmem:[#allocation22 + $0x6e0] sm:$0xf]
        %v2919 = vld [vmem:[#allocation22 + $0x6e4] sm:$0xf]
        %v2920 = vld [vmem:[#allocation22 + $0x6e8] sm:$0xf]
        %v2921 = vld [vmem:[#allocation22 + $0x6ec] sm:$0xf]
        %v2922 = vld [vmem:[#allocation22 + $0x6f0] sm:$0xf]
        %v2923 = vld [vmem:[#allocation22 + $0x6f4] sm:$0xf]
        %v2924 = vld [vmem:[#allocation22 + $0x6f8] sm:$0xf]
        %v2925 = vld [vmem:[#allocation22 + $0x6fc] sm:$0xf]
        %v2926 = vld [vmem:[#allocation22 + $0x700] sm:$0xf]
        %v2927 = vld [vmem:[#allocation22 + $0x704] sm:$0xf]
        %v2928 = vld [vmem:[#allocation22 + $0x708] sm:$0xf]
        %v2929 = vld [vmem:[#allocation22 + $0x70c] sm:$0xf]
        %v2930 = vld [vmem:[#allocation22 + $0x710] sm:$0xf]
        %v2931 = vld [vmem:[#allocation22 + $0x714] sm:$0xf]
        %v2932 = vld [vmem:[#allocation22 + $0x718] sm:$0xf]
        %v2933 = vld [vmem:[#allocation22 + $0x71c] sm:$0xf]
        %v2950 = vunpack.c.l.b16 %v2918
        %v2951 = vunpack.c.l.b16 %v2919
        %v2952 = vunpack.c.l.b16 %v2920
        %v2953 = vunpack.c.l.b16 %v2921
        %v2954 = vunpack.c.l.b16 %v2922
        %v2955 = vunpack.c.l.b16 %v2923
        %v2956 = vunpack.c.l.b16 %v2924
        %v2957 = vunpack.c.l.b16 %v2925
        %v2958 = vunpack.c.l.b16 %v2926
        %v2959 = vunpack.c.l.b16 %v2927
        %v2960 = vunpack.c.l.b16 %v2928
        %v2961 = vunpack.c.l.b16 %v2929
        %v2962 = vunpack.c.l.b16 %v2930
        %v2963 = vunpack.c.l.b16 %v2931
        %v2964 = vunpack.c.l.b16 %v2932
        %v2965 = vunpack.c.l.b16 %v2933
        %v2966 = vpack.c.b16 %v2951, %v2950
        %v2967 = vpack.c.b16 %v2953, %v2952
        %v2968 = vpack.c.b16 %v2955, %v2954
        %v2969 = vpack.c.b16 %v2957, %v2956
        %v2970 = vpack.c.b16 %v2959, %v2958
        %v2971 = vpack.c.b16 %v2961, %v2960
        %v2972 = vpack.c.b16 %v2963, %v2962
        %v2973 = vpack.c.b16 %v2965, %v2964
        %2982 = vmatpush.bf16.msra.mxu0 %v2973
        %2983 = vmatpush.bf16.msra.mxu0 %v2972
        %2984 = vmatpush.bf16.msra.mxu0 %v2971
        %2985 = vmatpush.bf16.msra.mxu0 %v2970
        %2986 = vmatpush.bf16.msra.mxu0 %v2969
        %2987 = vmatpush.bf16.msra.mxu0 %v2968
        %2988 = vmatpush.bf16.msra.mxu0 %v2967
        %2989 = vmatpush.bf16.msra.mxu0 %v2966
        %2990 = vmatmul.bf16.gmra.mxu0 %v2917
        %v2991 = vpop.f32.mrf.mxu0
        %v2992 = vadd.f32 0.0, %v2991
        %v2993 = vpop.f32.mrf.mxu0
        %2994 = vdwg.mxu0
        %v3011 = vunpack.c.l.b16 %v2900
        %v3012 = vunpack.c.l.b16 %v2901
        %v3013 = vunpack.c.l.b16 %v2902
        %v3014 = vunpack.c.l.b16 %v2903
        %v3015 = vunpack.c.l.b16 %v2904
        %v3016 = vunpack.c.l.b16 %v2905
        %v3017 = vunpack.c.l.b16 %v2906
        %v3018 = vunpack.c.l.b16 %v2907
        %v3019 = vunpack.c.l.b16 %v2908
        %v3020 = vunpack.c.l.b16 %v2909
        %v3021 = vunpack.c.l.b16 %v2910
        %v3022 = vunpack.c.l.b16 %v2911
        %v3023 = vunpack.c.l.b16 %v2912
        %v3024 = vunpack.c.l.b16 %v2913
        %v3025 = vunpack.c.l.b16 %v2914
        %v3026 = vunpack.c.l.b16 %v2915
        %v3027 = vpack.c.b16 %v3012, %v3011
        %v3028 = vpack.c.b16 %v3014, %v3013
        %v3029 = vpack.c.b16 %v3016, %v3015
        %v3030 = vpack.c.b16 %v3018, %v3017
        %v3031 = vpack.c.b16 %v3020, %v3019
        %v3032 = vpack.c.b16 %v3022, %v3021
        %v3033 = vpack.c.b16 %v3024, %v3023
        %v3034 = vpack.c.b16 %v3026, %v3025
        %3043 = vmatpush.bf16.msra.mxu0 %v3034
        %3044 = vmatpush.bf16.msra.mxu0 %v3033
        %3045 = vmatpush.bf16.msra.mxu0 %v3032
        %3046 = vmatpush.bf16.msra.mxu0 %v3031
        %3047 = vmatpush.bf16.msra.mxu0 %v3030
        %3048 = vmatpush.bf16.msra.mxu0 %v3029
        %3049 = vmatpush.bf16.msra.mxu0 %v3028
        %3050 = vmatpush.bf16.msra.mxu0 %v3027
        %3051 = vmatmul.bf16.gmra.mxu0 %v2899
        %v3052 = vpop.f32.mrf.mxu0
        %v3053 = vadd.f32 %v2992, %v3052
        %v3054 = vpop.f32.mrf.mxu0
        %3055 = vdwg.mxu0
        %v3056 = vld [vmem:[#allocation13 + $0x2] sm:$0x3]
        %v3057 = vpack.c.bf16 %v3056, %v3056
        %v3058 = vld [vmem:[#allocation22 + $0x720] sm:$0xf]
        %v3059 = vld [vmem:[#allocation22 + $0x724] sm:$0xf]
        %v3060 = vld [vmem:[#allocation22 + $0x728] sm:$0xf]
        %v3061 = vld [vmem:[#allocation22 + $0x72c] sm:$0xf]
        %v3062 = vld [vmem:[#allocation22 + $0x730] sm:$0xf]
        %v3063 = vld [vmem:[#allocation22 + $0x734] sm:$0xf]
        %v3064 = vld [vmem:[#allocation22 + $0x738] sm:$0xf]
        %v3065 = vld [vmem:[#allocation22 + $0x73c] sm:$0xf]
        %v3066 = vld [vmem:[#allocation22 + $0x740] sm:$0xf]
        %v3067 = vld [vmem:[#allocation22 + $0x744] sm:$0xf]
        %v3068 = vld [vmem:[#allocation22 + $0x748] sm:$0xf]
        %v3069 = vld [vmem:[#allocation22 + $0x74c] sm:$0xf]
        %v3070 = vld [vmem:[#allocation22 + $0x750] sm:$0xf]
        %v3071 = vld [vmem:[#allocation22 + $0x754] sm:$0xf]
        %v3072 = vld [vmem:[#allocation22 + $0x758] sm:$0xf]
        %v3073 = vld [vmem:[#allocation22 + $0x75c] sm:$0xf]
        %v3090 = vunpack.c.l.b16 %v3058
        %v3091 = vunpack.c.l.b16 %v3059
        %v3092 = vunpack.c.l.b16 %v3060
        %v3093 = vunpack.c.l.b16 %v3061
        %v3094 = vunpack.c.l.b16 %v3062
        %v3095 = vunpack.c.l.b16 %v3063
        %v3096 = vunpack.c.l.b16 %v3064
        %v3097 = vunpack.c.l.b16 %v3065
        %v3098 = vunpack.c.l.b16 %v3066
        %v3099 = vunpack.c.l.b16 %v3067
        %v3100 = vunpack.c.l.b16 %v3068
        %v3101 = vunpack.c.l.b16 %v3069
        %v3102 = vunpack.c.l.b16 %v3070
        %v3103 = vunpack.c.l.b16 %v3071
        %v3104 = vunpack.c.l.b16 %v3072
        %v3105 = vunpack.c.l.b16 %v3073
        %v3106 = vpack.c.b16 %v3091, %v3090
        %v3107 = vpack.c.b16 %v3093, %v3092
        %v3108 = vpack.c.b16 %v3095, %v3094
        %v3109 = vpack.c.b16 %v3097, %v3096
        %v3110 = vpack.c.b16 %v3099, %v3098
        %v3111 = vpack.c.b16 %v3101, %v3100
        %v3112 = vpack.c.b16 %v3103, %v3102
        %v3113 = vpack.c.b16 %v3105, %v3104
        %3122 = vmatpush.bf16.msra.mxu0 %v3113
        %3123 = vmatpush.bf16.msra.mxu0 %v3112
        %3124 = vmatpush.bf16.msra.mxu0 %v3111
        %3125 = vmatpush.bf16.msra.mxu0 %v3110
        %3126 = vmatpush.bf16.msra.mxu0 %v3109
        %3127 = vmatpush.bf16.msra.mxu0 %v3108
        %3128 = vmatpush.bf16.msra.mxu0 %v3107
        %3129 = vmatpush.bf16.msra.mxu0 %v3106
        %3130 = vmatmul.bf16.gmra.mxu0 %v3057
        %v3131 = vpop.f32.mrf.mxu0
        %v3132 = vadd.f32 0.0, %v3131
        %v3133 = vpop.f32.mrf.mxu0
        %3134 = vdwg.mxu0
        %v3135 = vadd.f32 %v3053, %v3132
        %v3136 = vld [vmem:[#allocation24 + $0xd8] sm:$0x1]
        %v3137 = vperm.slane %v3136, 0
        %v3138 = vadd.f32 %v3135, %v3137
        %v3139 = vld [vmem:[#allocation24 + $0xe0] sm:$0x1]
        %vm3140 = vcmp.gt.f32.partialorder %v3138, 0.0
        %v3141 = vperm.slane %v3139, 0
        %v3142 = vmul.f32 %v3141, %v3138
        %v3143 = vsel %vm3140, %v3138, %v3142
        %3145 = vrot.lane.b32.xlu0 %v3143, 32
        %v3146 = vpop.permute.xlu0 %3145
        %3148 = vst.msk [vmem:[#allocation14 + $0x1] sm:$0x3] %vm2896, %v3146
        %v3149 = vld [vmem:[#allocation14] sm:$0x3]
        %v3150 = vpack.c.bf16 %v3149, %v3149
        %v3151 = vld [vmem:[#allocation22 + $0x760] sm:$0xf]
        %v3152 = vld [vmem:[#allocation22 + $0x764] sm:$0xf]
        %v3153 = vld [vmem:[#allocation22 + $0x768] sm:$0xf]
        %v3154 = vld [vmem:[#allocation22 + $0x76c] sm:$0xf]
        %v3155 = vld [vmem:[#allocation22 + $0x770] sm:$0xf]
        %v3156 = vld [vmem:[#allocation22 + $0x774] sm:$0xf]
        %v3157 = vld [vmem:[#allocation22 + $0x778] sm:$0xf]
        %v3158 = vld [vmem:[#allocation22 + $0x77c] sm:$0xf]
        %v3159 = vld [vmem:[#allocation22 + $0x780] sm:$0xf]
        %v3160 = vld [vmem:[#allocation22 + $0x784] sm:$0xf]
        %v3161 = vld [vmem:[#allocation22 + $0x788] sm:$0xf]
        %v3162 = vld [vmem:[#allocation22 + $0x78c] sm:$0xf]
        %v3163 = vld [vmem:[#allocation22 + $0x790] sm:$0xf]
        %v3164 = vld [vmem:[#allocation22 + $0x794] sm:$0xf]
        %v3165 = vld [vmem:[#allocation22 + $0x798] sm:$0xf]
        %v3166 = vld [vmem:[#allocation22 + $0x79c] sm:$0xf]
        %v3167 = vld [vmem:[#allocation14 + $0x1] sm:$0x3]
        %v3168 = vpack.c.bf16 %v3167, %v3167
        %v3169 = vld [vmem:[#allocation22 + $0x7a0] sm:$0xf]
        %v3170 = vld [vmem:[#allocation22 + $0x7a4] sm:$0xf]
        %v3171 = vld [vmem:[#allocation22 + $0x7a8] sm:$0xf]
        %v3172 = vld [vmem:[#allocation22 + $0x7ac] sm:$0xf]
        %v3173 = vld [vmem:[#allocation22 + $0x7b0] sm:$0xf]
        %v3174 = vld [vmem:[#allocation22 + $0x7b4] sm:$0xf]
        %v3175 = vld [vmem:[#allocation22 + $0x7b8] sm:$0xf]
        %v3176 = vld [vmem:[#allocation22 + $0x7bc] sm:$0xf]
        %v3177 = vld [vmem:[#allocation22 + $0x7c0] sm:$0xf]
        %v3178 = vld [vmem:[#allocation22 + $0x7c4] sm:$0xf]
        %v3179 = vld [vmem:[#allocation22 + $0x7c8] sm:$0xf]
        %v3180 = vld [vmem:[#allocation22 + $0x7cc] sm:$0xf]
        %v3181 = vld [vmem:[#allocation22 + $0x7d0] sm:$0xf]
        %v3182 = vld [vmem:[#allocation22 + $0x7d4] sm:$0xf]
        %v3183 = vld [vmem:[#allocation22 + $0x7d8] sm:$0xf]
        %v3184 = vld [vmem:[#allocation22 + $0x7dc] sm:$0xf]
        %v3201 = vunpack.c.l.b16 %v3169
        %v3202 = vunpack.c.l.b16 %v3170
        %v3203 = vunpack.c.l.b16 %v3171
        %v3204 = vunpack.c.l.b16 %v3172
        %v3205 = vunpack.c.l.b16 %v3173
        %v3206 = vunpack.c.l.b16 %v3174
        %v3207 = vunpack.c.l.b16 %v3175
        %v3208 = vunpack.c.l.b16 %v3176
        %v3209 = vunpack.c.l.b16 %v3177
        %v3210 = vunpack.c.l.b16 %v3178
        %v3211 = vunpack.c.l.b16 %v3179
        %v3212 = vunpack.c.l.b16 %v3180
        %v3213 = vunpack.c.l.b16 %v3181
        %v3214 = vunpack.c.l.b16 %v3182
        %v3215 = vunpack.c.l.b16 %v3183
        %v3216 = vunpack.c.l.b16 %v3184
        %v3217 = vpack.c.b16 %v3202, %v3201
        %v3218 = vpack.c.b16 %v3204, %v3203
        %v3219 = vpack.c.b16 %v3206, %v3205
        %v3220 = vpack.c.b16 %v3208, %v3207
        %v3221 = vpack.c.b16 %v3210, %v3209
        %v3222 = vpack.c.b16 %v3212, %v3211
        %v3223 = vpack.c.b16 %v3214, %v3213
        %v3224 = vpack.c.b16 %v3216, %v3215
        %3233 = vmatpush.bf16.msra.mxu0 %v3224
        %3234 = vmatpush.bf16.msra.mxu0 %v3223
        %3235 = vmatpush.bf16.msra.mxu0 %v3222
        %3236 = vmatpush.bf16.msra.mxu0 %v3221
        %3237 = vmatpush.bf16.msra.mxu0 %v3220
        %3238 = vmatpush.bf16.msra.mxu0 %v3219
        %3239 = vmatpush.bf16.msra.mxu0 %v3218
        %3240 = vmatpush.bf16.msra.mxu0 %v3217
        %3241 = vmatmul.bf16.gmra.mxu0 %v3168
        %v3242 = vpop.f32.mrf.mxu0
        %v3243 = vadd.f32 0.0, %v3242
        %v3244 = vpop.f32.mrf.mxu0
        %3245 = vdwg.mxu0
        %v3262 = vunpack.c.l.b16 %v3151
        %v3263 = vunpack.c.l.b16 %v3152
        %v3264 = vunpack.c.l.b16 %v3153
        %v3265 = vunpack.c.l.b16 %v3154
        %v3266 = vunpack.c.l.b16 %v3155
        %v3267 = vunpack.c.l.b16 %v3156
        %v3268 = vunpack.c.l.b16 %v3157
        %v3269 = vunpack.c.l.b16 %v3158
        %v3270 = vunpack.c.l.b16 %v3159
        %v3271 = vunpack.c.l.b16 %v3160
        %v3272 = vunpack.c.l.b16 %v3161
        %v3273 = vunpack.c.l.b16 %v3162
        %v3274 = vunpack.c.l.b16 %v3163
        %v3275 = vunpack.c.l.b16 %v3164
        %v3276 = vunpack.c.l.b16 %v3165
        %v3277 = vunpack.c.l.b16 %v3166
        %v3278 = vpack.c.b16 %v3263, %v3262
        %v3279 = vpack.c.b16 %v3265, %v3264
        %v3280 = vpack.c.b16 %v3267, %v3266
        %v3281 = vpack.c.b16 %v3269, %v3268
        %v3282 = vpack.c.b16 %v3271, %v3270
        %v3283 = vpack.c.b16 %v3273, %v3272
        %v3284 = vpack.c.b16 %v3275, %v3274
        %v3285 = vpack.c.b16 %v3277, %v3276
        %3294 = vmatpush.bf16.msra.mxu0 %v3285
        %3295 = vmatpush.bf16.msra.mxu0 %v3284
        %3296 = vmatpush.bf16.msra.mxu0 %v3283
        %3297 = vmatpush.bf16.msra.mxu0 %v3282
        %3298 = vmatpush.bf16.msra.mxu0 %v3281
        %3299 = vmatpush.bf16.msra.mxu0 %v3280
        %3300 = vmatpush.bf16.msra.mxu0 %v3279
        %3301 = vmatpush.bf16.msra.mxu0 %v3278
        %3302 = vmatmul.bf16.gmra.mxu0 %v3150
        %v3303 = vpop.f32.mrf.mxu0
        %v3304 = vadd.f32 %v3243, %v3303
        %v3305 = vpop.f32.mrf.mxu0
        %3306 = vdwg.mxu0
        %v3307 = vld [vmem:[#allocation14 + $0x2] sm:$0x3]
        %v3308 = vpack.c.bf16 %v3307, %v3307
        %v3309 = vld [vmem:[#allocation22 + $0x7e0] sm:$0xf]
        %v3310 = vld [vmem:[#allocation22 + $0x7e4] sm:$0xf]
        %v3311 = vld [vmem:[#allocation22 + $0x7e8] sm:$0xf]
        %v3312 = vld [vmem:[#allocation22 + $0x7ec] sm:$0xf]
        %v3313 = vld [vmem:[#allocation22 + $0x7f0] sm:$0xf]
        %v3314 = vld [vmem:[#allocation22 + $0x7f4] sm:$0xf]
        %v3315 = vld [vmem:[#allocation22 + $0x7f8] sm:$0xf]
        %v3316 = vld [vmem:[#allocation22 + $0x7fc] sm:$0xf]
        %v3317 = vld [vmem:[#allocation22 + $0x800] sm:$0xf]
        %v3318 = vld [vmem:[#allocation22 + $0x804] sm:$0xf]
        %v3319 = vld [vmem:[#allocation22 + $0x808] sm:$0xf]
        %v3320 = vld [vmem:[#allocation22 + $0x80c] sm:$0xf]
        %v3321 = vld [vmem:[#allocation22 + $0x810] sm:$0xf]
        %v3322 = vld [vmem:[#allocation22 + $0x814] sm:$0xf]
        %v3323 = vld [vmem:[#allocation22 + $0x818] sm:$0xf]
        %v3324 = vld [vmem:[#allocation22 + $0x81c] sm:$0xf]
        %v3341 = vunpack.c.l.b16 %v3309
        %v3342 = vunpack.c.l.b16 %v3310
        %v3343 = vunpack.c.l.b16 %v3311
        %v3344 = vunpack.c.l.b16 %v3312
        %v3345 = vunpack.c.l.b16 %v3313
        %v3346 = vunpack.c.l.b16 %v3314
        %v3347 = vunpack.c.l.b16 %v3315
        %v3348 = vunpack.c.l.b16 %v3316
        %v3349 = vunpack.c.l.b16 %v3317
        %v3350 = vunpack.c.l.b16 %v3318
        %v3351 = vunpack.c.l.b16 %v3319
        %v3352 = vunpack.c.l.b16 %v3320
        %v3353 = vunpack.c.l.b16 %v3321
        %v3354 = vunpack.c.l.b16 %v3322
        %v3355 = vunpack.c.l.b16 %v3323
        %v3356 = vunpack.c.l.b16 %v3324
        %v3357 = vpack.c.b16 %v3342, %v3341
        %v3358 = vpack.c.b16 %v3344, %v3343
        %v3359 = vpack.c.b16 %v3346, %v3345
        %v3360 = vpack.c.b16 %v3348, %v3347
        %v3361 = vpack.c.b16 %v3350, %v3349
        %v3362 = vpack.c.b16 %v3352, %v3351
        %v3363 = vpack.c.b16 %v3354, %v3353
        %v3364 = vpack.c.b16 %v3356, %v3355
        %3373 = vmatpush.bf16.msra.mxu0 %v3364
        %3374 = vmatpush.bf16.msra.mxu0 %v3363
        %3375 = vmatpush.bf16.msra.mxu0 %v3362
        %3376 = vmatpush.bf16.msra.mxu0 %v3361
        %3377 = vmatpush.bf16.msra.mxu0 %v3360
        %3378 = vmatpush.bf16.msra.mxu0 %v3359
        %3379 = vmatpush.bf16.msra.mxu0 %v3358
        %3380 = vmatpush.bf16.msra.mxu0 %v3357
        %3381 = vmatmul.bf16.gmra.mxu0 %v3308
        %v3382 = vpop.f32.mrf.mxu0
        %v3383 = vadd.f32 0.0, %v3382
        %v3384 = vpop.f32.mrf.mxu0
        %3385 = vdwg.mxu0
        %v3386 = vadd.f32 %v3304, %v3383
        %v3387 = vld [vmem:[#allocation24 + $0xe8] sm:$0x1]
        %v3388 = vperm.slane %v3387, 0
        %v3389 = vadd.f32 %v3386, %v3388
        %v3390 = vld [vmem:[#allocation24 + $0xf0] sm:$0x1]
        %vm3391 = vcmp.gt.f32.partialorder %v3389, 0.0
        %v3392 = vperm.slane %v3390, 0
        %v3393 = vmul.f32 %v3392, %v3389
        %v3394 = vsel %vm3391, %v3389, %v3393
        %3396 = vrot.lane.b32.xlu0 %v3394, 32
        %v3397 = vpop.permute.xlu0 %3396
        %3399 = vst.msk [vmem:[#allocation15 + $0x1] sm:$0x3] %vm2896, %v3397
        %v3400 = vld [vmem:[#allocation15] sm:$0x3]
        %v3401 = vpack.c.bf16 %v3400, %v3400
        %v3402 = vld [vmem:[#allocation22 + $0x820] sm:$0xf]
        %v3403 = vld [vmem:[#allocation22 + $0x824] sm:$0xf]
        %v3404 = vld [vmem:[#allocation22 + $0x828] sm:$0xf]
        %v3405 = vld [vmem:[#allocation22 + $0x82c] sm:$0xf]
        %v3406 = vld [vmem:[#allocation22 + $0x830] sm:$0xf]
        %v3407 = vld [vmem:[#allocation22 + $0x834] sm:$0xf]
        %v3408 = vld [vmem:[#allocation22 + $0x838] sm:$0xf]
        %v3409 = vld [vmem:[#allocation22 + $0x83c] sm:$0xf]
        %v3410 = vld [vmem:[#allocation22 + $0x840] sm:$0xf]
        %v3411 = vld [vmem:[#allocation22 + $0x844] sm:$0xf]
        %v3412 = vld [vmem:[#allocation22 + $0x848] sm:$0xf]
        %v3413 = vld [vmem:[#allocation22 + $0x84c] sm:$0xf]
        %v3414 = vld [vmem:[#allocation22 + $0x850] sm:$0xf]
        %v3415 = vld [vmem:[#allocation22 + $0x854] sm:$0xf]
        %v3416 = vld [vmem:[#allocation22 + $0x858] sm:$0xf]
        %v3417 = vld [vmem:[#allocation22 + $0x85c] sm:$0xf]
        %v3418 = vld [vmem:[#allocation15 + $0x1] sm:$0x3]
        %v3419 = vpack.c.bf16 %v3418, %v3418
        %v3420 = vld [vmem:[#allocation22 + $0x860] sm:$0xf]
        %v3421 = vld [vmem:[#allocation22 + $0x864] sm:$0xf]
        %v3422 = vld [vmem:[#allocation22 + $0x868] sm:$0xf]
        %v3423 = vld [vmem:[#allocation22 + $0x86c] sm:$0xf]
        %v3424 = vld [vmem:[#allocation22 + $0x870] sm:$0xf]
        %v3425 = vld [vmem:[#allocation22 + $0x874] sm:$0xf]
        %v3426 = vld [vmem:[#allocation22 + $0x878] sm:$0xf]
        %v3427 = vld [vmem:[#allocation22 + $0x87c] sm:$0xf]
        %v3428 = vld [vmem:[#allocation22 + $0x880] sm:$0xf]
        %v3429 = vld [vmem:[#allocation22 + $0x884] sm:$0xf]
        %v3430 = vld [vmem:[#allocation22 + $0x888] sm:$0xf]
        %v3431 = vld [vmem:[#allocation22 + $0x88c] sm:$0xf]
        %v3432 = vld [vmem:[#allocation22 + $0x890] sm:$0xf]
        %v3433 = vld [vmem:[#allocation22 + $0x894] sm:$0xf]
        %v3434 = vld [vmem:[#allocation22 + $0x898] sm:$0xf]
        %v3435 = vld [vmem:[#allocation22 + $0x89c] sm:$0xf]
        %v3452 = vunpack.c.l.b16 %v3420
        %v3453 = vunpack.c.l.b16 %v3421
        %v3454 = vunpack.c.l.b16 %v3422
        %v3455 = vunpack.c.l.b16 %v3423
        %v3456 = vunpack.c.l.b16 %v3424
        %v3457 = vunpack.c.l.b16 %v3425
        %v3458 = vunpack.c.l.b16 %v3426
        %v3459 = vunpack.c.l.b16 %v3427
        %v3460 = vunpack.c.l.b16 %v3428
        %v3461 = vunpack.c.l.b16 %v3429
        %v3462 = vunpack.c.l.b16 %v3430
        %v3463 = vunpack.c.l.b16 %v3431
        %v3464 = vunpack.c.l.b16 %v3432
        %v3465 = vunpack.c.l.b16 %v3433
        %v3466 = vunpack.c.l.b16 %v3434
        %v3467 = vunpack.c.l.b16 %v3435
        %v3468 = vpack.c.b16 %v3453, %v3452
        %v3469 = vpack.c.b16 %v3455, %v3454
        %v3470 = vpack.c.b16 %v3457, %v3456
        %v3471 = vpack.c.b16 %v3459, %v3458
        %v3472 = vpack.c.b16 %v3461, %v3460
        %v3473 = vpack.c.b16 %v3463, %v3462
        %v3474 = vpack.c.b16 %v3465, %v3464
        %v3475 = vpack.c.b16 %v3467, %v3466
        %3484 = vmatpush.bf16.msra.mxu0 %v3475
        %3485 = vmatpush.bf16.msra.mxu0 %v3474
        %3486 = vmatpush.bf16.msra.mxu0 %v3473
        %3487 = vmatpush.bf16.msra.mxu0 %v3472
        %3488 = vmatpush.bf16.msra.mxu0 %v3471
        %3489 = vmatpush.bf16.msra.mxu0 %v3470
        %3490 = vmatpush.bf16.msra.mxu0 %v3469
        %3491 = vmatpush.bf16.msra.mxu0 %v3468
        %3492 = vmatmul.bf16.gmra.mxu0 %v3419
        %v3493 = vpop.f32.mrf.mxu0
        %v3494 = vadd.f32 0.0, %v3493
        %v3495 = vpop.f32.mrf.mxu0
        %3496 = vdwg.mxu0
        %v3513 = vunpack.c.l.b16 %v3402
        %v3514 = vunpack.c.l.b16 %v3403
        %v3515 = vunpack.c.l.b16 %v3404
        %v3516 = vunpack.c.l.b16 %v3405
        %v3517 = vunpack.c.l.b16 %v3406
        %v3518 = vunpack.c.l.b16 %v3407
        %v3519 = vunpack.c.l.b16 %v3408
        %v3520 = vunpack.c.l.b16 %v3409
        %v3521 = vunpack.c.l.b16 %v3410
        %v3522 = vunpack.c.l.b16 %v3411
        %v3523 = vunpack.c.l.b16 %v3412
        %v3524 = vunpack.c.l.b16 %v3413
        %v3525 = vunpack.c.l.b16 %v3414
        %v3526 = vunpack.c.l.b16 %v3415
        %v3527 = vunpack.c.l.b16 %v3416
        %v3528 = vunpack.c.l.b16 %v3417
        %v3529 = vpack.c.b16 %v3514, %v3513
        %v3530 = vpack.c.b16 %v3516, %v3515
        %v3531 = vpack.c.b16 %v3518, %v3517
        %v3532 = vpack.c.b16 %v3520, %v3519
        %v3533 = vpack.c.b16 %v3522, %v3521
        %v3534 = vpack.c.b16 %v3524, %v3523
        %v3535 = vpack.c.b16 %v3526, %v3525
        %v3536 = vpack.c.b16 %v3528, %v3527
        %3545 = vmatpush.bf16.msra.mxu0 %v3536
        %3546 = vmatpush.bf16.msra.mxu0 %v3535
        %3547 = vmatpush.bf16.msra.mxu0 %v3534
        %3548 = vmatpush.bf16.msra.mxu0 %v3533
        %3549 = vmatpush.bf16.msra.mxu0 %v3532
        %3550 = vmatpush.bf16.msra.mxu0 %v3531
        %3551 = vmatpush.bf16.msra.mxu0 %v3530
        %3552 = vmatpush.bf16.msra.mxu0 %v3529
        %3553 = vmatmul.bf16.gmra.mxu0 %v3401
        %v3554 = vpop.f32.mrf.mxu0
        %v3555 = vadd.f32 %v3494, %v3554
        %v3556 = vpop.f32.mrf.mxu0
        %3557 = vdwg.mxu0
        %v3558 = vld [vmem:[#allocation15 + $0x2] sm:$0x3]
        %v3559 = vpack.c.bf16 %v3558, %v3558
        %v3560 = vld [vmem:[#allocation22 + $0x8a0] sm:$0xf]
        %v3561 = vld [vmem:[#allocation22 + $0x8a4] sm:$0xf]
        %v3562 = vld [vmem:[#allocation22 + $0x8a8] sm:$0xf]
        %v3563 = vld [vmem:[#allocation22 + $0x8ac] sm:$0xf]
        %v3564 = vld [vmem:[#allocation22 + $0x8b0] sm:$0xf]
        %v3565 = vld [vmem:[#allocation22 + $0x8b4] sm:$0xf]
        %v3566 = vld [vmem:[#allocation22 + $0x8b8] sm:$0xf]
        %v3567 = vld [vmem:[#allocation22 + $0x8bc] sm:$0xf]
        %v3568 = vld [vmem:[#allocation22 + $0x8c0] sm:$0xf]
        %v3569 = vld [vmem:[#allocation22 + $0x8c4] sm:$0xf]
        %v3570 = vld [vmem:[#allocation22 + $0x8c8] sm:$0xf]
        %v3571 = vld [vmem:[#allocation22 + $0x8cc] sm:$0xf]
        %v3572 = vld [vmem:[#allocation22 + $0x8d0] sm:$0xf]
        %v3573 = vld [vmem:[#allocation22 + $0x8d4] sm:$0xf]
        %v3574 = vld [vmem:[#allocation22 + $0x8d8] sm:$0xf]
        %v3575 = vld [vmem:[#allocation22 + $0x8dc] sm:$0xf]
        %v3592 = vunpack.c.l.b16 %v3560
        %v3593 = vunpack.c.l.b16 %v3561
        %v3594 = vunpack.c.l.b16 %v3562
        %v3595 = vunpack.c.l.b16 %v3563
        %v3596 = vunpack.c.l.b16 %v3564
        %v3597 = vunpack.c.l.b16 %v3565
        %v3598 = vunpack.c.l.b16 %v3566
        %v3599 = vunpack.c.l.b16 %v3567
        %v3600 = vunpack.c.l.b16 %v3568
        %v3601 = vunpack.c.l.b16 %v3569
        %v3602 = vunpack.c.l.b16 %v3570
        %v3603 = vunpack.c.l.b16 %v3571
        %v3604 = vunpack.c.l.b16 %v3572
        %v3605 = vunpack.c.l.b16 %v3573
        %v3606 = vunpack.c.l.b16 %v3574
        %v3607 = vunpack.c.l.b16 %v3575
        %v3608 = vpack.c.b16 %v3593, %v3592
        %v3609 = vpack.c.b16 %v3595, %v3594
        %v3610 = vpack.c.b16 %v3597, %v3596
        %v3611 = vpack.c.b16 %v3599, %v3598
        %v3612 = vpack.c.b16 %v3601, %v3600
        %v3613 = vpack.c.b16 %v3603, %v3602
        %v3614 = vpack.c.b16 %v3605, %v3604
        %v3615 = vpack.c.b16 %v3607, %v3606
        %3624 = vmatpush.bf16.msra.mxu0 %v3615
        %3625 = vmatpush.bf16.msra.mxu0 %v3614
        %3626 = vmatpush.bf16.msra.mxu0 %v3613
        %3627 = vmatpush.bf16.msra.mxu0 %v3612
        %3628 = vmatpush.bf16.msra.mxu0 %v3611
        %3629 = vmatpush.bf16.msra.mxu0 %v3610
        %3630 = vmatpush.bf16.msra.mxu0 %v3609
        %3631 = vmatpush.bf16.msra.mxu0 %v3608
        %3632 = vmatmul.bf16.gmra.mxu0 %v3559
        %v3633 = vpop.f32.mrf.mxu0
        %v3634 = vadd.f32 0.0, %v3633
        %v3635 = vpop.f32.mrf.mxu0
        %3636 = vdwg.mxu0
        %v3637 = vadd.f32 %v3555, %v3634
        %v3638 = vld [vmem:[#allocation24 + $0xf8] sm:$0x1]
        %v3639 = vperm.slane %v3638, 0
        %v3640 = vadd.f32 %v3637, %v3639
        %v3641 = vld [vmem:[#allocation24 + $0x100] sm:$0x1]
        %vm3642 = vcmp.gt.f32.partialorder %v3640, 0.0
        %v3643 = vperm.slane %v3641, 0
        %v3644 = vmul.f32 %v3643, %v3640
        %v3645 = vsel %vm3642, %v3640, %v3644
        %3647 = vrot.lane.b32.xlu0 %v3645, 32
        %v3648 = vpop.permute.xlu0 %3647
        %3650 = vst.msk [vmem:[#allocation16 + $0x1] sm:$0x3] %vm2896, %v3648
        %v3651 = vld [vmem:[#allocation16] sm:$0x3]
        %v3652 = vpack.c.bf16 %v3651, %v3651
        %v3653 = vld [vmem:[#allocation22 + $0x8e0] sm:$0xf]
        %v3654 = vld [vmem:[#allocation22 + $0x8e4] sm:$0xf]
        %v3655 = vld [vmem:[#allocation22 + $0x8e8] sm:$0xf]
        %v3656 = vld [vmem:[#allocation22 + $0x8ec] sm:$0xf]
        %v3657 = vld [vmem:[#allocation22 + $0x8f0] sm:$0xf]
        %v3658 = vld [vmem:[#allocation22 + $0x8f4] sm:$0xf]
        %v3659 = vld [vmem:[#allocation22 + $0x8f8] sm:$0xf]
        %v3660 = vld [vmem:[#allocation22 + $0x8fc] sm:$0xf]
        %v3661 = vld [vmem:[#allocation22 + $0x900] sm:$0xf]
        %v3662 = vld [vmem:[#allocation22 + $0x904] sm:$0xf]
        %v3663 = vld [vmem:[#allocation22 + $0x908] sm:$0xf]
        %v3664 = vld [vmem:[#allocation22 + $0x90c] sm:$0xf]
        %v3665 = vld [vmem:[#allocation22 + $0x910] sm:$0xf]
        %v3666 = vld [vmem:[#allocation22 + $0x914] sm:$0xf]
        %v3667 = vld [vmem:[#allocation22 + $0x918] sm:$0xf]
        %v3668 = vld [vmem:[#allocation22 + $0x91c] sm:$0xf]
        %v3669 = vld [vmem:[#allocation16 + $0x1] sm:$0x3]
        %v3670 = vpack.c.bf16 %v3669, %v3669
        %v3671 = vld [vmem:[#allocation22 + $0x920] sm:$0xf]
        %v3672 = vld [vmem:[#allocation22 + $0x924] sm:$0xf]
        %v3673 = vld [vmem:[#allocation22 + $0x928] sm:$0xf]
        %v3674 = vld [vmem:[#allocation22 + $0x92c] sm:$0xf]
        %v3675 = vld [vmem:[#allocation22 + $0x930] sm:$0xf]
        %v3676 = vld [vmem:[#allocation22 + $0x934] sm:$0xf]
        %v3677 = vld [vmem:[#allocation22 + $0x938] sm:$0xf]
        %v3678 = vld [vmem:[#allocation22 + $0x93c] sm:$0xf]
        %v3679 = vld [vmem:[#allocation22 + $0x940] sm:$0xf]
        %v3680 = vld [vmem:[#allocation22 + $0x944] sm:$0xf]
        %v3681 = vld [vmem:[#allocation22 + $0x948] sm:$0xf]
        %v3682 = vld [vmem:[#allocation22 + $0x94c] sm:$0xf]
        %v3683 = vld [vmem:[#allocation22 + $0x950] sm:$0xf]
        %v3684 = vld [vmem:[#allocation22 + $0x954] sm:$0xf]
        %v3685 = vld [vmem:[#allocation22 + $0x958] sm:$0xf]
        %v3686 = vld [vmem:[#allocation22 + $0x95c] sm:$0xf]
        %v3703 = vunpack.c.l.b16 %v3671
        %v3704 = vunpack.c.l.b16 %v3672
        %v3705 = vunpack.c.l.b16 %v3673
        %v3706 = vunpack.c.l.b16 %v3674
        %v3707 = vunpack.c.l.b16 %v3675
        %v3708 = vunpack.c.l.b16 %v3676
        %v3709 = vunpack.c.l.b16 %v3677
        %v3710 = vunpack.c.l.b16 %v3678
        %v3711 = vunpack.c.l.b16 %v3679
        %v3712 = vunpack.c.l.b16 %v3680
        %v3713 = vunpack.c.l.b16 %v3681
        %v3714 = vunpack.c.l.b16 %v3682
        %v3715 = vunpack.c.l.b16 %v3683
        %v3716 = vunpack.c.l.b16 %v3684
        %v3717 = vunpack.c.l.b16 %v3685
        %v3718 = vunpack.c.l.b16 %v3686
        %v3719 = vpack.c.b16 %v3704, %v3703
        %v3720 = vpack.c.b16 %v3706, %v3705
        %v3721 = vpack.c.b16 %v3708, %v3707
        %v3722 = vpack.c.b16 %v3710, %v3709
        %v3723 = vpack.c.b16 %v3712, %v3711
        %v3724 = vpack.c.b16 %v3714, %v3713
        %v3725 = vpack.c.b16 %v3716, %v3715
        %v3726 = vpack.c.b16 %v3718, %v3717
        %3735 = vmatpush.bf16.msra.mxu0 %v3726
        %3736 = vmatpush.bf16.msra.mxu0 %v3725
        %3737 = vmatpush.bf16.msra.mxu0 %v3724
        %3738 = vmatpush.bf16.msra.mxu0 %v3723
        %3739 = vmatpush.bf16.msra.mxu0 %v3722
        %3740 = vmatpush.bf16.msra.mxu0 %v3721
        %3741 = vmatpush.bf16.msra.mxu0 %v3720
        %3742 = vmatpush.bf16.msra.mxu0 %v3719
        %3743 = vmatmul.bf16.gmra.mxu0 %v3670
        %v3744 = vpop.f32.mrf.mxu0
        %v3745 = vadd.f32 0.0, %v3744
        %v3746 = vpop.f32.mrf.mxu0
        %3747 = vdwg.mxu0
        %v3764 = vunpack.c.l.b16 %v3653
        %v3765 = vunpack.c.l.b16 %v3654
        %v3766 = vunpack.c.l.b16 %v3655
        %v3767 = vunpack.c.l.b16 %v3656
        %v3768 = vunpack.c.l.b16 %v3657
        %v3769 = vunpack.c.l.b16 %v3658
        %v3770 = vunpack.c.l.b16 %v3659
        %v3771 = vunpack.c.l.b16 %v3660
        %v3772 = vunpack.c.l.b16 %v3661
        %v3773 = vunpack.c.l.b16 %v3662
        %v3774 = vunpack.c.l.b16 %v3663
        %v3775 = vunpack.c.l.b16 %v3664
        %v3776 = vunpack.c.l.b16 %v3665
        %v3777 = vunpack.c.l.b16 %v3666
        %v3778 = vunpack.c.l.b16 %v3667
        %v3779 = vunpack.c.l.b16 %v3668
        %v3780 = vpack.c.b16 %v3765, %v3764
        %v3781 = vpack.c.b16 %v3767, %v3766
        %v3782 = vpack.c.b16 %v3769, %v3768
        %v3783 = vpack.c.b16 %v3771, %v3770
        %v3784 = vpack.c.b16 %v3773, %v3772
        %v3785 = vpack.c.b16 %v3775, %v3774
        %v3786 = vpack.c.b16 %v3777, %v3776
        %v3787 = vpack.c.b16 %v3779, %v3778
        %3796 = vmatpush.bf16.msra.mxu0 %v3787
        %3797 = vmatpush.bf16.msra.mxu0 %v3786
        %3798 = vmatpush.bf16.msra.mxu0 %v3785
        %3799 = vmatpush.bf16.msra.mxu0 %v3784
        %3800 = vmatpush.bf16.msra.mxu0 %v3783
        %3801 = vmatpush.bf16.msra.mxu0 %v3782
        %3802 = vmatpush.bf16.msra.mxu0 %v3781
        %3803 = vmatpush.bf16.msra.mxu0 %v3780
        %3804 = vmatmul.bf16.gmra.mxu0 %v3652
        %v3805 = vpop.f32.mrf.mxu0
        %v3806 = vadd.f32 %v3745, %v3805
        %v3807 = vpop.f32.mrf.mxu0
        %3808 = vdwg.mxu0
        %v3809 = vld [vmem:[#allocation16 + $0x2] sm:$0x3]
        %v3810 = vpack.c.bf16 %v3809, %v3809
        %v3811 = vld [vmem:[#allocation22 + $0x960] sm:$0xf]
        %v3812 = vld [vmem:[#allocation22 + $0x964] sm:$0xf]
        %v3813 = vld [vmem:[#allocation22 + $0x968] sm:$0xf]
        %v3814 = vld [vmem:[#allocation22 + $0x96c] sm:$0xf]
        %v3815 = vld [vmem:[#allocation22 + $0x970] sm:$0xf]
        %v3816 = vld [vmem:[#allocation22 + $0x974] sm:$0xf]
        %v3817 = vld [vmem:[#allocation22 + $0x978] sm:$0xf]
        %v3818 = vld [vmem:[#allocation22 + $0x97c] sm:$0xf]
        %v3819 = vld [vmem:[#allocation22 + $0x980] sm:$0xf]
        %v3820 = vld [vmem:[#allocation22 + $0x984] sm:$0xf]
        %v3821 = vld [vmem:[#allocation22 + $0x988] sm:$0xf]
        %v3822 = vld [vmem:[#allocation22 + $0x98c] sm:$0xf]
        %v3823 = vld [vmem:[#allocation22 + $0x990] sm:$0xf]
        %v3824 = vld [vmem:[#allocation22 + $0x994] sm:$0xf]
        %v3825 = vld [vmem:[#allocation22 + $0x998] sm:$0xf]
        %v3826 = vld [vmem:[#allocation22 + $0x99c] sm:$0xf]
        %v3843 = vunpack.c.l.b16 %v3811
        %v3844 = vunpack.c.l.b16 %v3812
        %v3845 = vunpack.c.l.b16 %v3813
        %v3846 = vunpack.c.l.b16 %v3814
        %v3847 = vunpack.c.l.b16 %v3815
        %v3848 = vunpack.c.l.b16 %v3816
        %v3849 = vunpack.c.l.b16 %v3817
        %v3850 = vunpack.c.l.b16 %v3818
        %v3851 = vunpack.c.l.b16 %v3819
        %v3852 = vunpack.c.l.b16 %v3820
        %v3853 = vunpack.c.l.b16 %v3821
        %v3854 = vunpack.c.l.b16 %v3822
        %v3855 = vunpack.c.l.b16 %v3823
        %v3856 = vunpack.c.l.b16 %v3824
        %v3857 = vunpack.c.l.b16 %v3825
        %v3858 = vunpack.c.l.b16 %v3826
        %v3859 = vpack.c.b16 %v3844, %v3843
        %v3860 = vpack.c.b16 %v3846, %v3845
        %v3861 = vpack.c.b16 %v3848, %v3847
        %v3862 = vpack.c.b16 %v3850, %v3849
        %v3863 = vpack.c.b16 %v3852, %v3851
        %v3864 = vpack.c.b16 %v3854, %v3853
        %v3865 = vpack.c.b16 %v3856, %v3855
        %v3866 = vpack.c.b16 %v3858, %v3857
        %3875 = vmatpush.bf16.msra.mxu0 %v3866
        %3876 = vmatpush.bf16.msra.mxu0 %v3865
        %3877 = vmatpush.bf16.msra.mxu0 %v3864
        %3878 = vmatpush.bf16.msra.mxu0 %v3863
        %3879 = vmatpush.bf16.msra.mxu0 %v3862
        %3880 = vmatpush.bf16.msra.mxu0 %v3861
        %3881 = vmatpush.bf16.msra.mxu0 %v3860
        %3882 = vmatpush.bf16.msra.mxu0 %v3859
        %3883 = vmatmul.bf16.gmra.mxu0 %v3810
        %v3884 = vpop.f32.mrf.mxu0
        %v3885 = vadd.f32 0.0, %v3884
        %v3886 = vpop.f32.mrf.mxu0
        %3887 = vdwg.mxu0
        %v3888 = vadd.f32 %v3806, %v3885
        %v3889 = vld [vmem:[#allocation24 + $0x108] sm:$0x1]
        %v3890 = vperm.slane %v3889, 0
        %v3891 = vadd.f32 %v3888, %v3890
        %v3892 = vld [vmem:[#allocation24 + $0x110] sm:$0x1]
        %vm3893 = vcmp.gt.f32.partialorder %v3891, 0.0
        %v3894 = vperm.slane %v3892, 0
        %v3895 = vmul.f32 %v3894, %v3891
        %v3896 = vsel %vm3893, %v3891, %v3895
        %3898 = vrot.lane.b32.xlu0 %v3896, 32
        %v3899 = vpop.permute.xlu0 %3898
        %3901 = vst.msk [vmem:[#allocation17 + $0x1] sm:$0x3] %vm2896, %v3899
        %v3902 = vld [vmem:[#allocation17] sm:$0x3]
        %v3903 = vpack.c.bf16 %v3902, %v3902
        %v3904 = vld [vmem:[#allocation22 + $0x9a0] sm:$0xf]
        %v3905 = vld [vmem:[#allocation22 + $0x9a4] sm:$0xf]
        %v3906 = vld [vmem:[#allocation22 + $0x9a8] sm:$0xf]
        %v3907 = vld [vmem:[#allocation22 + $0x9ac] sm:$0xf]
        %v3908 = vld [vmem:[#allocation22 + $0x9b0] sm:$0xf]
        %v3909 = vld [vmem:[#allocation22 + $0x9b4] sm:$0xf]
        %v3910 = vld [vmem:[#allocation22 + $0x9b8] sm:$0xf]
        %v3911 = vld [vmem:[#allocation22 + $0x9bc] sm:$0xf]
        %v3912 = vld [vmem:[#allocation22 + $0x9c0] sm:$0xf]
        %v3913 = vld [vmem:[#allocation22 + $0x9c4] sm:$0xf]
        %v3914 = vld [vmem:[#allocation22 + $0x9c8] sm:$0xf]
        %v3915 = vld [vmem:[#allocation22 + $0x9cc] sm:$0xf]
        %v3916 = vld [vmem:[#allocation22 + $0x9d0] sm:$0xf]
        %v3917 = vld [vmem:[#allocation22 + $0x9d4] sm:$0xf]
        %v3918 = vld [vmem:[#allocation22 + $0x9d8] sm:$0xf]
        %v3919 = vld [vmem:[#allocation22 + $0x9dc] sm:$0xf]
        %v3920 = vld [vmem:[#allocation17 + $0x1] sm:$0x3]
        %v3921 = vpack.c.bf16 %v3920, %v3920
        %v3922 = vld [vmem:[#allocation22 + $0x9e0] sm:$0xf]
        %v3923 = vld [vmem:[#allocation22 + $0x9e4] sm:$0xf]
        %v3924 = vld [vmem:[#allocation22 + $0x9e8] sm:$0xf]
        %v3925 = vld [vmem:[#allocation22 + $0x9ec] sm:$0xf]
        %v3926 = vld [vmem:[#allocation22 + $0x9f0] sm:$0xf]
        %v3927 = vld [vmem:[#allocation22 + $0x9f4] sm:$0xf]
        %v3928 = vld [vmem:[#allocation22 + $0x9f8] sm:$0xf]
        %v3929 = vld [vmem:[#allocation22 + $0x9fc] sm:$0xf]
        %v3930 = vld [vmem:[#allocation22 + $0xa00] sm:$0xf]
        %v3931 = vld [vmem:[#allocation22 + $0xa04] sm:$0xf]
        %v3932 = vld [vmem:[#allocation22 + $0xa08] sm:$0xf]
        %v3933 = vld [vmem:[#allocation22 + $0xa0c] sm:$0xf]
        %v3934 = vld [vmem:[#allocation22 + $0xa10] sm:$0xf]
        %v3935 = vld [vmem:[#allocation22 + $0xa14] sm:$0xf]
        %v3936 = vld [vmem:[#allocation22 + $0xa18] sm:$0xf]
        %v3937 = vld [vmem:[#allocation22 + $0xa1c] sm:$0xf]
        %v3954 = vunpack.c.l.b16 %v3922
        %v3955 = vunpack.c.l.b16 %v3923
        %v3956 = vunpack.c.l.b16 %v3924
        %v3957 = vunpack.c.l.b16 %v3925
        %v3958 = vunpack.c.l.b16 %v3926
        %v3959 = vunpack.c.l.b16 %v3927
        %v3960 = vunpack.c.l.b16 %v3928
        %v3961 = vunpack.c.l.b16 %v3929
        %v3962 = vunpack.c.l.b16 %v3930
        %v3963 = vunpack.c.l.b16 %v3931
        %v3964 = vunpack.c.l.b16 %v3932
        %v3965 = vunpack.c.l.b16 %v3933
        %v3966 = vunpack.c.l.b16 %v3934
        %v3967 = vunpack.c.l.b16 %v3935
        %v3968 = vunpack.c.l.b16 %v3936
        %v3969 = vunpack.c.l.b16 %v3937
        %v3970 = vpack.c.b16 %v3955, %v3954
        %v3971 = vpack.c.b16 %v3957, %v3956
        %v3972 = vpack.c.b16 %v3959, %v3958
        %v3973 = vpack.c.b16 %v3961, %v3960
        %v3974 = vpack.c.b16 %v3963, %v3962
        %v3975 = vpack.c.b16 %v3965, %v3964
        %v3976 = vpack.c.b16 %v3967, %v3966
        %v3977 = vpack.c.b16 %v3969, %v3968
        %3986 = vmatpush.bf16.msra.mxu0 %v3977
        %3987 = vmatpush.bf16.msra.mxu0 %v3976
        %3988 = vmatpush.bf16.msra.mxu0 %v3975
        %3989 = vmatpush.bf16.msra.mxu0 %v3974
        %3990 = vmatpush.bf16.msra.mxu0 %v3973
        %3991 = vmatpush.bf16.msra.mxu0 %v3972
        %3992 = vmatpush.bf16.msra.mxu0 %v3971
        %3993 = vmatpush.bf16.msra.mxu0 %v3970
        %3994 = vmatmul.bf16.gmra.mxu0 %v3921
        %v3995 = vpop.f32.mrf.mxu0
        %v3996 = vadd.f32 0.0, %v3995
        %v3997 = vpop.f32.mrf.mxu0
        %3998 = vdwg.mxu0
        %v4015 = vunpack.c.l.b16 %v3904
        %v4016 = vunpack.c.l.b16 %v3905
        %v4017 = vunpack.c.l.b16 %v3906
        %v4018 = vunpack.c.l.b16 %v3907
        %v4019 = vunpack.c.l.b16 %v3908
        %v4020 = vunpack.c.l.b16 %v3909
        %v4021 = vunpack.c.l.b16 %v3910
        %v4022 = vunpack.c.l.b16 %v3911
        %v4023 = vunpack.c.l.b16 %v3912
        %v4024 = vunpack.c.l.b16 %v3913
        %v4025 = vunpack.c.l.b16 %v3914
        %v4026 = vunpack.c.l.b16 %v3915
        %v4027 = vunpack.c.l.b16 %v3916
        %v4028 = vunpack.c.l.b16 %v3917
        %v4029 = vunpack.c.l.b16 %v3918
        %v4030 = vunpack.c.l.b16 %v3919
        %v4031 = vpack.c.b16 %v4016, %v4015
        %v4032 = vpack.c.b16 %v4018, %v4017
        %v4033 = vpack.c.b16 %v4020, %v4019
        %v4034 = vpack.c.b16 %v4022, %v4021
        %v4035 = vpack.c.b16 %v4024, %v4023
        %v4036 = vpack.c.b16 %v4026, %v4025
        %v4037 = vpack.c.b16 %v4028, %v4027
        %v4038 = vpack.c.b16 %v4030, %v4029
        %4047 = vmatpush.bf16.msra.mxu0 %v4038
        %4048 = vmatpush.bf16.msra.mxu0 %v4037
        %4049 = vmatpush.bf16.msra.mxu0 %v4036
        %4050 = vmatpush.bf16.msra.mxu0 %v4035
        %4051 = vmatpush.bf16.msra.mxu0 %v4034
        %4052 = vmatpush.bf16.msra.mxu0 %v4033
        %4053 = vmatpush.bf16.msra.mxu0 %v4032
        %4054 = vmatpush.bf16.msra.mxu0 %v4031
        %4055 = vmatmul.bf16.gmra.mxu0 %v3903
        %v4056 = vpop.f32.mrf.mxu0
        %v4057 = vadd.f32 %v3996, %v4056
        %v4058 = vpop.f32.mrf.mxu0
        %4059 = vdwg.mxu0
        %v4060 = vld [vmem:[#allocation17 + $0x2] sm:$0x3]
        %v4061 = vpack.c.bf16 %v4060, %v4060
        %v4062 = vld [vmem:[#allocation22 + $0xa20] sm:$0xf]
        %v4063 = vld [vmem:[#allocation22 + $0xa24] sm:$0xf]
        %v4064 = vld [vmem:[#allocation22 + $0xa28] sm:$0xf]
        %v4065 = vld [vmem:[#allocation22 + $0xa2c] sm:$0xf]
        %v4066 = vld [vmem:[#allocation22 + $0xa30] sm:$0xf]
        %v4067 = vld [vmem:[#allocation22 + $0xa34] sm:$0xf]
        %v4068 = vld [vmem:[#allocation22 + $0xa38] sm:$0xf]
        %v4069 = vld [vmem:[#allocation22 + $0xa3c] sm:$0xf]
        %v4070 = vld [vmem:[#allocation22 + $0xa40] sm:$0xf]
        %v4071 = vld [vmem:[#allocation22 + $0xa44] sm:$0xf]
        %v4072 = vld [vmem:[#allocation22 + $0xa48] sm:$0xf]
        %v4073 = vld [vmem:[#allocation22 + $0xa4c] sm:$0xf]
        %v4074 = vld [vmem:[#allocation22 + $0xa50] sm:$0xf]
        %v4075 = vld [vmem:[#allocation22 + $0xa54] sm:$0xf]
        %v4076 = vld [vmem:[#allocation22 + $0xa58] sm:$0xf]
        %v4077 = vld [vmem:[#allocation22 + $0xa5c] sm:$0xf]
        %v4094 = vunpack.c.l.b16 %v4062
        %v4095 = vunpack.c.l.b16 %v4063
        %v4096 = vunpack.c.l.b16 %v4064
        %v4097 = vunpack.c.l.b16 %v4065
        %v4098 = vunpack.c.l.b16 %v4066
        %v4099 = vunpack.c.l.b16 %v4067
        %v4100 = vunpack.c.l.b16 %v4068
        %v4101 = vunpack.c.l.b16 %v4069
        %v4102 = vunpack.c.l.b16 %v4070
        %v4103 = vunpack.c.l.b16 %v4071
        %v4104 = vunpack.c.l.b16 %v4072
        %v4105 = vunpack.c.l.b16 %v4073
        %v4106 = vunpack.c.l.b16 %v4074
        %v4107 = vunpack.c.l.b16 %v4075
        %v4108 = vunpack.c.l.b16 %v4076
        %v4109 = vunpack.c.l.b16 %v4077
        %v4110 = vpack.c.b16 %v4095, %v4094
        %v4111 = vpack.c.b16 %v4097, %v4096
        %v4112 = vpack.c.b16 %v4099, %v4098
        %v4113 = vpack.c.b16 %v4101, %v4100
        %v4114 = vpack.c.b16 %v4103, %v4102
        %v4115 = vpack.c.b16 %v4105, %v4104
        %v4116 = vpack.c.b16 %v4107, %v4106
        %v4117 = vpack.c.b16 %v4109, %v4108
        %4126 = vmatpush.bf16.msra.mxu0 %v4117
        %4127 = vmatpush.bf16.msra.mxu0 %v4116
        %4128 = vmatpush.bf16.msra.mxu0 %v4115
        %4129 = vmatpush.bf16.msra.mxu0 %v4114
        %4130 = vmatpush.bf16.msra.mxu0 %v4113
        %4131 = vmatpush.bf16.msra.mxu0 %v4112
        %4132 = vmatpush.bf16.msra.mxu0 %v4111
        %4133 = vmatpush.bf16.msra.mxu0 %v4110
        %4134 = vmatmul.bf16.gmra.mxu0 %v4061
        %v4135 = vpop.f32.mrf.mxu0
        %v4136 = vadd.f32 0.0, %v4135
        %v4137 = vpop.f32.mrf.mxu0
        %4138 = vdwg.mxu0
        %v4139 = vadd.f32 %v4057, %v4136
        %v4140 = vld [vmem:[#allocation24 + $0x118] sm:$0x1]
        %v4141 = vperm.slane %v4140, 0
        %v4142 = vadd.f32 %v4139, %v4141
        %v4143 = vld [vmem:[#allocation24 + $0x120] sm:$0x1]
        %vm4144 = vcmp.gt.f32.partialorder %v4142, 0.0
        %v4145 = vperm.slane %v4143, 0
        %v4146 = vmul.f32 %v4145, %v4142
        %v4147 = vsel %vm4144, %v4142, %v4146
        %4149 = vrot.lane.b32.xlu0 %v4147, 32
        %v4150 = vpop.permute.xlu0 %4149
        %4152 = vst.msk [vmem:[#allocation18 + $0x1] sm:$0x3] %vm2896, %v4150
        %v4153 = vld [vmem:[#allocation18] sm:$0x3]
        %v4154 = vpack.c.bf16 %v4153, %v4153
        %v4155 = vld [vmem:[#allocation22 + $0xa60] sm:$0xf]
        %v4156 = vld [vmem:[#allocation22 + $0xa64] sm:$0xf]
        %v4157 = vld [vmem:[#allocation22 + $0xa68] sm:$0xf]
        %v4158 = vld [vmem:[#allocation22 + $0xa6c] sm:$0xf]
        %v4159 = vld [vmem:[#allocation22 + $0xa70] sm:$0xf]
        %v4160 = vld [vmem:[#allocation22 + $0xa74] sm:$0xf]
        %v4161 = vld [vmem:[#allocation22 + $0xa78] sm:$0xf]
        %v4162 = vld [vmem:[#allocation22 + $0xa7c] sm:$0xf]
        %v4163 = vld [vmem:[#allocation22 + $0xa80] sm:$0xf]
        %v4164 = vld [vmem:[#allocation22 + $0xa84] sm:$0xf]
        %v4165 = vld [vmem:[#allocation22 + $0xa88] sm:$0xf]
        %v4166 = vld [vmem:[#allocation22 + $0xa8c] sm:$0xf]
        %v4167 = vld [vmem:[#allocation22 + $0xa90] sm:$0xf]
        %v4168 = vld [vmem:[#allocation22 + $0xa94] sm:$0xf]
        %v4169 = vld [vmem:[#allocation22 + $0xa98] sm:$0xf]
        %v4170 = vld [vmem:[#allocation22 + $0xa9c] sm:$0xf]
        %v4171 = vld [vmem:[#allocation18 + $0x1] sm:$0x3]
        %v4172 = vpack.c.bf16 %v4171, %v4171
        %v4173 = vld [vmem:[#allocation22 + $0xaa0] sm:$0xf]
        %v4174 = vld [vmem:[#allocation22 + $0xaa4] sm:$0xf]
        %v4175 = vld [vmem:[#allocation22 + $0xaa8] sm:$0xf]
        %v4176 = vld [vmem:[#allocation22 + $0xaac] sm:$0xf]
        %v4177 = vld [vmem:[#allocation22 + $0xab0] sm:$0xf]
        %v4178 = vld [vmem:[#allocation22 + $0xab4] sm:$0xf]
        %v4179 = vld [vmem:[#allocation22 + $0xab8] sm:$0xf]
        %v4180 = vld [vmem:[#allocation22 + $0xabc] sm:$0xf]
        %v4181 = vld [vmem:[#allocation22 + $0xac0] sm:$0xf]
        %v4182 = vld [vmem:[#allocation22 + $0xac4] sm:$0xf]
        %v4183 = vld [vmem:[#allocation22 + $0xac8] sm:$0xf]
        %v4184 = vld [vmem:[#allocation22 + $0xacc] sm:$0xf]
        %v4185 = vld [vmem:[#allocation22 + $0xad0] sm:$0xf]
        %v4186 = vld [vmem:[#allocation22 + $0xad4] sm:$0xf]
        %v4187 = vld [vmem:[#allocation22 + $0xad8] sm:$0xf]
        %v4188 = vld [vmem:[#allocation22 + $0xadc] sm:$0xf]
        %v4205 = vunpack.c.l.b16 %v4173
        %v4206 = vunpack.c.l.b16 %v4174
        %v4207 = vunpack.c.l.b16 %v4175
        %v4208 = vunpack.c.l.b16 %v4176
        %v4209 = vunpack.c.l.b16 %v4177
        %v4210 = vunpack.c.l.b16 %v4178
        %v4211 = vunpack.c.l.b16 %v4179
        %v4212 = vunpack.c.l.b16 %v4180
        %v4213 = vunpack.c.l.b16 %v4181
        %v4214 = vunpack.c.l.b16 %v4182
        %v4215 = vunpack.c.l.b16 %v4183
        %v4216 = vunpack.c.l.b16 %v4184
        %v4217 = vunpack.c.l.b16 %v4185
        %v4218 = vunpack.c.l.b16 %v4186
        %v4219 = vunpack.c.l.b16 %v4187
        %v4220 = vunpack.c.l.b16 %v4188
        %v4221 = vpack.c.b16 %v4206, %v4205
        %v4222 = vpack.c.b16 %v4208, %v4207
        %v4223 = vpack.c.b16 %v4210, %v4209
        %v4224 = vpack.c.b16 %v4212, %v4211
        %v4225 = vpack.c.b16 %v4214, %v4213
        %v4226 = vpack.c.b16 %v4216, %v4215
        %v4227 = vpack.c.b16 %v4218, %v4217
        %v4228 = vpack.c.b16 %v4220, %v4219
        %4237 = vmatpush.bf16.msra.mxu0 %v4228
        %4238 = vmatpush.bf16.msra.mxu0 %v4227
        %4239 = vmatpush.bf16.msra.mxu0 %v4226
        %4240 = vmatpush.bf16.msra.mxu0 %v4225
        %4241 = vmatpush.bf16.msra.mxu0 %v4224
        %4242 = vmatpush.bf16.msra.mxu0 %v4223
        %4243 = vmatpush.bf16.msra.mxu0 %v4222
        %4244 = vmatpush.bf16.msra.mxu0 %v4221
        %4245 = vmatmul.bf16.gmra.mxu0 %v4172
        %v4246 = vpop.f32.mrf.mxu0
        %v4247 = vadd.f32 0.0, %v4246
        %v4248 = vpop.f32.mrf.mxu0
        %4249 = vdwg.mxu0
        %v4266 = vunpack.c.l.b16 %v4155
        %v4267 = vunpack.c.l.b16 %v4156
        %v4268 = vunpack.c.l.b16 %v4157
        %v4269 = vunpack.c.l.b16 %v4158
        %v4270 = vunpack.c.l.b16 %v4159
        %v4271 = vunpack.c.l.b16 %v4160
        %v4272 = vunpack.c.l.b16 %v4161
        %v4273 = vunpack.c.l.b16 %v4162
        %v4274 = vunpack.c.l.b16 %v4163
        %v4275 = vunpack.c.l.b16 %v4164
        %v4276 = vunpack.c.l.b16 %v4165
        %v4277 = vunpack.c.l.b16 %v4166
        %v4278 = vunpack.c.l.b16 %v4167
        %v4279 = vunpack.c.l.b16 %v4168
        %v4280 = vunpack.c.l.b16 %v4169
        %v4281 = vunpack.c.l.b16 %v4170
        %v4282 = vpack.c.b16 %v4267, %v4266
        %v4283 = vpack.c.b16 %v4269, %v4268
        %v4284 = vpack.c.b16 %v4271, %v4270
        %v4285 = vpack.c.b16 %v4273, %v4272
        %v4286 = vpack.c.b16 %v4275, %v4274
        %v4287 = vpack.c.b16 %v4277, %v4276
        %v4288 = vpack.c.b16 %v4279, %v4278
        %v4289 = vpack.c.b16 %v4281, %v4280
        %4298 = vmatpush.bf16.msra.mxu0 %v4289
        %4299 = vmatpush.bf16.msra.mxu0 %v4288
        %4300 = vmatpush.bf16.msra.mxu0 %v4287
        %4301 = vmatpush.bf16.msra.mxu0 %v4286
        %4302 = vmatpush.bf16.msra.mxu0 %v4285
        %4303 = vmatpush.bf16.msra.mxu0 %v4284
        %4304 = vmatpush.bf16.msra.mxu0 %v4283
        %4305 = vmatpush.bf16.msra.mxu0 %v4282
        %4306 = vmatmul.bf16.gmra.mxu0 %v4154
        %v4307 = vpop.f32.mrf.mxu0
        %v4308 = vadd.f32 %v4247, %v4307
        %v4309 = vpop.f32.mrf.mxu0
        %4310 = vdwg.mxu0
        %v4311 = vld [vmem:[#allocation18 + $0x2] sm:$0x3]
        %v4312 = vpack.c.bf16 %v4311, %v4311
        %v4313 = vld [vmem:[#allocation22 + $0xae0] sm:$0xf]
        %v4314 = vld [vmem:[#allocation22 + $0xae4] sm:$0xf]
        %v4315 = vld [vmem:[#allocation22 + $0xae8] sm:$0xf]
        %v4316 = vld [vmem:[#allocation22 + $0xaec] sm:$0xf]
        %v4317 = vld [vmem:[#allocation22 + $0xaf0] sm:$0xf]
        %v4318 = vld [vmem:[#allocation22 + $0xaf4] sm:$0xf]
        %v4319 = vld [vmem:[#allocation22 + $0xaf8] sm:$0xf]
        %v4320 = vld [vmem:[#allocation22 + $0xafc] sm:$0xf]
        %v4321 = vld [vmem:[#allocation22 + $0xb00] sm:$0xf]
        %v4322 = vld [vmem:[#allocation22 + $0xb04] sm:$0xf]
        %v4323 = vld [vmem:[#allocation22 + $0xb08] sm:$0xf]
        %v4324 = vld [vmem:[#allocation22 + $0xb0c] sm:$0xf]
        %v4325 = vld [vmem:[#allocation22 + $0xb10] sm:$0xf]
        %v4326 = vld [vmem:[#allocation22 + $0xb14] sm:$0xf]
        %v4327 = vld [vmem:[#allocation22 + $0xb18] sm:$0xf]
        %v4328 = vld [vmem:[#allocation22 + $0xb1c] sm:$0xf]
        %v4345 = vunpack.c.l.b16 %v4313
        %v4346 = vunpack.c.l.b16 %v4314
        %v4347 = vunpack.c.l.b16 %v4315
        %v4348 = vunpack.c.l.b16 %v4316
        %v4349 = vunpack.c.l.b16 %v4317
        %v4350 = vunpack.c.l.b16 %v4318
        %v4351 = vunpack.c.l.b16 %v4319
        %v4352 = vunpack.c.l.b16 %v4320
        %v4353 = vunpack.c.l.b16 %v4321
        %v4354 = vunpack.c.l.b16 %v4322
        %v4355 = vunpack.c.l.b16 %v4323
        %v4356 = vunpack.c.l.b16 %v4324
        %v4357 = vunpack.c.l.b16 %v4325
        %v4358 = vunpack.c.l.b16 %v4326
        %v4359 = vunpack.c.l.b16 %v4327
        %v4360 = vunpack.c.l.b16 %v4328
        %v4361 = vpack.c.b16 %v4346, %v4345
        %v4362 = vpack.c.b16 %v4348, %v4347
        %v4363 = vpack.c.b16 %v4350, %v4349
        %v4364 = vpack.c.b16 %v4352, %v4351
        %v4365 = vpack.c.b16 %v4354, %v4353
        %v4366 = vpack.c.b16 %v4356, %v4355
        %v4367 = vpack.c.b16 %v4358, %v4357
        %v4368 = vpack.c.b16 %v4360, %v4359
        %4377 = vmatpush.bf16.msra.mxu0 %v4368
        %4378 = vmatpush.bf16.msra.mxu0 %v4367
        %4379 = vmatpush.bf16.msra.mxu0 %v4366
        %4380 = vmatpush.bf16.msra.mxu0 %v4365
        %4381 = vmatpush.bf16.msra.mxu0 %v4364
        %4382 = vmatpush.bf16.msra.mxu0 %v4363
        %4383 = vmatpush.bf16.msra.mxu0 %v4362
        %4384 = vmatpush.bf16.msra.mxu0 %v4361
        %4385 = vmatmul.bf16.gmra.mxu0 %v4312
        %v4386 = vpop.f32.mrf.mxu0
        %v4387 = vadd.f32 0.0, %v4386
        %v4388 = vpop.f32.mrf.mxu0
        %4389 = vdwg.mxu0
        %v4390 = vadd.f32 %v4308, %v4387
        %v4391 = vld [vmem:[#allocation24 + $0x128] sm:$0x1]
        %v4392 = vperm.slane %v4391, 0
        %v4393 = vadd.f32 %v4390, %v4392
        %v4394 = vld [vmem:[#allocation24 + $0x130] sm:$0x1]
        %vm4395 = vcmp.gt.f32.partialorder %v4393, 0.0
        %v4396 = vperm.slane %v4394, 0
        %v4397 = vmul.f32 %v4396, %v4393
        %v4398 = vsel %vm4395, %v4393, %v4397
        %v4400 = vrot.slane %v4398, 4
        %4401 = vrot.lane.b32.xlu0 %v4400, 64
        %v4402 = vpop.permute.xlu0 %4401
        %vm4404 = vcmask 1046020
        %4405 = vst.msk [vmem:[#allocation19 + $0x8] sm:$0x30] %vm4404, %v4402
        %vm4406 = vcmask 259076
        %4407 = vst.msk [vmem:[#allocation19 + $0x10] sm:$0x30] %vm4406, %v4402
        %v4408 = vld [vmem:[#allocation19] sm:$0x3]
        %v4409 = vld [vmem:[#allocation19 + $0x8] sm:$0x3]
        %v4410 = vld [vmem:[#allocation19 + $0x10] sm:$0x3]
        %v4411 = vld [vmem:[#allocation19 + $0x18] sm:$0x3]
        %v4412 = vpack.c.bf16 %v4408, %v4408
        %v4413 = vpack.c.bf16 %v4409, %v4409
        %v4414 = vpack.c.bf16 %v4410, %v4410
        %v4415 = vpack.c.bf16 %v4411, %v4411
        %v4416 = vld [vmem:[#allocation22 + $0xb20] sm:$0xf]
        %v4417 = vld [vmem:[#allocation22 + $0xb24] sm:$0xf]
        %v4418 = vld [vmem:[#allocation22 + $0xb28] sm:$0xf]
        %v4419 = vld [vmem:[#allocation22 + $0xb2c] sm:$0xf]
        %v4420 = vld [vmem:[#allocation22 + $0xb30] sm:$0xf]
        %v4421 = vld [vmem:[#allocation22 + $0xb34] sm:$0xf]
        %v4422 = vld [vmem:[#allocation22 + $0xb38] sm:$0xf]
        %v4423 = vld [vmem:[#allocation22 + $0xb3c] sm:$0xf]
        %v4424 = vld [vmem:[#allocation22 + $0xb40] sm:$0xf]
        %v4425 = vld [vmem:[#allocation22 + $0xb44] sm:$0xf]
        %v4426 = vld [vmem:[#allocation22 + $0xb48] sm:$0xf]
        %v4427 = vld [vmem:[#allocation22 + $0xb4c] sm:$0xf]
        %v4428 = vld [vmem:[#allocation22 + $0xb50] sm:$0xf]
        %v4429 = vld [vmem:[#allocation22 + $0xb54] sm:$0xf]
        %v4430 = vld [vmem:[#allocation22 + $0xb58] sm:$0xf]
        %v4431 = vld [vmem:[#allocation22 + $0xb5c] sm:$0xf]
        %v4432 = vld [vmem:[#allocation22 + $0xb60] sm:$0xf]
        %v4433 = vld [vmem:[#allocation22 + $0xb64] sm:$0xf]
        %v4434 = vld [vmem:[#allocation22 + $0xb68] sm:$0xf]
        %v4435 = vld [vmem:[#allocation22 + $0xb6c] sm:$0xf]
        %v4436 = vld [vmem:[#allocation22 + $0xb70] sm:$0xf]
        %v4437 = vld [vmem:[#allocation22 + $0xb74] sm:$0xf]
        %v4438 = vld [vmem:[#allocation22 + $0xb78] sm:$0xf]
        %v4439 = vld [vmem:[#allocation22 + $0xb7c] sm:$0xf]
        %v4440 = vld [vmem:[#allocation22 + $0xb80] sm:$0xf]
        %v4441 = vld [vmem:[#allocation22 + $0xb84] sm:$0xf]
        %v4442 = vld [vmem:[#allocation22 + $0xb88] sm:$0xf]
        %v4443 = vld [vmem:[#allocation22 + $0xb8c] sm:$0xf]
        %v4444 = vld [vmem:[#allocation22 + $0xb90] sm:$0xf]
        %v4445 = vld [vmem:[#allocation22 + $0xb94] sm:$0xf]
        %v4446 = vld [vmem:[#allocation22 + $0xb98] sm:$0xf]
        %v4447 = vld [vmem:[#allocation22 + $0xb9c] sm:$0xf]
        %v4448 = vld [vmem:[#allocation22 + $0xba0] sm:$0xf]
        %v4449 = vld [vmem:[#allocation22 + $0xba4] sm:$0xf]
        %v4450 = vld [vmem:[#allocation22 + $0xba8] sm:$0xf]
        %v4451 = vld [vmem:[#allocation22 + $0xbac] sm:$0xf]
        %v4452 = vld [vmem:[#allocation22 + $0xbb0] sm:$0xf]
        %v4453 = vld [vmem:[#allocation22 + $0xbb4] sm:$0xf]
        %v4454 = vld [vmem:[#allocation22 + $0xbb8] sm:$0xf]
        %v4455 = vld [vmem:[#allocation22 + $0xbbc] sm:$0xf]
        %v4456 = vld [vmem:[#allocation22 + $0xbc0] sm:$0xf]
        %v4457 = vld [vmem:[#allocation22 + $0xbc4] sm:$0xf]
        %v4458 = vld [vmem:[#allocation22 + $0xbc8] sm:$0xf]
        %v4459 = vld [vmem:[#allocation22 + $0xbcc] sm:$0xf]
        %v4460 = vld [vmem:[#allocation22 + $0xbd0] sm:$0xf]
        %v4461 = vld [vmem:[#allocation22 + $0xbd4] sm:$0xf]
        %v4462 = vld [vmem:[#allocation22 + $0xbd8] sm:$0xf]
        %v4463 = vld [vmem:[#allocation22 + $0xbdc] sm:$0xf]
        %v4464 = vld [vmem:[#allocation22 + $0xbe0] sm:$0xf]
        %v4465 = vld [vmem:[#allocation22 + $0xbe4] sm:$0xf]
        %v4466 = vld [vmem:[#allocation22 + $0xbe8] sm:$0xf]
        %v4467 = vld [vmem:[#allocation22 + $0xbec] sm:$0xf]
        %v4468 = vld [vmem:[#allocation22 + $0xbf0] sm:$0xf]
        %v4469 = vld [vmem:[#allocation22 + $0xbf4] sm:$0xf]
        %v4470 = vld [vmem:[#allocation22 + $0xbf8] sm:$0xf]
        %v4471 = vld [vmem:[#allocation22 + $0xbfc] sm:$0xf]
        %v4472 = vld [vmem:[#allocation22 + $0xc00] sm:$0xf]
        %v4473 = vld [vmem:[#allocation22 + $0xc04] sm:$0xf]
        %v4474 = vld [vmem:[#allocation22 + $0xc08] sm:$0xf]
        %v4475 = vld [vmem:[#allocation22 + $0xc0c] sm:$0xf]
        %v4476 = vld [vmem:[#allocation19] sm:$0x30]
        %v4477 = vld [vmem:[#allocation19 + $0x8] sm:$0x30]
        %v4478 = vld [vmem:[#allocation19 + $0x10] sm:$0x30]
        %v4479 = vld [vmem:[#allocation19 + $0x18] sm:$0x30]
        %v4480 = vpack.c.bf16 %v4476, %v4476
        %v4481 = vpack.c.bf16 %v4477, %v4477
        %v4482 = vpack.c.bf16 %v4478, %v4478
        %v4483 = vpack.c.bf16 %v4479, %v4479
        %v4484 = vld [vmem:[#allocation22 + $0xc10] sm:$0xf]
        %v4485 = vld [vmem:[#allocation22 + $0xc14] sm:$0xf]
        %v4486 = vld [vmem:[#allocation22 + $0xc18] sm:$0xf]
        %v4487 = vld [vmem:[#allocation22 + $0xc1c] sm:$0xf]
        %v4488 = vld [vmem:[#allocation22 + $0xc20] sm:$0xf]
        %v4489 = vld [vmem:[#allocation22 + $0xc24] sm:$0xf]
        %v4490 = vld [vmem:[#allocation22 + $0xc28] sm:$0xf]
        %v4491 = vld [vmem:[#allocation22 + $0xc2c] sm:$0xf]
        %v4492 = vld [vmem:[#allocation22 + $0xc30] sm:$0xf]
        %v4493 = vld [vmem:[#allocation22 + $0xc34] sm:$0xf]
        %v4494 = vld [vmem:[#allocation22 + $0xc38] sm:$0xf]
        %v4495 = vld [vmem:[#allocation22 + $0xc3c] sm:$0xf]
        %v4496 = vld [vmem:[#allocation22 + $0xc40] sm:$0xf]
        %v4497 = vld [vmem:[#allocation22 + $0xc44] sm:$0xf]
        %v4498 = vld [vmem:[#allocation22 + $0xc48] sm:$0xf]
        %v4499 = vld [vmem:[#allocation22 + $0xc4c] sm:$0xf]
        %v4500 = vld [vmem:[#allocation22 + $0xc50] sm:$0xf]
        %v4501 = vld [vmem:[#allocation22 + $0xc54] sm:$0xf]
        %v4502 = vld [vmem:[#allocation22 + $0xc58] sm:$0xf]
        %v4503 = vld [vmem:[#allocation22 + $0xc5c] sm:$0xf]
        %v4504 = vld [vmem:[#allocation22 + $0xc60] sm:$0xf]
        %v4505 = vld [vmem:[#allocation22 + $0xc64] sm:$0xf]
        %v4506 = vld [vmem:[#allocation22 + $0xc68] sm:$0xf]
        %v4507 = vld [vmem:[#allocation22 + $0xc6c] sm:$0xf]
        %v4508 = vld [vmem:[#allocation22 + $0xc70] sm:$0xf]
        %v4509 = vld [vmem:[#allocation22 + $0xc74] sm:$0xf]
        %v4510 = vld [vmem:[#allocation22 + $0xc78] sm:$0xf]
        %v4511 = vld [vmem:[#allocation22 + $0xc7c] sm:$0xf]
        %v4512 = vld [vmem:[#allocation22 + $0xc80] sm:$0xf]
        %v4513 = vld [vmem:[#allocation22 + $0xc84] sm:$0xf]
        %v4514 = vld [vmem:[#allocation22 + $0xc88] sm:$0xf]
        %v4515 = vld [vmem:[#allocation22 + $0xc8c] sm:$0xf]
        %v4516 = vld [vmem:[#allocation22 + $0xc90] sm:$0xf]
        %v4517 = vld [vmem:[#allocation22 + $0xc94] sm:$0xf]
        %v4518 = vld [vmem:[#allocation22 + $0xc98] sm:$0xf]
        %v4519 = vld [vmem:[#allocation22 + $0xc9c] sm:$0xf]
        %v4520 = vld [vmem:[#allocation22 + $0xca0] sm:$0xf]
        %v4521 = vld [vmem:[#allocation22 + $0xca4] sm:$0xf]
        %v4522 = vld [vmem:[#allocation22 + $0xca8] sm:$0xf]
        %v4523 = vld [vmem:[#allocation22 + $0xcac] sm:$0xf]
        %v4524 = vld [vmem:[#allocation22 + $0xcb0] sm:$0xf]
        %v4525 = vld [vmem:[#allocation22 + $0xcb4] sm:$0xf]
        %v4526 = vld [vmem:[#allocation22 + $0xcb8] sm:$0xf]
        %v4527 = vld [vmem:[#allocation22 + $0xcbc] sm:$0xf]
        %v4528 = vld [vmem:[#allocation22 + $0xcc0] sm:$0xf]
        %v4529 = vld [vmem:[#allocation22 + $0xcc4] sm:$0xf]
        %v4530 = vld [vmem:[#allocation22 + $0xcc8] sm:$0xf]
        %v4531 = vld [vmem:[#allocation22 + $0xccc] sm:$0xf]
        %v4532 = vld [vmem:[#allocation22 + $0xcd0] sm:$0xf]
        %v4533 = vld [vmem:[#allocation22 + $0xcd4] sm:$0xf]
        %v4534 = vld [vmem:[#allocation22 + $0xcd8] sm:$0xf]
        %v4535 = vld [vmem:[#allocation22 + $0xcdc] sm:$0xf]
        %v4536 = vld [vmem:[#allocation22 + $0xce0] sm:$0xf]
        %v4537 = vld [vmem:[#allocation22 + $0xce4] sm:$0xf]
        %v4538 = vld [vmem:[#allocation22 + $0xce8] sm:$0xf]
        %v4539 = vld [vmem:[#allocation22 + $0xcec] sm:$0xf]
        %v4540 = vld [vmem:[#allocation22 + $0xcf0] sm:$0xf]
        %v4541 = vld [vmem:[#allocation22 + $0xcf4] sm:$0xf]
        %v4542 = vld [vmem:[#allocation22 + $0xcf8] sm:$0xf]
        %v4543 = vld [vmem:[#allocation22 + $0xcfc] sm:$0xf]
        %v4548 = vrot.slane %v4480, 2
        %v4549 = vrot.slane %v4481, 2
        %v4550 = vrot.slane %v4482, 2
        %v4551 = vrot.slane %v4483, 2
        %v4615 = vunpack.c.l.b16 %v4484
        %v4616 = vunpack.c.l.b16 %v4485
        %v4617 = vunpack.c.l.b16 %v4486
        %v4618 = vunpack.c.l.b16 %v4487
        %v4619 = vunpack.c.l.b16 %v4488
        %v4620 = vunpack.c.l.b16 %v4489
        %v4621 = vunpack.c.l.b16 %v4490
        %v4622 = vunpack.c.l.b16 %v4491
        %v4623 = vunpack.c.l.b16 %v4492
        %v4624 = vunpack.c.l.b16 %v4493
        %v4625 = vunpack.c.l.b16 %v4494
        %v4626 = vunpack.c.l.b16 %v4495
        %v4627 = vunpack.c.l.b16 %v4496
        %v4628 = vunpack.c.l.b16 %v4497
        %v4629 = vunpack.c.l.b16 %v4498
        %v4630 = vunpack.c.l.b16 %v4499
        %v4631 = vunpack.c.l.b16 %v4500
        %v4632 = vunpack.c.l.b16 %v4501
        %v4633 = vunpack.c.l.b16 %v4502
        %v4634 = vunpack.c.l.b16 %v4503
        %v4635 = vunpack.c.l.b16 %v4504
        %v4636 = vunpack.c.l.b16 %v4505
        %v4637 = vunpack.c.l.b16 %v4506
        %v4638 = vunpack.c.l.b16 %v4507
        %v4639 = vunpack.c.l.b16 %v4508
        %v4640 = vunpack.c.l.b16 %v4509
        %v4641 = vunpack.c.l.b16 %v4510
        %v4642 = vunpack.c.l.b16 %v4511
        %v4643 = vunpack.c.l.b16 %v4512
        %v4644 = vunpack.c.l.b16 %v4513
        %v4645 = vunpack.c.l.b16 %v4514
        %v4646 = vunpack.c.l.b16 %v4515
        %v4647 = vunpack.c.l.b16 %v4516
        %v4648 = vunpack.c.l.b16 %v4517
        %v4649 = vunpack.c.l.b16 %v4518
        %v4650 = vunpack.c.l.b16 %v4519
        %v4651 = vunpack.c.l.b16 %v4520
        %v4652 = vunpack.c.l.b16 %v4521
        %v4653 = vunpack.c.l.b16 %v4522
        %v4654 = vunpack.c.l.b16 %v4523
        %v4655 = vunpack.c.l.b16 %v4524
        %v4656 = vunpack.c.l.b16 %v4525
        %v4657 = vunpack.c.l.b16 %v4526
        %v4658 = vunpack.c.l.b16 %v4527
        %v4659 = vunpack.c.l.b16 %v4528
        %v4660 = vunpack.c.l.b16 %v4529
        %v4661 = vunpack.c.l.b16 %v4530
        %v4662 = vunpack.c.l.b16 %v4531
        %v4663 = vunpack.c.l.b16 %v4532
        %v4664 = vunpack.c.l.b16 %v4533
        %v4665 = vunpack.c.l.b16 %v4534
        %v4666 = vunpack.c.l.b16 %v4535
        %v4667 = vunpack.c.l.b16 %v4536
        %v4668 = vunpack.c.l.b16 %v4537
        %v4669 = vunpack.c.l.b16 %v4538
        %v4670 = vunpack.c.l.b16 %v4539
        %v4671 = vunpack.c.l.b16 %v4540
        %v4672 = vunpack.c.l.b16 %v4541
        %v4673 = vunpack.c.l.b16 %v4542
        %v4674 = vunpack.c.l.b16 %v4543
        %v4675 = vpack.c.b16 %v4616, %v4615
        %v4676 = vpack.c.b16 %v4618, %v4617
        %v4677 = vpack.c.b16 %v4620, %v4619
        %v4678 = vpack.c.b16 %v4622, %v4621
        %v4679 = vpack.c.b16 %v4624, %v4623
        %v4680 = vpack.c.b16 %v4626, %v4625
        %v4681 = vpack.c.b16 %v4628, %v4627
        %v4682 = vpack.c.b16 %v4630, %v4629
        %v4683 = vpack.c.b16 %v4632, %v4631
        %v4684 = vpack.c.b16 %v4634, %v4633
        %v4685 = vpack.c.b16 %v4636, %v4635
        %v4686 = vpack.c.b16 %v4638, %v4637
        %v4687 = vpack.c.b16 %v4640, %v4639
        %v4688 = vpack.c.b16 %v4642, %v4641
        %v4689 = vpack.c.b16 %v4644, %v4643
        %v4690 = vpack.c.b16 %v4646, %v4645
        %v4691 = vpack.c.b16 %v4648, %v4647
        %v4692 = vpack.c.b16 %v4650, %v4649
        %v4693 = vpack.c.b16 %v4652, %v4651
        %v4694 = vpack.c.b16 %v4654, %v4653
        %v4695 = vpack.c.b16 %v4656, %v4655
        %v4696 = vpack.c.b16 %v4658, %v4657
        %v4697 = vpack.c.b16 %v4660, %v4659
        %v4698 = vpack.c.b16 %v4662, %v4661
        %v4699 = vpack.c.b16 %v4664, %v4663
        %v4700 = vpack.c.b16 %v4666, %v4665
        %v4701 = vpack.c.b16 %v4668, %v4667
        %v4702 = vpack.c.b16 %v4670, %v4669
        %v4703 = vpack.c.b16 %v4672, %v4671
        %v4704 = vpack.c.b16 %v4674, %v4673
        %vm4735 = vcmask 785408
        %v4737 = vsel %vm4735, %v4551, 0
        %4739 = vmatpush.bf16.msra.mxu0 %v4682
        %4740 = vmatpush.bf16.msra.mxu0 %v4681
        %4741 = vmatpush.bf16.msra.mxu0 %v4680
        %4742 = vmatpush.bf16.msra.mxu0 %v4679
        %4743 = vmatpush.bf16.msra.mxu0 %v4678
        %4744 = vmatpush.bf16.msra.mxu0 %v4677
        %4745 = vmatpush.bf16.msra.mxu0 %v4676
        %4746 = vmatpush.bf16.msra.mxu0 %v4675
        %4747 = vmatmul.bf16.gmra.mxu0 %v4548
        %v4748 = vpop.f32.mrf.mxu0
        %v4749 = vadd.f32 0.0, %v4748
        %v4750 = vpop.f32.mrf.mxu0
        %4751 = vdwg.mxu0
        %4752 = vmatpush.bf16.msra.mxu0 %v4690
        %4753 = vmatpush.bf16.msra.mxu0 %v4689
        %4754 = vmatpush.bf16.msra.mxu0 %v4688
        %4755 = vmatpush.bf16.msra.mxu0 %v4687
        %4756 = vmatpush.bf16.msra.mxu0 %v4686
        %4757 = vmatpush.bf16.msra.mxu0 %v4685
        %4758 = vmatpush.bf16.msra.mxu0 %v4684
        %4759 = vmatpush.bf16.msra.mxu0 %v4683
        %4760 = vmatmul.bf16.gmra.mxu0 %v4549
        %v4761 = vpop.f32.mrf.mxu0
        %v4762 = vadd.f32 %v4749, %v4761
        %v4763 = vpop.f32.mrf.mxu0
        %4764 = vdwg.mxu0
        %4765 = vmatpush.bf16.msra.mxu0 %v4698
        %4766 = vmatpush.bf16.msra.mxu0 %v4697
        %4767 = vmatpush.bf16.msra.mxu0 %v4696
        %4768 = vmatpush.bf16.msra.mxu0 %v4695
        %4769 = vmatpush.bf16.msra.mxu0 %v4694
        %4770 = vmatpush.bf16.msra.mxu0 %v4693
        %4771 = vmatpush.bf16.msra.mxu0 %v4692
        %4772 = vmatpush.bf16.msra.mxu0 %v4691
        %4773 = vmatmul.bf16.gmra.mxu0 %v4550
        %v4774 = vpop.f32.mrf.mxu0
        %v4775 = vadd.f32 %v4762, %v4774
        %v4776 = vpop.f32.mrf.mxu0
        %4777 = vdwg.mxu0
        %4778 = vmatpush.bf16.msra.mxu0 0
        %4779 = vmatpush.bf16.msra.mxu0 0
        %4780 = vmatpush.bf16.msra.mxu0 %v4704
        %4781 = vmatpush.bf16.msra.mxu0 %v4703
        %4782 = vmatpush.bf16.msra.mxu0 %v4702
        %4783 = vmatpush.bf16.msra.mxu0 %v4701
        %4784 = vmatpush.bf16.msra.mxu0 %v4700
        %4785 = vmatpush.bf16.msra.mxu0 %v4699
        %4786 = vmatmul.bf16.gmra.mxu0 %v4737
        %v4787 = vpop.f32.mrf.mxu0
        %v4788 = vadd.f32 %v4775, %v4787
        %v4789 = vpop.f32.mrf.mxu0
        %4790 = vdwg.mxu0
        %v4851 = vunpack.c.l.b16 %v4416
        %v4852 = vunpack.c.l.b16 %v4417
        %v4853 = vunpack.c.l.b16 %v4418
        %v4854 = vunpack.c.l.b16 %v4419
        %v4855 = vunpack.c.l.b16 %v4420
        %v4856 = vunpack.c.l.b16 %v4421
        %v4857 = vunpack.c.l.b16 %v4422
        %v4858 = vunpack.c.l.b16 %v4423
        %v4859 = vunpack.c.l.b16 %v4424
        %v4860 = vunpack.c.l.b16 %v4425
        %v4861 = vunpack.c.l.b16 %v4426
        %v4862 = vunpack.c.l.b16 %v4427
        %v4863 = vunpack.c.l.b16 %v4428
        %v4864 = vunpack.c.l.b16 %v4429
        %v4865 = vunpack.c.l.b16 %v4430
        %v4866 = vunpack.c.l.b16 %v4431
        %v4867 = vunpack.c.l.b16 %v4432
        %v4868 = vunpack.c.l.b16 %v4433
        %v4869 = vunpack.c.l.b16 %v4434
        %v4870 = vunpack.c.l.b16 %v4435
        %v4871 = vunpack.c.l.b16 %v4436
        %v4872 = vunpack.c.l.b16 %v4437
        %v4873 = vunpack.c.l.b16 %v4438
        %v4874 = vunpack.c.l.b16 %v4439
        %v4875 = vunpack.c.l.b16 %v4440
        %v4876 = vunpack.c.l.b16 %v4441
        %v4877 = vunpack.c.l.b16 %v4442
        %v4878 = vunpack.c.l.b16 %v4443
        %v4879 = vunpack.c.l.b16 %v4444
        %v4880 = vunpack.c.l.b16 %v4445
        %v4881 = vunpack.c.l.b16 %v4446
        %v4882 = vunpack.c.l.b16 %v4447
        %v4883 = vunpack.c.l.b16 %v4448
        %v4884 = vunpack.c.l.b16 %v4449
        %v4885 = vunpack.c.l.b16 %v4450
        %v4886 = vunpack.c.l.b16 %v4451
        %v4887 = vunpack.c.l.b16 %v4452
        %v4888 = vunpack.c.l.b16 %v4453
        %v4889 = vunpack.c.l.b16 %v4454
        %v4890 = vunpack.c.l.b16 %v4455
        %v4891 = vunpack.c.l.b16 %v4456
        %v4892 = vunpack.c.l.b16 %v4457
        %v4893 = vunpack.c.l.b16 %v4458
        %v4894 = vunpack.c.l.b16 %v4459
        %v4895 = vunpack.c.l.b16 %v4460
        %v4896 = vunpack.c.l.b16 %v4461
        %v4897 = vunpack.c.l.b16 %v4462
        %v4898 = vunpack.c.l.b16 %v4463
        %v4899 = vunpack.c.l.b16 %v4464
        %v4900 = vunpack.c.l.b16 %v4465
        %v4901 = vunpack.c.l.b16 %v4466
        %v4902 = vunpack.c.l.b16 %v4467
        %v4903 = vunpack.c.l.b16 %v4468
        %v4904 = vunpack.c.l.b16 %v4469
        %v4905 = vunpack.c.l.b16 %v4470
        %v4906 = vunpack.c.l.b16 %v4471
        %v4907 = vunpack.c.l.b16 %v4472
        %v4908 = vunpack.c.l.b16 %v4473
        %v4909 = vunpack.c.l.b16 %v4474
        %v4910 = vunpack.c.l.b16 %v4475
        %v4911 = vpack.c.b16 %v4852, %v4851
        %v4912 = vpack.c.b16 %v4854, %v4853
        %v4913 = vpack.c.b16 %v4856, %v4855
        %v4914 = vpack.c.b16 %v4858, %v4857
        %v4915 = vpack.c.b16 %v4860, %v4859
        %v4916 = vpack.c.b16 %v4862, %v4861
        %v4917 = vpack.c.b16 %v4864, %v4863
        %v4918 = vpack.c.b16 %v4866, %v4865
        %v4919 = vpack.c.b16 %v4868, %v4867
        %v4920 = vpack.c.b16 %v4870, %v4869
        %v4921 = vpack.c.b16 %v4872, %v4871
        %v4922 = vpack.c.b16 %v4874, %v4873
        %v4923 = vpack.c.b16 %v4876, %v4875
        %v4924 = vpack.c.b16 %v4878, %v4877
        %v4925 = vpack.c.b16 %v4880, %v4879
        %v4926 = vpack.c.b16 %v4882, %v4881
        %v4927 = vpack.c.b16 %v4884, %v4883
        %v4928 = vpack.c.b16 %v4886, %v4885
        %v4929 = vpack.c.b16 %v4888, %v4887
        %v4930 = vpack.c.b16 %v4890, %v4889
        %v4931 = vpack.c.b16 %v4892, %v4891
        %v4932 = vpack.c.b16 %v4894, %v4893
        %v4933 = vpack.c.b16 %v4896, %v4895
        %v4934 = vpack.c.b16 %v4898, %v4897
        %v4935 = vpack.c.b16 %v4900, %v4899
        %v4936 = vpack.c.b16 %v4902, %v4901
        %v4937 = vpack.c.b16 %v4904, %v4903
        %v4938 = vpack.c.b16 %v4906, %v4905
        %v4939 = vpack.c.b16 %v4908, %v4907
        %v4940 = vpack.c.b16 %v4910, %v4909
        %v4972 = vsel %vm4735, %v4415, 0
        %4974 = vmatpush.bf16.msra.mxu0 %v4918
        %4975 = vmatpush.bf16.msra.mxu0 %v4917
        %4976 = vmatpush.bf16.msra.mxu0 %v4916
        %4977 = vmatpush.bf16.msra.mxu0 %v4915
        %4978 = vmatpush.bf16.msra.mxu0 %v4914
        %4979 = vmatpush.bf16.msra.mxu0 %v4913
        %4980 = vmatpush.bf16.msra.mxu0 %v4912
        %4981 = vmatpush.bf16.msra.mxu0 %v4911
        %4982 = vmatmul.bf16.gmra.mxu0 %v4412
        %v4983 = vpop.f32.mrf.mxu0
        %v4984 = vadd.f32 %v4788, %v4983
        %v4985 = vpop.f32.mrf.mxu0
        %4986 = vdwg.mxu0
        %4987 = vmatpush.bf16.msra.mxu0 %v4926
        %4988 = vmatpush.bf16.msra.mxu0 %v4925
        %4989 = vmatpush.bf16.msra.mxu0 %v4924
        %4990 = vmatpush.bf16.msra.mxu0 %v4923
        %4991 = vmatpush.bf16.msra.mxu0 %v4922
        %4992 = vmatpush.bf16.msra.mxu0 %v4921
        %4993 = vmatpush.bf16.msra.mxu0 %v4920
        %4994 = vmatpush.bf16.msra.mxu0 %v4919
        %4995 = vmatmul.bf16.gmra.mxu0 %v4413
        %v4996 = vpop.f32.mrf.mxu0
        %v4997 = vadd.f32 %v4984, %v4996
        %v4998 = vpop.f32.mrf.mxu0
        %4999 = vdwg.mxu0
        %5000 = vmatpush.bf16.msra.mxu0 %v4934
        %5001 = vmatpush.bf16.msra.mxu0 %v4933
        %5002 = vmatpush.bf16.msra.mxu0 %v4932
        %5003 = vmatpush.bf16.msra.mxu0 %v4931
        %5004 = vmatpush.bf16.msra.mxu0 %v4930
        %5005 = vmatpush.bf16.msra.mxu0 %v4929
        %5006 = vmatpush.bf16.msra.mxu0 %v4928
        %5007 = vmatpush.bf16.msra.mxu0 %v4927
        %5008 = vmatmul.bf16.gmra.mxu0 %v4414
        %v5009 = vpop.f32.mrf.mxu0
        %v5010 = vadd.f32 %v4997, %v5009
        %v5011 = vpop.f32.mrf.mxu0
        %5012 = vdwg.mxu0
        %5013 = vmatpush.bf16.msra.mxu0 0
        %5014 = vmatpush.bf16.msra.mxu0 0
        %5015 = vmatpush.bf16.msra.mxu0 %v4940
        %5016 = vmatpush.bf16.msra.mxu0 %v4939
        %5017 = vmatpush.bf16.msra.mxu0 %v4938
        %5018 = vmatpush.bf16.msra.mxu0 %v4937
        %5019 = vmatpush.bf16.msra.mxu0 %v4936
        %5020 = vmatpush.bf16.msra.mxu0 %v4935
        %5021 = vmatmul.bf16.gmra.mxu0 %v4972
        %v5022 = vpop.f32.mrf.mxu0
        %v5023 = vadd.f32 %v5010, %v5022
        %v5024 = vpop.f32.mrf.mxu0
        %5025 = vdwg.mxu0
        %v5026 = vld [vmem:[#allocation19 + $0x20] sm:$0x3]
        %v5027 = vld [vmem:[#allocation19 + $0x28] sm:$0x3]
        %v5028 = vld [vmem:[#allocation19 + $0x30] sm:$0x3]
        %v5029 = vld [vmem:[#allocation19 + $0x38] sm:$0x3]
        %v5030 = vpack.c.bf16 %v5026, %v5026
        %v5031 = vpack.c.bf16 %v5027, %v5027
        %v5032 = vpack.c.bf16 %v5028, %v5028
        %v5033 = vpack.c.bf16 %v5029, %v5029
        %v5034 = vld [vmem:[#allocation22 + $0xd00] sm:$0xf]
        %v5035 = vld [vmem:[#allocation22 + $0xd04] sm:$0xf]
        %v5036 = vld [vmem:[#allocation22 + $0xd08] sm:$0xf]
        %v5037 = vld [vmem:[#allocation22 + $0xd0c] sm:$0xf]
        %v5038 = vld [vmem:[#allocation22 + $0xd10] sm:$0xf]
        %v5039 = vld [vmem:[#allocation22 + $0xd14] sm:$0xf]
        %v5040 = vld [vmem:[#allocation22 + $0xd18] sm:$0xf]
        %v5041 = vld [vmem:[#allocation22 + $0xd1c] sm:$0xf]
        %v5042 = vld [vmem:[#allocation22 + $0xd20] sm:$0xf]
        %v5043 = vld [vmem:[#allocation22 + $0xd24] sm:$0xf]
        %v5044 = vld [vmem:[#allocation22 + $0xd28] sm:$0xf]
        %v5045 = vld [vmem:[#allocation22 + $0xd2c] sm:$0xf]
        %v5046 = vld [vmem:[#allocation22 + $0xd30] sm:$0xf]
        %v5047 = vld [vmem:[#allocation22 + $0xd34] sm:$0xf]
        %v5048 = vld [vmem:[#allocation22 + $0xd38] sm:$0xf]
        %v5049 = vld [vmem:[#allocation22 + $0xd3c] sm:$0xf]
        %v5050 = vld [vmem:[#allocation22 + $0xd40] sm:$0xf]
        %v5051 = vld [vmem:[#allocation22 + $0xd44] sm:$0xf]
        %v5052 = vld [vmem:[#allocation22 + $0xd48] sm:$0xf]
        %v5053 = vld [vmem:[#allocation22 + $0xd4c] sm:$0xf]
        %v5054 = vld [vmem:[#allocation22 + $0xd50] sm:$0xf]
        %v5055 = vld [vmem:[#allocation22 + $0xd54] sm:$0xf]
        %v5056 = vld [vmem:[#allocation22 + $0xd58] sm:$0xf]
        %v5057 = vld [vmem:[#allocation22 + $0xd5c] sm:$0xf]
        %v5058 = vld [vmem:[#allocation22 + $0xd60] sm:$0xf]
        %v5059 = vld [vmem:[#allocation22 + $0xd64] sm:$0xf]
        %v5060 = vld [vmem:[#allocation22 + $0xd68] sm:$0xf]
        %v5061 = vld [vmem:[#allocation22 + $0xd6c] sm:$0xf]
        %v5062 = vld [vmem:[#allocation22 + $0xd70] sm:$0xf]
        %v5063 = vld [vmem:[#allocation22 + $0xd74] sm:$0xf]
        %v5064 = vld [vmem:[#allocation22 + $0xd78] sm:$0xf]
        %v5065 = vld [vmem:[#allocation22 + $0xd7c] sm:$0xf]
        %v5066 = vld [vmem:[#allocation22 + $0xd80] sm:$0xf]
        %v5067 = vld [vmem:[#allocation22 + $0xd84] sm:$0xf]
        %v5068 = vld [vmem:[#allocation22 + $0xd88] sm:$0xf]
        %v5069 = vld [vmem:[#allocation22 + $0xd8c] sm:$0xf]
        %v5070 = vld [vmem:[#allocation22 + $0xd90] sm:$0xf]
        %v5071 = vld [vmem:[#allocation22 + $0xd94] sm:$0xf]
        %v5072 = vld [vmem:[#allocation22 + $0xd98] sm:$0xf]
        %v5073 = vld [vmem:[#allocation22 + $0xd9c] sm:$0xf]
        %v5074 = vld [vmem:[#allocation22 + $0xda0] sm:$0xf]
        %v5075 = vld [vmem:[#allocation22 + $0xda4] sm:$0xf]
        %v5076 = vld [vmem:[#allocation22 + $0xda8] sm:$0xf]
        %v5077 = vld [vmem:[#allocation22 + $0xdac] sm:$0xf]
        %v5078 = vld [vmem:[#allocation22 + $0xdb0] sm:$0xf]
        %v5079 = vld [vmem:[#allocation22 + $0xdb4] sm:$0xf]
        %v5080 = vld [vmem:[#allocation22 + $0xdb8] sm:$0xf]
        %v5081 = vld [vmem:[#allocation22 + $0xdbc] sm:$0xf]
        %v5082 = vld [vmem:[#allocation22 + $0xdc0] sm:$0xf]
        %v5083 = vld [vmem:[#allocation22 + $0xdc4] sm:$0xf]
        %v5084 = vld [vmem:[#allocation22 + $0xdc8] sm:$0xf]
        %v5085 = vld [vmem:[#allocation22 + $0xdcc] sm:$0xf]
        %v5086 = vld [vmem:[#allocation22 + $0xdd0] sm:$0xf]
        %v5087 = vld [vmem:[#allocation22 + $0xdd4] sm:$0xf]
        %v5088 = vld [vmem:[#allocation22 + $0xdd8] sm:$0xf]
        %v5089 = vld [vmem:[#allocation22 + $0xddc] sm:$0xf]
        %v5090 = vld [vmem:[#allocation22 + $0xde0] sm:$0xf]
        %v5091 = vld [vmem:[#allocation22 + $0xde4] sm:$0xf]
        %v5092 = vld [vmem:[#allocation22 + $0xde8] sm:$0xf]
        %v5093 = vld [vmem:[#allocation22 + $0xdec] sm:$0xf]
        %v5154 = vunpack.c.l.b16 %v5034
        %v5155 = vunpack.c.l.b16 %v5035
        %v5156 = vunpack.c.l.b16 %v5036
        %v5157 = vunpack.c.l.b16 %v5037
        %v5158 = vunpack.c.l.b16 %v5038
        %v5159 = vunpack.c.l.b16 %v5039
        %v5160 = vunpack.c.l.b16 %v5040
        %v5161 = vunpack.c.l.b16 %v5041
        %v5162 = vunpack.c.l.b16 %v5042
        %v5163 = vunpack.c.l.b16 %v5043
        %v5164 = vunpack.c.l.b16 %v5044
        %v5165 = vunpack.c.l.b16 %v5045
        %v5166 = vunpack.c.l.b16 %v5046
        %v5167 = vunpack.c.l.b16 %v5047
        %v5168 = vunpack.c.l.b16 %v5048
        %v5169 = vunpack.c.l.b16 %v5049
        %v5170 = vunpack.c.l.b16 %v5050
        %v5171 = vunpack.c.l.b16 %v5051
        %v5172 = vunpack.c.l.b16 %v5052
        %v5173 = vunpack.c.l.b16 %v5053
        %v5174 = vunpack.c.l.b16 %v5054
        %v5175 = vunpack.c.l.b16 %v5055
        %v5176 = vunpack.c.l.b16 %v5056
        %v5177 = vunpack.c.l.b16 %v5057
        %v5178 = vunpack.c.l.b16 %v5058
        %v5179 = vunpack.c.l.b16 %v5059
        %v5180 = vunpack.c.l.b16 %v5060
        %v5181 = vunpack.c.l.b16 %v5061
        %v5182 = vunpack.c.l.b16 %v5062
        %v5183 = vunpack.c.l.b16 %v5063
        %v5184 = vunpack.c.l.b16 %v5064
        %v5185 = vunpack.c.l.b16 %v5065
        %v5186 = vunpack.c.l.b16 %v5066
        %v5187 = vunpack.c.l.b16 %v5067
        %v5188 = vunpack.c.l.b16 %v5068
        %v5189 = vunpack.c.l.b16 %v5069
        %v5190 = vunpack.c.l.b16 %v5070
        %v5191 = vunpack.c.l.b16 %v5071
        %v5192 = vunpack.c.l.b16 %v5072
        %v5193 = vunpack.c.l.b16 %v5073
        %v5194 = vunpack.c.l.b16 %v5074
        %v5195 = vunpack.c.l.b16 %v5075
        %v5196 = vunpack.c.l.b16 %v5076
        %v5197 = vunpack.c.l.b16 %v5077
        %v5198 = vunpack.c.l.b16 %v5078
        %v5199 = vunpack.c.l.b16 %v5079
        %v5200 = vunpack.c.l.b16 %v5080
        %v5201 = vunpack.c.l.b16 %v5081
        %v5202 = vunpack.c.l.b16 %v5082
        %v5203 = vunpack.c.l.b16 %v5083
        %v5204 = vunpack.c.l.b16 %v5084
        %v5205 = vunpack.c.l.b16 %v5085
        %v5206 = vunpack.c.l.b16 %v5086
        %v5207 = vunpack.c.l.b16 %v5087
        %v5208 = vunpack.c.l.b16 %v5088
        %v5209 = vunpack.c.l.b16 %v5089
        %v5210 = vunpack.c.l.b16 %v5090
        %v5211 = vunpack.c.l.b16 %v5091
        %v5212 = vunpack.c.l.b16 %v5092
        %v5213 = vunpack.c.l.b16 %v5093
        %v5214 = vpack.c.b16 %v5155, %v5154
        %v5215 = vpack.c.b16 %v5157, %v5156
        %v5216 = vpack.c.b16 %v5159, %v5158
        %v5217 = vpack.c.b16 %v5161, %v5160
        %v5218 = vpack.c.b16 %v5163, %v5162
        %v5219 = vpack.c.b16 %v5165, %v5164
        %v5220 = vpack.c.b16 %v5167, %v5166
        %v5221 = vpack.c.b16 %v5169, %v5168
        %v5222 = vpack.c.b16 %v5171, %v5170
        %v5223 = vpack.c.b16 %v5173, %v5172
        %v5224 = vpack.c.b16 %v5175, %v5174
        %v5225 = vpack.c.b16 %v5177, %v5176
        %v5226 = vpack.c.b16 %v5179, %v5178
        %v5227 = vpack.c.b16 %v5181, %v5180
        %v5228 = vpack.c.b16 %v5183, %v5182
        %v5229 = vpack.c.b16 %v5185, %v5184
        %v5230 = vpack.c.b16 %v5187, %v5186
        %v5231 = vpack.c.b16 %v5189, %v5188
        %v5232 = vpack.c.b16 %v5191, %v5190
        %v5233 = vpack.c.b16 %v5193, %v5192
        %v5234 = vpack.c.b16 %v5195, %v5194
        %v5235 = vpack.c.b16 %v5197, %v5196
        %v5236 = vpack.c.b16 %v5199, %v5198
        %v5237 = vpack.c.b16 %v5201, %v5200
        %v5238 = vpack.c.b16 %v5203, %v5202
        %v5239 = vpack.c.b16 %v5205, %v5204
        %v5240 = vpack.c.b16 %v5207, %v5206
        %v5241 = vpack.c.b16 %v5209, %v5208
        %v5242 = vpack.c.b16 %v5211, %v5210
        %v5243 = vpack.c.b16 %v5213, %v5212
        %v5275 = vsel %vm4735, %v5033, 0
        %5277 = vmatpush.bf16.msra.mxu0 %v5221
        %5278 = vmatpush.bf16.msra.mxu0 %v5220
        %5279 = vmatpush.bf16.msra.mxu0 %v5219
        %5280 = vmatpush.bf16.msra.mxu0 %v5218
        %5281 = vmatpush.bf16.msra.mxu0 %v5217
        %5282 = vmatpush.bf16.msra.mxu0 %v5216
        %5283 = vmatpush.bf16.msra.mxu0 %v5215
        %5284 = vmatpush.bf16.msra.mxu0 %v5214
        %5285 = vmatmul.bf16.gmra.mxu0 %v5030
        %v5286 = vpop.f32.mrf.mxu0
        %v5287 = vadd.f32 0.0, %v5286
        %v5288 = vpop.f32.mrf.mxu0
        %5289 = vdwg.mxu0
        %5290 = vmatpush.bf16.msra.mxu0 %v5229
        %5291 = vmatpush.bf16.msra.mxu0 %v5228
        %5292 = vmatpush.bf16.msra.mxu0 %v5227
        %5293 = vmatpush.bf16.msra.mxu0 %v5226
        %5294 = vmatpush.bf16.msra.mxu0 %v5225
        %5295 = vmatpush.bf16.msra.mxu0 %v5224
        %5296 = vmatpush.bf16.msra.mxu0 %v5223
        %5297 = vmatpush.bf16.msra.mxu0 %v5222
        %5298 = vmatmul.bf16.gmra.mxu0 %v5031
        %v5299 = vpop.f32.mrf.mxu0
        %v5300 = vadd.f32 %v5287, %v5299
        %v5301 = vpop.f32.mrf.mxu0
        %5302 = vdwg.mxu0
        %5303 = vmatpush.bf16.msra.mxu0 %v5237
        %5304 = vmatpush.bf16.msra.mxu0 %v5236
        %5305 = vmatpush.bf16.msra.mxu0 %v5235
        %5306 = vmatpush.bf16.msra.mxu0 %v5234
        %5307 = vmatpush.bf16.msra.mxu0 %v5233
        %5308 = vmatpush.bf16.msra.mxu0 %v5232
        %5309 = vmatpush.bf16.msra.mxu0 %v5231
        %5310 = vmatpush.bf16.msra.mxu0 %v5230
        %5311 = vmatmul.bf16.gmra.mxu0 %v5032
        %v5312 = vpop.f32.mrf.mxu0
        %v5313 = vadd.f32 %v5300, %v5312
        %v5314 = vpop.f32.mrf.mxu0
        %5315 = vdwg.mxu0
        %5316 = vmatpush.bf16.msra.mxu0 0
        %5317 = vmatpush.bf16.msra.mxu0 0
        %5318 = vmatpush.bf16.msra.mxu0 %v5243
        %5319 = vmatpush.bf16.msra.mxu0 %v5242
        %5320 = vmatpush.bf16.msra.mxu0 %v5241
        %5321 = vmatpush.bf16.msra.mxu0 %v5240
        %5322 = vmatpush.bf16.msra.mxu0 %v5239
        %5323 = vmatpush.bf16.msra.mxu0 %v5238
        %5324 = vmatmul.bf16.gmra.mxu0 %v5275
        %v5325 = vpop.f32.mrf.mxu0
        %v5326 = vadd.f32 %v5313, %v5325
        %v5327 = vpop.f32.mrf.mxu0
        %5328 = vdwg.mxu0
        %v5329 = vadd.f32 %v5023, %v5326
        %v5330 = vld [vmem:[#allocation24 + $0x138] sm:$0x1]
        %v5331 = vperm.slane %v5330, 0
        %v5332 = vadd.f32 %v5329, %v5331
        %v5333 = vld [vmem:[#allocation24 + $0x140] sm:$0x1]
        %vm5334 = vcmp.gt.f32.partialorder %v5332, 0.0
        %v5335 = vperm.slane %v5333, 0
        %v5336 = vmul.f32 %v5335, %v5332
        %v5337 = vsel %vm5334, %v5332, %v5336
        %v5338 = vpack.c.bf16 %v5337, %v5337
        %v5339 = vld [vmem:[#allocation22 + $0xdf0] sm:$0xf]
        %v5340 = vld [vmem:[#allocation22 + $0xdf4] sm:$0xf]
        %v5341 = vld [vmem:[#allocation22 + $0xdf8] sm:$0xf]
        %v5342 = vld [vmem:[#allocation22 + $0xdfc] sm:$0xf]
        %v5343 = vld [vmem:[#allocation22 + $0xe00] sm:$0xf]
        %v5344 = vld [vmem:[#allocation22 + $0xe04] sm:$0xf]
        %v5345 = vld [vmem:[#allocation22 + $0xe08] sm:$0xf]
        %v5346 = vld [vmem:[#allocation22 + $0xe0c] sm:$0xf]
        %v5347 = vld [vmem:[#allocation22 + $0xe10] sm:$0xf]
        %v5348 = vld [vmem:[#allocation22 + $0xe14] sm:$0xf]
        %v5349 = vld [vmem:[#allocation22 + $0xe18] sm:$0xf]
        %v5350 = vld [vmem:[#allocation22 + $0xe1c] sm:$0xf]
        %v5351 = vld [vmem:[#allocation24 + $0x148] sm:$0x1]
        %v5352 = vperm.slane %v5351, 0
        %v5365 = vunpack.c.l.b16 %v5339
        %v5366 = vunpack.c.l.b16 %v5340
        %v5367 = vunpack.c.l.b16 %v5341
        %v5368 = vunpack.c.l.b16 %v5342
        %v5369 = vunpack.c.l.b16 %v5343
        %v5370 = vunpack.c.l.b16 %v5344
        %v5371 = vunpack.c.l.b16 %v5345
        %v5372 = vunpack.c.l.b16 %v5346
        %v5373 = vunpack.c.l.b16 %v5347
        %v5374 = vunpack.c.l.b16 %v5348
        %v5375 = vunpack.c.l.b16 %v5349
        %v5376 = vunpack.c.l.b16 %v5350
        %v5377 = vpack.c.b16 %v5366, %v5365
        %v5378 = vpack.c.b16 %v5368, %v5367
        %v5379 = vpack.c.b16 %v5370, %v5369
        %v5380 = vpack.c.b16 %v5372, %v5371
        %v5381 = vpack.c.b16 %v5374, %v5373
        %v5382 = vpack.c.b16 %v5376, %v5375
        %v5390 = vsel %vm4735, %v5338, 0
        %5392 = vmatpush.bf16.msra.mxu0 0
        %5393 = vmatpush.bf16.msra.mxu0 0
        %5394 = vmatpush.bf16.msra.mxu0 %v5382
        %5395 = vmatpush.bf16.msra.mxu0 %v5381
        %5396 = vmatpush.bf16.msra.mxu0 %v5380
        %5397 = vmatpush.bf16.msra.mxu0 %v5379
        %5398 = vmatpush.bf16.msra.mxu0 %v5378
        %5399 = vmatpush.bf16.msra.mxu0 %v5377
        %5400 = vmatmul.bf16.gmra.mxu0 %v5390
        %v5401 = vpop.f32.mrf.mxu0
        %v5402 = vadd.f32 %v5352, %v5401
        %v5403 = vpop.f32.mrf.mxu0
        %5404 = vdwg.mxu0
        %v5405 = vld [vmem:[#allocation24 + $0x150] sm:$0x1]
        %vm5406 = vcmp.gt.f32.partialorder %v5402, 0.0
        %v5407 = vperm.slane %v5405, 0
        %v5408 = vmul.f32 %v5407, %v5402
        %v5409 = vsel %vm5406, %v5402, %v5408
        %v5410 = vpack.c.bf16 %v5409, %v5409
        %v5411 = vld [vmem:[#allocation22 + $0xe20] sm:$0xf]
        %v5412 = vld [vmem:[#allocation22 + $0xe24] sm:$0xf]
        %v5413 = vld [vmem:[#allocation22 + $0xe28] sm:$0xf]
        %v5414 = vld [vmem:[#allocation22 + $0xe2c] sm:$0xf]
        %v5415 = vld [vmem:[#allocation22 + $0xe30] sm:$0xf]
        %v5416 = vld [vmem:[#allocation22 + $0xe34] sm:$0xf]
        %v5417 = vld [vmem:[#allocation22 + $0xe38] sm:$0xf]
        %v5418 = vld [vmem:[#allocation22 + $0xe3c] sm:$0xf]
        %v5419 = vld [vmem:[#allocation22 + $0xe40] sm:$0xf]
        %v5420 = vld [vmem:[#allocation22 + $0xe44] sm:$0xf]
        %v5421 = vld [vmem:[#allocation22 + $0xe48] sm:$0xf]
        %v5422 = vld [vmem:[#allocation22 + $0xe4c] sm:$0xf]
        %v5423 = vld [vmem:[#allocation22 + $0xe50] sm:$0xf]
        %v5424 = vld [vmem:[#allocation22 + $0xe54] sm:$0xf]
        %v5425 = vld [vmem:[#allocation22 + $0xe58] sm:$0xf]
        %v5426 = vld [vmem:[#allocation22 + $0xe5c] sm:$0xf]
        %v5427 = vld [vmem:[#allocation24 + $0x158] sm:$0x1]
        %v5428 = vperm.slane %v5427, 0
        %v5445 = vunpack.c.l.b16 %v5411
        %v5446 = vunpack.c.l.b16 %v5412
        %v5447 = vunpack.c.l.b16 %v5413
        %v5448 = vunpack.c.l.b16 %v5414
        %v5449 = vunpack.c.l.b16 %v5415
        %v5450 = vunpack.c.l.b16 %v5416
        %v5451 = vunpack.c.l.b16 %v5417
        %v5452 = vunpack.c.l.b16 %v5418
        %v5453 = vunpack.c.l.b16 %v5419
        %v5454 = vunpack.c.l.b16 %v5420
        %v5455 = vunpack.c.l.b16 %v5421
        %v5456 = vunpack.c.l.b16 %v5422
        %v5457 = vunpack.c.l.b16 %v5423
        %v5458 = vunpack.c.l.b16 %v5424
        %v5459 = vunpack.c.l.b16 %v5425
        %v5460 = vunpack.c.l.b16 %v5426
        %v5461 = vpack.c.b16 %v5446, %v5445
        %v5462 = vpack.c.b16 %v5448, %v5447
        %v5463 = vpack.c.b16 %v5450, %v5449
        %v5464 = vpack.c.b16 %v5452, %v5451
        %v5465 = vpack.c.b16 %v5454, %v5453
        %v5466 = vpack.c.b16 %v5456, %v5455
        %v5467 = vpack.c.b16 %v5458, %v5457
        %v5468 = vpack.c.b16 %v5460, %v5459
        %5477 = vmatpush.bf16.msra.mxu0 %v5468
        %5478 = vmatpush.bf16.msra.mxu0 %v5467
        %5479 = vmatpush.bf16.msra.mxu0 %v5466
        %5480 = vmatpush.bf16.msra.mxu0 %v5465
        %5481 = vmatpush.bf16.msra.mxu0 %v5464
        %5482 = vmatpush.bf16.msra.mxu0 %v5463
        %5483 = vmatpush.bf16.msra.mxu0 %v5462
        %5484 = vmatpush.bf16.msra.mxu0 %v5461
        %5485 = vmatmul.bf16.gmra.mxu0 %v5410
        %v5486 = vpop.f32.mrf.mxu0
        %v5487 = vadd.f32 %v5428, %v5486
        %v5488 = vpop.f32.mrf.mxu0
        %5489 = vdwg.mxu0
        %v5490 = vld [vmem:[#allocation24 + $0x160] sm:$0x1]
        %vm5491 = vcmp.gt.f32.partialorder %v5487, 0.0
        %v5492 = vperm.slane %v5490, 0
        %v5493 = vmul.f32 %v5492, %v5487
        %v5494 = vsel %vm5491, %v5487, %v5493
        %v5495 = vpack.c.bf16 %v5494, %v5494
        %v5496 = vld [vmem:[#allocation22 + $0xe60] sm:$0xf]
        %v5497 = vld [vmem:[#allocation22 + $0xe64] sm:$0xf]
        %v5498 = vld [vmem:[#allocation22 + $0xe68] sm:$0xf]
        %v5499 = vld [vmem:[#allocation22 + $0xe6c] sm:$0xf]
        %v5500 = vld [vmem:[#allocation22 + $0xe70] sm:$0xf]
        %v5501 = vld [vmem:[#allocation22 + $0xe74] sm:$0xf]
        %v5502 = vld [vmem:[#allocation22 + $0xe78] sm:$0xf]
        %v5503 = vld [vmem:[#allocation22 + $0xe7c] sm:$0xf]
        %v5504 = vld [vmem:[#allocation22 + $0xe80] sm:$0xf]
        %v5505 = vld [vmem:[#allocation22 + $0xe84] sm:$0xf]
        %v5506 = vld [vmem:[#allocation22 + $0xe88] sm:$0xf]
        %v5507 = vld [vmem:[#allocation22 + $0xe8c] sm:$0xf]
        %v5508 = vld [vmem:[#allocation22 + $0xe90] sm:$0xf]
        %v5509 = vld [vmem:[#allocation22 + $0xe94] sm:$0xf]
        %v5510 = vld [vmem:[#allocation22 + $0xe98] sm:$0xf]
        %v5511 = vld [vmem:[#allocation22 + $0xe9c] sm:$0xf]
        %v5512 = vld [vmem:[#allocation24 + $0x168] sm:$0x1]
        %v5513 = vperm.slane %v5512, 0
        %v5530 = vunpack.c.l.b16 %v5496
        %v5531 = vunpack.c.l.b16 %v5497
        %v5532 = vunpack.c.l.b16 %v5498
        %v5533 = vunpack.c.l.b16 %v5499
        %v5534 = vunpack.c.l.b16 %v5500
        %v5535 = vunpack.c.l.b16 %v5501
        %v5536 = vunpack.c.l.b16 %v5502
        %v5537 = vunpack.c.l.b16 %v5503
        %v5538 = vunpack.c.l.b16 %v5504
        %v5539 = vunpack.c.l.b16 %v5505
        %v5540 = vunpack.c.l.b16 %v5506
        %v5541 = vunpack.c.l.b16 %v5507
        %v5542 = vunpack.c.l.b16 %v5508
        %v5543 = vunpack.c.l.b16 %v5509
        %v5544 = vunpack.c.l.b16 %v5510
        %v5545 = vunpack.c.l.b16 %v5511
        %v5546 = vpack.c.b16 %v5531, %v5530
        %v5547 = vpack.c.b16 %v5533, %v5532
        %v5548 = vpack.c.b16 %v5535, %v5534
        %v5549 = vpack.c.b16 %v5537, %v5536
        %v5550 = vpack.c.b16 %v5539, %v5538
        %v5551 = vpack.c.b16 %v5541, %v5540
        %v5552 = vpack.c.b16 %v5543, %v5542
        %v5553 = vpack.c.b16 %v5545, %v5544
        %5562 = vmatpush.bf16.msra.mxu0 %v5553
        %5563 = vmatpush.bf16.msra.mxu0 %v5552
        %5564 = vmatpush.bf16.msra.mxu0 %v5551
        %5565 = vmatpush.bf16.msra.mxu0 %v5550
        %5566 = vmatpush.bf16.msra.mxu0 %v5549
        %5567 = vmatpush.bf16.msra.mxu0 %v5548
        %5568 = vmatpush.bf16.msra.mxu0 %v5547
        %5569 = vmatpush.bf16.msra.mxu0 %v5546
        %5570 = vmatmul.bf16.gmra.mxu0 %v5495
        %v5571 = vpop.f32.mrf.mxu0
        %v5572 = vadd.f32 %v5513, %v5571
        %v5573 = vpop.f32.mrf.mxu0
        %5574 = vdwg.mxu0
        %v5575 = vld [vmem:[#allocation24 + $0x170] sm:$0x1]
        %vm5576 = vcmp.gt.f32.partialorder %v5572, 0.0
        %v5577 = vperm.slane %v5575, 0
        %v5578 = vmul.f32 %v5577, %v5572
        %v5579 = vsel %vm5576, %v5572, %v5578
        %v5580 = vpack.c.bf16 %v5579, %v5579
        %v5581 = vld [vmem:[#allocation22 + $0xea0] sm:$0xf]
        %v5582 = vld [vmem:[#allocation22 + $0xea4] sm:$0xf]
        %v5583 = vld [vmem:[#allocation22 + $0xea8] sm:$0xf]
        %v5584 = vld [vmem:[#allocation22 + $0xeac] sm:$0xf]
        %v5585 = vld [vmem:[#allocation22 + $0xeb0] sm:$0xf]
        %v5586 = vld [vmem:[#allocation22 + $0xeb4] sm:$0xf]
        %v5587 = vld [vmem:[#allocation22 + $0xeb8] sm:$0xf]
        %v5588 = vld [vmem:[#allocation22 + $0xebc] sm:$0xf]
        %v5589 = vld [vmem:[#allocation22 + $0xec0] sm:$0xf]
        %v5590 = vld [vmem:[#allocation22 + $0xec4] sm:$0xf]
        %v5591 = vld [vmem:[#allocation22 + $0xec8] sm:$0xf]
        %v5592 = vld [vmem:[#allocation22 + $0xecc] sm:$0xf]
        %v5593 = vld [vmem:[#allocation22 + $0xed0] sm:$0xf]
        %v5594 = vld [vmem:[#allocation22 + $0xed4] sm:$0xf]
        %v5595 = vld [vmem:[#allocation22 + $0xed8] sm:$0xf]
        %v5596 = vld [vmem:[#allocation22 + $0xedc] sm:$0xf]
        %v5597 = vld [vmem:[#allocation24 + $0x178] sm:$0x1]
        %v5598 = vperm.slane %v5597, 0
        %v5615 = vunpack.c.l.b16 %v5581
        %v5616 = vunpack.c.l.b16 %v5582
        %v5617 = vunpack.c.l.b16 %v5583
        %v5618 = vunpack.c.l.b16 %v5584
        %v5619 = vunpack.c.l.b16 %v5585
        %v5620 = vunpack.c.l.b16 %v5586
        %v5621 = vunpack.c.l.b16 %v5587
        %v5622 = vunpack.c.l.b16 %v5588
        %v5623 = vunpack.c.l.b16 %v5589
        %v5624 = vunpack.c.l.b16 %v5590
        %v5625 = vunpack.c.l.b16 %v5591
        %v5626 = vunpack.c.l.b16 %v5592
        %v5627 = vunpack.c.l.b16 %v5593
        %v5628 = vunpack.c.l.b16 %v5594
        %v5629 = vunpack.c.l.b16 %v5595
        %v5630 = vunpack.c.l.b16 %v5596
        %v5631 = vpack.c.b16 %v5616, %v5615
        %v5632 = vpack.c.b16 %v5618, %v5617
        %v5633 = vpack.c.b16 %v5620, %v5619
        %v5634 = vpack.c.b16 %v5622, %v5621
        %v5635 = vpack.c.b16 %v5624, %v5623
        %v5636 = vpack.c.b16 %v5626, %v5625
        %v5637 = vpack.c.b16 %v5628, %v5627
        %v5638 = vpack.c.b16 %v5630, %v5629
        %5647 = vmatpush.bf16.msra.mxu0 %v5638
        %5648 = vmatpush.bf16.msra.mxu0 %v5637
        %5649 = vmatpush.bf16.msra.mxu0 %v5636
        %5650 = vmatpush.bf16.msra.mxu0 %v5635
        %5651 = vmatpush.bf16.msra.mxu0 %v5634
        %5652 = vmatpush.bf16.msra.mxu0 %v5633
        %5653 = vmatpush.bf16.msra.mxu0 %v5632
        %5654 = vmatpush.bf16.msra.mxu0 %v5631
        %5655 = vmatmul.bf16.gmra.mxu0 %v5580
        %v5656 = vpop.f32.mrf.mxu0
        %v5657 = vadd.f32 %v5598, %v5656
        %v5658 = vpop.f32.mrf.mxu0
        %5659 = vdwg.mxu0
        %v5660 = vld [vmem:[#allocation8 + $0x1] sm:$0x1f]
        %v5661 = vpack.c.bf16 %v5660, %v5660
        %v5662 = vld [vmem:[#allocation22 + $0xee0] sm:$0xf]
        %v5663 = vld [vmem:[#allocation22 + $0xee4] sm:$0xf]
        %v5664 = vld [vmem:[#allocation22 + $0xee8] sm:$0xf]
        %v5665 = vld [vmem:[#allocation22 + $0xeec] sm:$0xf]
        %v5666 = vld [vmem:[#allocation22 + $0xef0] sm:$0xf]
        %v5667 = vld [vmem:[#allocation22 + $0xef4] sm:$0xf]
        %v5668 = vld [vmem:[#allocation22 + $0xef8] sm:$0xf]
        %v5669 = vld [vmem:[#allocation22 + $0xefc] sm:$0x3]
        %v5670 = vld [vmem:[#allocation24 + $0x180] sm:$0x1]
        %v5671 = vperm.slane %v5670, 0
        %5673 = vrot.lane.b32.xlu0 %v5661, 116
        %v5674 = vpop.permute.xlu0 %5673
        %v5683 = vunpack.c.l.b16 %v5662
        %v5684 = vunpack.c.l.b16 %v5663
        %v5685 = vunpack.c.l.b16 %v5664
        %v5686 = vunpack.c.l.b16 %v5665
        %v5687 = vunpack.c.l.b16 %v5666
        %v5688 = vunpack.c.l.b16 %v5667
        %v5689 = vunpack.c.l.b16 %v5668
        %v5690 = vunpack.c.l.b16 %v5669
        %v5691 = vpack.c.b16 %v5684, %v5683
        %v5692 = vpack.c.b16 %v5686, %v5685
        %v5693 = vpack.c.b16 %v5688, %v5687
        %v5694 = vpack.c.b16 %v5690, %v5689
        %vm5698 = vcmask 490496
        %v5700 = vsel %vm5698, %v5674, 0
        %vm5702 = vcmask 1045504
        %v5704 = vsel %vm5702, %v5694, 0
        %5706 = vmatpush.bf16.msra.mxu0 0
        %5707 = vmatpush.bf16.msra.mxu0 0
        %5708 = vmatpush.bf16.msra.mxu0 0
        %5709 = vmatpush.bf16.msra.mxu0 0
        %5710 = vmatpush.bf16.msra.mxu0 %v5704
        %5711 = vmatpush.bf16.msra.mxu0 %v5693
        %5712 = vmatpush.bf16.msra.mxu0 %v5692
        %5713 = vmatpush.bf16.msra.mxu0 %v5691
        %5714 = vmatmul.bf16.gmra.mxu0 %v5700
        %v5715 = vpop.f32.mrf.mxu0
        %v5716 = vadd.f32 %v5671, %v5715
        %v5717 = vpop.f32.mrf.mxu0
        %5718 = vdwg.mxu0
        %v5719 = vld [vmem:[#allocation24 + $0x188] sm:$0x1]
        %vm5720 = vcmp.gt.f32.partialorder %v5716, 0.0
        %v5721 = vperm.slane %v5719, 0
        %v5722 = vmul.f32 %v5721, %v5716
        %v5723 = vsel %vm5720, %v5716, %v5722
        %5725 = vrot.lane.b32.xlu0 %v5723, 4
        %v5726 = vpop.permute.xlu0 %5725
        %vm5728 = vcmask 192544
        %5729 = vst.msk [vmem:[#allocation20 + $0x1] sm:$0x1f] %vm5728, %v5726
        %v5730 = vld [vmem:[#allocation24 + $0x190] sm:$0x1f]
        %vm5731 = vcmask 15360
        %v5733 = vsel %vm5731, %v5730, 0
        %v5736 = vsel %vm829, %v5657, 0
        %5738 = vmatpush.msra.mxu0 0.0
        %5739 = vmatpush.msra.mxu0 0.0
        %5740 = vmatpush.msra.mxu0 0.0
        %5741 = vmatpush.msra.mxu0 0.0
        %5742 = vmatpush.msra.mxu0 0.0
        %5743 = vmatpush.msra.mxu0 0.0
        %5744 = vmatpush.msra.mxu0 0.0
        %5745 = vmatpush.msra.mxu0 0.0
        %5746 = vmatpush.msra.mxu0 0.0
        %5747 = vmatpush.msra.mxu0 0.0
        %5748 = vmatpush.msra.mxu0 0.0
        %5749 = vmatpush.msra.mxu0 0.0
        %5750 = vmatpush.msra.mxu0 0.0
        %5751 = vmatpush.msra.mxu0 0.0
        %5752 = vmatpush.msra.mxu0 0.0
        %5753 = vmatpush.msra.mxu0 %v5736
        %5754 = vmatmul.f32.gmra.mxu0 %v5733
        %v5755 = vpop.f32.mrf.mxu0
        %v5756 = vadd.f32 0.0, %v5755
        %5757 = vdwg.mxu0
        %v5758 = vld [vmem:[#allocation24 + $0x198] sm:$0xff]
        %v5760 = vsel %vm218, %v5756, 0
        %5762 = vmatpush.msra.mxu0 0.0
        %5763 = vmatpush.msra.mxu0 0.0
        %5764 = vmatpush.msra.mxu0 0.0
        %5765 = vmatpush.msra.mxu0 0.0
        %5766 = vmatpush.msra.mxu0 0.0
        %5767 = vmatpush.msra.mxu0 0.0
        %5768 = vmatpush.msra.mxu0 0.0
        %5769 = vmatpush.msra.mxu0 0.0
        %5770 = vmatpush.msra.mxu0 0.0
        %5771 = vmatpush.msra.mxu0 0.0
        %5772 = vmatpush.msra.mxu0 0.0
        %5773 = vmatpush.msra.mxu0 0.0
        %5774 = vmatpush.msra.mxu0 0.0
        %5775 = vmatpush.msra.mxu0 0.0
        %5776 = vmatpush.msra.mxu0 0.0
        %5777 = vmatpush.msra.mxu0 %v5758
        %5778 = vmatmul.f32.gmra.mxu0 %v5760
        %v5779 = vpop.f32.mrf.mxu0
        %v5780 = vadd.f32 0.0, %v5779
        %5781 = vdwg.mxu0
        %5783 = vrot.lane.b32.xlu0 %v5780, 4
        %v5784 = vpop.permute.xlu0 %5783
        %5786 = vst.msk [vmem:[#allocation21 + $0x1] sm:$0x1f] %vm5728, %v5784
        %v5787 = vld [vmem:[#allocation21] sm:$0x1f]
        %v5788 = vpack.c.bf16 %v5787, %v5787
        %v5789 = vld [vmem:[#allocation20] sm:$0x1f]
        %v5790 = vpack.c.bf16 %v5789, %v5789
        %v5791 = vld [vmem:[#allocation22 + $0xf00] sm:$0xf]
        %v5792 = vld [vmem:[#allocation22 + $0xf04] sm:$0xf]
        %v5793 = vld [vmem:[#allocation22 + $0xf08] sm:$0xf]
        %v5794 = vld [vmem:[#allocation22 + $0xf0c] sm:$0x3]
        %v5795 = vld [vmem:[#allocation22 + $0xf30] sm:$0xf]
        %v5796 = vld [vmem:[#allocation22 + $0xf34] sm:$0xf]
        %v5797 = vld [vmem:[#allocation22 + $0xf38] sm:$0xf]
        %v5798 = vld [vmem:[#allocation22 + $0xf3c] sm:$0x3]
        %v5803 = vunpack.c.l.b16 %v5795
        %v5804 = vunpack.c.l.b16 %v5796
        %v5805 = vunpack.c.l.b16 %v5797
        %v5806 = vunpack.c.l.b16 %v5798
        %v5807 = vpack.c.b16 %v5804, %v5803
        %v5808 = vpack.c.b16 %v5806, %v5805
        %vm5810 = vcmask 228352
        %v5812 = vsel %vm5810, %v5790, 0
        %v5815 = vsel %vm5702, %v5808, 0
        %5817 = vmatpush.bf16.msra.mxu0 0
        %5818 = vmatpush.bf16.msra.mxu0 0
        %5819 = vmatpush.bf16.msra.mxu0 0
        %5820 = vmatpush.bf16.msra.mxu0 0
        %5821 = vmatpush.bf16.msra.mxu0 0
        %5822 = vmatpush.bf16.msra.mxu0 0
        %5823 = vmatpush.bf16.msra.mxu0 %v5815
        %5824 = vmatpush.bf16.msra.mxu0 %v5807
        %5825 = vmatmul.bf16.gmra.mxu0 %v5812
        %v5826 = vpop.f32.mrf.mxu0
        %v5827 = vadd.f32 0.0, %v5826
        %v5828 = vpop.f32.mrf.mxu0
        %5829 = vdwg.mxu0
        %v5834 = vunpack.c.l.b16 %v5791
        %v5835 = vunpack.c.l.b16 %v5792
        %v5836 = vunpack.c.l.b16 %v5793
        %v5837 = vunpack.c.l.b16 %v5794
        %v5838 = vpack.c.b16 %v5835, %v5834
        %v5839 = vpack.c.b16 %v5837, %v5836
        %v5842 = vsel %vm5810, %v5788, 0
        %v5845 = vsel %vm5702, %v5839, 0
        %5847 = vmatpush.bf16.msra.mxu0 0
        %5848 = vmatpush.bf16.msra.mxu0 0
        %5849 = vmatpush.bf16.msra.mxu0 0
        %5850 = vmatpush.bf16.msra.mxu0 0
        %5851 = vmatpush.bf16.msra.mxu0 0
        %5852 = vmatpush.bf16.msra.mxu0 0
        %5853 = vmatpush.bf16.msra.mxu0 %v5845
        %5854 = vmatpush.bf16.msra.mxu0 %v5838
        %5855 = vmatmul.bf16.gmra.mxu0 %v5842
        %v5856 = vpop.f32.mrf.mxu0
        %v5857 = vadd.f32 %v5827, %v5856
        %v5858 = vpop.f32.mrf.mxu0
        %5859 = vdwg.mxu0
        %v5860 = vld [vmem:[#allocation21 + $0x1] sm:$0x1f]
        %v5861 = vpack.c.bf16 %v5860, %v5860
        %v5862 = vld [vmem:[#allocation20 + $0x1] sm:$0x1f]
        %v5863 = vpack.c.bf16 %v5862, %v5862
        %v5864 = vld [vmem:[#allocation22 + $0xf10] sm:$0xf]
        %v5865 = vld [vmem:[#allocation22 + $0xf14] sm:$0xf]
        %v5866 = vld [vmem:[#allocation22 + $0xf18] sm:$0xf]
        %v5867 = vld [vmem:[#allocation22 + $0xf1c] sm:$0x3]
        %v5868 = vld [vmem:[#allocation22 + $0xf40] sm:$0xf]
        %v5869 = vld [vmem:[#allocation22 + $0xf44] sm:$0xf]
        %v5870 = vld [vmem:[#allocation22 + $0xf48] sm:$0xf]
        %v5871 = vld [vmem:[#allocation22 + $0xf4c] sm:$0x3]
        %v5876 = vunpack.c.l.b16 %v5868
        %v5877 = vunpack.c.l.b16 %v5869
        %v5878 = vunpack.c.l.b16 %v5870
        %v5879 = vunpack.c.l.b16 %v5871
        %v5880 = vpack.c.b16 %v5877, %v5876
        %v5881 = vpack.c.b16 %v5879, %v5878
        %v5884 = vsel %vm5810, %v5863, 0
        %v5887 = vsel %vm5702, %v5881, 0
        %5889 = vmatpush.bf16.msra.mxu0 0
        %5890 = vmatpush.bf16.msra.mxu0 0
        %5891 = vmatpush.bf16.msra.mxu0 0
        %5892 = vmatpush.bf16.msra.mxu0 0
        %5893 = vmatpush.bf16.msra.mxu0 0
        %5894 = vmatpush.bf16.msra.mxu0 0
        %5895 = vmatpush.bf16.msra.mxu0 %v5887
        %5896 = vmatpush.bf16.msra.mxu0 %v5880
        %5897 = vmatmul.bf16.gmra.mxu0 %v5884
        %v5898 = vpop.f32.mrf.mxu0
        %v5899 = vadd.f32 0.0, %v5898
        %v5900 = vpop.f32.mrf.mxu0
        %5901 = vdwg.mxu0
        %v5906 = vunpack.c.l.b16 %v5864
        %v5907 = vunpack.c.l.b16 %v5865
        %v5908 = vunpack.c.l.b16 %v5866
        %v5909 = vunpack.c.l.b16 %v5867
        %v5910 = vpack.c.b16 %v5907, %v5906
        %v5911 = vpack.c.b16 %v5909, %v5908
        %v5914 = vsel %vm5810, %v5861, 0
        %v5917 = vsel %vm5702, %v5911, 0
        %5919 = vmatpush.bf16.msra.mxu0 0
        %5920 = vmatpush.bf16.msra.mxu0 0
        %5921 = vmatpush.bf16.msra.mxu0 0
        %5922 = vmatpush.bf16.msra.mxu0 0
        %5923 = vmatpush.bf16.msra.mxu0 0
        %5924 = vmatpush.bf16.msra.mxu0 0
        %5925 = vmatpush.bf16.msra.mxu0 %v5917
        %5926 = vmatpush.bf16.msra.mxu0 %v5910
        %5927 = vmatmul.bf16.gmra.mxu0 %v5914
        %v5928 = vpop.f32.mrf.mxu0
        %v5929 = vadd.f32 %v5899, %v5928
        %v5930 = vpop.f32.mrf.mxu0
        %5931 = vdwg.mxu0
        %v5932 = vadd.f32 %v5857, %v5929
        %v5933 = vld [vmem:[#allocation21 + $0x2] sm:$0x1f]
        %v5934 = vpack.c.bf16 %v5933, %v5933
        %v5935 = vld [vmem:[#allocation20 + $0x2] sm:$0x1f]
        %v5936 = vpack.c.bf16 %v5935, %v5935
        %v5937 = vld [vmem:[#allocation22 + $0xf20] sm:$0xf]
        %v5938 = vld [vmem:[#allocation22 + $0xf24] sm:$0xf]
        %v5939 = vld [vmem:[#allocation22 + $0xf28] sm:$0xf]
        %v5940 = vld [vmem:[#allocation22 + $0xf2c] sm:$0x3]
        %v5941 = vld [vmem:[#allocation22 + $0xf50] sm:$0xf]
        %v5942 = vld [vmem:[#allocation22 + $0xf54] sm:$0xf]
        %v5943 = vld [vmem:[#allocation22 + $0xf58] sm:$0xf]
        %v5944 = vld [vmem:[#allocation22 + $0xf5c] sm:$0x3]
        %v5949 = vunpack.c.l.b16 %v5941
        %v5950 = vunpack.c.l.b16 %v5942
        %v5951 = vunpack.c.l.b16 %v5943
        %v5952 = vunpack.c.l.b16 %v5944
        %v5953 = vpack.c.b16 %v5950, %v5949
        %v5954 = vpack.c.b16 %v5952, %v5951
        %v5957 = vsel %vm5810, %v5936, 0
        %v5960 = vsel %vm5702, %v5954, 0
        %5962 = vmatpush.bf16.msra.mxu0 0
        %5963 = vmatpush.bf16.msra.mxu0 0
        %5964 = vmatpush.bf16.msra.mxu0 0
        %5965 = vmatpush.bf16.msra.mxu0 0
        %5966 = vmatpush.bf16.msra.mxu0 0
        %5967 = vmatpush.bf16.msra.mxu0 0
        %5968 = vmatpush.bf16.msra.mxu0 %v5960
        %5969 = vmatpush.bf16.msra.mxu0 %v5953
        %5970 = vmatmul.bf16.gmra.mxu0 %v5957
        %v5971 = vpop.f32.mrf.mxu0
        %v5972 = vadd.f32 0.0, %v5971
        %v5973 = vpop.f32.mrf.mxu0
        %5974 = vdwg.mxu0
        %v5979 = vunpack.c.l.b16 %v5937
        %v5980 = vunpack.c.l.b16 %v5938
        %v5981 = vunpack.c.l.b16 %v5939
        %v5982 = vunpack.c.l.b16 %v5940
        %v5983 = vpack.c.b16 %v5980, %v5979
        %v5984 = vpack.c.b16 %v5982, %v5981
        %v5987 = vsel %vm5810, %v5934, 0
        %v5990 = vsel %vm5702, %v5984, 0
        %5992 = vmatpush.bf16.msra.mxu0 0
        %5993 = vmatpush.bf16.msra.mxu0 0
        %5994 = vmatpush.bf16.msra.mxu0 0
        %5995 = vmatpush.bf16.msra.mxu0 0
        %5996 = vmatpush.bf16.msra.mxu0 0
        %5997 = vmatpush.bf16.msra.mxu0 0
        %5998 = vmatpush.bf16.msra.mxu0 %v5990
        %5999 = vmatpush.bf16.msra.mxu0 %v5983
        %6000 = vmatmul.bf16.gmra.mxu0 %v5987
        %v6001 = vpop.f32.mrf.mxu0
        %v6002 = vadd.f32 %v5972, %v6001
        %v6003 = vpop.f32.mrf.mxu0
        %6004 = vdwg.mxu0
        %v6005 = vadd.f32 %v5932, %v6002
        %v6006 = vld [vmem:[#allocation24 + $0x1a0] sm:$0x1]
        %v6007 = vperm.slane %v6006, 0
        %v6008 = vadd.f32 %v6005, %v6007
        %v6009 = vld [vmem:[#allocation24 + $0x1a8] sm:$0xff]
        %v6010 = vld [vmem:[#allocation24 + $0x1b0] sm:$0xff]
        %v6012 = vsel %vm1803, %v6009, 0
        %v6015 = vsel %vm1803, %v6010, 0
        %v6018 = vsel %vm1807, %v6008, 0
        %6020 = vmatpush.msra.mxu0 0.0
        %6021 = vmatpush.msra.mxu0 0.0
        %6022 = vmatpush.msra.mxu0 0.0
        %6023 = vmatpush.msra.mxu0 0.0
        %6024 = vmatpush.msra.mxu0 0.0
        %6025 = vmatpush.msra.mxu0 0.0
        %6026 = vmatpush.msra.mxu0 0.0
        %6027 = vmatpush.msra.mxu0 0.0
        %6028 = vmatpush.msra.mxu0 0.0
        %6029 = vmatpush.msra.mxu0 0.0
        %6030 = vmatpush.msra.mxu0 0.0
        %6031 = vmatpush.msra.mxu0 0.0
        %6032 = vmatpush.msra.mxu0 0.0
        %6033 = vmatpush.msra.mxu0 0.0
        %6034 = vmatpush.msra.mxu0 0.0
        %6035 = vmatpush.msra.mxu0 %v6018
        %6036 = vmatmul.f32.gmra.mxu0 %v6012
        %v6037 = vpop.f32.mrf.mxu0
        %v6038 = vadd.f32 0.0, %v6037
        %6039 = vmatmul.f32.gmra.mxu0 %v6015
        %v6040 = vpop.f32.mrf.mxu0
        %v6041 = vadd.f32 0.0, %v6040
        %6042 = vdwg.mxu0
        %v6043 = vld [vmem:[#allocation24 + $0x1b8] sm:$0xff]
        %v6044 = vld [vmem:[#allocation24 + $0x1c0] sm:$0xff]
        %v6045 = vld [vmem:[#allocation24 + $0x1c8] sm:$0xf]
        %vm6046 = vcmask 162816
        %v6048 = vsel %vm6046, %v6038, 0
        %v6051 = vsel %vm6046, %v6041, 0
        %v6054 = vsel %vm585, %v6045, 0
        %6056 = vmatpush.msra.mxu0 0.0
        %6057 = vmatpush.msra.mxu0 0.0
        %6058 = vmatpush.msra.mxu0 0.0
        %6059 = vmatpush.msra.mxu0 0.0
        %6060 = vmatpush.msra.mxu0 0.0
        %6061 = vmatpush.msra.mxu0 0.0
        %6062 = vmatpush.msra.mxu0 0.0
        %6063 = vmatpush.msra.mxu0 0.0
        %6064 = vmatpush.msra.mxu0 0.0
        %6065 = vmatpush.msra.mxu0 0.0
        %6066 = vmatpush.msra.mxu0 0.0
        %6067 = vmatpush.msra.mxu0 0.0
        %6068 = vmatpush.msra.mxu0 0.0
        %6069 = vmatpush.msra.mxu0 %v6054
        %6070 = vmatpush.msra.mxu0 %v6044
        %6071 = vmatpush.msra.mxu0 %v6043
        %6072 = vmatmul.f32.gmra.mxu0 %v6048
        %v6073 = vpop.f32.mrf.mxu0
        %v6074 = vadd.f32 0.0, %v6073
        %6075 = vmatmul.f32.gmra.mxu0 %v6051
        %v6076 = vpop.f32.mrf.mxu0
        %v6077 = vadd.f32 0.0, %v6076
        %6078 = vdwg.mxu0
        %vm6079 = vcmask 523264
        %6080 = vst.msk [vmem:[%s204] sm:$0xff] %vm6079, %v6074
        %6081 = vst.msk [vmem:[%s204 + $0x8] sm:$0xff] %vm6079, %v6077
        %p6082 = scmp.lt.s32.totalorder %s16, 1
        %s6083 = scalar_select %p6082, %s16, 1
        %s6084 = smul.addr %s6083, 2
        %s6085 = smul.addr %s6084, 8
        %s6086 = scalar_lea.vmem %s3, %s6085
        // Predicated region
        $region41: #{forward.1} parent=31 // pred_check
          %p6087 = pneg %p102
        $region42: #{forward.1} parent=31 // pred_check_branch
          %6089 = sbr.rel (%p6087) target = $region44
        $region43: #{forward.1} parent=31 // pred_region
          _
        $region44: #{forward.1} parent=31 // pred_fallthru
          _
      $region32: #{forward.1} parent=5 // pred_fallthru
        _
      %p6090 = scmp.le.s32.totalorder 2, %s11
      // Predicated region
      $region45: #{forward.1} parent=5 // pred_check
        %p6091 = pneg %p6090
      $region46: #{forward.1} parent=5 // pred_check_branch
        %6093 = sbr.rel (%p6091) target = $region48
      $region47: #{forward.1} parent=5 // pred_region
        %s6094 = ssub.s32 %s11, 2
        // Predicated region
        $region49: #{forward.1} parent=47 // pred_check
          %p6095 = pneg %p108
        $region50: #{forward.1} parent=47 // pred_check_branch
          %6097 = sbr.rel (%p6095) target = $region52
        $region51: #{forward.1} parent=47 // pred_region
          %p6098 = scmp.lt.s32.totalorder %s17, 1
          %s6099 = scalar_select %p6098, %s17, 1
          %s6100 = smul.addr %s6099, 2
          %s6101 = smul.addr %s6100, 8
          %s6102 = scalar_lea.vmem %s3, %s6101
        $region52: #{forward.1} parent=47 // pred_fallthru
          _
      $region48: #{forward.1} parent=5 // pred_fallthru
        _
    $region6: #{forward.1} parent=1 // loop_footer
      %s15 = sadd.s32 1, %s11
    $region7: #{forward.1} parent=1 // loop_footer_branch
      %10 = sbr.rel target = $region3
    $region8: #{forward.1} parent=1 // loop_exit
      _
    %6103 = vsyncpa [#allocation23], 1
    %s6104 = scalar_lea.sflag [#allocation23], 1
    %6105 = vsyncpa %s6104, 1
    %6106 = vsyncpa [#allocation25], 1

</llo_original>
